<compile_context>
chip_gen: v7x
topology: tpu7x:2x2x1
jax: 0.10.0
libtpu: 0.0.40
codegen_flags: <defaults>
</compile_context>

<pallas_src>
import functools

import jax
import jax.numpy as jnp
from jax.experimental import pallas as pl
from jax.experimental.pallas import tpu as pltpu


MXU_DTYPE = jnp.float32   # jnp.bfloat16 on v6e/v7x for 2x MXU / half DMA
NP_FC2 = 128              # fc2 output padded to a lane-dense width


# ----------------------------------------------------------------------------
# Kernel 1: fused conv stack  (conv1 -> relu -> conv2 -> relu -> conv3 -> relu)
# One grid step = one image.  Activations live in VMEM scratch.
# ----------------------------------------------------------------------------
def _conv_stack_kernel(cols1_ref, w1_ref, b1_ref, w2_ref, b2_ref, w3_ref, b3_ref,
                       feat_ref, act1_ref, act2_ref, act3_ref):
    f32 = jnp.float32

    # --- conv1 (8x8 s4): one GEMM per conv1-output parity phase --------------
    # act1[a, c, p*10+q, :] = conv1_out[2p+a, 2q+c, :]   (phase-split so that
    # conv2's stride-2 patch reads below are plain contiguous slices).
    act1_ref[...] = jnp.zeros(act1_ref.shape, act1_ref.dtype)  # zero pad rows
    w1 = w1_ref[...]
    b1 = b1_ref[...].astype(f32)
    for a in range(2):
        for c in range(2):
            x = cols1_ref[0, 2 * a + c, :, :]                       # [100, 256]
            y = jnp.dot(x, w1, preferred_element_type=f32) + b1     # [100, 32]
            act1_ref[a, c, :100, :] = jnp.maximum(y, 0.0).astype(act1_ref.dtype)

    # --- conv2 (4x4 s2): sum of 16 shifted GEMMs on a padded 10x10 grid ------
    # acc2 row r = P*10+Q (P,Q <= 8 valid); offset (i,j) contributes rows r+d.
    acc2 = jnp.zeros((100, 64), f32)
    for i in range(4):
        for j in range(4):
            ip, ii = i % 2, i // 2
            jp, jj = j % 2, j // 2
            src = act1_ref[ip, jp, pl.ds(ii * 10 + jj, 100), :]     # [100, 32]
            acc2 = acc2 + jnp.dot(src, w2_ref[i * 4 + j, :, :],
                                  preferred_element_type=f32)
    act2 = jnp.maximum(acc2 + b2_ref[...].astype(f32), 0.0)
    act2_ref[...] = act2.astype(act2_ref.dtype)

    # --- conv3 (3x3 s1): sum of 9 shifted GEMMs on the same padded grid ------
    # acc3 row r = p*10+q (p,q <= 6 valid).
    acc3 = jnp.zeros((67, 64), f32)
    for i in range(3):
        for j in range(3):
            src = act2_ref[pl.ds(i * 10 + j, 67), :]                # [67, 64]
            acc3 = acc3 + jnp.dot(src, w3_ref[i * 3 + j, :, :],
                                  preferred_element_type=f32)
    act3_ref[...] = jnp.maximum(acc3 + b3_ref[...].astype(f32), 0.0)

    # --- gather the valid 7x7 rows (row p*10+q) into the HBM feature output --
    for p in range(7):
        feat_ref[0, p, :, :] = act3_ref[pl.ds(p * 10, 7), :]        # [7, 64]


def _conv_stack(cols1, pp):
    B = cols1.shape[0]
    return pl.pallas_call(
        _conv_stack_kernel,
        out_shape=jax.ShapeDtypeStruct((B, 7, 7, 64), jnp.float32),
        grid_spec=pltpu.PrefetchScalarGridSpec(
            num_scalar_prefetch=0,
            grid=(B,),
            in_specs=[
                pl.BlockSpec((1, 4, 100, 256), lambda b: (b, 0, 0, 0)),  # cols1
                pl.BlockSpec((256, 32), lambda b: (0, 0)),               # w1
                pl.BlockSpec((1, 32), lambda b: (0, 0)),                 # b1
                pl.BlockSpec((16, 32, 64), lambda b: (0, 0, 0)),         # w2
                pl.BlockSpec((1, 64), lambda b: (0, 0)),                 # b2
                pl.BlockSpec((9, 64, 64), lambda b: (0, 0, 0)),          # w3
                pl.BlockSpec((1, 64), lambda b: (0, 0)),                 # b3
            ],
            out_specs=pl.BlockSpec((1, 7, 7, 64), lambda b: (b, 0, 0, 0)),
            scratch_shapes=[
                pltpu.VMEM((2, 2, 112, 32), MXU_DTYPE),   # conv1 out (phase-split, padded)
                pltpu.VMEM((100, 64), MXU_DTYPE),         # conv2 out (padded 10x10 grid)
                pltpu.VMEM((67, 64), jnp.float32),        # conv3 out (padded grid)
            ],
        ),
        compiler_params=pltpu.CompilerParams(
            dimension_semantics=("parallel",),
            vmem_limit_bytes=16 << 20),        # working set ~3 MiB; valid on all gens
    )(cols1, pp["w1"], pp["b1"], pp["w2"], pp["b2"], pp["w3"], pp["b3"])


# ----------------------------------------------------------------------------
# Kernel 2: fused FC head   out = (relu(x @ W1 + b1)) @ W2 + b2
# Grid over M tiles; weights stay resident (constant index_map).
# ----------------------------------------------------------------------------
def _fc_kernel(x_ref, w1_ref, b1_ref, w2_ref, b2_ref, o_ref):
    f32 = jnp.float32
    h = jnp.dot(x_ref[...], w1_ref[...], preferred_element_type=f32)
    h = jnp.maximum(h + b1_ref[...], 0.0).astype(w2_ref.dtype)
    o = jnp.dot(h, w2_ref[...], preferred_element_type=f32) + b2_ref[...]
    o_ref[...] = o.astype(o_ref.dtype)


def _fc_head(x, pp):
    B, K = x.shape
    N1 = pp["fc1_w"].shape[1]
    N2 = pp["fc2_w"].shape[1]
    tm = B
    for cand in (256, 128, 64, 32, 16, 8):
        if B % cand == 0:
            tm = cand
            break
    return pl.pallas_call(
        _fc_kernel,
        out_shape=jax.ShapeDtypeStruct((B, N2), jnp.float32),
        grid_spec=pltpu.PrefetchScalarGridSpec(
            num_scalar_prefetch=0,
            grid=(B // tm,),
            in_specs=[
                pl.BlockSpec((tm, K), lambda m: (m, 0)),
                pl.BlockSpec((K, N1), lambda m: (0, 0)),
                pl.BlockSpec((1, N1), lambda m: (0, 0)),
                pl.BlockSpec((N1, N2), lambda m: (0, 0)),
                pl.BlockSpec((1, N2), lambda m: (0, 0)),
            ],
            out_specs=pl.BlockSpec((tm, N2), lambda m: (m, 0)),
        ),
        compiler_params=pltpu.CompilerParams(
            dimension_semantics=("parallel",),
            vmem_limit_bytes=32 << 20),        # fc1_w resident (~13 MiB dbl-buffered)
    )(x, pp["fc1_w"], pp["fc1_b"], pp["fc2_w"], pp["fc2_b"])


# ----------------------------------------------------------------------------
# One-time XLA glue on the raw input: conv1 patches grouped by output parity.
# cols1[b, 2a+c, p*10+q, (i*8+j)*4+cin] = x_nhwc[b, 4*(2p+a)+i, 4*(2q+c)+j, cin]
# ----------------------------------------------------------------------------
def _conv1_patches(x):
    B = x.shape[0]
    xh = jnp.transpose(x, (0, 2, 3, 1))                        # [B, 84, 84, 4]
    rows = []
    for i in range(8):
        cols = [xh[:, i:i + 77:4, j:j + 77:4, :] for j in range(8)]
        rows.append(jnp.stack(cols, axis=3))                   # [B, 20, 20, 8, 4]
    p = jnp.stack(rows, axis=3)                                # [B, 20, 20, 8, 8, 4]
    p = p.reshape(B, 10, 2, 10, 2, 8, 8, 4)                    # split output parity
    p = p.transpose(0, 2, 4, 1, 3, 5, 6, 7)                    # [B, a, c, p, q, i, j, cin]
    return p.reshape(B, 4, 100, 256).astype(MXU_DTYPE)


# ----------------------------------------------------------------------------
# Parameter packing (done once): transpose conv weights to (kh,kw,in,out),
# fold the NCHW-flatten permutation into fc1_w rows, pad fc2 to 128 lanes.
# ----------------------------------------------------------------------------
def pack_params(p, action_dim):
    assert action_dim <= NP_FC2
    mx = MXU_DTYPE
    w1 = jnp.transpose(p["conv1_w"], (2, 3, 1, 0)).reshape(256, 32)
    w2 = jnp.transpose(p["conv2_w"], (2, 3, 1, 0)).reshape(16, 32, 64)
    w3 = jnp.transpose(p["conv3_w"], (2, 3, 1, 0)).reshape(9, 64, 64)
    # fc1_w rows are in PyTorch NCHW-flatten order (c, p, q); permute to the
    # (p, q, c) order the conv kernel emits.
    fc1 = p["fc1_w"].reshape(64, 7, 7, 512).transpose(1, 2, 0, 3).reshape(3136, 512)
    npad = NP_FC2 - action_dim
    fc2 = jnp.pad(p["fc2_w"], ((0, 0), (0, npad)))
    fc2_b = jnp.pad(p["fc2_b"], ((0, npad),))
    return {
        "w1": w1.astype(mx), "b1": p["conv1_b"].reshape(1, 32).astype(jnp.float32),
        "w2": w2.astype(mx), "b2": p["conv2_b"].reshape(1, 64).astype(jnp.float32),
        "w3": w3.astype(mx), "b3": p["conv3_b"].reshape(1, 64).astype(jnp.float32),
        "fc1_w": fc1.astype(mx), "fc1_b": p["fc1_b"].reshape(1, 512).astype(jnp.float32),
        "fc2_w": fc2.astype(mx), "fc2_b": fc2_b.reshape(1, NP_FC2).astype(jnp.float32),
    }


# ----------------------------------------------------------------------------
# DQN forward
# ----------------------------------------------------------------------------
def dqn_forward(packed, x, *, action_dim):
    B = x.shape[0]
    cols1 = _conv1_patches(x)                       # [B, 4, 100, 256]
    feats = _conv_stack(cols1, packed)              # [B, 7, 7, 64]
    h = feats.reshape(B, 7 * 7 * 64).astype(MXU_DTYPE)
    out = _fc_head(h, packed)                       # [B, 128] lane-dense
    return out[:, :action_dim]


def init_params(key, action_dim):
    ks = jax.random.split(key, 10)

    def u(k, shape, fan_in):
        bound = 1.0 / jnp.sqrt(fan_in)
        return jax.random.uniform(k, shape, jnp.float32, -bound, bound)

    return {
        "conv1_w": u(ks[0], (32, 4, 8, 8), 4 * 8 * 8),
        "conv1_b": u(ks[1], (32,), 4 * 8 * 8),
        "conv2_w": u(ks[2], (64, 32, 4, 4), 32 * 4 * 4),
        "conv2_b": u(ks[3], (64,), 32 * 4 * 4),
        "conv3_w": u(ks[4], (64, 64, 3, 3), 64 * 3 * 3),
        "conv3_b": u(ks[5], (64,), 64 * 3 * 3),
        "fc1_w": u(ks[6], (64 * 7 * 7, 512), 64 * 7 * 7),
        "fc1_b": u(ks[7], (512,), 64 * 7 * 7),
        "fc2_w": u(ks[8], (512, action_dim), 512),
        "fc2_b": u(ks[9], (action_dim,), 512),
    }


# ----------------------------------------------------------------------------
# Pure-JAX reference (numerical sanity check, PyTorch semantics)
# ----------------------------------------------------------------------------
def dqn_forward_ref(params, x):
    def conv(x, w, b, stride, relu):
        out = jax.lax.conv_general_dilated(
            x, w, window_strides=(stride, stride), padding="VALID",
            dimension_numbers=("NCHW", "OIHW", "NCHW"))
        out = out + b[None, :, None, None]
        return jnp.maximum(out, 0.0) if relu else out

    x = conv(x, params["conv1_w"], params["conv1_b"], 4, True)
    x = conv(x, params["conv2_w"], params["conv2_b"], 2, True)
    x = conv(x, params["conv3_w"], params["conv3_b"], 1, True)
    x = x.reshape(x.shape[0], -1)
    x = jnp.maximum(x @ params["fc1_w"] + params["fc1_b"], 0.0)
    return x @ params["fc2_w"] + params["fc2_b"]


if __name__ == "__main__":
    key = jax.random.PRNGKey(0)
    k_param, k_x = jax.random.split(key)

    action_dim = 6
    batch = 2
    # Spatial size is fixed at 84x84 by the 64*7*7 flatten in fc1.
    x = jax.random.uniform(k_x, (batch, 4, 84, 84), jnp.float32)
    params = init_params(k_param, action_dim)
    packed = pack_params(params, action_dim)

    fwd = jax.jit(functools.partial(dqn_forward, action_dim=action_dim))
    out = jax.block_until_ready(fwd(packed, x))

    ref = dqn_forward_ref(params, x)
    assert out.shape == (batch, action_dim), out.shape
    err = jnp.max(jnp.abs(out - ref))
    assert jnp.allclose(out, ref, rtol=2e-3, atol=2e-3), f"max abs err {err}"

    print("KERNEL_OK")
</pallas_src>

<mosaic_0001>
module attributes {stable_mosaic.version = 11 : i64} {
  func.func @_conv_stack_kernel(%arg0: i32, %arg1: memref<1x4x100x256xf32, #tpu.memory_space<vmem>>, %arg2: memref<256x32xf32, #tpu.memory_space<vmem>>, %arg3: memref<1x32xf32, #tpu.memory_space<vmem>>, %arg4: memref<16x32x64xf32, #tpu.memory_space<vmem>>, %arg5: memref<1x64xf32, #tpu.memory_space<vmem>>, %arg6: memref<9x64x64xf32, #tpu.memory_space<vmem>>, %arg7: memref<1x64xf32, #tpu.memory_space<vmem>>, %arg8: memref<1x7x7x64xf32, #tpu.memory_space<vmem>>, %arg9: memref<2x2x112x32xf32, #tpu.memory_space<vmem>>, %arg10: memref<100x64xf32, #tpu.memory_space<vmem>>, %arg11: memref<67x64xf32, #tpu.memory_space<vmem>>) attributes {dimension_semantics = [#tpu.dimension_semantics<parallel>], iteration_bounds = array<i64: 2>, scalar_prefetch = 0 : i64, scratch_operands = 3 : i64, tpu.core_type = #tpu.core_type<tc>, window_params = [{transform_indices = @transform_0, window_bounds = array<i64: 1, 4, 100, 256>}, {pipeline_mode = #tpu.pipeline_mode<synchronous>, transform_indices = @transform_1, window_bounds = array<i64: 256, 32>}, {pipeline_mode = #tpu.pipeline_mode<synchronous>, transform_indices = @transform_2, window_bounds = array<i64: 1, 32>}, {pipeline_mode = #tpu.pipeline_mode<synchronous>, transform_indices = @transform_3, window_bounds = array<i64: 16, 32, 64>}, {pipeline_mode = #tpu.pipeline_mode<synchronous>, transform_indices = @transform_4, window_bounds = array<i64: 1, 64>}, {pipeline_mode = #tpu.pipeline_mode<synchronous>, transform_indices = @transform_5, window_bounds = array<i64: 9, 64, 64>}, {pipeline_mode = #tpu.pipeline_mode<synchronous>, transform_indices = @transform_6, window_bounds = array<i64: 1, 64>}, {transform_indices = @transform_7, window_bounds = array<i64: 1, 7, 7, 64>}]} {
    %cst = arith.constant 0.000000e+00 : f32
    %0 = vector.broadcast %cst : f32 to vector<2x2x112x32xf32>
    %c0 = arith.constant 0 : index
    %c0_0 = arith.constant 0 : index
    %c0_1 = arith.constant 0 : index
    %c0_2 = arith.constant 0 : index
    %1 = vector.load %arg9[%c0, %c0_0, %c0_1, %c0_2] : memref<2x2x112x32xf32, #tpu.memory_space<vmem>>, vector<2x2x112x32xf32>
    tpu.vector_store %arg9[%c0, %c0_0, %c0_1, %c0_2], %0 {strides = array<i32>} : memref<2x2x112x32xf32, #tpu.memory_space<vmem>>, vector<2x2x112x32xf32>,
    %c0_3 = arith.constant 0 : index
    %c0_4 = arith.constant 0 : index
    %2 = vector.load %arg2[%c0_3, %c0_4] : memref<256x32xf32, #tpu.memory_space<vmem>>, vector<256x32xf32>
    %c0_5 = arith.constant 0 : index
    %c0_6 = arith.constant 0 : index
    %3 = vector.load %arg3[%c0_5, %c0_6] : memref<1x32xf32, #tpu.memory_space<vmem>>, vector<1x32xf32>
    %c0_7 = arith.constant 0 : index
    %c0_8 = arith.constant 0 : index
    %c0_9 = arith.constant 0 : index
    %c0_10 = arith.constant 0 : index
    %4 = vector.load %arg1[%c0_7, %c0_8, %c0_9, %c0_10] : memref<1x4x100x256xf32, #tpu.memory_space<vmem>>, vector<1x1x100x256xf32>
    %5 = vector.shape_cast %4 : vector<1x1x100x256xf32> to vector<100x256xf32>
    %cst_11 = arith.constant dense<0.000000e+00> : vector<100x32xf32>
    %6 = tpu.matmul %5, %2, %cst_11 {dimension_numbers = #tpu.dot_dimension_numbers<[1], [0], [0], [1], [0, 0, 1, 1], [], []>} : vector<100x256xf32>, vector<256x32xf32>, vector<100x32xf32> -> vector<100x32xf32>
    %7 = vector.broadcast %3 : vector<1x32xf32> to vector<100x32xf32>
    %8 = arith.addf %6, %7 : vector<100x32xf32>
    %cst_12 = arith.constant 0.000000e+00 : f32
    %9 = vector.broadcast %cst_12 : f32 to vector<100x32xf32>
    %10 = arith.maximumf %8, %9 : vector<100x32xf32>
    %c0_13 = arith.constant 0 : index
    %c0_14 = arith.constant 0 : index
    %c0_15 = arith.constant 0 : index
    %c0_16 = arith.constant 0 : index
    %11 = vector.load %arg9[%c0_13, %c0_14, %c0_15, %c0_16] : memref<2x2x112x32xf32, #tpu.memory_space<vmem>>, vector<1x1x100x32xf32>
    %12 = vector.shape_cast %11 : vector<1x1x100x32xf32> to vector<100x32xf32>
    %13 = vector.shape_cast %10 : vector<100x32xf32> to vector<1x1x100x32xf32>
    tpu.vector_store %arg9[%c0_13, %c0_14, %c0_15, %c0_16], %13 {strides = array<i32>} : memref<2x2x112x32xf32, #tpu.memory_space<vmem>>, vector<1x1x100x32xf32>,
    %c0_17 = arith.constant 0 : index
    %c1 = arith.constant 1 : index
    %c0_18 = arith.constant 0 : index
    %c0_19 = arith.constant 0 : index
    %14 = vector.load %arg1[%c0_17, %c1, %c0_18, %c0_19] : memref<1x4x100x256xf32, #tpu.memory_space<vmem>>, vector<1x1x100x256xf32>
    %15 = vector.shape_cast %14 : vector<1x1x100x256xf32> to vector<100x256xf32>
    %cst_20 = arith.constant dense<0.000000e+00> : vector<100x32xf32>
    %16 = tpu.matmul %15, %2, %cst_20 {dimension_numbers = #tpu.dot_dimension_numbers<[1], [0], [0], [1], [0, 0, 1, 1], [], []>} : vector<100x256xf32>, vector<256x32xf32>, vector<100x32xf32> -> vector<100x32xf32>
    %17 = vector.broadcast %3 : vector<1x32xf32> to vector<100x32xf32>
    %18 = arith.addf %16, %17 : vector<100x32xf32>
    %cst_21 = arith.constant 0.000000e+00 : f32
    %19 = vector.broadcast %cst_21 : f32 to vector<100x32xf32>
    %20 = arith.maximumf %18, %19 : vector<100x32xf32>
    %c0_22 = arith.constant 0 : index
    %c1_23 = arith.constant 1 : index
    %c0_24 = arith.constant 0 : index
    %c0_25 = arith.constant 0 : index
    %21 = vector.load %arg9[%c0_22, %c1_23, %c0_24, %c0_25] : memref<2x2x112x32xf32, #tpu.memory_space<vmem>>, vector<1x1x100x32xf32>
    %22 = vector.shape_cast %21 : vector<1x1x100x32xf32> to vector<100x32xf32>
    %23 = vector.shape_cast %20 : vector<100x32xf32> to vector<1x1x100x32xf32>
    tpu.vector_store %arg9[%c0_22, %c1_23, %c0_24, %c0_25], %23 {strides = array<i32>} : memref<2x2x112x32xf32, #tpu.memory_space<vmem>>, vector<1x1x100x32xf32>,
    %c0_26 = arith.constant 0 : index
    %c2 = arith.constant 2 : index
    %c0_27 = arith.constant 0 : index
    %c0_28 = arith.constant 0 : index
    %24 = vector.load %arg1[%c0_26, %c2, %c0_27, %c0_28] : memref<1x4x100x256xf32, #tpu.memory_space<vmem>>, vector<1x1x100x256xf32>
    %25 = vector.shape_cast %24 : vector<1x1x100x256xf32> to vector<100x256xf32>
    %cst_29 = arith.constant dense<0.000000e+00> : vector<100x32xf32>
    %26 = tpu.matmul %25, %2, %cst_29 {dimension_numbers = #tpu.dot_dimension_numbers<[1], [0], [0], [1], [0, 0, 1, 1], [], []>} : vector<100x256xf32>, vector<256x32xf32>, vector<100x32xf32> -> vector<100x32xf32>
    %27 = vector.broadcast %3 : vector<1x32xf32> to vector<100x32xf32>
    %28 = arith.addf %26, %27 : vector<100x32xf32>
    %cst_30 = arith.constant 0.000000e+00 : f32
    %29 = vector.broadcast %cst_30 : f32 to vector<100x32xf32>
    %30 = arith.maximumf %28, %29 : vector<100x32xf32>
    %c1_31 = arith.constant 1 : index
    %c0_32 = arith.constant 0 : index
    %c0_33 = arith.constant 0 : index
    %c0_34 = arith.constant 0 : index
    %31 = vector.load %arg9[%c1_31, %c0_32, %c0_33, %c0_34] : memref<2x2x112x32xf32, #tpu.memory_space<vmem>>, vector<1x1x100x32xf32>
    %32 = vector.shape_cast %31 : vector<1x1x100x32xf32> to vector<100x32xf32>
    %33 = vector.shape_cast %30 : vector<100x32xf32> to vector<1x1x100x32xf32>
    tpu.vector_store %arg9[%c1_31, %c0_32, %c0_33, %c0_34], %33 {strides = array<i32>} : memref<2x2x112x32xf32, #tpu.memory_space<vmem>>, vector<1x1x100x32xf32>,
    %c0_35 = arith.constant 0 : index
    %c3 = arith.constant 3 : index
    %c0_36 = arith.constant 0 : index
    %c0_37 = arith.constant 0 : index
    %34 = vector.load %arg1[%c0_35, %c3, %c0_36, %c0_37] : memref<1x4x100x256xf32, #tpu.memory_space<vmem>>, vector<1x1x100x256xf32>
    %35 = vector.shape_cast %34 : vector<1x1x100x256xf32> to vector<100x256xf32>
    %cst_38 = arith.constant dense<0.000000e+00> : vector<100x32xf32>
    %36 = tpu.matmul %35, %2, %cst_38 {dimension_numbers = #tpu.dot_dimension_numbers<[1], [0], [0], [1], [0, 0, 1, 1], [], []>} : vector<100x256xf32>, vector<256x32xf32>, vector<100x32xf32> -> vector<100x32xf32>
    %37 = vector.broadcast %3 : vector<1x32xf32> to vector<100x32xf32>
    %38 = arith.addf %36, %37 : vector<100x32xf32>
    %cst_39 = arith.constant 0.000000e+00 : f32
    %39 = vector.broadcast %cst_39 : f32 to vector<100x32xf32>
    %40 = arith.maximumf %38, %39 : vector<100x32xf32>
    %c1_40 = arith.constant 1 : index
    %c1_41 = arith.constant 1 : index
    %c0_42 = arith.constant 0 : index
    %c0_43 = arith.constant 0 : index
    %41 = vector.load %arg9[%c1_40, %c1_41, %c0_42, %c0_43] : memref<2x2x112x32xf32, #tpu.memory_space<vmem>>, vector<1x1x100x32xf32>
    %42 = vector.shape_cast %41 : vector<1x1x100x32xf32> to vector<100x32xf32>
    %43 = vector.shape_cast %40 : vector<100x32xf32> to vector<1x1x100x32xf32>
    tpu.vector_store %arg9[%c1_40, %c1_41, %c0_42, %c0_43], %43 {strides = array<i32>} : memref<2x2x112x32xf32, #tpu.memory_space<vmem>>, vector<1x1x100x32xf32>,
    %cst_44 = arith.constant 0.000000e+00 : f32
    %44 = vector.broadcast %cst_44 : f32 to vector<100x64xf32>
    %c0_45 = arith.constant 0 : index
    %c0_46 = arith.constant 0 : index
    %c0_47 = arith.constant 0 : index
    %c0_48 = arith.constant 0 : index
    %45 = vector.load %arg9[%c0_45, %c0_46, %c0_47, %c0_48] : memref<2x2x112x32xf32, #tpu.memory_space<vmem>>, vector<1x1x100x32xf32>
    %46 = vector.shape_cast %45 : vector<1x1x100x32xf32> to vector<100x32xf32>
    %c0_49 = arith.constant 0 : index
    %c0_50 = arith.constant 0 : index
    %c0_51 = arith.constant 0 : index
    %47 = vector.load %arg4[%c0_49, %c0_50, %c0_51] : memref<16x32x64xf32, #tpu.memory_space<vmem>>, vector<1x32x64xf32>
    %48 = vector.shape_cast %47 : vector<1x32x64xf32> to vector<32x64xf32>
    %cst_52 = arith.constant dense<0.000000e+00> : vector<100x64xf32>
    %49 = tpu.matmul %46, %48, %cst_52 {dimension_numbers = #tpu.dot_dimension_numbers<[1], [0], [0], [1], [0, 0, 1, 1], [], []>} : vector<100x32xf32>, vector<32x64xf32>, vector<100x64xf32> -> vector<100x64xf32>
    %50 = arith.addf %44, %49 : vector<100x64xf32>
    %c0_53 = arith.constant 0 : index
    %c1_54 = arith.constant 1 : index
    %c0_55 = arith.constant 0 : index
    %c0_56 = arith.constant 0 : index
    %51 = vector.load %arg9[%c0_53, %c1_54, %c0_55, %c0_56] : memref<2x2x112x32xf32, #tpu.memory_space<vmem>>, vector<1x1x100x32xf32>
    %52 = vector.shape_cast %51 : vector<1x1x100x32xf32> to vector<100x32xf32>
    %c1_57 = arith.constant 1 : index
    %c0_58 = arith.constant 0 : index
    %c0_59 = arith.constant 0 : index
    %53 = vector.load %arg4[%c1_57, %c0_58, %c0_59] : memref<16x32x64xf32, #tpu.memory_space<vmem>>, vector<1x32x64xf32>
    %54 = vector.shape_cast %53 : vector<1x32x64xf32> to vector<32x64xf32>
    %cst_60 = arith.constant dense<0.000000e+00> : vector<100x64xf32>
    %55 = tpu.matmul %52, %54, %cst_60 {dimension_numbers = #tpu.dot_dimension_numbers<[1], [0], [0], [1], [0, 0, 1, 1], [], []>} : vector<100x32xf32>, vector<32x64xf32>, vector<100x64xf32> -> vector<100x64xf32>
    %56 = arith.addf %50, %55 : vector<100x64xf32>
    %c0_61 = arith.constant 0 : index
    %c0_62 = arith.constant 0 : index
    %c1_63 = arith.constant 1 : index
    %c0_64 = arith.constant 0 : index
    %57 = vector.load %arg9[%c0_61, %c0_62, %c1_63, %c0_64] : memref<2x2x112x32xf32, #tpu.memory_space<vmem>>, vector<1x1x100x32xf32>
    %58 = vector.shape_cast %57 : vector<1x1x100x32xf32> to vector<100x32xf32>
    %c2_65 = arith.constant 2 : index
    %c0_66 = arith.constant 0 : index
    %c0_67 = arith.constant 0 : index
    %59 = vector.load %arg4[%c2_65, %c0_66, %c0_67] : memref<16x32x64xf32, #tpu.memory_space<vmem>>, vector<1x32x64xf32>
    %60 = vector.shape_cast %59 : vector<1x32x64xf32> to vector<32x64xf32>
    %cst_68 = arith.constant dense<0.000000e+00> : vector<100x64xf32>
    %61 = tpu.matmul %58, %60, %cst_68 {dimension_numbers = #tpu.dot_dimension_numbers<[1], [0], [0], [1], [0, 0, 1, 1], [], []>} : vector<100x32xf32>, vector<32x64xf32>, vector<100x64xf32> -> vector<100x64xf32>
    %62 = arith.addf %56, %61 : vector<100x64xf32>
    %c0_69 = arith.constant 0 : index
    %c1_70 = arith.constant 1 : index
    %c1_71 = arith.constant 1 : index
    %c0_72 = arith.constant 0 : index
    %63 = vector.load %arg9[%c0_69, %c1_70, %c1_71, %c0_72] : memref<2x2x112x32xf32, #tpu.memory_space<vmem>>, vector<1x1x100x32xf32>
    %64 = vector.shape_cast %63 : vector<1x1x100x32xf32> to vector<100x32xf32>
    %c3_73 = arith.constant 3 : index
    %c0_74 = arith.constant 0 : index
    %c0_75 = arith.constant 0 : index
    %65 = vector.load %arg4[%c3_73, %c0_74, %c0_75] : memref<16x32x64xf32, #tpu.memory_space<vmem>>, vector<1x32x64xf32>
    %66 = vector.shape_cast %65 : vector<1x32x64xf32> to vector<32x64xf32>
    %cst_76 = arith.constant dense<0.000000e+00> : vector<100x64xf32>
    %67 = tpu.matmul %64, %66, %cst_76 {dimension_numbers = #tpu.dot_dimension_numbers<[1], [0], [0], [1], [0, 0, 1, 1], [], []>} : vector<100x32xf32>, vector<32x64xf32>, vector<100x64xf32> -> vector<100x64xf32>
    %68 = arith.addf %62, %67 : vector<100x64xf32>
    %c1_77 = arith.constant 1 : index
    %c0_78 = arith.constant 0 : index
    %c0_79 = arith.constant 0 : index
    %c0_80 = arith.constant 0 : index
    %69 = vector.load %arg9[%c1_77, %c0_78, %c0_79, %c0_80] : memref<2x2x112x32xf32, #tpu.memory_space<vmem>>, vector<1x1x100x32xf32>
    %70 = vector.shape_cast %69 : vector<1x1x100x32xf32> to vector<100x32xf32>
    %c4 = arith.constant 4 : index
    %c0_81 = arith.constant 0 : index
    %c0_82 = arith.constant 0 : index
    %71 = vector.load %arg4[%c4, %c0_81, %c0_82] : memref<16x32x64xf32, #tpu.memory_space<vmem>>, vector<1x32x64xf32>
    %72 = vector.shape_cast %71 : vector<1x32x64xf32> to vector<32x64xf32>
    %cst_83 = arith.constant dense<0.000000e+00> : vector<100x64xf32>
    %73 = tpu.matmul %70, %72, %cst_83 {dimension_numbers = #tpu.dot_dimension_numbers<[1], [0], [0], [1], [0, 0, 1, 1], [], []>} : vector<100x32xf32>, vector<32x64xf32>, vector<100x64xf32> -> vector<100x64xf32>
    %74 = arith.addf %68, %73 : vector<100x64xf32>
    %c1_84 = arith.constant 1 : index
    %c1_85 = arith.constant 1 : index
    %c0_86 = arith.constant 0 : index
    %c0_87 = arith.constant 0 : index
    %75 = vector.load %arg9[%c1_84, %c1_85, %c0_86, %c0_87] : memref<2x2x112x32xf32, #tpu.memory_space<vmem>>, vector<1x1x100x32xf32>
    %76 = vector.shape_cast %75 : vector<1x1x100x32xf32> to vector<100x32xf32>
    %c5 = arith.constant 5 : index
    %c0_88 = arith.constant 0 : index
    %c0_89 = arith.constant 0 : index
    %77 = vector.load %arg4[%c5, %c0_88, %c0_89] : memref<16x32x64xf32, #tpu.memory_space<vmem>>, vector<1x32x64xf32>
    %78 = vector.shape_cast %77 : vector<1x32x64xf32> to vector<32x64xf32>
    %cst_90 = arith.constant dense<0.000000e+00> : vector<100x64xf32>
    %79 = tpu.matmul %76, %78, %cst_90 {dimension_numbers = #tpu.dot_dimension_numbers<[1], [0], [0], [1], [0, 0, 1, 1], [], []>} : vector<100x32xf32>, vector<32x64xf32>, vector<100x64xf32> -> vector<100x64xf32>
    %80 = arith.addf %74, %79 : vector<100x64xf32>
    %c1_91 = arith.constant 1 : index
    %c0_92 = arith.constant 0 : index
    %c1_93 = arith.constant 1 : index
    %c0_94 = arith.constant 0 : index
    %81 = vector.load %arg9[%c1_91, %c0_92, %c1_93, %c0_94] : memref<2x2x112x32xf32, #tpu.memory_space<vmem>>, vector<1x1x100x32xf32>
    %82 = vector.shape_cast %81 : vector<1x1x100x32xf32> to vector<100x32xf32>
    %c6 = arith.constant 6 : index
    %c0_95 = arith.constant 0 : index
    %c0_96 = arith.constant 0 : index
    %83 = vector.load %arg4[%c6, %c0_95, %c0_96] : memref<16x32x64xf32, #tpu.memory_space<vmem>>, vector<1x32x64xf32>
    %84 = vector.shape_cast %83 : vector<1x32x64xf32> to vector<32x64xf32>
    %cst_97 = arith.constant dense<0.000000e+00> : vector<100x64xf32>
    %85 = tpu.matmul %82, %84, %cst_97 {dimension_numbers = #tpu.dot_dimension_numbers<[1], [0], [0], [1], [0, 0, 1, 1], [], []>} : vector<100x32xf32>, vector<32x64xf32>, vector<100x64xf32> -> vector<100x64xf32>
    %86 = arith.addf %80, %85 : vector<100x64xf32>
    %c1_98 = arith.constant 1 : index
    %c1_99 = arith.constant 1 : index
    %c1_100 = arith.constant 1 : index
    %c0_101 = arith.constant 0 : index
    %87 = vector.load %arg9[%c1_98, %c1_99, %c1_100, %c0_101] : memref<2x2x112x32xf32, #tpu.memory_space<vmem>>, vector<1x1x100x32xf32>
    %88 = vector.shape_cast %87 : vector<1x1x100x32xf32> to vector<100x32xf32>
    %c7 = arith.constant 7 : index
    %c0_102 = arith.constant 0 : index
    %c0_103 = arith.constant 0 : index
    %89 = vector.load %arg4[%c7, %c0_102, %c0_103] : memref<16x32x64xf32, #tpu.memory_space<vmem>>, vector<1x32x64xf32>
    %90 = vector.shape_cast %89 : vector<1x32x64xf32> to vector<32x64xf32>
    %cst_104 = arith.constant dense<0.000000e+00> : vector<100x64xf32>
    %91 = tpu.matmul %88, %90, %cst_104 {dimension_numbers = #tpu.dot_dimension_numbers<[1], [0], [0], [1], [0, 0, 1, 1], [], []>} : vector<100x32xf32>, vector<32x64xf32>, vector<100x64xf32> -> vector<100x64xf32>
    %92 = arith.addf %86, %91 : vector<100x64xf32>
    %c0_105 = arith.constant 0 : index
    %c0_106 = arith.constant 0 : index
    %c10 = arith.constant 10 : index
    %c0_107 = arith.constant 0 : index
    %93 = vector.load %arg9[%c0_105, %c0_106, %c10, %c0_107] : memref<2x2x112x32xf32, #tpu.memory_space<vmem>>, vector<1x1x100x32xf32>
    %94 = vector.shape_cast %93 : vector<1x1x100x32xf32> to vector<100x32xf32>
    %c8 = arith.constant 8 : index
    %c0_108 = arith.constant 0 : index
    %c0_109 = arith.constant 0 : index
    %95 = vector.load %arg4[%c8, %c0_108, %c0_109] : memref<16x32x64xf32, #tpu.memory_space<vmem>>, vector<1x32x64xf32>
    %96 = vector.shape_cast %95 : vector<1x32x64xf32> to vector<32x64xf32>
    %cst_110 = arith.constant dense<0.000000e+00> : vector<100x64xf32>
    %97 = tpu.matmul %94, %96, %cst_110 {dimension_numbers = #tpu.dot_dimension_numbers<[1], [0], [0], [1], [0, 0, 1, 1], [], []>} : vector<100x32xf32>, vector<32x64xf32>, vector<100x64xf32> -> vector<100x64xf32>
    %98 = arith.addf %92, %97 : vector<100x64xf32>
    %c0_111 = arith.constant 0 : index
    %c1_112 = arith.constant 1 : index
    %c10_113 = arith.constant 10 : index
    %c0_114 = arith.constant 0 : index
    %99 = vector.load %arg9[%c0_111, %c1_112, %c10_113, %c0_114] : memref<2x2x112x32xf32, #tpu.memory_space<vmem>>, vector<1x1x100x32xf32>
    %100 = vector.shape_cast %99 : vector<1x1x100x32xf32> to vector<100x32xf32>
    %c9 = arith.constant 9 : index
    %c0_115 = arith.constant 0 : index
    %c0_116 = arith.constant 0 : index
    %101 = vector.load %arg4[%c9, %c0_115, %c0_116] : memref<16x32x64xf32, #tpu.memory_space<vmem>>, vector<1x32x64xf32>
    %102 = vector.shape_cast %101 : vector<1x32x64xf32> to vector<32x64xf32>
    %cst_117 = arith.constant dense<0.000000e+00> : vector<100x64xf32>
    %103 = tpu.matmul %100, %102, %cst_117 {dimension_numbers = #tpu.dot_dimension_numbers<[1], [0], [0], [1], [0, 0, 1, 1], [], []>} : vector<100x32xf32>, vector<32x64xf32>, vector<100x64xf32> -> vector<100x64xf32>
    %104 = arith.addf %98, %103 : vector<100x64xf32>
    %c0_118 = arith.constant 0 : index
    %c0_119 = arith.constant 0 : index
    %c11 = arith.constant 11 : index
    %c0_120 = arith.constant 0 : index
    %105 = vector.load %arg9[%c0_118, %c0_119, %c11, %c0_120] : memref<2x2x112x32xf32, #tpu.memory_space<vmem>>, vector<1x1x100x32xf32>
    %106 = vector.shape_cast %105 : vector<1x1x100x32xf32> to vector<100x32xf32>
    %c10_121 = arith.constant 10 : index
    %c0_122 = arith.constant 0 : index
    %c0_123 = arith.constant 0 : index
    %107 = vector.load %arg4[%c10_121, %c0_122, %c0_123] : memref<16x32x64xf32, #tpu.memory_space<vmem>>, vector<1x32x64xf32>
    %108 = vector.shape_cast %107 : vector<1x32x64xf32> to vector<32x64xf32>
    %cst_124 = arith.constant dense<0.000000e+00> : vector<100x64xf32>
    %109 = tpu.matmul %106, %108, %cst_124 {dimension_numbers = #tpu.dot_dimension_numbers<[1], [0], [0], [1], [0, 0, 1, 1], [], []>} : vector<100x32xf32>, vector<32x64xf32>, vector<100x64xf32> -> vector<100x64xf32>
    %110 = arith.addf %104, %109 : vector<100x64xf32>
    %c0_125 = arith.constant 0 : index
    %c1_126 = arith.constant 1 : index
    %c11_127 = arith.constant 11 : index
    %c0_128 = arith.constant 0 : index
    %111 = vector.load %arg9[%c0_125, %c1_126, %c11_127, %c0_128] : memref<2x2x112x32xf32, #tpu.memory_space<vmem>>, vector<1x1x100x32xf32>
    %112 = vector.shape_cast %111 : vector<1x1x100x32xf32> to vector<100x32xf32>
    %c11_129 = arith.constant 11 : index
    %c0_130 = arith.constant 0 : index
    %c0_131 = arith.constant 0 : index
    %113 = vector.load %arg4[%c11_129, %c0_130, %c0_131] : memref<16x32x64xf32, #tpu.memory_space<vmem>>, vector<1x32x64xf32>
    %114 = vector.shape_cast %113 : vector<1x32x64xf32> to vector<32x64xf32>
    %cst_132 = arith.constant dense<0.000000e+00> : vector<100x64xf32>
    %115 = tpu.matmul %112, %114, %cst_132 {dimension_numbers = #tpu.dot_dimension_numbers<[1], [0], [0], [1], [0, 0, 1, 1], [], []>} : vector<100x32xf32>, vector<32x64xf32>, vector<100x64xf32> -> vector<100x64xf32>
    %116 = arith.addf %110, %115 : vector<100x64xf32>
    %c1_133 = arith.constant 1 : index
    %c0_134 = arith.constant 0 : index
    %c10_135 = arith.constant 10 : index
    %c0_136 = arith.constant 0 : index
    %117 = vector.load %arg9[%c1_133, %c0_134, %c10_135, %c0_136] : memref<2x2x112x32xf32, #tpu.memory_space<vmem>>, vector<1x1x100x32xf32>
    %118 = vector.shape_cast %117 : vector<1x1x100x32xf32> to vector<100x32xf32>
    %c12 = arith.constant 12 : index
    %c0_137 = arith.constant 0 : index
    %c0_138 = arith.constant 0 : index
    %119 = vector.load %arg4[%c12, %c0_137, %c0_138] : memref<16x32x64xf32, #tpu.memory_space<vmem>>, vector<1x32x64xf32>
    %120 = vector.shape_cast %119 : vector<1x32x64xf32> to vector<32x64xf32>
    %cst_139 = arith.constant dense<0.000000e+00> : vector<100x64xf32>
    %121 = tpu.matmul %118, %120, %cst_139 {dimension_numbers = #tpu.dot_dimension_numbers<[1], [0], [0], [1], [0, 0, 1, 1], [], []>} : vector<100x32xf32>, vector<32x64xf32>, vector<100x64xf32> -> vector<100x64xf32>
    %122 = arith.addf %116, %121 : vector<100x64xf32>
    %c1_140 = arith.constant 1 : index
    %c1_141 = arith.constant 1 : index
    %c10_142 = arith.constant 10 : index
    %c0_143 = arith.constant 0 : index
    %123 = vector.load %arg9[%c1_140, %c1_141, %c10_142, %c0_143] : memref<2x2x112x32xf32, #tpu.memory_space<vmem>>, vector<1x1x100x32xf32>
    %124 = vector.shape_cast %123 : vector<1x1x100x32xf32> to vector<100x32xf32>
    %c13 = arith.constant 13 : index
    %c0_144 = arith.constant 0 : index
    %c0_145 = arith.constant 0 : index
    %125 = vector.load %arg4[%c13, %c0_144, %c0_145] : memref<16x32x64xf32, #tpu.memory_space<vmem>>, vector<1x32x64xf32>
    %126 = vector.shape_cast %125 : vector<1x32x64xf32> to vector<32x64xf32>
    %cst_146 = arith.constant dense<0.000000e+00> : vector<100x64xf32>
    %127 = tpu.matmul %124, %126, %cst_146 {dimension_numbers = #tpu.dot_dimension_numbers<[1], [0], [0], [1], [0, 0, 1, 1], [], []>} : vector<100x32xf32>, vector<32x64xf32>, vector<100x64xf32> -> vector<100x64xf32>
    %128 = arith.addf %122, %127 : vector<100x64xf32>
    %c1_147 = arith.constant 1 : index
    %c0_148 = arith.constant 0 : index
    %c11_149 = arith.constant 11 : index
    %c0_150 = arith.constant 0 : index
    %129 = vector.load %arg9[%c1_147, %c0_148, %c11_149, %c0_150] : memref<2x2x112x32xf32, #tpu.memory_space<vmem>>, vector<1x1x100x32xf32>
    %130 = vector.shape_cast %129 : vector<1x1x100x32xf32> to vector<100x32xf32>
    %c14 = arith.constant 14 : index
    %c0_151 = arith.constant 0 : index
    %c0_152 = arith.constant 0 : index
    %131 = vector.load %arg4[%c14, %c0_151, %c0_152] : memref<16x32x64xf32, #tpu.memory_space<vmem>>, vector<1x32x64xf32>
    %132 = vector.shape_cast %131 : vector<1x32x64xf32> to vector<32x64xf32>
    %cst_153 = arith.constant dense<0.000000e+00> : vector<100x64xf32>
    %133 = tpu.matmul %130, %132, %cst_153 {dimension_numbers = #tpu.dot_dimension_numbers<[1], [0], [0], [1], [0, 0, 1, 1], [], []>} : vector<100x32xf32>, vector<32x64xf32>, vector<100x64xf32> -> vector<100x64xf32>
    %134 = arith.addf %128, %133 : vector<100x64xf32>
    %c1_154 = arith.constant 1 : index
    %c1_155 = arith.constant 1 : index
    %c11_156 = arith.constant 11 : index
    %c0_157 = arith.constant 0 : index
    %135 = vector.load %arg9[%c1_154, %c1_155, %c11_156, %c0_157] : memref<2x2x112x32xf32, #tpu.memory_space<vmem>>, vector<1x1x100x32xf32>
    %136 = vector.shape_cast %135 : vector<1x1x100x32xf32> to vector<100x32xf32>
    %c15 = arith.constant 15 : index
    %c0_158 = arith.constant 0 : index
    %c0_159 = arith.constant 0 : index
    %137 = vector.load %arg4[%c15, %c0_158, %c0_159] : memref<16x32x64xf32, #tpu.memory_space<vmem>>, vector<1x32x64xf32>
    %138 = vector.shape_cast %137 : vector<1x32x64xf32> to vector<32x64xf32>
    %cst_160 = arith.constant dense<0.000000e+00> : vector<100x64xf32>
    %139 = tpu.matmul %136, %138, %cst_160 {dimension_numbers = #tpu.dot_dimension_numbers<[1], [0], [0], [1], [0, 0, 1, 1], [], []>} : vector<100x32xf32>, vector<32x64xf32>, vector<100x64xf32> -> vector<100x64xf32>
    %140 = arith.addf %134, %139 : vector<100x64xf32>
    %c0_161 = arith.constant 0 : index
    %c0_162 = arith.constant 0 : index
    %141 = vector.load %arg5[%c0_161, %c0_162] : memref<1x64xf32, #tpu.memory_space<vmem>>, vector<1x64xf32>
    %142 = vector.broadcast %141 : vector<1x64xf32> to vector<100x64xf32>
    %143 = arith.addf %140, %142 : vector<100x64xf32>
    %cst_163 = arith.constant 0.000000e+00 : f32
    %144 = vector.broadcast %cst_163 : f32 to vector<100x64xf32>
    %145 = arith.maximumf %143, %144 : vector<100x64xf32>
    %c0_164 = arith.constant 0 : index
    %c0_165 = arith.constant 0 : index
    %146 = vector.load %arg10[%c0_164, %c0_165] : memref<100x64xf32, #tpu.memory_space<vmem>>, vector<100x64xf32>
    tpu.vector_store %arg10[%c0_164, %c0_165], %145 {strides = array<i32>} : memref<100x64xf32, #tpu.memory_space<vmem>>, vector<100x64xf32>,
    %cst_166 = arith.constant 0.000000e+00 : f32
    %147 = vector.broadcast %cst_166 : f32 to vector<67x64xf32>
    %c0_167 = arith.constant 0 : index
    %c0_168 = arith.constant 0 : index
    %148 = vector.load %arg10[%c0_167, %c0_168] : memref<100x64xf32, #tpu.memory_space<vmem>>, vector<67x64xf32>
    %c0_169 = arith.constant 0 : index
    %c0_170 = arith.constant 0 : index
    %c0_171 = arith.constant 0 : index
    %149 = vector.load %arg6[%c0_169, %c0_170, %c0_171] : memref<9x64x64xf32, #tpu.memory_space<vmem>>, vector<1x64x64xf32>
    %150 = vector.shape_cast %149 : vector<1x64x64xf32> to vector<64x64xf32>
    %cst_172 = arith.constant dense<0.000000e+00> : vector<67x64xf32>
    %151 = tpu.matmul %148, %150, %cst_172 {dimension_numbers = #tpu.dot_dimension_numbers<[1], [0], [0], [1], [0, 0, 1, 1], [], []>} : vector<67x64xf32>, vector<64x64xf32>, vector<67x64xf32> -> vector<67x64xf32>
    %152 = arith.addf %147, %151 : vector<67x64xf32>
    %c1_173 = arith.constant 1 : index
    %c0_174 = arith.constant 0 : index
    %153 = vector.load %arg10[%c1_173, %c0_174] : memref<100x64xf32, #tpu.memory_space<vmem>>, vector<67x64xf32>
    %c1_175 = arith.constant 1 : index
    %c0_176 = arith.constant 0 : index
    %c0_177 = arith.constant 0 : index
    %154 = vector.load %arg6[%c1_175, %c0_176, %c0_177] : memref<9x64x64xf32, #tpu.memory_space<vmem>>, vector<1x64x64xf32>
    %155 = vector.shape_cast %154 : vector<1x64x64xf32> to vector<64x64xf32>
    %cst_178 = arith.constant dense<0.000000e+00> : vector<67x64xf32>
    %156 = tpu.matmul %153, %155, %cst_178 {dimension_numbers = #tpu.dot_dimension_numbers<[1], [0], [0], [1], [0, 0, 1, 1], [], []>} : vector<67x64xf32>, vector<64x64xf32>, vector<67x64xf32> -> vector<67x64xf32>
    %157 = arith.addf %152, %156 : vector<67x64xf32>
    %c2_179 = arith.constant 2 : index
    %c0_180 = arith.constant 0 : index
    %158 = vector.load %arg10[%c2_179, %c0_180] : memref<100x64xf32, #tpu.memory_space<vmem>>, vector<67x64xf32>
    %c2_181 = arith.constant 2 : index
    %c0_182 = arith.constant 0 : index
    %c0_183 = arith.constant 0 : index
    %159 = vector.load %arg6[%c2_181, %c0_182, %c0_183] : memref<9x64x64xf32, #tpu.memory_space<vmem>>, vector<1x64x64xf32>
    %160 = vector.shape_cast %159 : vector<1x64x64xf32> to vector<64x64xf32>
    %cst_184 = arith.constant dense<0.000000e+00> : vector<67x64xf32>
    %161 = tpu.matmul %158, %160, %cst_184 {dimension_numbers = #tpu.dot_dimension_numbers<[1], [0], [0], [1], [0, 0, 1, 1], [], []>} : vector<67x64xf32>, vector<64x64xf32>, vector<67x64xf32> -> vector<67x64xf32>
    %162 = arith.addf %157, %161 : vector<67x64xf32>
    %c10_185 = arith.constant 10 : index
    %c0_186 = arith.constant 0 : index
    %163 = vector.load %arg10[%c10_185, %c0_186] : memref<100x64xf32, #tpu.memory_space<vmem>>, vector<67x64xf32>
    %c3_187 = arith.constant 3 : index
    %c0_188 = arith.constant 0 : index
    %c0_189 = arith.constant 0 : index
    %164 = vector.load %arg6[%c3_187, %c0_188, %c0_189] : memref<9x64x64xf32, #tpu.memory_space<vmem>>, vector<1x64x64xf32>
    %165 = vector.shape_cast %164 : vector<1x64x64xf32> to vector<64x64xf32>
    %cst_190 = arith.constant dense<0.000000e+00> : vector<67x64xf32>
    %166 = tpu.matmul %163, %165, %cst_190 {dimension_numbers = #tpu.dot_dimension_numbers<[1], [0], [0], [1], [0, 0, 1, 1], [], []>} : vector<67x64xf32>, vector<64x64xf32>, vector<67x64xf32> -> vector<67x64xf32>
    %167 = arith.addf %162, %166 : vector<67x64xf32>
    %c11_191 = arith.constant 11 : index
    %c0_192 = arith.constant 0 : index
    %168 = vector.load %arg10[%c11_191, %c0_192] : memref<100x64xf32, #tpu.memory_space<vmem>>, vector<67x64xf32>
    %c4_193 = arith.constant 4 : index
    %c0_194 = arith.constant 0 : index
    %c0_195 = arith.constant 0 : index
    %169 = vector.load %arg6[%c4_193, %c0_194, %c0_195] : memref<9x64x64xf32, #tpu.memory_space<vmem>>, vector<1x64x64xf32>
    %170 = vector.shape_cast %169 : vector<1x64x64xf32> to vector<64x64xf32>
    %cst_196 = arith.constant dense<0.000000e+00> : vector<67x64xf32>
    %171 = tpu.matmul %168, %170, %cst_196 {dimension_numbers = #tpu.dot_dimension_numbers<[1], [0], [0], [1], [0, 0, 1, 1], [], []>} : vector<67x64xf32>, vector<64x64xf32>, vector<67x64xf32> -> vector<67x64xf32>
    %172 = arith.addf %167, %171 : vector<67x64xf32>
    %c12_197 = arith.constant 12 : index
    %c0_198 = arith.constant 0 : index
    %173 = vector.load %arg10[%c12_197, %c0_198] : memref<100x64xf32, #tpu.memory_space<vmem>>, vector<67x64xf32>
    %c5_199 = arith.constant 5 : index
    %c0_200 = arith.constant 0 : index
    %c0_201 = arith.constant 0 : index
    %174 = vector.load %arg6[%c5_199, %c0_200, %c0_201] : memref<9x64x64xf32, #tpu.memory_space<vmem>>, vector<1x64x64xf32>
    %175 = vector.shape_cast %174 : vector<1x64x64xf32> to vector<64x64xf32>
    %cst_202 = arith.constant dense<0.000000e+00> : vector<67x64xf32>
    %176 = tpu.matmul %173, %175, %cst_202 {dimension_numbers = #tpu.dot_dimension_numbers<[1], [0], [0], [1], [0, 0, 1, 1], [], []>} : vector<67x64xf32>, vector<64x64xf32>, vector<67x64xf32> -> vector<67x64xf32>
    %177 = arith.addf %172, %176 : vector<67x64xf32>
    %c20 = arith.constant 20 : index
    %c0_203 = arith.constant 0 : index
    %178 = vector.load %arg10[%c20, %c0_203] : memref<100x64xf32, #tpu.memory_space<vmem>>, vector<67x64xf32>
    %c6_204 = arith.constant 6 : index
    %c0_205 = arith.constant 0 : index
    %c0_206 = arith.constant 0 : index
    %179 = vector.load %arg6[%c6_204, %c0_205, %c0_206] : memref<9x64x64xf32, #tpu.memory_space<vmem>>, vector<1x64x64xf32>
    %180 = vector.shape_cast %179 : vector<1x64x64xf32> to vector<64x64xf32>
    %cst_207 = arith.constant dense<0.000000e+00> : vector<67x64xf32>
    %181 = tpu.matmul %178, %180, %cst_207 {dimension_numbers = #tpu.dot_dimension_numbers<[1], [0], [0], [1], [0, 0, 1, 1], [], []>} : vector<67x64xf32>, vector<64x64xf32>, vector<67x64xf32> -> vector<67x64xf32>
    %182 = arith.addf %177, %181 : vector<67x64xf32>
    %c21 = arith.constant 21 : index
    %c0_208 = arith.constant 0 : index
    %183 = vector.load %arg10[%c21, %c0_208] : memref<100x64xf32, #tpu.memory_space<vmem>>, vector<67x64xf32>
    %c7_209 = arith.constant 7 : index
    %c0_210 = arith.constant 0 : index
    %c0_211 = arith.constant 0 : index
    %184 = vector.load %arg6[%c7_209, %c0_210, %c0_211] : memref<9x64x64xf32, #tpu.memory_space<vmem>>, vector<1x64x64xf32>
    %185 = vector.shape_cast %184 : vector<1x64x64xf32> to vector<64x64xf32>
    %cst_212 = arith.constant dense<0.000000e+00> : vector<67x64xf32>
    %186 = tpu.matmul %183, %185, %cst_212 {dimension_numbers = #tpu.dot_dimension_numbers<[1], [0], [0], [1], [0, 0, 1, 1], [], []>} : vector<67x64xf32>, vector<64x64xf32>, vector<67x64xf32> -> vector<67x64xf32>
    %187 = arith.addf %182, %186 : vector<67x64xf32>
    %c22 = arith.constant 22 : index
    %c0_213 = arith.constant 0 : index
    %188 = vector.load %arg10[%c22, %c0_213] : memref<100x64xf32, #tpu.memory_space<vmem>>, vector<67x64xf32>
    %c8_214 = arith.constant 8 : index
    %c0_215 = arith.constant 0 : index
    %c0_216 = arith.constant 0 : index
    %189 = vector.load %arg6[%c8_214, %c0_215, %c0_216] : memref<9x64x64xf32, #tpu.memory_space<vmem>>, vector<1x64x64xf32>
    %190 = vector.shape_cast %189 : vector<1x64x64xf32> to vector<64x64xf32>
    %cst_217 = arith.constant dense<0.000000e+00> : vector<67x64xf32>
    %191 = tpu.matmul %188, %190, %cst_217 {dimension_numbers = #tpu.dot_dimension_numbers<[1], [0], [0], [1], [0, 0, 1, 1], [], []>} : vector<67x64xf32>, vector<64x64xf32>, vector<67x64xf32> -> vector<67x64xf32>
    %192 = arith.addf %187, %191 : vector<67x64xf32>
    %c0_218 = arith.constant 0 : index
    %c0_219 = arith.constant 0 : index
    %193 = vector.load %arg7[%c0_218, %c0_219] : memref<1x64xf32, #tpu.memory_space<vmem>>, vector<1x64xf32>
    %194 = vector.broadcast %193 : vector<1x64xf32> to vector<67x64xf32>
    %195 = arith.addf %192, %194 : vector<67x64xf32>
    %cst_220 = arith.constant 0.000000e+00 : f32
    %196 = vector.broadcast %cst_220 : f32 to vector<67x64xf32>
    %197 = arith.maximumf %195, %196 : vector<67x64xf32>
    %c0_221 = arith.constant 0 : index
    %c0_222 = arith.constant 0 : index
    %198 = vector.load %arg11[%c0_221, %c0_222] : memref<67x64xf32, #tpu.memory_space<vmem>>, vector<67x64xf32>
    tpu.vector_store %arg11[%c0_221, %c0_222], %197 {strides = array<i32>} : memref<67x64xf32, #tpu.memory_space<vmem>>, vector<67x64xf32>,
    %c0_223 = arith.constant 0 : index
    %c0_224 = arith.constant 0 : index
    %199 = vector.load %arg11[%c0_223, %c0_224] : memref<67x64xf32, #tpu.memory_space<vmem>>, vector<7x64xf32>
    %c0_225 = arith.constant 0 : index
    %c0_226 = arith.constant 0 : index
    %c0_227 = arith.constant 0 : index
    %c0_228 = arith.constant 0 : index
    %200 = vector.load %arg8[%c0_225, %c0_226, %c0_227, %c0_228] : memref<1x7x7x64xf32, #tpu.memory_space<vmem>>, vector<1x1x7x64xf32>
    %201 = vector.shape_cast %200 : vector<1x1x7x64xf32> to vector<7x64xf32>
    %202 = vector.shape_cast %199 : vector<7x64xf32> to vector<1x1x7x64xf32>
    tpu.vector_store %arg8[%c0_225, %c0_226, %c0_227, %c0_228], %202 {strides = array<i32>} : memref<1x7x7x64xf32, #tpu.memory_space<vmem>>, vector<1x1x7x64xf32>,
    %c10_229 = arith.constant 10 : index
    %c0_230 = arith.constant 0 : index
    %203 = vector.load %arg11[%c10_229, %c0_230] : memref<67x64xf32, #tpu.memory_space<vmem>>, vector<7x64xf32>
    %c0_231 = arith.constant 0 : index
    %c1_232 = arith.constant 1 : index
    %c0_233 = arith.constant 0 : index
    %c0_234 = arith.constant 0 : index
    %204 = vector.load %arg8[%c0_231, %c1_232, %c0_233, %c0_234] : memref<1x7x7x64xf32, #tpu.memory_space<vmem>>, vector<1x1x7x64xf32>
    %205 = vector.shape_cast %204 : vector<1x1x7x64xf32> to vector<7x64xf32>
    %206 = vector.shape_cast %203 : vector<7x64xf32> to vector<1x1x7x64xf32>
    tpu.vector_store %arg8[%c0_231, %c1_232, %c0_233, %c0_234], %206 {strides = array<i32>} : memref<1x7x7x64xf32, #tpu.memory_space<vmem>>, vector<1x1x7x64xf32>,
    %c20_235 = arith.constant 20 : index
    %c0_236 = arith.constant 0 : index
    %207 = vector.load %arg11[%c20_235, %c0_236] : memref<67x64xf32, #tpu.memory_space<vmem>>, vector<7x64xf32>
    %c0_237 = arith.constant 0 : index
    %c2_238 = arith.constant 2 : index
    %c0_239 = arith.constant 0 : index
    %c0_240 = arith.constant 0 : index
    %208 = vector.load %arg8[%c0_237, %c2_238, %c0_239, %c0_240] : memref<1x7x7x64xf32, #tpu.memory_space<vmem>>, vector<1x1x7x64xf32>
    %209 = vector.shape_cast %208 : vector<1x1x7x64xf32> to vector<7x64xf32>
    %210 = vector.shape_cast %207 : vector<7x64xf32> to vector<1x1x7x64xf32>
    tpu.vector_store %arg8[%c0_237, %c2_238, %c0_239, %c0_240], %210 {strides = array<i32>} : memref<1x7x7x64xf32, #tpu.memory_space<vmem>>, vector<1x1x7x64xf32>,
    %c30 = arith.constant 30 : index
    %c0_241 = arith.constant 0 : index
    %211 = vector.load %arg11[%c30, %c0_241] : memref<67x64xf32, #tpu.memory_space<vmem>>, vector<7x64xf32>
    %c0_242 = arith.constant 0 : index
    %c3_243 = arith.constant 3 : index
    %c0_244 = arith.constant 0 : index
    %c0_245 = arith.constant 0 : index
    %212 = vector.load %arg8[%c0_242, %c3_243, %c0_244, %c0_245] : memref<1x7x7x64xf32, #tpu.memory_space<vmem>>, vector<1x1x7x64xf32>
    %213 = vector.shape_cast %212 : vector<1x1x7x64xf32> to vector<7x64xf32>
    %214 = vector.shape_cast %211 : vector<7x64xf32> to vector<1x1x7x64xf32>
    tpu.vector_store %arg8[%c0_242, %c3_243, %c0_244, %c0_245], %214 {strides = array<i32>} : memref<1x7x7x64xf32, #tpu.memory_space<vmem>>, vector<1x1x7x64xf32>,
    %c40 = arith.constant 40 : index
    %c0_246 = arith.constant 0 : index
    %215 = vector.load %arg11[%c40, %c0_246] : memref<67x64xf32, #tpu.memory_space<vmem>>, vector<7x64xf32>
    %c0_247 = arith.constant 0 : index
    %c4_248 = arith.constant 4 : index
    %c0_249 = arith.constant 0 : index
    %c0_250 = arith.constant 0 : index
    %216 = vector.load %arg8[%c0_247, %c4_248, %c0_249, %c0_250] : memref<1x7x7x64xf32, #tpu.memory_space<vmem>>, vector<1x1x7x64xf32>
    %217 = vector.shape_cast %216 : vector<1x1x7x64xf32> to vector<7x64xf32>
    %218 = vector.shape_cast %215 : vector<7x64xf32> to vector<1x1x7x64xf32>
    tpu.vector_store %arg8[%c0_247, %c4_248, %c0_249, %c0_250], %218 {strides = array<i32>} : memref<1x7x7x64xf32, #tpu.memory_space<vmem>>, vector<1x1x7x64xf32>,
    %c50 = arith.constant 50 : index
    %c0_251 = arith.constant 0 : index
    %219 = vector.load %arg11[%c50, %c0_251] : memref<67x64xf32, #tpu.memory_space<vmem>>, vector<7x64xf32>
    %c0_252 = arith.constant 0 : index
    %c5_253 = arith.constant 5 : index
    %c0_254 = arith.constant 0 : index
    %c0_255 = arith.constant 0 : index
    %220 = vector.load %arg8[%c0_252, %c5_253, %c0_254, %c0_255] : memref<1x7x7x64xf32, #tpu.memory_space<vmem>>, vector<1x1x7x64xf32>
    %221 = vector.shape_cast %220 : vector<1x1x7x64xf32> to vector<7x64xf32>
    %222 = vector.shape_cast %219 : vector<7x64xf32> to vector<1x1x7x64xf32>
    tpu.vector_store %arg8[%c0_252, %c5_253, %c0_254, %c0_255], %222 {strides = array<i32>} : memref<1x7x7x64xf32, #tpu.memory_space<vmem>>, vector<1x1x7x64xf32>,
    %c60 = arith.constant 60 : index
    %c0_256 = arith.constant 0 : index
    %223 = vector.load %arg11[%c60, %c0_256] : memref<67x64xf32, #tpu.memory_space<vmem>>, vector<7x64xf32>
    %c0_257 = arith.constant 0 : index
    %c6_258 = arith.constant 6 : index
    %c0_259 = arith.constant 0 : index
    %c0_260 = arith.constant 0 : index
    %224 = vector.load %arg8[%c0_257, %c6_258, %c0_259, %c0_260] : memref<1x7x7x64xf32, #tpu.memory_space<vmem>>, vector<1x1x7x64xf32>
    %225 = vector.shape_cast %224 : vector<1x1x7x64xf32> to vector<7x64xf32>
    %226 = vector.shape_cast %223 : vector<7x64xf32> to vector<1x1x7x64xf32>
    tpu.vector_store %arg8[%c0_257, %c6_258, %c0_259, %c0_260], %226 {strides = array<i32>} : memref<1x7x7x64xf32, #tpu.memory_space<vmem>>, vector<1x1x7x64xf32>,
    return
  }
  func.func @transform_0(%arg0: i32) -> (i32, i32, i32, i32) {
    %c0_i32 = arith.constant 0 : i32
    %c0_i32_0 = arith.constant 0 : i32
    %c0_i32_1 = arith.constant 0 : i32
    %c0_i32_2 = arith.constant 0 : i32
    return %arg0, %c0_i32, %c0_i32_0, %c0_i32_1 : i32, i32, i32, i32
  }
  func.func @transform_1(%arg0: i32) -> (i32, i32) {
    %c0_i32 = arith.constant 0 : i32
    %c0_i32_0 = arith.constant 0 : i32
    %c0_i32_1 = arith.constant 0 : i32
    return %c0_i32, %c0_i32_0 : i32, i32
  }
  func.func @transform_2(%arg0: i32) -> (i32, i32) {
    %c0_i32 = arith.constant 0 : i32
    %c0_i32_0 = arith.constant 0 : i32
    %c0_i32_1 = arith.constant 0 : i32
    return %c0_i32, %c0_i32_0 : i32, i32
  }
  func.func @transform_3(%arg0: i32) -> (i32, i32, i32) {
    %c0_i32 = arith.constant 0 : i32
    %c0_i32_0 = arith.constant 0 : i32
    %c0_i32_1 = arith.constant 0 : i32
    %c0_i32_2 = arith.constant 0 : i32
    return %c0_i32, %c0_i32_0, %c0_i32_1 : i32, i32, i32
  }
  func.func @transform_4(%arg0: i32) -> (i32, i32) {
    %c0_i32 = arith.constant 0 : i32
    %c0_i32_0 = arith.constant 0 : i32
    %c0_i32_1 = arith.constant 0 : i32
    return %c0_i32, %c0_i32_0 : i32, i32
  }
  func.func @transform_5(%arg0: i32) -> (i32, i32, i32) {
    %c0_i32 = arith.constant 0 : i32
    %c0_i32_0 = arith.constant 0 : i32
    %c0_i32_1 = arith.constant 0 : i32
    %c0_i32_2 = arith.constant 0 : i32
    return %c0_i32, %c0_i32_0, %c0_i32_1 : i32, i32, i32
  }
  func.func @transform_6(%arg0: i32) -> (i32, i32) {
    %c0_i32 = arith.constant 0 : i32
    %c0_i32_0 = arith.constant 0 : i32
    %c0_i32_1 = arith.constant 0 : i32
    return %c0_i32, %c0_i32_0 : i32, i32
  }
  func.func @transform_7(%arg0: i32) -> (i32, i32, i32, i32) {
    %c0_i32 = arith.constant 0 : i32
    %c0_i32_0 = arith.constant 0 : i32
    %c0_i32_1 = arith.constant 0 : i32
    %c0_i32_2 = arith.constant 0 : i32
    return %arg0, %c0_i32, %c0_i32_0, %c0_i32_1 : i32, i32, i32, i32
  }
}

module attributes {stable_mosaic.version = 11 : i64} {
  func.func @_fc_kernel(%arg0: i32, %arg1: memref<2x3136xf32, #tpu.memory_space<vmem>>, %arg2: memref<3136x512xf32, #tpu.memory_space<vmem>>, %arg3: memref<1x512xf32, #tpu.memory_space<vmem>>, %arg4: memref<512x128xf32, #tpu.memory_space<vmem>>, %arg5: memref<1x128xf32, #tpu.memory_space<vmem>>, %arg6: memref<2x128xf32, #tpu.memory_space<vmem>>) attributes {dimension_semantics = [#tpu.dimension_semantics<parallel>], iteration_bounds = array<i64: 1>, scalar_prefetch = 0 : i64, scratch_operands = 0 : i64, tpu.core_type = #tpu.core_type<tc>, window_params = [{transform_indices = @transform_0, window_bounds = array<i64: 2, 3136>}, {pipeline_mode = #tpu.pipeline_mode<synchronous>, transform_indices = @transform_1, window_bounds = array<i64: 3136, 512>}, {pipeline_mode = #tpu.pipeline_mode<synchronous>, transform_indices = @transform_2, window_bounds = array<i64: 1, 512>}, {pipeline_mode = #tpu.pipeline_mode<synchronous>, transform_indices = @transform_3, window_bounds = array<i64: 512, 128>}, {pipeline_mode = #tpu.pipeline_mode<synchronous>, transform_indices = @transform_4, window_bounds = array<i64: 1, 128>}, {transform_indices = @transform_5, window_bounds = array<i64: 2, 128>}]} {
    %c0 = arith.constant 0 : index
    %c0_0 = arith.constant 0 : index
    %0 = vector.load %arg1[%c0, %c0_0] : memref<2x3136xf32, #tpu.memory_space<vmem>>, vector<2x3136xf32>
    %c0_1 = arith.constant 0 : index
    %c0_2 = arith.constant 0 : index
    %1 = vector.load %arg2[%c0_1, %c0_2] : memref<3136x512xf32, #tpu.memory_space<vmem>>, vector<3136x512xf32>
    %cst = arith.constant dense<0.000000e+00> : vector<2x512xf32>
    %2 = tpu.matmul %0, %1, %cst {dimension_numbers = #tpu.dot_dimension_numbers<[1], [0], [0], [1], [0, 0, 1, 1], [], []>} : vector<2x3136xf32>, vector<3136x512xf32>, vector<2x512xf32> -> vector<2x512xf32>
    %c0_3 = arith.constant 0 : index
    %c0_4 = arith.constant 0 : index
    %3 = vector.load %arg3[%c0_3, %c0_4] : memref<1x512xf32, #tpu.memory_space<vmem>>, vector<1x512xf32>
    %4 = vector.broadcast %3 : vector<1x512xf32> to vector<2x512xf32>
    %5 = arith.addf %2, %4 : vector<2x512xf32>
    %cst_5 = arith.constant 0.000000e+00 : f32
    %6 = vector.broadcast %cst_5 : f32 to vector<2x512xf32>
    %7 = arith.maximumf %5, %6 : vector<2x512xf32>
    %c0_6 = arith.constant 0 : index
    %c0_7 = arith.constant 0 : index
    %8 = vector.load %arg4[%c0_6, %c0_7] : memref<512x128xf32, #tpu.memory_space<vmem>>, vector<512x128xf32>
    %cst_8 = arith.constant dense<0.000000e+00> : vector<2x128xf32>
    %9 = tpu.matmul %7, %8, %cst_8 {dimension_numbers = #tpu.dot_dimension_numbers<[1], [0], [0], [1], [0, 0, 1, 1], [], []>} : vector<2x512xf32>, vector<512x128xf32>, vector<2x128xf32> -> vector<2x128xf32>
    %c0_9 = arith.constant 0 : index
    %c0_10 = arith.constant 0 : index
    %10 = vector.load %arg5[%c0_9, %c0_10] : memref<1x128xf32, #tpu.memory_space<vmem>>, vector<1x128xf32>
    %11 = vector.broadcast %10 : vector<1x128xf32> to vector<2x128xf32>
    %12 = arith.addf %9, %11 : vector<2x128xf32>
    %c0_11 = arith.constant 0 : index
    %c0_12 = arith.constant 0 : index
    %13 = vector.load %arg6[%c0_11, %c0_12] : memref<2x128xf32, #tpu.memory_space<vmem>>, vector<2x128xf32>
    tpu.vector_store %arg6[%c0_11, %c0_12], %12 {strides = array<i32>} : memref<2x128xf32, #tpu.memory_space<vmem>>, vector<2x128xf32>,
    return
  }
  func.func @transform_0(%arg0: i32) -> (i32, i32) {
    %c0_i32 = arith.constant 0 : i32
    %c0_i32_0 = arith.constant 0 : i32
    return %arg0, %c0_i32 : i32, i32
  }
  func.func @transform_1(%arg0: i32) -> (i32, i32) {
    %c0_i32 = arith.constant 0 : i32
    %c0_i32_0 = arith.constant 0 : i32
    %c0_i32_1 = arith.constant 0 : i32
    return %c0_i32, %c0_i32_0 : i32, i32
  }
  func.func @transform_2(%arg0: i32) -> (i32, i32) {
    %c0_i32 = arith.constant 0 : i32
    %c0_i32_0 = arith.constant 0 : i32
    %c0_i32_1 = arith.constant 0 : i32
    return %c0_i32, %c0_i32_0 : i32, i32
  }
  func.func @transform_3(%arg0: i32) -> (i32, i32) {
    %c0_i32 = arith.constant 0 : i32
    %c0_i32_0 = arith.constant 0 : i32
    %c0_i32_1 = arith.constant 0 : i32
    return %c0_i32, %c0_i32_0 : i32, i32
  }
  func.func @transform_4(%arg0: i32) -> (i32, i32) {
    %c0_i32 = arith.constant 0 : i32
    %c0_i32_0 = arith.constant 0 : i32
    %c0_i32_1 = arith.constant 0 : i32
    return %c0_i32, %c0_i32_0 : i32, i32
  }
  func.func @transform_5(%arg0: i32) -> (i32, i32) {
    %c0_i32 = arith.constant 0 : i32
    %c0_i32_0 = arith.constant 0 : i32
    return %arg0, %c0_i32 : i32, i32
  }
}

</mosaic_0001>

<llo_original>
// kernel: dqn_forward.2
$region0: #{dqn_forward.2}
  #allocation0 [shape = 'u32[]', space=smem, size = 0x4, offset = 0x4, fixed_abs, tag = 'smem constant byte address 0x4 - core index']
  #allocation1 [shape = 'u32[144,128]{1,0:T(1,128)}', space=vmem, size = 0x12000, scoped, tag = 'internal scratch']
  #allocation2 [shape = 'f32[2,2,112,32]{3,2,1,0:T(8,128)}', space=vmem, size = 0x38000, scoped, tag = 'scratch operand']
  #allocation3 [shape = 'f32[100,64]{1,0:T(8,128)}', space=vmem, size = 0xd000, scoped, tag = 'scratch operand']
  #allocation4 [shape = 'f32[67,64]{1,0:T(8,128)}', space=vmem, size = 0x9000, scoped, tag = 'scratch operand']
  %s0 = inlined_call_operand.vmem [shape: f32[2,4,100,256], index: 0, kind: input, shape index: {}]
  %s1 = inlined_call_operand.vmem [shape: f32[256,32], index: 1, kind: input, shape index: {}]
  %s2 = inlined_call_operand.vmem [shape: f32[1,32], index: 2, kind: input, shape index: {}]
  %s3 = inlined_call_operand.vmem [shape: f32[16,32,64], index: 3, kind: input, shape index: {}]
  %s4 = inlined_call_operand.vmem [shape: f32[1,64], index: 4, kind: input, shape index: {}]
  %s5 = inlined_call_operand.vmem [shape: f32[9,64,64], index: 5, kind: input, shape index: {}]
  %s6 = inlined_call_operand.vmem [shape: f32[1,64], index: 6, kind: input, shape index: {}]
  %s7 = inlined_call_operand.vmem [shape: f32[2,7,7,64], index: 7, kind: output, shape index: {}]
  %s8 = sld [smem:[#allocation0]]
  $region61: #{dqn_forward.2} parent=0
    _
  %s10 = ssub.s32 1, %s8
  %s11 = scalar_select 0, %s10, %s8
  loop: start=0, step=1, limit=4
  $region2: #{dqn_forward.2} parent=0 // loop_pre_header
    _
  $region3: #{dqn_forward.2} parent=0 // loop_header
    %s13 = sphi 0, %s17
    %p14 = scmp.ge.s32.totalorder %s13, 4
    %s23 = sphi 0, %s25
    %s26 = sphi 0, %s23
    %s27 = sphi 0, %s26
    %s43 = sphi 0, %s27
    %s47 = sphi 0, %s47
    %s49 = sphi 0, %s47
    %s50 = sphi 0, %s49
    %s64 = sphi 0, %s50
    %s68 = sphi 0, %s68
    %s70 = sphi 0, %s68
    %s71 = sphi 0, %s70
    %s85 = sphi 0, %s71
    %s89 = sphi 0, %s89
    %s91 = sphi 0, %s89
    %s92 = sphi 0, %s91
    %s106 = sphi 0, %s92
    %s110 = sphi 0, %s110
    %s112 = sphi 0, %s110
    %s113 = sphi 0, %s112
    %s127 = sphi 0, %s113
    %s131 = sphi 0, %s131
    %s133 = sphi 0, %s131
    %s134 = sphi 0, %s133
    %s148 = sphi 0, %s134
    %s152 = sphi 0, %s152
    %s154 = sphi 0, %s152
    %s155 = sphi 0, %s154
    %s169 = sphi 0, %s155
    %s175 = sphi 0, %s177
    %s178 = sphi 0, %s175
    %s179 = sphi 0, %s178
    %s195 = sphi 0, %s179
  $region4: #{dqn_forward.2} parent=0 // loop_header_branch
    %16 = sbr.rel (%p14) target = $region8
  $region5: #{dqn_forward.2} parent=0 // loop_body
    %s18 = ssub.s32 %s13, 1
    %s19 = ssub.s32 %s13, 2
    %s20 = sadd.s32 %s13, 1
    %s21 = ssub.s32 %s13, %s20
    %p22 = scmp.eq.s32.totalorder %s21, 0
    %s24 = sadd.s32 %s23, 1
    %s25 = scalar_select %p22, %s23, %s24
    %p28 = pneg %p22
    %p29 = scmp.eq.s32.totalorder %s13, 1
    %p30 = por %p28, %p29
    %p31 = scmp.ne.s32.totalorder %s23, %s26
    %p32 = scmp.eq.s32.totalorder %s13, 0
    %p33 = por %p31, %p32
    %p34 = scmp.ne.s32.totalorder %s23, %s26
    %p35 = scmp.eq.s32.totalorder %s18, 1
    %p36 = por %p34, %p35
    %p37 = scmp.ne.s32.totalorder %s26, %s27
    %p38 = scmp.eq.s32.totalorder %s18, 0
    %p39 = por %p37, %p38
    %p40 = scmp.ne.s32.totalorder %s26, %s27
    %p41 = scmp.eq.s32.totalorder %s19, 1
    %p42 = por %p40, %p41
    %p44 = scmp.ne.s32.totalorder %s27, %s43
    %p45 = scmp.eq.s32.totalorder %s19, 0
    %p46 = por %p44, %p45
    %s48 = sadd.s32 %s47, 1
    %p51 = scmp.eq.s32.totalorder %s13, 1
    %p52 = scmp.ne.s32.totalorder %s47, %s49
    %p53 = scmp.eq.s32.totalorder %s13, 0
    %p54 = por %p52, %p53
    %p55 = scmp.ne.s32.totalorder %s47, %s49
    %p56 = scmp.eq.s32.totalorder %s18, 1
    %p57 = por %p55, %p56
    %p58 = scmp.ne.s32.totalorder %s49, %s50
    %p59 = scmp.eq.s32.totalorder %s18, 0
    %p60 = por %p58, %p59
    %p61 = scmp.ne.s32.totalorder %s49, %s50
    %p62 = scmp.eq.s32.totalorder %s19, 1
    %p63 = por %p61, %p62
    %p65 = scmp.ne.s32.totalorder %s50, %s64
    %p66 = scmp.eq.s32.totalorder %s19, 0
    %p67 = por %p65, %p66
    %s69 = sadd.s32 %s68, 1
    %p72 = scmp.eq.s32.totalorder %s13, 1
    %p73 = scmp.ne.s32.totalorder %s68, %s70
    %p74 = scmp.eq.s32.totalorder %s13, 0
    %p75 = por %p73, %p74
    %p76 = scmp.ne.s32.totalorder %s68, %s70
    %p77 = scmp.eq.s32.totalorder %s18, 1
    %p78 = por %p76, %p77
    %p79 = scmp.ne.s32.totalorder %s70, %s71
    %p80 = scmp.eq.s32.totalorder %s18, 0
    %p81 = por %p79, %p80
    %p82 = scmp.ne.s32.totalorder %s70, %s71
    %p83 = scmp.eq.s32.totalorder %s19, 1
    %p84 = por %p82, %p83
    %p86 = scmp.ne.s32.totalorder %s71, %s85
    %p87 = scmp.eq.s32.totalorder %s19, 0
    %p88 = por %p86, %p87
    %s90 = sadd.s32 %s89, 1
    %p93 = scmp.eq.s32.totalorder %s13, 1
    %p94 = scmp.ne.s32.totalorder %s89, %s91
    %p95 = scmp.eq.s32.totalorder %s13, 0
    %p96 = por %p94, %p95
    %p97 = scmp.ne.s32.totalorder %s89, %s91
    %p98 = scmp.eq.s32.totalorder %s18, 1
    %p99 = por %p97, %p98
    %p100 = scmp.ne.s32.totalorder %s91, %s92
    %p101 = scmp.eq.s32.totalorder %s18, 0
    %p102 = por %p100, %p101
    %p103 = scmp.ne.s32.totalorder %s91, %s92
    %p104 = scmp.eq.s32.totalorder %s19, 1
    %p105 = por %p103, %p104
    %p107 = scmp.ne.s32.totalorder %s92, %s106
    %p108 = scmp.eq.s32.totalorder %s19, 0
    %p109 = por %p107, %p108
    %s111 = sadd.s32 %s110, 1
    %p114 = scmp.eq.s32.totalorder %s13, 1
    %p115 = scmp.ne.s32.totalorder %s110, %s112
    %p116 = scmp.eq.s32.totalorder %s13, 0
    %p117 = por %p115, %p116
    %p118 = scmp.ne.s32.totalorder %s110, %s112
    %p119 = scmp.eq.s32.totalorder %s18, 1
    %p120 = por %p118, %p119
    %p121 = scmp.ne.s32.totalorder %s112, %s113
    %p122 = scmp.eq.s32.totalorder %s18, 0
    %p123 = por %p121, %p122
    %p124 = scmp.ne.s32.totalorder %s112, %s113
    %p125 = scmp.eq.s32.totalorder %s19, 1
    %p126 = por %p124, %p125
    %p128 = scmp.ne.s32.totalorder %s113, %s127
    %p129 = scmp.eq.s32.totalorder %s19, 0
    %p130 = por %p128, %p129
    %s132 = sadd.s32 %s131, 1
    %p135 = scmp.eq.s32.totalorder %s13, 1
    %p136 = scmp.ne.s32.totalorder %s131, %s133
    %p137 = scmp.eq.s32.totalorder %s13, 0
    %p138 = por %p136, %p137
    %p139 = scmp.ne.s32.totalorder %s131, %s133
    %p140 = scmp.eq.s32.totalorder %s18, 1
    %p141 = por %p139, %p140
    %p142 = scmp.ne.s32.totalorder %s133, %s134
    %p143 = scmp.eq.s32.totalorder %s18, 0
    %p144 = por %p142, %p143
    %p145 = scmp.ne.s32.totalorder %s133, %s134
    %p146 = scmp.eq.s32.totalorder %s19, 1
    %p147 = por %p145, %p146
    %p149 = scmp.ne.s32.totalorder %s134, %s148
    %p150 = scmp.eq.s32.totalorder %s19, 0
    %p151 = por %p149, %p150
    %s153 = sadd.s32 %s152, 1
    %p156 = scmp.eq.s32.totalorder %s13, 1
    %p157 = scmp.ne.s32.totalorder %s152, %s154
    %p158 = scmp.eq.s32.totalorder %s13, 0
    %p159 = por %p157, %p158
    %p160 = scmp.ne.s32.totalorder %s152, %s154
    %p161 = scmp.eq.s32.totalorder %s18, 1
    %p162 = por %p160, %p161
    %p163 = scmp.ne.s32.totalorder %s154, %s155
    %p164 = scmp.eq.s32.totalorder %s18, 0
    %p165 = por %p163, %p164
    %p166 = scmp.ne.s32.totalorder %s154, %s155
    %p167 = scmp.eq.s32.totalorder %s19, 1
    %p168 = por %p166, %p167
    %p170 = scmp.ne.s32.totalorder %s155, %s169
    %p171 = scmp.eq.s32.totalorder %s19, 0
    %p172 = por %p170, %p171
    %s173 = ssub.s32 %s13, %s20
    %p174 = scmp.eq.s32.totalorder %s173, 0
    %s176 = sadd.s32 %s175, 1
    %s177 = scalar_select %p174, %s175, %s176
    %p180 = pneg %p174
    %p181 = scmp.eq.s32.totalorder %s13, 1
    %p182 = por %p180, %p181
    %p183 = scmp.ne.s32.totalorder %s175, %s178
    %p184 = scmp.eq.s32.totalorder %s13, 0
    %p185 = por %p183, %p184
    %p186 = scmp.ne.s32.totalorder %s175, %s178
    %p187 = scmp.eq.s32.totalorder %s18, 1
    %p188 = por %p186, %p187
    %p189 = scmp.ne.s32.totalorder %s178, %s179
    %p190 = scmp.eq.s32.totalorder %s18, 0
    %p191 = por %p189, %p190
    %p192 = scmp.ne.s32.totalorder %s178, %s179
    %p193 = scmp.eq.s32.totalorder %s19, 1
    %p194 = por %p192, %p193
    %p196 = scmp.ne.s32.totalorder %s179, %s195
    %p197 = scmp.eq.s32.totalorder %s19, 0
    %p198 = por %p196, %p197
    %p199 = scmp.le.s32.totalorder 1, %s13
    %p200 = scmp.lt.s32.totalorder %s13, 3
    %p201 = pnand %p199, %p200
    %p202 = pneg %p201
    // Predicated region
    $region9: #{dqn_forward.2} parent=5 // pred_check
      _
    $region10: #{dqn_forward.2} parent=5 // pred_check_branch
      %204 = sbr.rel (%p201) target = $region12
    $region11: #{dqn_forward.2} parent=5 // pred_region
      %s205 = ssub.s32 %s13, 1
      // Predicated region
      $region13: #{dqn_forward.2} parent=11 // pred_check
        %p206 = pneg %p60
      $region14: #{dqn_forward.2} parent=11 // pred_check_branch
        %208 = sbr.rel (%p206) target = $region16
      $region15: #{dqn_forward.2} parent=11 // pred_region
        _
      $region16: #{dqn_forward.2} parent=11 // pred_fallthru
        _
      // Predicated region
      $region17: #{dqn_forward.2} parent=11 // pred_check
        %p209 = pneg %p81
      $region18: #{dqn_forward.2} parent=11 // pred_check_branch
        %211 = sbr.rel (%p209) target = $region20
      $region19: #{dqn_forward.2} parent=11 // pred_region
        _
      $region20: #{dqn_forward.2} parent=11 // pred_fallthru
        _
      // Predicated region
      $region21: #{dqn_forward.2} parent=11 // pred_check
        %p212 = pneg %p102
      $region22: #{dqn_forward.2} parent=11 // pred_check_branch
        %214 = sbr.rel (%p212) target = $region24
      $region23: #{dqn_forward.2} parent=11 // pred_region
        _
      $region24: #{dqn_forward.2} parent=11 // pred_fallthru
        _
      // Predicated region
      $region25: #{dqn_forward.2} parent=11 // pred_check
        %p215 = pneg %p123
      $region26: #{dqn_forward.2} parent=11 // pred_check_branch
        %217 = sbr.rel (%p215) target = $region28
      $region27: #{dqn_forward.2} parent=11 // pred_region
        _
      $region28: #{dqn_forward.2} parent=11 // pred_fallthru
        _
      // Predicated region
      $region29: #{dqn_forward.2} parent=11 // pred_check
        %p218 = pneg %p144
      $region30: #{dqn_forward.2} parent=11 // pred_check_branch
        %220 = sbr.rel (%p218) target = $region32
      $region31: #{dqn_forward.2} parent=11 // pred_region
        _
      $region32: #{dqn_forward.2} parent=11 // pred_fallthru
        _
      // Predicated region
      $region33: #{dqn_forward.2} parent=11 // pred_check
        %p221 = pneg %p165
      $region34: #{dqn_forward.2} parent=11 // pred_check_branch
        %223 = sbr.rel (%p221) target = $region36
      $region35: #{dqn_forward.2} parent=11 // pred_region
        _
      $region36: #{dqn_forward.2} parent=11 // pred_fallthru
        _
    $region12: #{dqn_forward.2} parent=5 // pred_fallthru
      _
    %p224 = scmp.lt.s32.totalorder %s13, 2
    // Predicated region
    $region37: #{dqn_forward.2} parent=5 // pred_check
      %p225 = pneg %p224
    $region38: #{dqn_forward.2} parent=5 // pred_check_branch
      %227 = sbr.rel (%p225) target = $region40
    $region39: #{dqn_forward.2} parent=5 // pred_region
      // Predicated region
      $region41: #{dqn_forward.2} parent=39 // pred_check
        %p228 = pneg %p33
      $region42: #{dqn_forward.2} parent=39 // pred_check_branch
        %230 = sbr.rel (%p228) target = $region44
      $region43: #{dqn_forward.2} parent=39 // pred_region
        %p231 = scmp.lt.s32.totalorder %s13, 1
        %s232 = scalar_select %p231, %s13, 1
        %s233 = smul.addr %s232, 104
        %s234 = smul.addr %s233, 8
        %s235 = scalar_lea.vmem %s0, %s234
      $region44: #{dqn_forward.2} parent=39 // pred_fallthru
        _
    $region40: #{dqn_forward.2} parent=5 // pred_fallthru
      _
    %p236 = scmp.le.s32.totalorder 1, %s13
    %p237 = scmp.lt.s32.totalorder %s13, 3
    %p238 = pnand %p236, %p237
    %p239 = pneg %p238
    // Predicated region
    $region45: #{dqn_forward.2} parent=5 // pred_check
      _
    $region46: #{dqn_forward.2} parent=5 // pred_check_branch
      %241 = sbr.rel (%p238) target = $region48
    $region47: #{dqn_forward.2} parent=5 // pred_region
      %s242 = ssub.s32 %s13, 1
      %p243 = scmp.lt.s32.totalorder %s18, 1
      %s244 = scalar_select %p243, %s18, 1
      %s245 = smul.addr %s244, 104
      %s246 = smul.addr %s245, 8
      %s247 = scalar_lea.vmem %s0, %s246
      %p248 = pneg %p39
      %p249 = pneg %p36
      %p250 = pneg %p60
      %p251 = pneg %p57
      %p252 = pneg %p81
      %p253 = pneg %p78
      %p254 = pneg %p102
      %p255 = pneg %p99
      %p256 = pneg %p123
      %p257 = pneg %p120
      %p258 = pneg %p144
      %p259 = pneg %p141
      %p260 = pneg %p165
      %p261 = pneg %p162
      %p262 = pneg %p191
      %p263 = pneg %p188
      %p264 = scmp.lt.s32.totalorder %s18, 1
      %s265 = scalar_select %p264, %s18, 1
      %s266 = smul.addr %s265, 7
      %s267 = smul.addr %s266, 8
      %s268 = scalar_lea.vmem %s7, %s267
      %p269 = scmp.lt.s32.totalorder %s18, 1
      %s270 = scalar_select %p269, %s18, 1
      %s271 = smul.addr %s270, 104
      %s272 = smul.addr %s271, 8
      %s273 = scalar_lea.vmem %s0, %s272
      %p274 = scmp.lt.s32.totalorder %s18, 1
      %s275 = scalar_select %p274, %s18, 1
      %s276 = smul.addr %s275, 7
      %s277 = smul.addr %s276, 8
      %s278 = scalar_lea.vmem %s7, %s277
      %vm279 = vcmask 261120
      %280 = vst.msk [vmem:[#allocation2] sm:$0xff] %vm279, 0.0
      %281 = vst.msk [vmem:[#allocation2 + $0x8] sm:$0xff] %vm279, 0.0
      %282 = vst.msk [vmem:[#allocation2 + $0x10] sm:$0xff] %vm279, 0.0
      %283 = vst.msk [vmem:[#allocation2 + $0x18] sm:$0xff] %vm279, 0.0
      %284 = vst.msk [vmem:[#allocation2 + $0x20] sm:$0xff] %vm279, 0.0
      %285 = vst.msk [vmem:[#allocation2 + $0x28] sm:$0xff] %vm279, 0.0
      %286 = vst.msk [vmem:[#allocation2 + $0x30] sm:$0xff] %vm279, 0.0
      %287 = vst.msk [vmem:[#allocation2 + $0x38] sm:$0xff] %vm279, 0.0
      %288 = vst.msk [vmem:[#allocation2 + $0x40] sm:$0xff] %vm279, 0.0
      %289 = vst.msk [vmem:[#allocation2 + $0x48] sm:$0xff] %vm279, 0.0
      %290 = vst.msk [vmem:[#allocation2 + $0x50] sm:$0xff] %vm279, 0.0
      %291 = vst.msk [vmem:[#allocation2 + $0x58] sm:$0xff] %vm279, 0.0
      %292 = vst.msk [vmem:[#allocation2 + $0x60] sm:$0xff] %vm279, 0.0
      %293 = vst.msk [vmem:[#allocation2 + $0x68] sm:$0xff] %vm279, 0.0
      %294 = vst.msk [vmem:[#allocation2 + $0x70] sm:$0xff] %vm279, 0.0
      %295 = vst.msk [vmem:[#allocation2 + $0x78] sm:$0xff] %vm279, 0.0
      %296 = vst.msk [vmem:[#allocation2 + $0x80] sm:$0xff] %vm279, 0.0
      %297 = vst.msk [vmem:[#allocation2 + $0x88] sm:$0xff] %vm279, 0.0
      %298 = vst.msk [vmem:[#allocation2 + $0x90] sm:$0xff] %vm279, 0.0
      %299 = vst.msk [vmem:[#allocation2 + $0x98] sm:$0xff] %vm279, 0.0
      %300 = vst.msk [vmem:[#allocation2 + $0xa0] sm:$0xff] %vm279, 0.0
      %301 = vst.msk [vmem:[#allocation2 + $0xa8] sm:$0xff] %vm279, 0.0
      %302 = vst.msk [vmem:[#allocation2 + $0xb0] sm:$0xff] %vm279, 0.0
      %303 = vst.msk [vmem:[#allocation2 + $0xb8] sm:$0xff] %vm279, 0.0
      %304 = vst.msk [vmem:[#allocation2 + $0xc0] sm:$0xff] %vm279, 0.0
      %305 = vst.msk [vmem:[#allocation2 + $0xc8] sm:$0xff] %vm279, 0.0
      %306 = vst.msk [vmem:[#allocation2 + $0xd0] sm:$0xff] %vm279, 0.0
      %307 = vst.msk [vmem:[#allocation2 + $0xd8] sm:$0xff] %vm279, 0.0
      %308 = vst.msk [vmem:[#allocation2 + $0xe0] sm:$0xff] %vm279, 0.0
      %309 = vst.msk [vmem:[#allocation2 + $0xe8] sm:$0xff] %vm279, 0.0
      %310 = vst.msk [vmem:[#allocation2 + $0xf0] sm:$0xff] %vm279, 0.0
      %311 = vst.msk [vmem:[#allocation2 + $0xf8] sm:$0xff] %vm279, 0.0
      %312 = vst.msk [vmem:[#allocation2 + $0x100] sm:$0xff] %vm279, 0.0
      %313 = vst.msk [vmem:[#allocation2 + $0x108] sm:$0xff] %vm279, 0.0
      %314 = vst.msk [vmem:[#allocation2 + $0x110] sm:$0xff] %vm279, 0.0
      %315 = vst.msk [vmem:[#allocation2 + $0x118] sm:$0xff] %vm279, 0.0
      %316 = vst.msk [vmem:[#allocation2 + $0x120] sm:$0xff] %vm279, 0.0
      %317 = vst.msk [vmem:[#allocation2 + $0x128] sm:$0xff] %vm279, 0.0
      %318 = vst.msk [vmem:[#allocation2 + $0x130] sm:$0xff] %vm279, 0.0
      %319 = vst.msk [vmem:[#allocation2 + $0x138] sm:$0xff] %vm279, 0.0
      %320 = vst.msk [vmem:[#allocation2 + $0x140] sm:$0xff] %vm279, 0.0
      %321 = vst.msk [vmem:[#allocation2 + $0x148] sm:$0xff] %vm279, 0.0
      %322 = vst.msk [vmem:[#allocation2 + $0x150] sm:$0xff] %vm279, 0.0
      %323 = vst.msk [vmem:[#allocation2 + $0x158] sm:$0xff] %vm279, 0.0
      %324 = vst.msk [vmem:[#allocation2 + $0x160] sm:$0xff] %vm279, 0.0
      %325 = vst.msk [vmem:[#allocation2 + $0x168] sm:$0xff] %vm279, 0.0
      %326 = vst.msk [vmem:[#allocation2 + $0x170] sm:$0xff] %vm279, 0.0
      %327 = vst.msk [vmem:[#allocation2 + $0x178] sm:$0xff] %vm279, 0.0
      %328 = vst.msk [vmem:[#allocation2 + $0x180] sm:$0xff] %vm279, 0.0
      %329 = vst.msk [vmem:[#allocation2 + $0x188] sm:$0xff] %vm279, 0.0
      %330 = vst.msk [vmem:[#allocation2 + $0x190] sm:$0xff] %vm279, 0.0
      %331 = vst.msk [vmem:[#allocation2 + $0x198] sm:$0xff] %vm279, 0.0
      %332 = vst.msk [vmem:[#allocation2 + $0x1a0] sm:$0xff] %vm279, 0.0
      %333 = vst.msk [vmem:[#allocation2 + $0x1a8] sm:$0xff] %vm279, 0.0
      %334 = vst.msk [vmem:[#allocation2 + $0x1b0] sm:$0xff] %vm279, 0.0
      %335 = vst.msk [vmem:[#allocation2 + $0x1b8] sm:$0xff] %vm279, 0.0
      %v336 = vld [vmem:[%s1] sm:$0xff]
      %v337 = vld [vmem:[%s1 + $0x8] sm:$0xff]
      %v338 = vld [vmem:[%s1 + $0x10] sm:$0xff]
      %v339 = vld [vmem:[%s1 + $0x18] sm:$0xff]
      %v340 = vld [vmem:[%s1 + $0x20] sm:$0xff]
      %v341 = vld [vmem:[%s1 + $0x28] sm:$0xff]
      %v342 = vld [vmem:[%s1 + $0x30] sm:$0xff]
      %v343 = vld [vmem:[%s1 + $0x38] sm:$0xff]
      %v344 = vld [vmem:[%s1 + $0x40] sm:$0xff]
      %v345 = vld [vmem:[%s1 + $0x48] sm:$0xff]
      %v346 = vld [vmem:[%s1 + $0x50] sm:$0xff]
      %v347 = vld [vmem:[%s1 + $0x58] sm:$0xff]
      %v348 = vld [vmem:[%s1 + $0x60] sm:$0xff]
      %v349 = vld [vmem:[%s1 + $0x68] sm:$0xff]
      %v350 = vld [vmem:[%s1 + $0x70] sm:$0xff]
      %v351 = vld [vmem:[%s1 + $0x78] sm:$0xff]
      %v352 = vld [vmem:[%s1 + $0x80] sm:$0xff]
      %v353 = vld [vmem:[%s1 + $0x88] sm:$0xff]
      %v354 = vld [vmem:[%s1 + $0x90] sm:$0xff]
      %v355 = vld [vmem:[%s1 + $0x98] sm:$0xff]
      %v356 = vld [vmem:[%s1 + $0xa0] sm:$0xff]
      %v357 = vld [vmem:[%s1 + $0xa8] sm:$0xff]
      %v358 = vld [vmem:[%s1 + $0xb0] sm:$0xff]
      %v359 = vld [vmem:[%s1 + $0xb8] sm:$0xff]
      %v360 = vld [vmem:[%s1 + $0xc0] sm:$0xff]
      %v361 = vld [vmem:[%s1 + $0xc8] sm:$0xff]
      %v362 = vld [vmem:[%s1 + $0xd0] sm:$0xff]
      %v363 = vld [vmem:[%s1 + $0xd8] sm:$0xff]
      %v364 = vld [vmem:[%s1 + $0xe0] sm:$0xff]
      %v365 = vld [vmem:[%s1 + $0xe8] sm:$0xff]
      %v366 = vld [vmem:[%s1 + $0xf0] sm:$0xff]
      %v367 = vld [vmem:[%s1 + $0xf8] sm:$0xff]
      %v368 = vld [vmem:[%s2] sm:$0x1]
      %v369 = vld [vmem:[%s273] sm:$0xff]
      %v370 = vld [vmem:[%s273 + $0x8] sm:$0xff]
      %v371 = vld [vmem:[%s273 + $0x10] sm:$0xff]
      %v372 = vld [vmem:[%s273 + $0x18] sm:$0xff]
      %v373 = vld [vmem:[%s273 + $0x20] sm:$0xff]
      %v374 = vld [vmem:[%s273 + $0x28] sm:$0xff]
      %v375 = vld [vmem:[%s273 + $0x30] sm:$0xff]
      %v376 = vld [vmem:[%s273 + $0x38] sm:$0xff]
      %v377 = vld [vmem:[%s273 + $0x40] sm:$0xff]
      %v378 = vld [vmem:[%s273 + $0x48] sm:$0xff]
      %v379 = vld [vmem:[%s273 + $0x50] sm:$0xff]
      %v380 = vld [vmem:[%s273 + $0x58] sm:$0xff]
      %v381 = vld [vmem:[%s273 + $0x60] sm:$0xff]
      %v382 = vld [vmem:[%s273 + $0x68] sm:$0xff]
      %v383 = vld [vmem:[%s273 + $0x70] sm:$0xff]
      %v384 = vld [vmem:[%s273 + $0x78] sm:$0xff]
      %v385 = vld [vmem:[%s273 + $0x80] sm:$0xff]
      %v386 = vld [vmem:[%s273 + $0x88] sm:$0xff]
      %v387 = vld [vmem:[%s273 + $0x90] sm:$0xff]
      %v388 = vld [vmem:[%s273 + $0x98] sm:$0xff]
      %v389 = vld [vmem:[%s273 + $0xa0] sm:$0xff]
      %v390 = vld [vmem:[%s273 + $0xa8] sm:$0xff]
      %v391 = vld [vmem:[%s273 + $0xb0] sm:$0xff]
      %v392 = vld [vmem:[%s273 + $0xb8] sm:$0xff]
      %v393 = vld [vmem:[%s273 + $0xc0] sm:$0xf]
      %v394 = vld [vmem:[%s273 + $0xc8] sm:$0xf]
      %v396 = vlaneseq
      %v397 = vshrl.u32 %v396, 7
      %v398 = vsub.s32 0, %v397
      %v399 = vrot.slane %v368, %v398
      %401 = vmatprep.subr.mxu0 0.0
      %402 = vmatpush1.msra.mxu0 %v336
      %403 = vmatprep.subr.mxu0 0.0
      %404 = vmatpush1.msra.mxu0 %v337
      %405 = vmatprep.subr.mxu0 0.0
      %406 = vmatpush1.msra.mxu0 %v338
      %407 = vmatprep.subr.mxu0 0.0
      %408 = vmatpush1.msra.mxu0 %v339
      %409 = vmatprep.subr.mxu0 0.0
      %410 = vmatpush1.msra.mxu0 %v340
      %411 = vmatprep.subr.mxu0 0.0
      %412 = vmatpush1.msra.mxu0 %v341
      %413 = vmatprep.subr.mxu0 0.0
      %414 = vmatpush1.msra.mxu0 %v342
      %415 = vmatprep.subr.mxu0 0.0
      %416 = vmatpush1.msra.mxu0 %v343
      %417 = vmatprep.subr.mxu0 0.0
      %418 = vmatpush1.msra.mxu0 %v344
      %419 = vmatprep.subr.mxu0 0.0
      %420 = vmatpush1.msra.mxu0 %v345
      %421 = vmatprep.subr.mxu0 0.0
      %422 = vmatpush1.msra.mxu0 %v346
      %423 = vmatprep.subr.mxu0 0.0
      %424 = vmatpush1.msra.mxu0 %v347
      %425 = vmatprep.subr.mxu0 0.0
      %426 = vmatpush1.msra.mxu0 %v348
      %427 = vmatprep.subr.mxu0 0.0
      %428 = vmatpush1.msra.mxu0 %v349
      %429 = vmatprep.subr.mxu0 0.0
      %430 = vmatpush1.msra.mxu0 %v350
      %431 = vmatprep.subr.mxu0 0.0
      %432 = vmatpush1.msra.mxu0 %v351
      %433 = vmatprep.subr.mxu0 0.0
      %434 = vmatpush1.msra.mxu0 %v352
      %435 = vmatprep.subr.mxu0 0.0
      %436 = vmatpush1.msra.mxu0 %v353
      %437 = vmatprep.subr.mxu0 0.0
      %438 = vmatpush1.msra.mxu0 %v354
      %439 = vmatprep.subr.mxu0 0.0
      %440 = vmatpush1.msra.mxu0 %v355
      %441 = vmatprep.subr.mxu0 0.0
      %442 = vmatpush1.msra.mxu0 %v356
      %443 = vmatprep.subr.mxu0 0.0
      %444 = vmatpush1.msra.mxu0 %v357
      %445 = vmatprep.subr.mxu0 0.0
      %446 = vmatpush1.msra.mxu0 %v358
      %447 = vmatprep.subr.mxu0 0.0
      %448 = vmatpush1.msra.mxu0 %v359
      %449 = vmatprep.subr.mxu0 0.0
      %450 = vmatpush1.msra.mxu0 %v360
      %451 = vmatprep.subr.mxu0 0.0
      %452 = vmatpush1.msra.mxu0 %v361
      %453 = vmatprep.subr.mxu0 0.0
      %454 = vmatpush1.msra.mxu0 %v362
      %455 = vmatprep.subr.mxu0 0.0
      %456 = vmatpush1.msra.mxu0 %v363
      %457 = vmatprep.subr.mxu0 0.0
      %458 = vmatpush1.msra.mxu0 %v364
      %459 = vmatprep.subr.mxu0 0.0
      %460 = vmatpush1.msra.mxu0 %v365
      %461 = vmatprep.subr.mxu0 0.0
      %462 = vmatpush1.msra.mxu0 %v366
      %463 = vmatprep.subr.mxu0 0.0
      %464 = vmatpush1.msra.mxu0 %v367
      %465 = vmatprep.mubr.f32.mxu0 %v370
      %466 = vmatmul.mubr.f32.gmra.mrb[0].mxu0 %v369
      %v467 = vpop.f32.mrb[0].mxu0
      %v468 = vadd.f32 %v399, %v467
      %v469 = vpop.f32.mrb[0].mxu0
      %470 = vmatprep.mubr.f32.mxu0 %v372
      %471 = vmatmul.mubr.f32.gmra.mrb[0].mxu0 %v371
      %v472 = vpop.f32.mrb[0].mxu0
      %v473 = vadd.f32 %v399, %v472
      %v474 = vpop.f32.mrb[0].mxu0
      %475 = vmatprep.mubr.f32.mxu0 %v374
      %476 = vmatmul.mubr.f32.gmra.mrb[0].mxu0 %v373
      %v477 = vpop.f32.mrb[0].mxu0
      %v478 = vadd.f32 %v399, %v477
      %v479 = vpop.f32.mrb[0].mxu0
      %480 = vmatprep.mubr.f32.mxu0 %v376
      %481 = vmatmul.mubr.f32.gmra.mrb[0].mxu0 %v375
      %v482 = vpop.f32.mrb[0].mxu0
      %v483 = vadd.f32 %v399, %v482
      %v484 = vpop.f32.mrb[0].mxu0
      %485 = vmatprep.mubr.f32.mxu0 %v378
      %486 = vmatmul.mubr.f32.gmra.mrb[0].mxu0 %v377
      %v487 = vpop.f32.mrb[0].mxu0
      %v488 = vadd.f32 %v399, %v487
      %v489 = vpop.f32.mrb[0].mxu0
      %490 = vmatprep.mubr.f32.mxu0 %v380
      %491 = vmatmul.mubr.f32.gmra.mrb[0].mxu0 %v379
      %v492 = vpop.f32.mrb[0].mxu0
      %v493 = vadd.f32 %v399, %v492
      %v494 = vpop.f32.mrb[0].mxu0
      %495 = vmatprep.mubr.f32.mxu0 %v382
      %496 = vmatmul.mubr.f32.gmra.mrb[0].mxu0 %v381
      %v497 = vpop.f32.mrb[0].mxu0
      %v498 = vadd.f32 %v399, %v497
      %v499 = vpop.f32.mrb[0].mxu0
      %500 = vmatprep.mubr.f32.mxu0 %v384
      %501 = vmatmul.mubr.f32.gmra.mrb[0].mxu0 %v383
      %v502 = vpop.f32.mrb[0].mxu0
      %v503 = vadd.f32 %v399, %v502
      %v504 = vpop.f32.mrb[0].mxu0
      %505 = vmatprep.mubr.f32.mxu0 %v386
      %506 = vmatmul.mubr.f32.gmra.mrb[0].mxu0 %v385
      %v507 = vpop.f32.mrb[0].mxu0
      %v508 = vadd.f32 %v399, %v507
      %v509 = vpop.f32.mrb[0].mxu0
      %510 = vmatprep.mubr.f32.mxu0 %v388
      %511 = vmatmul.mubr.f32.gmra.mrb[0].mxu0 %v387
      %v512 = vpop.f32.mrb[0].mxu0
      %v513 = vadd.f32 %v399, %v512
      %v514 = vpop.f32.mrb[0].mxu0
      %515 = vmatprep.mubr.f32.mxu0 %v390
      %516 = vmatmul.mubr.f32.gmra.mrb[0].mxu0 %v389
      %v517 = vpop.f32.mrb[0].mxu0
      %v518 = vadd.f32 %v399, %v517
      %v519 = vpop.f32.mrb[0].mxu0
      %520 = vmatprep.mubr.f32.mxu0 %v392
      %521 = vmatmul.mubr.f32.gmra.mrb[0].mxu0 %v391
      %v522 = vpop.f32.mrb[0].mxu0
      %v523 = vadd.f32 %v399, %v522
      %v524 = vpop.f32.mrb[0].mxu0
      %525 = vmatprep.mubr.f32.mxu0 %v394
      %526 = vmatmul.mubr.f32.gmra.mrb[0].mxu0 %v393
      %v527 = vpop.f32.mrb[0].mxu0
      %v528 = vadd.f32 %v399, %v527
      %v529 = vpop.f32.mrb[0].mxu0
      %530 = vdwg.mxu0
      %v531 = vmax.f32 %v468, 0.0
      %v532 = vmax.f32 %v473, 0.0
      %v533 = vmax.f32 %v478, 0.0
      %v534 = vmax.f32 %v483, 0.0
      %v535 = vmax.f32 %v488, 0.0
      %v536 = vmax.f32 %v493, 0.0
      %v537 = vmax.f32 %v498, 0.0
      %v538 = vmax.f32 %v503, 0.0
      %v539 = vmax.f32 %v508, 0.0
      %v540 = vmax.f32 %v513, 0.0
      %v541 = vmax.f32 %v518, 0.0
      %v542 = vmax.f32 %v523, 0.0
      %v543 = vmax.f32 %v528, 0.0
      %544 = vst.msk [vmem:[#allocation2] sm:$0xff] %vm279, %v531
      %545 = vst.msk [vmem:[#allocation2 + $0x8] sm:$0xff] %vm279, %v532
      %546 = vst.msk [vmem:[#allocation2 + $0x10] sm:$0xff] %vm279, %v533
      %547 = vst.msk [vmem:[#allocation2 + $0x18] sm:$0xff] %vm279, %v534
      %548 = vst.msk [vmem:[#allocation2 + $0x20] sm:$0xff] %vm279, %v535
      %549 = vst.msk [vmem:[#allocation2 + $0x28] sm:$0xff] %vm279, %v536
      %550 = vst.msk [vmem:[#allocation2 + $0x30] sm:$0xff] %vm279, %v537
      %551 = vst.msk [vmem:[#allocation2 + $0x38] sm:$0xff] %vm279, %v538
      %552 = vst.msk [vmem:[#allocation2 + $0x40] sm:$0xff] %vm279, %v539
      %553 = vst.msk [vmem:[#allocation2 + $0x48] sm:$0xff] %vm279, %v540
      %554 = vst.msk [vmem:[#allocation2 + $0x50] sm:$0xff] %vm279, %v541
      %555 = vst.msk [vmem:[#allocation2 + $0x58] sm:$0xff] %vm279, %v542
      %vm556 = vcmask 257024
      %557 = vst.msk [vmem:[#allocation2 + $0x60] sm:$0xf] %vm556, %v543
      %s558 = scalar_lea.vmem %s273, 208
      %v559 = vld [vmem:[%s558] sm:$0xff]
      %v560 = vld [vmem:[%s558 + $0x8] sm:$0xff]
      %v561 = vld [vmem:[%s558 + $0x10] sm:$0xff]
      %v562 = vld [vmem:[%s558 + $0x18] sm:$0xff]
      %v563 = vld [vmem:[%s558 + $0x20] sm:$0xff]
      %v564 = vld [vmem:[%s558 + $0x28] sm:$0xff]
      %v565 = vld [vmem:[%s558 + $0x30] sm:$0xff]
      %v566 = vld [vmem:[%s558 + $0x38] sm:$0xff]
      %v567 = vld [vmem:[%s558 + $0x40] sm:$0xff]
      %v568 = vld [vmem:[%s558 + $0x48] sm:$0xff]
      %v569 = vld [vmem:[%s558 + $0x50] sm:$0xff]
      %v570 = vld [vmem:[%s558 + $0x58] sm:$0xff]
      %v571 = vld [vmem:[%s558 + $0x60] sm:$0xff]
      %v572 = vld [vmem:[%s558 + $0x68] sm:$0xff]
      %v573 = vld [vmem:[%s558 + $0x70] sm:$0xff]
      %v574 = vld [vmem:[%s558 + $0x78] sm:$0xff]
      %v575 = vld [vmem:[%s558 + $0x80] sm:$0xff]
      %v576 = vld [vmem:[%s558 + $0x88] sm:$0xff]
      %v577 = vld [vmem:[%s558 + $0x90] sm:$0xff]
      %v578 = vld [vmem:[%s558 + $0x98] sm:$0xff]
      %v579 = vld [vmem:[%s558 + $0xa0] sm:$0xff]
      %v580 = vld [vmem:[%s558 + $0xa8] sm:$0xff]
      %v581 = vld [vmem:[%s558 + $0xb0] sm:$0xff]
      %v582 = vld [vmem:[%s558 + $0xb8] sm:$0xff]
      %v583 = vld [vmem:[%s558 + $0xc0] sm:$0xf]
      %v584 = vld [vmem:[%s558 + $0xc8] sm:$0xf]
      %585 = vmatprep.subr.mxu0 0.0
      %586 = vmatpush1.msra.mxu0 %v336
      %587 = vmatprep.subr.mxu0 0.0
      %588 = vmatpush1.msra.mxu0 %v337
      %589 = vmatprep.subr.mxu0 0.0
      %590 = vmatpush1.msra.mxu0 %v338
      %591 = vmatprep.subr.mxu0 0.0
      %592 = vmatpush1.msra.mxu0 %v339
      %593 = vmatprep.subr.mxu0 0.0
      %594 = vmatpush1.msra.mxu0 %v340
      %595 = vmatprep.subr.mxu0 0.0
      %596 = vmatpush1.msra.mxu0 %v341
      %597 = vmatprep.subr.mxu0 0.0
      %598 = vmatpush1.msra.mxu0 %v342
      %599 = vmatprep.subr.mxu0 0.0
      %600 = vmatpush1.msra.mxu0 %v343
      %601 = vmatprep.subr.mxu0 0.0
      %602 = vmatpush1.msra.mxu0 %v344
      %603 = vmatprep.subr.mxu0 0.0
      %604 = vmatpush1.msra.mxu0 %v345
      %605 = vmatprep.subr.mxu0 0.0
      %606 = vmatpush1.msra.mxu0 %v346
      %607 = vmatprep.subr.mxu0 0.0
      %608 = vmatpush1.msra.mxu0 %v347
      %609 = vmatprep.subr.mxu0 0.0
      %610 = vmatpush1.msra.mxu0 %v348
      %611 = vmatprep.subr.mxu0 0.0
      %612 = vmatpush1.msra.mxu0 %v349
      %613 = vmatprep.subr.mxu0 0.0
      %614 = vmatpush1.msra.mxu0 %v350
      %615 = vmatprep.subr.mxu0 0.0
      %616 = vmatpush1.msra.mxu0 %v351
      %617 = vmatprep.subr.mxu0 0.0
      %618 = vmatpush1.msra.mxu0 %v352
      %619 = vmatprep.subr.mxu0 0.0
      %620 = vmatpush1.msra.mxu0 %v353
      %621 = vmatprep.subr.mxu0 0.0
      %622 = vmatpush1.msra.mxu0 %v354
      %623 = vmatprep.subr.mxu0 0.0
      %624 = vmatpush1.msra.mxu0 %v355
      %625 = vmatprep.subr.mxu0 0.0
      %626 = vmatpush1.msra.mxu0 %v356
      %627 = vmatprep.subr.mxu0 0.0
      %628 = vmatpush1.msra.mxu0 %v357
      %629 = vmatprep.subr.mxu0 0.0
      %630 = vmatpush1.msra.mxu0 %v358
      %631 = vmatprep.subr.mxu0 0.0
      %632 = vmatpush1.msra.mxu0 %v359
      %633 = vmatprep.subr.mxu0 0.0
      %634 = vmatpush1.msra.mxu0 %v360
      %635 = vmatprep.subr.mxu0 0.0
      %636 = vmatpush1.msra.mxu0 %v361
      %637 = vmatprep.subr.mxu0 0.0
      %638 = vmatpush1.msra.mxu0 %v362
      %639 = vmatprep.subr.mxu0 0.0
      %640 = vmatpush1.msra.mxu0 %v363
      %641 = vmatprep.subr.mxu0 0.0
      %642 = vmatpush1.msra.mxu0 %v364
      %643 = vmatprep.subr.mxu0 0.0
      %644 = vmatpush1.msra.mxu0 %v365
      %645 = vmatprep.subr.mxu0 0.0
      %646 = vmatpush1.msra.mxu0 %v366
      %647 = vmatprep.subr.mxu0 0.0
      %648 = vmatpush1.msra.mxu0 %v367
      %649 = vmatprep.mubr.f32.mxu0 %v560
      %650 = vmatmul.mubr.f32.gmra.mrb[0].mxu0 %v559
      %v651 = vpop.f32.mrb[0].mxu0
      %v652 = vadd.f32 %v399, %v651
      %v653 = vpop.f32.mrb[0].mxu0
      %654 = vmatprep.mubr.f32.mxu0 %v562
      %655 = vmatmul.mubr.f32.gmra.mrb[0].mxu0 %v561
      %v656 = vpop.f32.mrb[0].mxu0
      %v657 = vadd.f32 %v399, %v656
      %v658 = vpop.f32.mrb[0].mxu0
      %659 = vmatprep.mubr.f32.mxu0 %v564
      %660 = vmatmul.mubr.f32.gmra.mrb[0].mxu0 %v563
      %v661 = vpop.f32.mrb[0].mxu0
      %v662 = vadd.f32 %v399, %v661
      %v663 = vpop.f32.mrb[0].mxu0
      %664 = vmatprep.mubr.f32.mxu0 %v566
      %665 = vmatmul.mubr.f32.gmra.mrb[0].mxu0 %v565
      %v666 = vpop.f32.mrb[0].mxu0
      %v667 = vadd.f32 %v399, %v666
      %v668 = vpop.f32.mrb[0].mxu0
      %669 = vmatprep.mubr.f32.mxu0 %v568
      %670 = vmatmul.mubr.f32.gmra.mrb[0].mxu0 %v567
      %v671 = vpop.f32.mrb[0].mxu0
      %v672 = vadd.f32 %v399, %v671
      %v673 = vpop.f32.mrb[0].mxu0
      %674 = vmatprep.mubr.f32.mxu0 %v570
      %675 = vmatmul.mubr.f32.gmra.mrb[0].mxu0 %v569
      %v676 = vpop.f32.mrb[0].mxu0
      %v677 = vadd.f32 %v399, %v676
      %v678 = vpop.f32.mrb[0].mxu0
      %679 = vmatprep.mubr.f32.mxu0 %v572
      %680 = vmatmul.mubr.f32.gmra.mrb[0].mxu0 %v571
      %v681 = vpop.f32.mrb[0].mxu0
      %v682 = vadd.f32 %v399, %v681
      %v683 = vpop.f32.mrb[0].mxu0
      %684 = vmatprep.mubr.f32.mxu0 %v574
      %685 = vmatmul.mubr.f32.gmra.mrb[0].mxu0 %v573
      %v686 = vpop.f32.mrb[0].mxu0
      %v687 = vadd.f32 %v399, %v686
      %v688 = vpop.f32.mrb[0].mxu0
      %689 = vmatprep.mubr.f32.mxu0 %v576
      %690 = vmatmul.mubr.f32.gmra.mrb[0].mxu0 %v575
      %v691 = vpop.f32.mrb[0].mxu0
      %v692 = vadd.f32 %v399, %v691
      %v693 = vpop.f32.mrb[0].mxu0
      %694 = vmatprep.mubr.f32.mxu0 %v578
      %695 = vmatmul.mubr.f32.gmra.mrb[0].mxu0 %v577
      %v696 = vpop.f32.mrb[0].mxu0
      %v697 = vadd.f32 %v399, %v696
      %v698 = vpop.f32.mrb[0].mxu0
      %699 = vmatprep.mubr.f32.mxu0 %v580
      %700 = vmatmul.mubr.f32.gmra.mrb[0].mxu0 %v579
      %v701 = vpop.f32.mrb[0].mxu0
      %v702 = vadd.f32 %v399, %v701
      %v703 = vpop.f32.mrb[0].mxu0
      %704 = vmatprep.mubr.f32.mxu0 %v582
      %705 = vmatmul.mubr.f32.gmra.mrb[0].mxu0 %v581
      %v706 = vpop.f32.mrb[0].mxu0
      %v707 = vadd.f32 %v399, %v706
      %v708 = vpop.f32.mrb[0].mxu0
      %709 = vmatprep.mubr.f32.mxu0 %v584
      %710 = vmatmul.mubr.f32.gmra.mrb[0].mxu0 %v583
      %v711 = vpop.f32.mrb[0].mxu0
      %v712 = vadd.f32 %v399, %v711
      %v713 = vpop.f32.mrb[0].mxu0
      %714 = vdwg.mxu0
      %v715 = vmax.f32 %v652, 0.0
      %v716 = vmax.f32 %v657, 0.0
      %v717 = vmax.f32 %v662, 0.0
      %v718 = vmax.f32 %v667, 0.0
      %v719 = vmax.f32 %v672, 0.0
      %v720 = vmax.f32 %v677, 0.0
      %v721 = vmax.f32 %v682, 0.0
      %v722 = vmax.f32 %v687, 0.0
      %v723 = vmax.f32 %v692, 0.0
      %v724 = vmax.f32 %v697, 0.0
      %v725 = vmax.f32 %v702, 0.0
      %v726 = vmax.f32 %v707, 0.0
      %v727 = vmax.f32 %v712, 0.0
      %s728 = scalar_lea.vmem [#allocation2], 112
      %729 = vst.msk [vmem:[%s728] sm:$0xff] %vm279, %v715
      %730 = vst.msk [vmem:[%s728 + $0x8] sm:$0xff] %vm279, %v716
      %731 = vst.msk [vmem:[%s728 + $0x10] sm:$0xff] %vm279, %v717
      %732 = vst.msk [vmem:[%s728 + $0x18] sm:$0xff] %vm279, %v718
      %733 = vst.msk [vmem:[%s728 + $0x20] sm:$0xff] %vm279, %v719
      %734 = vst.msk [vmem:[%s728 + $0x28] sm:$0xff] %vm279, %v720
      %735 = vst.msk [vmem:[%s728 + $0x30] sm:$0xff] %vm279, %v721
      %736 = vst.msk [vmem:[%s728 + $0x38] sm:$0xff] %vm279, %v722
      %737 = vst.msk [vmem:[%s728 + $0x40] sm:$0xff] %vm279, %v723
      %738 = vst.msk [vmem:[%s728 + $0x48] sm:$0xff] %vm279, %v724
      %739 = vst.msk [vmem:[%s728 + $0x50] sm:$0xff] %vm279, %v725
      %740 = vst.msk [vmem:[%s728 + $0x58] sm:$0xff] %vm279, %v726
      %741 = vst.msk [vmem:[%s728 + $0x60] sm:$0xf] %vm556, %v727
      %s742 = scalar_lea.vmem %s273, 416
      %v743 = vld [vmem:[%s742] sm:$0xff]
      %v744 = vld [vmem:[%s742 + $0x8] sm:$0xff]
      %v745 = vld [vmem:[%s742 + $0x10] sm:$0xff]
      %v746 = vld [vmem:[%s742 + $0x18] sm:$0xff]
      %v747 = vld [vmem:[%s742 + $0x20] sm:$0xff]
      %v748 = vld [vmem:[%s742 + $0x28] sm:$0xff]
      %v749 = vld [vmem:[%s742 + $0x30] sm:$0xff]
      %v750 = vld [vmem:[%s742 + $0x38] sm:$0xff]
      %v751 = vld [vmem:[%s742 + $0x40] sm:$0xff]
      %v752 = vld [vmem:[%s742 + $0x48] sm:$0xff]
      %v753 = vld [vmem:[%s742 + $0x50] sm:$0xff]
      %v754 = vld [vmem:[%s742 + $0x58] sm:$0xff]
      %v755 = vld [vmem:[%s742 + $0x60] sm:$0xff]
      %v756 = vld [vmem:[%s742 + $0x68] sm:$0xff]
      %v757 = vld [vmem:[%s742 + $0x70] sm:$0xff]
      %v758 = vld [vmem:[%s742 + $0x78] sm:$0xff]
      %v759 = vld [vmem:[%s742 + $0x80] sm:$0xff]
      %v760 = vld [vmem:[%s742 + $0x88] sm:$0xff]
      %v761 = vld [vmem:[%s742 + $0x90] sm:$0xff]
      %v762 = vld [vmem:[%s742 + $0x98] sm:$0xff]
      %v763 = vld [vmem:[%s742 + $0xa0] sm:$0xff]
      %v764 = vld [vmem:[%s742 + $0xa8] sm:$0xff]
      %v765 = vld [vmem:[%s742 + $0xb0] sm:$0xff]
      %v766 = vld [vmem:[%s742 + $0xb8] sm:$0xff]
      %v767 = vld [vmem:[%s742 + $0xc0] sm:$0xf]
      %v768 = vld [vmem:[%s742 + $0xc8] sm:$0xf]
      %769 = vmatprep.subr.mxu0 0.0
      %770 = vmatpush1.msra.mxu0 %v336
      %771 = vmatprep.subr.mxu0 0.0
      %772 = vmatpush1.msra.mxu0 %v337
      %773 = vmatprep.subr.mxu0 0.0
      %774 = vmatpush1.msra.mxu0 %v338
      %775 = vmatprep.subr.mxu0 0.0
      %776 = vmatpush1.msra.mxu0 %v339
      %777 = vmatprep.subr.mxu0 0.0
      %778 = vmatpush1.msra.mxu0 %v340
      %779 = vmatprep.subr.mxu0 0.0
      %780 = vmatpush1.msra.mxu0 %v341
      %781 = vmatprep.subr.mxu0 0.0
      %782 = vmatpush1.msra.mxu0 %v342
      %783 = vmatprep.subr.mxu0 0.0
      %784 = vmatpush1.msra.mxu0 %v343
      %785 = vmatprep.subr.mxu0 0.0
      %786 = vmatpush1.msra.mxu0 %v344
      %787 = vmatprep.subr.mxu0 0.0
      %788 = vmatpush1.msra.mxu0 %v345
      %789 = vmatprep.subr.mxu0 0.0
      %790 = vmatpush1.msra.mxu0 %v346
      %791 = vmatprep.subr.mxu0 0.0
      %792 = vmatpush1.msra.mxu0 %v347
      %793 = vmatprep.subr.mxu0 0.0
      %794 = vmatpush1.msra.mxu0 %v348
      %795 = vmatprep.subr.mxu0 0.0
      %796 = vmatpush1.msra.mxu0 %v349
      %797 = vmatprep.subr.mxu0 0.0
      %798 = vmatpush1.msra.mxu0 %v350
      %799 = vmatprep.subr.mxu0 0.0
      %800 = vmatpush1.msra.mxu0 %v351
      %801 = vmatprep.subr.mxu0 0.0
      %802 = vmatpush1.msra.mxu0 %v352
      %803 = vmatprep.subr.mxu0 0.0
      %804 = vmatpush1.msra.mxu0 %v353
      %805 = vmatprep.subr.mxu0 0.0
      %806 = vmatpush1.msra.mxu0 %v354
      %807 = vmatprep.subr.mxu0 0.0
      %808 = vmatpush1.msra.mxu0 %v355
      %809 = vmatprep.subr.mxu0 0.0
      %810 = vmatpush1.msra.mxu0 %v356
      %811 = vmatprep.subr.mxu0 0.0
      %812 = vmatpush1.msra.mxu0 %v357
      %813 = vmatprep.subr.mxu0 0.0
      %814 = vmatpush1.msra.mxu0 %v358
      %815 = vmatprep.subr.mxu0 0.0
      %816 = vmatpush1.msra.mxu0 %v359
      %817 = vmatprep.subr.mxu0 0.0
      %818 = vmatpush1.msra.mxu0 %v360
      %819 = vmatprep.subr.mxu0 0.0
      %820 = vmatpush1.msra.mxu0 %v361
      %821 = vmatprep.subr.mxu0 0.0
      %822 = vmatpush1.msra.mxu0 %v362
      %823 = vmatprep.subr.mxu0 0.0
      %824 = vmatpush1.msra.mxu0 %v363
      %825 = vmatprep.subr.mxu0 0.0
      %826 = vmatpush1.msra.mxu0 %v364
      %827 = vmatprep.subr.mxu0 0.0
      %828 = vmatpush1.msra.mxu0 %v365
      %829 = vmatprep.subr.mxu0 0.0
      %830 = vmatpush1.msra.mxu0 %v366
      %831 = vmatprep.subr.mxu0 0.0
      %832 = vmatpush1.msra.mxu0 %v367
      %833 = vmatprep.mubr.f32.mxu0 %v744
      %834 = vmatmul.mubr.f32.gmra.mrb[0].mxu0 %v743
      %v835 = vpop.f32.mrb[0].mxu0
      %v836 = vadd.f32 %v399, %v835
      %v837 = vpop.f32.mrb[0].mxu0
      %838 = vmatprep.mubr.f32.mxu0 %v746
      %839 = vmatmul.mubr.f32.gmra.mrb[0].mxu0 %v745
      %v840 = vpop.f32.mrb[0].mxu0
      %v841 = vadd.f32 %v399, %v840
      %v842 = vpop.f32.mrb[0].mxu0
      %843 = vmatprep.mubr.f32.mxu0 %v748
      %844 = vmatmul.mubr.f32.gmra.mrb[0].mxu0 %v747
      %v845 = vpop.f32.mrb[0].mxu0
      %v846 = vadd.f32 %v399, %v845
      %v847 = vpop.f32.mrb[0].mxu0
      %848 = vmatprep.mubr.f32.mxu0 %v750
      %849 = vmatmul.mubr.f32.gmra.mrb[0].mxu0 %v749
      %v850 = vpop.f32.mrb[0].mxu0
      %v851 = vadd.f32 %v399, %v850
      %v852 = vpop.f32.mrb[0].mxu0
      %853 = vmatprep.mubr.f32.mxu0 %v752
      %854 = vmatmul.mubr.f32.gmra.mrb[0].mxu0 %v751
      %v855 = vpop.f32.mrb[0].mxu0
      %v856 = vadd.f32 %v399, %v855
      %v857 = vpop.f32.mrb[0].mxu0
      %858 = vmatprep.mubr.f32.mxu0 %v754
      %859 = vmatmul.mubr.f32.gmra.mrb[0].mxu0 %v753
      %v860 = vpop.f32.mrb[0].mxu0
      %v861 = vadd.f32 %v399, %v860
      %v862 = vpop.f32.mrb[0].mxu0
      %863 = vmatprep.mubr.f32.mxu0 %v756
      %864 = vmatmul.mubr.f32.gmra.mrb[0].mxu0 %v755
      %v865 = vpop.f32.mrb[0].mxu0
      %v866 = vadd.f32 %v399, %v865
      %v867 = vpop.f32.mrb[0].mxu0
      %868 = vmatprep.mubr.f32.mxu0 %v758
      %869 = vmatmul.mubr.f32.gmra.mrb[0].mxu0 %v757
      %v870 = vpop.f32.mrb[0].mxu0
      %v871 = vadd.f32 %v399, %v870
      %v872 = vpop.f32.mrb[0].mxu0
      %873 = vmatprep.mubr.f32.mxu0 %v760
      %874 = vmatmul.mubr.f32.gmra.mrb[0].mxu0 %v759
      %v875 = vpop.f32.mrb[0].mxu0
      %v876 = vadd.f32 %v399, %v875
      %v877 = vpop.f32.mrb[0].mxu0
      %878 = vmatprep.mubr.f32.mxu0 %v762
      %879 = vmatmul.mubr.f32.gmra.mrb[0].mxu0 %v761
      %v880 = vpop.f32.mrb[0].mxu0
      %v881 = vadd.f32 %v399, %v880
      %v882 = vpop.f32.mrb[0].mxu0
      %883 = vmatprep.mubr.f32.mxu0 %v764
      %884 = vmatmul.mubr.f32.gmra.mrb[0].mxu0 %v763
      %v885 = vpop.f32.mrb[0].mxu0
      %v886 = vadd.f32 %v399, %v885
      %v887 = vpop.f32.mrb[0].mxu0
      %888 = vmatprep.mubr.f32.mxu0 %v766
      %889 = vmatmul.mubr.f32.gmra.mrb[0].mxu0 %v765
      %v890 = vpop.f32.mrb[0].mxu0
      %v891 = vadd.f32 %v399, %v890
      %v892 = vpop.f32.mrb[0].mxu0
      %893 = vmatprep.mubr.f32.mxu0 %v768
      %894 = vmatmul.mubr.f32.gmra.mrb[0].mxu0 %v767
      %v895 = vpop.f32.mrb[0].mxu0
      %v896 = vadd.f32 %v399, %v895
      %v897 = vpop.f32.mrb[0].mxu0
      %898 = vdwg.mxu0
      %v899 = vmax.f32 %v836, 0.0
      %v900 = vmax.f32 %v841, 0.0
      %v901 = vmax.f32 %v846, 0.0
      %v902 = vmax.f32 %v851, 0.0
      %v903 = vmax.f32 %v856, 0.0
      %v904 = vmax.f32 %v861, 0.0
      %v905 = vmax.f32 %v866, 0.0
      %v906 = vmax.f32 %v871, 0.0
      %v907 = vmax.f32 %v876, 0.0
      %v908 = vmax.f32 %v881, 0.0
      %v909 = vmax.f32 %v886, 0.0
      %v910 = vmax.f32 %v891, 0.0
      %v911 = vmax.f32 %v896, 0.0
      %s912 = scalar_lea.vmem [#allocation2], 224
      %913 = vst.msk [vmem:[%s912] sm:$0xff] %vm279, %v899
      %914 = vst.msk [vmem:[%s912 + $0x8] sm:$0xff] %vm279, %v900
      %915 = vst.msk [vmem:[%s912 + $0x10] sm:$0xff] %vm279, %v901
      %916 = vst.msk [vmem:[%s912 + $0x18] sm:$0xff] %vm279, %v902
      %917 = vst.msk [vmem:[%s912 + $0x20] sm:$0xff] %vm279, %v903
      %918 = vst.msk [vmem:[%s912 + $0x28] sm:$0xff] %vm279, %v904
      %919 = vst.msk [vmem:[%s912 + $0x30] sm:$0xff] %vm279, %v905
      %920 = vst.msk [vmem:[%s912 + $0x38] sm:$0xff] %vm279, %v906
      %921 = vst.msk [vmem:[%s912 + $0x40] sm:$0xff] %vm279, %v907
      %922 = vst.msk [vmem:[%s912 + $0x48] sm:$0xff] %vm279, %v908
      %923 = vst.msk [vmem:[%s912 + $0x50] sm:$0xff] %vm279, %v909
      %924 = vst.msk [vmem:[%s912 + $0x58] sm:$0xff] %vm279, %v910
      %925 = vst.msk [vmem:[%s912 + $0x60] sm:$0xf] %vm556, %v911
      %s926 = scalar_lea.vmem %s273, 624
      %v927 = vld [vmem:[%s926] sm:$0xff]
      %v928 = vld [vmem:[%s926 + $0x8] sm:$0xff]
      %v929 = vld [vmem:[%s926 + $0x10] sm:$0xff]
      %v930 = vld [vmem:[%s926 + $0x18] sm:$0xff]
      %v931 = vld [vmem:[%s926 + $0x20] sm:$0xff]
      %v932 = vld [vmem:[%s926 + $0x28] sm:$0xff]
      %v933 = vld [vmem:[%s926 + $0x30] sm:$0xff]
      %v934 = vld [vmem:[%s926 + $0x38] sm:$0xff]
      %v935 = vld [vmem:[%s926 + $0x40] sm:$0xff]
      %v936 = vld [vmem:[%s926 + $0x48] sm:$0xff]
      %v937 = vld [vmem:[%s926 + $0x50] sm:$0xff]
      %v938 = vld [vmem:[%s926 + $0x58] sm:$0xff]
      %v939 = vld [vmem:[%s926 + $0x60] sm:$0xff]
      %v940 = vld [vmem:[%s926 + $0x68] sm:$0xff]
      %v941 = vld [vmem:[%s926 + $0x70] sm:$0xff]
      %v942 = vld [vmem:[%s926 + $0x78] sm:$0xff]
      %v943 = vld [vmem:[%s926 + $0x80] sm:$0xff]
      %v944 = vld [vmem:[%s926 + $0x88] sm:$0xff]
      %v945 = vld [vmem:[%s926 + $0x90] sm:$0xff]
      %v946 = vld [vmem:[%s926 + $0x98] sm:$0xff]
      %v947 = vld [vmem:[%s926 + $0xa0] sm:$0xff]
      %v948 = vld [vmem:[%s926 + $0xa8] sm:$0xff]
      %v949 = vld [vmem:[%s926 + $0xb0] sm:$0xff]
      %v950 = vld [vmem:[%s926 + $0xb8] sm:$0xff]
      %v951 = vld [vmem:[%s926 + $0xc0] sm:$0xf]
      %v952 = vld [vmem:[%s926 + $0xc8] sm:$0xf]
      %953 = vmatprep.subr.mxu0 0.0
      %954 = vmatpush1.msra.mxu0 %v336
      %955 = vmatprep.subr.mxu0 0.0
      %956 = vmatpush1.msra.mxu0 %v337
      %957 = vmatprep.subr.mxu0 0.0
      %958 = vmatpush1.msra.mxu0 %v338
      %959 = vmatprep.subr.mxu0 0.0
      %960 = vmatpush1.msra.mxu0 %v339
      %961 = vmatprep.subr.mxu0 0.0
      %962 = vmatpush1.msra.mxu0 %v340
      %963 = vmatprep.subr.mxu0 0.0
      %964 = vmatpush1.msra.mxu0 %v341
      %965 = vmatprep.subr.mxu0 0.0
      %966 = vmatpush1.msra.mxu0 %v342
      %967 = vmatprep.subr.mxu0 0.0
      %968 = vmatpush1.msra.mxu0 %v343
      %969 = vmatprep.subr.mxu0 0.0
      %970 = vmatpush1.msra.mxu0 %v344
      %971 = vmatprep.subr.mxu0 0.0
      %972 = vmatpush1.msra.mxu0 %v345
      %973 = vmatprep.subr.mxu0 0.0
      %974 = vmatpush1.msra.mxu0 %v346
      %975 = vmatprep.subr.mxu0 0.0
      %976 = vmatpush1.msra.mxu0 %v347
      %977 = vmatprep.subr.mxu0 0.0
      %978 = vmatpush1.msra.mxu0 %v348
      %979 = vmatprep.subr.mxu0 0.0
      %980 = vmatpush1.msra.mxu0 %v349
      %981 = vmatprep.subr.mxu0 0.0
      %982 = vmatpush1.msra.mxu0 %v350
      %983 = vmatprep.subr.mxu0 0.0
      %984 = vmatpush1.msra.mxu0 %v351
      %985 = vmatprep.subr.mxu0 0.0
      %986 = vmatpush1.msra.mxu0 %v352
      %987 = vmatprep.subr.mxu0 0.0
      %988 = vmatpush1.msra.mxu0 %v353
      %989 = vmatprep.subr.mxu0 0.0
      %990 = vmatpush1.msra.mxu0 %v354
      %991 = vmatprep.subr.mxu0 0.0
      %992 = vmatpush1.msra.mxu0 %v355
      %993 = vmatprep.subr.mxu0 0.0
      %994 = vmatpush1.msra.mxu0 %v356
      %995 = vmatprep.subr.mxu0 0.0
      %996 = vmatpush1.msra.mxu0 %v357
      %997 = vmatprep.subr.mxu0 0.0
      %998 = vmatpush1.msra.mxu0 %v358
      %999 = vmatprep.subr.mxu0 0.0
      %1000 = vmatpush1.msra.mxu0 %v359
      %1001 = vmatprep.subr.mxu0 0.0
      %1002 = vmatpush1.msra.mxu0 %v360
      %1003 = vmatprep.subr.mxu0 0.0
      %1004 = vmatpush1.msra.mxu0 %v361
      %1005 = vmatprep.subr.mxu0 0.0
      %1006 = vmatpush1.msra.mxu0 %v362
      %1007 = vmatprep.subr.mxu0 0.0
      %1008 = vmatpush1.msra.mxu0 %v363
      %1009 = vmatprep.subr.mxu0 0.0
      %1010 = vmatpush1.msra.mxu0 %v364
      %1011 = vmatprep.subr.mxu0 0.0
      %1012 = vmatpush1.msra.mxu0 %v365
      %1013 = vmatprep.subr.mxu0 0.0
      %1014 = vmatpush1.msra.mxu0 %v366
      %1015 = vmatprep.subr.mxu0 0.0
      %1016 = vmatpush1.msra.mxu0 %v367
      %1017 = vmatprep.mubr.f32.mxu0 %v928
      %1018 = vmatmul.mubr.f32.gmra.mrb[0].mxu0 %v927
      %v1019 = vpop.f32.mrb[0].mxu0
      %v1020 = vadd.f32 %v399, %v1019
      %v1021 = vpop.f32.mrb[0].mxu0
      %1022 = vmatprep.mubr.f32.mxu0 %v930
      %1023 = vmatmul.mubr.f32.gmra.mrb[0].mxu0 %v929
      %v1024 = vpop.f32.mrb[0].mxu0
      %v1025 = vadd.f32 %v399, %v1024
      %v1026 = vpop.f32.mrb[0].mxu0
      %1027 = vmatprep.mubr.f32.mxu0 %v932
      %1028 = vmatmul.mubr.f32.gmra.mrb[0].mxu0 %v931
      %v1029 = vpop.f32.mrb[0].mxu0
      %v1030 = vadd.f32 %v399, %v1029
      %v1031 = vpop.f32.mrb[0].mxu0
      %1032 = vmatprep.mubr.f32.mxu0 %v934
      %1033 = vmatmul.mubr.f32.gmra.mrb[0].mxu0 %v933
      %v1034 = vpop.f32.mrb[0].mxu0
      %v1035 = vadd.f32 %v399, %v1034
      %v1036 = vpop.f32.mrb[0].mxu0
      %1037 = vmatprep.mubr.f32.mxu0 %v936
      %1038 = vmatmul.mubr.f32.gmra.mrb[0].mxu0 %v935
      %v1039 = vpop.f32.mrb[0].mxu0
      %v1040 = vadd.f32 %v399, %v1039
      %v1041 = vpop.f32.mrb[0].mxu0
      %1042 = vmatprep.mubr.f32.mxu0 %v938
      %1043 = vmatmul.mubr.f32.gmra.mrb[0].mxu0 %v937
      %v1044 = vpop.f32.mrb[0].mxu0
      %v1045 = vadd.f32 %v399, %v1044
      %v1046 = vpop.f32.mrb[0].mxu0
      %1047 = vmatprep.mubr.f32.mxu0 %v940
      %1048 = vmatmul.mubr.f32.gmra.mrb[0].mxu0 %v939
      %v1049 = vpop.f32.mrb[0].mxu0
      %v1050 = vadd.f32 %v399, %v1049
      %v1051 = vpop.f32.mrb[0].mxu0
      %1052 = vmatprep.mubr.f32.mxu0 %v942
      %1053 = vmatmul.mubr.f32.gmra.mrb[0].mxu0 %v941
      %v1054 = vpop.f32.mrb[0].mxu0
      %v1055 = vadd.f32 %v399, %v1054
      %v1056 = vpop.f32.mrb[0].mxu0
      %1057 = vmatprep.mubr.f32.mxu0 %v944
      %1058 = vmatmul.mubr.f32.gmra.mrb[0].mxu0 %v943
      %v1059 = vpop.f32.mrb[0].mxu0
      %v1060 = vadd.f32 %v399, %v1059
      %v1061 = vpop.f32.mrb[0].mxu0
      %1062 = vmatprep.mubr.f32.mxu0 %v946
      %1063 = vmatmul.mubr.f32.gmra.mrb[0].mxu0 %v945
      %v1064 = vpop.f32.mrb[0].mxu0
      %v1065 = vadd.f32 %v399, %v1064
      %v1066 = vpop.f32.mrb[0].mxu0
      %1067 = vmatprep.mubr.f32.mxu0 %v948
      %1068 = vmatmul.mubr.f32.gmra.mrb[0].mxu0 %v947
      %v1069 = vpop.f32.mrb[0].mxu0
      %v1070 = vadd.f32 %v399, %v1069
      %v1071 = vpop.f32.mrb[0].mxu0
      %1072 = vmatprep.mubr.f32.mxu0 %v950
      %1073 = vmatmul.mubr.f32.gmra.mrb[0].mxu0 %v949
      %v1074 = vpop.f32.mrb[0].mxu0
      %v1075 = vadd.f32 %v399, %v1074
      %v1076 = vpop.f32.mrb[0].mxu0
      %1077 = vmatprep.mubr.f32.mxu0 %v952
      %1078 = vmatmul.mubr.f32.gmra.mrb[0].mxu0 %v951
      %v1079 = vpop.f32.mrb[0].mxu0
      %v1080 = vadd.f32 %v399, %v1079
      %v1081 = vpop.f32.mrb[0].mxu0
      %1082 = vdwg.mxu0
      %v1083 = vmax.f32 %v1020, 0.0
      %v1084 = vmax.f32 %v1025, 0.0
      %v1085 = vmax.f32 %v1030, 0.0
      %v1086 = vmax.f32 %v1035, 0.0
      %v1087 = vmax.f32 %v1040, 0.0
      %v1088 = vmax.f32 %v1045, 0.0
      %v1089 = vmax.f32 %v1050, 0.0
      %v1090 = vmax.f32 %v1055, 0.0
      %v1091 = vmax.f32 %v1060, 0.0
      %v1092 = vmax.f32 %v1065, 0.0
      %v1093 = vmax.f32 %v1070, 0.0
      %v1094 = vmax.f32 %v1075, 0.0
      %v1095 = vmax.f32 %v1080, 0.0
      %s1096 = scalar_lea.vmem [#allocation2], 336
      %1097 = vst.msk [vmem:[%s1096] sm:$0xff] %vm279, %v1083
      %1098 = vst.msk [vmem:[%s1096 + $0x8] sm:$0xff] %vm279, %v1084
      %1099 = vst.msk [vmem:[%s1096 + $0x10] sm:$0xff] %vm279, %v1085
      %1100 = vst.msk [vmem:[%s1096 + $0x18] sm:$0xff] %vm279, %v1086
      %1101 = vst.msk [vmem:[%s1096 + $0x20] sm:$0xff] %vm279, %v1087
      %1102 = vst.msk [vmem:[%s1096 + $0x28] sm:$0xff] %vm279, %v1088
      %1103 = vst.msk [vmem:[%s1096 + $0x30] sm:$0xff] %vm279, %v1089
      %1104 = vst.msk [vmem:[%s1096 + $0x38] sm:$0xff] %vm279, %v1090
      %1105 = vst.msk [vmem:[%s1096 + $0x40] sm:$0xff] %vm279, %v1091
      %1106 = vst.msk [vmem:[%s1096 + $0x48] sm:$0xff] %vm279, %v1092
      %1107 = vst.msk [vmem:[%s1096 + $0x50] sm:$0xff] %vm279, %v1093
      %1108 = vst.msk [vmem:[%s1096 + $0x58] sm:$0xff] %vm279, %v1094
      %1109 = vst.msk [vmem:[%s1096 + $0x60] sm:$0xf] %vm556, %v1095
      %v1110 = vld [vmem:[#allocation2] sm:$0xff]
      %v1111 = vld [vmem:[#allocation2 + $0x8] sm:$0xff]
      %v1112 = vld [vmem:[#allocation2 + $0x10] sm:$0xff]
      %v1113 = vld [vmem:[#allocation2 + $0x18] sm:$0xff]
      %v1114 = vld [vmem:[#allocation2 + $0x20] sm:$0xff]
      %v1115 = vld [vmem:[#allocation2 + $0x28] sm:$0xff]
      %v1116 = vld [vmem:[#allocation2 + $0x30] sm:$0xff]
      %v1117 = vld [vmem:[#allocation2 + $0x38] sm:$0xff]
      %v1118 = vld [vmem:[#allocation2 + $0x40] sm:$0xff]
      %v1119 = vld [vmem:[#allocation2 + $0x48] sm:$0xff]
      %v1120 = vld [vmem:[#allocation2 + $0x50] sm:$0xff]
      %v1121 = vld [vmem:[#allocation2 + $0x58] sm:$0xff]
      %v1122 = vld [vmem:[#allocation2 + $0x60] sm:$0xf]
      %v1123 = vld [vmem:[%s3] sm:$0xff]
      %v1124 = vld [vmem:[%s3 + $0x8] sm:$0xff]
      %v1125 = vld [vmem:[%s3 + $0x10] sm:$0xff]
      %v1126 = vld [vmem:[%s3 + $0x18] sm:$0xff]
      %v1127 = vld [vmem:[%s728] sm:$0xff]
      %v1128 = vld [vmem:[%s728 + $0x8] sm:$0xff]
      %v1129 = vld [vmem:[%s728 + $0x10] sm:$0xff]
      %v1130 = vld [vmem:[%s728 + $0x18] sm:$0xff]
      %v1131 = vld [vmem:[%s728 + $0x20] sm:$0xff]
      %v1132 = vld [vmem:[%s728 + $0x28] sm:$0xff]
      %v1133 = vld [vmem:[%s728 + $0x30] sm:$0xff]
      %v1134 = vld [vmem:[%s728 + $0x38] sm:$0xff]
      %v1135 = vld [vmem:[%s728 + $0x40] sm:$0xff]
      %v1136 = vld [vmem:[%s728 + $0x48] sm:$0xff]
      %v1137 = vld [vmem:[%s728 + $0x50] sm:$0xff]
      %v1138 = vld [vmem:[%s728 + $0x58] sm:$0xff]
      %v1139 = vld [vmem:[%s728 + $0x60] sm:$0xf]
      %s1140 = scalar_lea.vmem %s3, 32
      %v1141 = vld [vmem:[%s1140] sm:$0xff]
      %v1142 = vld [vmem:[%s1140 + $0x8] sm:$0xff]
      %v1143 = vld [vmem:[%s1140 + $0x10] sm:$0xff]
      %v1144 = vld [vmem:[%s1140 + $0x18] sm:$0xff]
      %v1146 = vsel %vm279, %v1127, 0
      %v1149 = vsel %vm279, %v1128, 0
      %v1152 = vsel %vm279, %v1129, 0
      %v1155 = vsel %vm279, %v1130, 0
      %v1158 = vsel %vm279, %v1131, 0
      %v1161 = vsel %vm279, %v1132, 0
      %v1164 = vsel %vm279, %v1133, 0
      %v1167 = vsel %vm279, %v1134, 0
      %v1170 = vsel %vm279, %v1135, 0
      %v1173 = vsel %vm279, %v1136, 0
      %v1176 = vsel %vm279, %v1137, 0
      %v1179 = vsel %vm279, %v1138, 0
      %v1182 = vsel %vm279, %v1139, 0
      %1184 = vmatprep.subr.mxu0 0.0
      %1185 = vmatpush1.msra.mxu0 %v1141
      %1186 = vmatprep.subr.mxu0 0.0
      %1187 = vmatpush1.msra.mxu0 %v1142
      %1188 = vmatprep.subr.mxu0 0.0
      %1189 = vmatpush1.msra.mxu0 %v1143
      %1190 = vmatprep.subr.mxu0 0.0
      %1191 = vmatpush1.msra.mxu0 %v1144
      %1192 = vmatprep.subr.mxu0 0.0
      %1193 = vmatpush1.msra.mxu0 0.0
      %1194 = vmatprep.subr.mxu0 0.0
      %1195 = vmatpush1.msra.mxu0 0.0
      %1196 = vmatprep.subr.mxu0 0.0
      %1197 = vmatpush1.msra.mxu0 0.0
      %1198 = vmatprep.subr.mxu0 0.0
      %1199 = vmatpush1.msra.mxu0 0.0
      %1200 = vmatprep.subr.mxu0 0.0
      %1201 = vmatpush1.msra.mxu0 0.0
      %1202 = vmatprep.subr.mxu0 0.0
      %1203 = vmatpush1.msra.mxu0 0.0
      %1204 = vmatprep.subr.mxu0 0.0
      %1205 = vmatpush1.msra.mxu0 0.0
      %1206 = vmatprep.subr.mxu0 0.0
      %1207 = vmatpush1.msra.mxu0 0.0
      %1208 = vmatprep.subr.mxu0 0.0
      %1209 = vmatpush1.msra.mxu0 0.0
      %1210 = vmatprep.subr.mxu0 0.0
      %1211 = vmatpush1.msra.mxu0 0.0
      %1212 = vmatprep.subr.mxu0 0.0
      %1213 = vmatpush1.msra.mxu0 0.0
      %1214 = vmatprep.subr.mxu0 0.0
      %1215 = vmatpush1.msra.mxu0 0.0
      %1216 = vmatprep.subr.mxu0 0.0
      %1217 = vmatpush1.msra.mxu0 0.0
      %1218 = vmatprep.subr.mxu0 0.0
      %1219 = vmatpush1.msra.mxu0 0.0
      %1220 = vmatprep.subr.mxu0 0.0
      %1221 = vmatpush1.msra.mxu0 0.0
      %1222 = vmatprep.subr.mxu0 0.0
      %1223 = vmatpush1.msra.mxu0 0.0
      %1224 = vmatprep.subr.mxu0 0.0
      %1225 = vmatpush1.msra.mxu0 0.0
      %1226 = vmatprep.subr.mxu0 0.0
      %1227 = vmatpush1.msra.mxu0 0.0
      %1228 = vmatprep.subr.mxu0 0.0
      %1229 = vmatpush1.msra.mxu0 0.0
      %1230 = vmatprep.subr.mxu0 0.0
      %1231 = vmatpush1.msra.mxu0 0.0
      %1232 = vmatprep.subr.mxu0 0.0
      %1233 = vmatpush1.msra.mxu0 0.0
      %1234 = vmatprep.subr.mxu0 0.0
      %1235 = vmatpush1.msra.mxu0 0.0
      %1236 = vmatprep.subr.mxu0 0.0
      %1237 = vmatpush1.msra.mxu0 0.0
      %1238 = vmatprep.subr.mxu0 0.0
      %1239 = vmatpush1.msra.mxu0 0.0
      %1240 = vmatprep.subr.mxu0 0.0
      %1241 = vmatpush1.msra.mxu0 0.0
      %1242 = vmatprep.subr.mxu0 0.0
      %1243 = vmatpush1.msra.mxu0 0.0
      %1244 = vmatprep.subr.mxu0 0.0
      %1245 = vmatpush1.msra.mxu0 0.0
      %1246 = vmatprep.subr.mxu0 0.0
      %1247 = vmatpush1.msra.mxu0 0.0
      %1248 = vmatprep.mubr.f32.mxu0 0.0
      %1249 = vmatmul.mubr.f32.gmra.mrb[0].mxu0 %v1146
      %v1250 = vpop.f32.mrb[0].mxu0
      %v1251 = vadd.f32 0.0, %v1250
      %v1252 = vpop.f32.mrb[0].mxu0
      %1253 = vmatprep.mubr.f32.mxu0 0.0
      %1254 = vmatmul.mubr.f32.gmra.mrb[0].mxu0 %v1149
      %v1255 = vpop.f32.mrb[0].mxu0
      %v1256 = vadd.f32 0.0, %v1255
      %v1257 = vpop.f32.mrb[0].mxu0
      %1258 = vmatprep.mubr.f32.mxu0 0.0
      %1259 = vmatmul.mubr.f32.gmra.mrb[0].mxu0 %v1152
      %v1260 = vpop.f32.mrb[0].mxu0
      %v1261 = vadd.f32 0.0, %v1260
      %v1262 = vpop.f32.mrb[0].mxu0
      %1263 = vmatprep.mubr.f32.mxu0 0.0
      %1264 = vmatmul.mubr.f32.gmra.mrb[0].mxu0 %v1155
      %v1265 = vpop.f32.mrb[0].mxu0
      %v1266 = vadd.f32 0.0, %v1265
      %v1267 = vpop.f32.mrb[0].mxu0
      %1268 = vmatprep.mubr.f32.mxu0 0.0
      %1269 = vmatmul.mubr.f32.gmra.mrb[0].mxu0 %v1158
      %v1270 = vpop.f32.mrb[0].mxu0
      %v1271 = vadd.f32 0.0, %v1270
      %v1272 = vpop.f32.mrb[0].mxu0
      %1273 = vmatprep.mubr.f32.mxu0 0.0
      %1274 = vmatmul.mubr.f32.gmra.mrb[0].mxu0 %v1161
      %v1275 = vpop.f32.mrb[0].mxu0
      %v1276 = vadd.f32 0.0, %v1275
      %v1277 = vpop.f32.mrb[0].mxu0
      %1278 = vmatprep.mubr.f32.mxu0 0.0
      %1279 = vmatmul.mubr.f32.gmra.mrb[0].mxu0 %v1164
      %v1280 = vpop.f32.mrb[0].mxu0
      %v1281 = vadd.f32 0.0, %v1280
      %v1282 = vpop.f32.mrb[0].mxu0
      %1283 = vmatprep.mubr.f32.mxu0 0.0
      %1284 = vmatmul.mubr.f32.gmra.mrb[0].mxu0 %v1167
      %v1285 = vpop.f32.mrb[0].mxu0
      %v1286 = vadd.f32 0.0, %v1285
      %v1287 = vpop.f32.mrb[0].mxu0
      %1288 = vmatprep.mubr.f32.mxu0 0.0
      %1289 = vmatmul.mubr.f32.gmra.mrb[0].mxu0 %v1170
      %v1290 = vpop.f32.mrb[0].mxu0
      %v1291 = vadd.f32 0.0, %v1290
      %v1292 = vpop.f32.mrb[0].mxu0
      %1293 = vmatprep.mubr.f32.mxu0 0.0
      %1294 = vmatmul.mubr.f32.gmra.mrb[0].mxu0 %v1173
      %v1295 = vpop.f32.mrb[0].mxu0
      %v1296 = vadd.f32 0.0, %v1295
      %v1297 = vpop.f32.mrb[0].mxu0
      %1298 = vmatprep.mubr.f32.mxu0 0.0
      %1299 = vmatmul.mubr.f32.gmra.mrb[0].mxu0 %v1176
      %v1300 = vpop.f32.mrb[0].mxu0
      %v1301 = vadd.f32 0.0, %v1300
      %v1302 = vpop.f32.mrb[0].mxu0
      %1303 = vmatprep.mubr.f32.mxu0 0.0
      %1304 = vmatmul.mubr.f32.gmra.mrb[0].mxu0 %v1179
      %v1305 = vpop.f32.mrb[0].mxu0
      %v1306 = vadd.f32 0.0, %v1305
      %v1307 = vpop.f32.mrb[0].mxu0
      %1308 = vmatprep.mubr.f32.mxu0 0.0
      %1309 = vmatmul.mubr.f32.gmra.mrb[0].mxu0 %v1182
      %v1310 = vpop.f32.mrb[0].mxu0
      %v1311 = vadd.f32 0.0, %v1310
      %v1312 = vpop.f32.mrb[0].mxu0
      %1313 = vdwg.mxu0
      %v1315 = vsel %vm279, %v1110, 0
      %v1318 = vsel %vm279, %v1111, 0
      %v1321 = vsel %vm279, %v1112, 0
      %v1324 = vsel %vm279, %v1113, 0
      %v1327 = vsel %vm279, %v1114, 0
      %v1330 = vsel %vm279, %v1115, 0
      %v1333 = vsel %vm279, %v1116, 0
      %v1336 = vsel %vm279, %v1117, 0
      %v1339 = vsel %vm279, %v1118, 0
      %v1342 = vsel %vm279, %v1119, 0
      %v1345 = vsel %vm279, %v1120, 0
      %v1348 = vsel %vm279, %v1121, 0
      %v1351 = vsel %vm279, %v1122, 0
      %1353 = vmatprep.subr.mxu0 0.0
      %1354 = vmatpush1.msra.mxu0 %v1123
      %1355 = vmatprep.subr.mxu0 0.0
      %1356 = vmatpush1.msra.mxu0 %v1124
      %1357 = vmatprep.subr.mxu0 0.0
      %1358 = vmatpush1.msra.mxu0 %v1125
      %1359 = vmatprep.subr.mxu0 0.0
      %1360 = vmatpush1.msra.mxu0 %v1126
      %1361 = vmatprep.subr.mxu0 0.0
      %1362 = vmatpush1.msra.mxu0 0.0
      %1363 = vmatprep.subr.mxu0 0.0
      %1364 = vmatpush1.msra.mxu0 0.0
      %1365 = vmatprep.subr.mxu0 0.0
      %1366 = vmatpush1.msra.mxu0 0.0
      %1367 = vmatprep.subr.mxu0 0.0
      %1368 = vmatpush1.msra.mxu0 0.0
      %1369 = vmatprep.subr.mxu0 0.0
      %1370 = vmatpush1.msra.mxu0 0.0
      %1371 = vmatprep.subr.mxu0 0.0
      %1372 = vmatpush1.msra.mxu0 0.0
      %1373 = vmatprep.subr.mxu0 0.0
      %1374 = vmatpush1.msra.mxu0 0.0
      %1375 = vmatprep.subr.mxu0 0.0
      %1376 = vmatpush1.msra.mxu0 0.0
      %1377 = vmatprep.subr.mxu0 0.0
      %1378 = vmatpush1.msra.mxu0 0.0
      %1379 = vmatprep.subr.mxu0 0.0
      %1380 = vmatpush1.msra.mxu0 0.0
      %1381 = vmatprep.subr.mxu0 0.0
      %1382 = vmatpush1.msra.mxu0 0.0
      %1383 = vmatprep.subr.mxu0 0.0
      %1384 = vmatpush1.msra.mxu0 0.0
      %1385 = vmatprep.subr.mxu0 0.0
      %1386 = vmatpush1.msra.mxu0 0.0
      %1387 = vmatprep.subr.mxu0 0.0
      %1388 = vmatpush1.msra.mxu0 0.0
      %1389 = vmatprep.subr.mxu0 0.0
      %1390 = vmatpush1.msra.mxu0 0.0
      %1391 = vmatprep.subr.mxu0 0.0
      %1392 = vmatpush1.msra.mxu0 0.0
      %1393 = vmatprep.subr.mxu0 0.0
      %1394 = vmatpush1.msra.mxu0 0.0
      %1395 = vmatprep.subr.mxu0 0.0
      %1396 = vmatpush1.msra.mxu0 0.0
      %1397 = vmatprep.subr.mxu0 0.0
      %1398 = vmatpush1.msra.mxu0 0.0
      %1399 = vmatprep.subr.mxu0 0.0
      %1400 = vmatpush1.msra.mxu0 0.0
      %1401 = vmatprep.subr.mxu0 0.0
      %1402 = vmatpush1.msra.mxu0 0.0
      %1403 = vmatprep.subr.mxu0 0.0
      %1404 = vmatpush1.msra.mxu0 0.0
      %1405 = vmatprep.subr.mxu0 0.0
      %1406 = vmatpush1.msra.mxu0 0.0
      %1407 = vmatprep.subr.mxu0 0.0
      %1408 = vmatpush1.msra.mxu0 0.0
      %1409 = vmatprep.subr.mxu0 0.0
      %1410 = vmatpush1.msra.mxu0 0.0
      %1411 = vmatprep.subr.mxu0 0.0
      %1412 = vmatpush1.msra.mxu0 0.0
      %1413 = vmatprep.subr.mxu0 0.0
      %1414 = vmatpush1.msra.mxu0 0.0
      %1415 = vmatprep.subr.mxu0 0.0
      %1416 = vmatpush1.msra.mxu0 0.0
      %1417 = vmatprep.mubr.f32.mxu0 0.0
      %1418 = vmatmul.mubr.f32.gmra.mrb[0].mxu0 %v1315
      %v1419 = vpop.f32.mrb[0].mxu0
      %v1420 = vadd.f32 %v1251, %v1419
      %v1421 = vpop.f32.mrb[0].mxu0
      %1422 = vmatprep.mubr.f32.mxu0 0.0
      %1423 = vmatmul.mubr.f32.gmra.mrb[0].mxu0 %v1318
      %v1424 = vpop.f32.mrb[0].mxu0
      %v1425 = vadd.f32 %v1256, %v1424
      %v1426 = vpop.f32.mrb[0].mxu0
      %1427 = vmatprep.mubr.f32.mxu0 0.0
      %1428 = vmatmul.mubr.f32.gmra.mrb[0].mxu0 %v1321
      %v1429 = vpop.f32.mrb[0].mxu0
      %v1430 = vadd.f32 %v1261, %v1429
      %v1431 = vpop.f32.mrb[0].mxu0
      %1432 = vmatprep.mubr.f32.mxu0 0.0
      %1433 = vmatmul.mubr.f32.gmra.mrb[0].mxu0 %v1324
      %v1434 = vpop.f32.mrb[0].mxu0
      %v1435 = vadd.f32 %v1266, %v1434
      %v1436 = vpop.f32.mrb[0].mxu0
      %1437 = vmatprep.mubr.f32.mxu0 0.0
      %1438 = vmatmul.mubr.f32.gmra.mrb[0].mxu0 %v1327
      %v1439 = vpop.f32.mrb[0].mxu0
      %v1440 = vadd.f32 %v1271, %v1439
      %v1441 = vpop.f32.mrb[0].mxu0
      %1442 = vmatprep.mubr.f32.mxu0 0.0
      %1443 = vmatmul.mubr.f32.gmra.mrb[0].mxu0 %v1330
      %v1444 = vpop.f32.mrb[0].mxu0
      %v1445 = vadd.f32 %v1276, %v1444
      %v1446 = vpop.f32.mrb[0].mxu0
      %1447 = vmatprep.mubr.f32.mxu0 0.0
      %1448 = vmatmul.mubr.f32.gmra.mrb[0].mxu0 %v1333
      %v1449 = vpop.f32.mrb[0].mxu0
      %v1450 = vadd.f32 %v1281, %v1449
      %v1451 = vpop.f32.mrb[0].mxu0
      %1452 = vmatprep.mubr.f32.mxu0 0.0
      %1453 = vmatmul.mubr.f32.gmra.mrb[0].mxu0 %v1336
      %v1454 = vpop.f32.mrb[0].mxu0
      %v1455 = vadd.f32 %v1286, %v1454
      %v1456 = vpop.f32.mrb[0].mxu0
      %1457 = vmatprep.mubr.f32.mxu0 0.0
      %1458 = vmatmul.mubr.f32.gmra.mrb[0].mxu0 %v1339
      %v1459 = vpop.f32.mrb[0].mxu0
      %v1460 = vadd.f32 %v1291, %v1459
      %v1461 = vpop.f32.mrb[0].mxu0
      %1462 = vmatprep.mubr.f32.mxu0 0.0
      %1463 = vmatmul.mubr.f32.gmra.mrb[0].mxu0 %v1342
      %v1464 = vpop.f32.mrb[0].mxu0
      %v1465 = vadd.f32 %v1296, %v1464
      %v1466 = vpop.f32.mrb[0].mxu0
      %1467 = vmatprep.mubr.f32.mxu0 0.0
      %1468 = vmatmul.mubr.f32.gmra.mrb[0].mxu0 %v1345
      %v1469 = vpop.f32.mrb[0].mxu0
      %v1470 = vadd.f32 %v1301, %v1469
      %v1471 = vpop.f32.mrb[0].mxu0
      %1472 = vmatprep.mubr.f32.mxu0 0.0
      %1473 = vmatmul.mubr.f32.gmra.mrb[0].mxu0 %v1348
      %v1474 = vpop.f32.mrb[0].mxu0
      %v1475 = vadd.f32 %v1306, %v1474
      %v1476 = vpop.f32.mrb[0].mxu0
      %1477 = vmatprep.mubr.f32.mxu0 0.0
      %1478 = vmatmul.mubr.f32.gmra.mrb[0].mxu0 %v1351
      %v1479 = vpop.f32.mrb[0].mxu0
      %v1480 = vadd.f32 %v1311, %v1479
      %v1481 = vpop.f32.mrb[0].mxu0
      %1482 = vdwg.mxu0
      %v1483 = vld [vmem:[#allocation2 + $0x1] sm:$0xff]
      %v1484 = vld [vmem:[#allocation2 + $0x9] sm:$0xff]
      %v1485 = vld [vmem:[#allocation2 + $0x11] sm:$0xff]
      %v1486 = vld [vmem:[#allocation2 + $0x19] sm:$0xff]
      %v1487 = vld [vmem:[#allocation2 + $0x21] sm:$0xff]
      %v1488 = vld [vmem:[#allocation2 + $0x29] sm:$0xff]
      %v1489 = vld [vmem:[#allocation2 + $0x31] sm:$0xff]
      %v1490 = vld [vmem:[#allocation2 + $0x39] sm:$0xff]
      %v1491 = vld [vmem:[#allocation2 + $0x41] sm:$0xff]
      %v1492 = vld [vmem:[#allocation2 + $0x49] sm:$0xff]
      %v1493 = vld [vmem:[#allocation2 + $0x51] sm:$0xff]
      %v1494 = vld [vmem:[#allocation2 + $0x59] sm:$0xff]
      %v1495 = vld [vmem:[#allocation2 + $0x61] sm:$0xf]
      %s1496 = scalar_lea.vmem %s3, 64
      %v1497 = vld [vmem:[%s1496] sm:$0xff]
      %v1498 = vld [vmem:[%s1496 + $0x8] sm:$0xff]
      %v1499 = vld [vmem:[%s1496 + $0x10] sm:$0xff]
      %v1500 = vld [vmem:[%s1496 + $0x18] sm:$0xff]
      %v1502 = vsel %vm279, %v1483, 0
      %v1505 = vsel %vm279, %v1484, 0
      %v1508 = vsel %vm279, %v1485, 0
      %v1511 = vsel %vm279, %v1486, 0
      %v1514 = vsel %vm279, %v1487, 0
      %v1517 = vsel %vm279, %v1488, 0
      %v1520 = vsel %vm279, %v1489, 0
      %v1523 = vsel %vm279, %v1490, 0
      %v1526 = vsel %vm279, %v1491, 0
      %v1529 = vsel %vm279, %v1492, 0
      %v1532 = vsel %vm279, %v1493, 0
      %v1535 = vsel %vm279, %v1494, 0
      %v1538 = vsel %vm279, %v1495, 0
      %1540 = vmatprep.subr.mxu0 0.0
      %1541 = vmatpush1.msra.mxu0 %v1497
      %1542 = vmatprep.subr.mxu0 0.0
      %1543 = vmatpush1.msra.mxu0 %v1498
      %1544 = vmatprep.subr.mxu0 0.0
      %1545 = vmatpush1.msra.mxu0 %v1499
      %1546 = vmatprep.subr.mxu0 0.0
      %1547 = vmatpush1.msra.mxu0 %v1500
      %1548 = vmatprep.subr.mxu0 0.0
      %1549 = vmatpush1.msra.mxu0 0.0
      %1550 = vmatprep.subr.mxu0 0.0
      %1551 = vmatpush1.msra.mxu0 0.0
      %1552 = vmatprep.subr.mxu0 0.0
      %1553 = vmatpush1.msra.mxu0 0.0
      %1554 = vmatprep.subr.mxu0 0.0
      %1555 = vmatpush1.msra.mxu0 0.0
      %1556 = vmatprep.subr.mxu0 0.0
      %1557 = vmatpush1.msra.mxu0 0.0
      %1558 = vmatprep.subr.mxu0 0.0
      %1559 = vmatpush1.msra.mxu0 0.0
      %1560 = vmatprep.subr.mxu0 0.0
      %1561 = vmatpush1.msra.mxu0 0.0
      %1562 = vmatprep.subr.mxu0 0.0
      %1563 = vmatpush1.msra.mxu0 0.0
      %1564 = vmatprep.subr.mxu0 0.0
      %1565 = vmatpush1.msra.mxu0 0.0
      %1566 = vmatprep.subr.mxu0 0.0
      %1567 = vmatpush1.msra.mxu0 0.0
      %1568 = vmatprep.subr.mxu0 0.0
      %1569 = vmatpush1.msra.mxu0 0.0
      %1570 = vmatprep.subr.mxu0 0.0
      %1571 = vmatpush1.msra.mxu0 0.0
      %1572 = vmatprep.subr.mxu0 0.0
      %1573 = vmatpush1.msra.mxu0 0.0
      %1574 = vmatprep.subr.mxu0 0.0
      %1575 = vmatpush1.msra.mxu0 0.0
      %1576 = vmatprep.subr.mxu0 0.0
      %1577 = vmatpush1.msra.mxu0 0.0
      %1578 = vmatprep.subr.mxu0 0.0
      %1579 = vmatpush1.msra.mxu0 0.0
      %1580 = vmatprep.subr.mxu0 0.0
      %1581 = vmatpush1.msra.mxu0 0.0
      %1582 = vmatprep.subr.mxu0 0.0
      %1583 = vmatpush1.msra.mxu0 0.0
      %1584 = vmatprep.subr.mxu0 0.0
      %1585 = vmatpush1.msra.mxu0 0.0
      %1586 = vmatprep.subr.mxu0 0.0
      %1587 = vmatpush1.msra.mxu0 0.0
      %1588 = vmatprep.subr.mxu0 0.0
      %1589 = vmatpush1.msra.mxu0 0.0
      %1590 = vmatprep.subr.mxu0 0.0
      %1591 = vmatpush1.msra.mxu0 0.0
      %1592 = vmatprep.subr.mxu0 0.0
      %1593 = vmatpush1.msra.mxu0 0.0
      %1594 = vmatprep.subr.mxu0 0.0
      %1595 = vmatpush1.msra.mxu0 0.0
      %1596 = vmatprep.subr.mxu0 0.0
      %1597 = vmatpush1.msra.mxu0 0.0
      %1598 = vmatprep.subr.mxu0 0.0
      %1599 = vmatpush1.msra.mxu0 0.0
      %1600 = vmatprep.subr.mxu0 0.0
      %1601 = vmatpush1.msra.mxu0 0.0
      %1602 = vmatprep.subr.mxu0 0.0
      %1603 = vmatpush1.msra.mxu0 0.0
      %1604 = vmatprep.mubr.f32.mxu0 0.0
      %1605 = vmatmul.mubr.f32.gmra.mrb[0].mxu0 %v1502
      %v1606 = vpop.f32.mrb[0].mxu0
      %v1607 = vadd.f32 0.0, %v1606
      %v1608 = vpop.f32.mrb[0].mxu0
      %1609 = vmatprep.mubr.f32.mxu0 0.0
      %1610 = vmatmul.mubr.f32.gmra.mrb[0].mxu0 %v1505
      %v1611 = vpop.f32.mrb[0].mxu0
      %v1612 = vadd.f32 0.0, %v1611
      %v1613 = vpop.f32.mrb[0].mxu0
      %1614 = vmatprep.mubr.f32.mxu0 0.0
      %1615 = vmatmul.mubr.f32.gmra.mrb[0].mxu0 %v1508
      %v1616 = vpop.f32.mrb[0].mxu0
      %v1617 = vadd.f32 0.0, %v1616
      %v1618 = vpop.f32.mrb[0].mxu0
      %1619 = vmatprep.mubr.f32.mxu0 0.0
      %1620 = vmatmul.mubr.f32.gmra.mrb[0].mxu0 %v1511
      %v1621 = vpop.f32.mrb[0].mxu0
      %v1622 = vadd.f32 0.0, %v1621
      %v1623 = vpop.f32.mrb[0].mxu0
      %1624 = vmatprep.mubr.f32.mxu0 0.0
      %1625 = vmatmul.mubr.f32.gmra.mrb[0].mxu0 %v1514
      %v1626 = vpop.f32.mrb[0].mxu0
      %v1627 = vadd.f32 0.0, %v1626
      %v1628 = vpop.f32.mrb[0].mxu0
      %1629 = vmatprep.mubr.f32.mxu0 0.0
      %1630 = vmatmul.mubr.f32.gmra.mrb[0].mxu0 %v1517
      %v1631 = vpop.f32.mrb[0].mxu0
      %v1632 = vadd.f32 0.0, %v1631
      %v1633 = vpop.f32.mrb[0].mxu0
      %1634 = vmatprep.mubr.f32.mxu0 0.0
      %1635 = vmatmul.mubr.f32.gmra.mrb[0].mxu0 %v1520
      %v1636 = vpop.f32.mrb[0].mxu0
      %v1637 = vadd.f32 0.0, %v1636
      %v1638 = vpop.f32.mrb[0].mxu0
      %1639 = vmatprep.mubr.f32.mxu0 0.0
      %1640 = vmatmul.mubr.f32.gmra.mrb[0].mxu0 %v1523
      %v1641 = vpop.f32.mrb[0].mxu0
      %v1642 = vadd.f32 0.0, %v1641
      %v1643 = vpop.f32.mrb[0].mxu0
      %1644 = vmatprep.mubr.f32.mxu0 0.0
      %1645 = vmatmul.mubr.f32.gmra.mrb[0].mxu0 %v1526
      %v1646 = vpop.f32.mrb[0].mxu0
      %v1647 = vadd.f32 0.0, %v1646
      %v1648 = vpop.f32.mrb[0].mxu0
      %1649 = vmatprep.mubr.f32.mxu0 0.0
      %1650 = vmatmul.mubr.f32.gmra.mrb[0].mxu0 %v1529
      %v1651 = vpop.f32.mrb[0].mxu0
      %v1652 = vadd.f32 0.0, %v1651
      %v1653 = vpop.f32.mrb[0].mxu0
      %1654 = vmatprep.mubr.f32.mxu0 0.0
      %1655 = vmatmul.mubr.f32.gmra.mrb[0].mxu0 %v1532
      %v1656 = vpop.f32.mrb[0].mxu0
      %v1657 = vadd.f32 0.0, %v1656
      %v1658 = vpop.f32.mrb[0].mxu0
      %1659 = vmatprep.mubr.f32.mxu0 0.0
      %1660 = vmatmul.mubr.f32.gmra.mrb[0].mxu0 %v1535
      %v1661 = vpop.f32.mrb[0].mxu0
      %v1662 = vadd.f32 0.0, %v1661
      %v1663 = vpop.f32.mrb[0].mxu0
      %1664 = vmatprep.mubr.f32.mxu0 0.0
      %1665 = vmatmul.mubr.f32.gmra.mrb[0].mxu0 %v1538
      %v1666 = vpop.f32.mrb[0].mxu0
      %v1667 = vadd.f32 0.0, %v1666
      %v1668 = vpop.f32.mrb[0].mxu0
      %1669 = vdwg.mxu0
      %v1670 = vadd.f32 %v1420, %v1607
      %v1671 = vadd.f32 %v1425, %v1612
      %v1672 = vadd.f32 %v1430, %v1617
      %v1673 = vadd.f32 %v1435, %v1622
      %v1674 = vadd.f32 %v1440, %v1627
      %v1675 = vadd.f32 %v1445, %v1632
      %v1676 = vadd.f32 %v1450, %v1637
      %v1677 = vadd.f32 %v1455, %v1642
      %v1678 = vadd.f32 %v1460, %v1647
      %v1679 = vadd.f32 %v1465, %v1652
      %v1680 = vadd.f32 %v1470, %v1657
      %v1681 = vadd.f32 %v1475, %v1662
      %v1682 = vadd.f32 %v1480, %v1667
      %v1683 = vld [vmem:[%s728 + $0x1] sm:$0xff]
      %v1684 = vld [vmem:[%s728 + $0x9] sm:$0xff]
      %v1685 = vld [vmem:[%s728 + $0x11] sm:$0xff]
      %v1686 = vld [vmem:[%s728 + $0x19] sm:$0xff]
      %v1687 = vld [vmem:[%s728 + $0x21] sm:$0xff]
      %v1688 = vld [vmem:[%s728 + $0x29] sm:$0xff]
      %v1689 = vld [vmem:[%s728 + $0x31] sm:$0xff]
      %v1690 = vld [vmem:[%s728 + $0x39] sm:$0xff]
      %v1691 = vld [vmem:[%s728 + $0x41] sm:$0xff]
      %v1692 = vld [vmem:[%s728 + $0x49] sm:$0xff]
      %v1693 = vld [vmem:[%s728 + $0x51] sm:$0xff]
      %v1694 = vld [vmem:[%s728 + $0x59] sm:$0xff]
      %v1695 = vld [vmem:[%s728 + $0x61] sm:$0xf]
      %s1696 = scalar_lea.vmem %s3, 96
      %v1697 = vld [vmem:[%s1696] sm:$0xff]
      %v1698 = vld [vmem:[%s1696 + $0x8] sm:$0xff]
      %v1699 = vld [vmem:[%s1696 + $0x10] sm:$0xff]
      %v1700 = vld [vmem:[%s1696 + $0x18] sm:$0xff]
      %v1702 = vsel %vm279, %v1683, 0
      %v1705 = vsel %vm279, %v1684, 0
      %v1708 = vsel %vm279, %v1685, 0
      %v1711 = vsel %vm279, %v1686, 0
      %v1714 = vsel %vm279, %v1687, 0
      %v1717 = vsel %vm279, %v1688, 0
      %v1720 = vsel %vm279, %v1689, 0
      %v1723 = vsel %vm279, %v1690, 0
      %v1726 = vsel %vm279, %v1691, 0
      %v1729 = vsel %vm279, %v1692, 0
      %v1732 = vsel %vm279, %v1693, 0
      %v1735 = vsel %vm279, %v1694, 0
      %v1738 = vsel %vm279, %v1695, 0
      %1740 = vmatprep.subr.mxu0 0.0
      %1741 = vmatpush1.msra.mxu0 %v1697
      %1742 = vmatprep.subr.mxu0 0.0
      %1743 = vmatpush1.msra.mxu0 %v1698
      %1744 = vmatprep.subr.mxu0 0.0
      %1745 = vmatpush1.msra.mxu0 %v1699
      %1746 = vmatprep.subr.mxu0 0.0
      %1747 = vmatpush1.msra.mxu0 %v1700
      %1748 = vmatprep.subr.mxu0 0.0
      %1749 = vmatpush1.msra.mxu0 0.0
      %1750 = vmatprep.subr.mxu0 0.0
      %1751 = vmatpush1.msra.mxu0 0.0
      %1752 = vmatprep.subr.mxu0 0.0
      %1753 = vmatpush1.msra.mxu0 0.0
      %1754 = vmatprep.subr.mxu0 0.0
      %1755 = vmatpush1.msra.mxu0 0.0
      %1756 = vmatprep.subr.mxu0 0.0
      %1757 = vmatpush1.msra.mxu0 0.0
      %1758 = vmatprep.subr.mxu0 0.0
      %1759 = vmatpush1.msra.mxu0 0.0
      %1760 = vmatprep.subr.mxu0 0.0
      %1761 = vmatpush1.msra.mxu0 0.0
      %1762 = vmatprep.subr.mxu0 0.0
      %1763 = vmatpush1.msra.mxu0 0.0
      %1764 = vmatprep.subr.mxu0 0.0
      %1765 = vmatpush1.msra.mxu0 0.0
      %1766 = vmatprep.subr.mxu0 0.0
      %1767 = vmatpush1.msra.mxu0 0.0
      %1768 = vmatprep.subr.mxu0 0.0
      %1769 = vmatpush1.msra.mxu0 0.0
      %1770 = vmatprep.subr.mxu0 0.0
      %1771 = vmatpush1.msra.mxu0 0.0
      %1772 = vmatprep.subr.mxu0 0.0
      %1773 = vmatpush1.msra.mxu0 0.0
      %1774 = vmatprep.subr.mxu0 0.0
      %1775 = vmatpush1.msra.mxu0 0.0
      %1776 = vmatprep.subr.mxu0 0.0
      %1777 = vmatpush1.msra.mxu0 0.0
      %1778 = vmatprep.subr.mxu0 0.0
      %1779 = vmatpush1.msra.mxu0 0.0
      %1780 = vmatprep.subr.mxu0 0.0
      %1781 = vmatpush1.msra.mxu0 0.0
      %1782 = vmatprep.subr.mxu0 0.0
      %1783 = vmatpush1.msra.mxu0 0.0
      %1784 = vmatprep.subr.mxu0 0.0
      %1785 = vmatpush1.msra.mxu0 0.0
      %1786 = vmatprep.subr.mxu0 0.0
      %1787 = vmatpush1.msra.mxu0 0.0
      %1788 = vmatprep.subr.mxu0 0.0
      %1789 = vmatpush1.msra.mxu0 0.0
      %1790 = vmatprep.subr.mxu0 0.0
      %1791 = vmatpush1.msra.mxu0 0.0
      %1792 = vmatprep.subr.mxu0 0.0
      %1793 = vmatpush1.msra.mxu0 0.0
      %1794 = vmatprep.subr.mxu0 0.0
      %1795 = vmatpush1.msra.mxu0 0.0
      %1796 = vmatprep.subr.mxu0 0.0
      %1797 = vmatpush1.msra.mxu0 0.0
      %1798 = vmatprep.subr.mxu0 0.0
      %1799 = vmatpush1.msra.mxu0 0.0
      %1800 = vmatprep.subr.mxu0 0.0
      %1801 = vmatpush1.msra.mxu0 0.0
      %1802 = vmatprep.subr.mxu0 0.0
      %1803 = vmatpush1.msra.mxu0 0.0
      %1804 = vmatprep.mubr.f32.mxu0 0.0
      %1805 = vmatmul.mubr.f32.gmra.mrb[0].mxu0 %v1702
      %v1806 = vpop.f32.mrb[0].mxu0
      %v1807 = vadd.f32 0.0, %v1806
      %v1808 = vpop.f32.mrb[0].mxu0
      %1809 = vmatprep.mubr.f32.mxu0 0.0
      %1810 = vmatmul.mubr.f32.gmra.mrb[0].mxu0 %v1705
      %v1811 = vpop.f32.mrb[0].mxu0
      %v1812 = vadd.f32 0.0, %v1811
      %v1813 = vpop.f32.mrb[0].mxu0
      %1814 = vmatprep.mubr.f32.mxu0 0.0
      %1815 = vmatmul.mubr.f32.gmra.mrb[0].mxu0 %v1708
      %v1816 = vpop.f32.mrb[0].mxu0
      %v1817 = vadd.f32 0.0, %v1816
      %v1818 = vpop.f32.mrb[0].mxu0
      %1819 = vmatprep.mubr.f32.mxu0 0.0
      %1820 = vmatmul.mubr.f32.gmra.mrb[0].mxu0 %v1711
      %v1821 = vpop.f32.mrb[0].mxu0
      %v1822 = vadd.f32 0.0, %v1821
      %v1823 = vpop.f32.mrb[0].mxu0
      %1824 = vmatprep.mubr.f32.mxu0 0.0
      %1825 = vmatmul.mubr.f32.gmra.mrb[0].mxu0 %v1714
      %v1826 = vpop.f32.mrb[0].mxu0
      %v1827 = vadd.f32 0.0, %v1826
      %v1828 = vpop.f32.mrb[0].mxu0
      %1829 = vmatprep.mubr.f32.mxu0 0.0
      %1830 = vmatmul.mubr.f32.gmra.mrb[0].mxu0 %v1717
      %v1831 = vpop.f32.mrb[0].mxu0
      %v1832 = vadd.f32 0.0, %v1831
      %v1833 = vpop.f32.mrb[0].mxu0
      %1834 = vmatprep.mubr.f32.mxu0 0.0
      %1835 = vmatmul.mubr.f32.gmra.mrb[0].mxu0 %v1720
      %v1836 = vpop.f32.mrb[0].mxu0
      %v1837 = vadd.f32 0.0, %v1836
      %v1838 = vpop.f32.mrb[0].mxu0
      %1839 = vmatprep.mubr.f32.mxu0 0.0
      %1840 = vmatmul.mubr.f32.gmra.mrb[0].mxu0 %v1723
      %v1841 = vpop.f32.mrb[0].mxu0
      %v1842 = vadd.f32 0.0, %v1841
      %v1843 = vpop.f32.mrb[0].mxu0
      %1844 = vmatprep.mubr.f32.mxu0 0.0
      %1845 = vmatmul.mubr.f32.gmra.mrb[0].mxu0 %v1726
      %v1846 = vpop.f32.mrb[0].mxu0
      %v1847 = vadd.f32 0.0, %v1846
      %v1848 = vpop.f32.mrb[0].mxu0
      %1849 = vmatprep.mubr.f32.mxu0 0.0
      %1850 = vmatmul.mubr.f32.gmra.mrb[0].mxu0 %v1729
      %v1851 = vpop.f32.mrb[0].mxu0
      %v1852 = vadd.f32 0.0, %v1851
      %v1853 = vpop.f32.mrb[0].mxu0
      %1854 = vmatprep.mubr.f32.mxu0 0.0
      %1855 = vmatmul.mubr.f32.gmra.mrb[0].mxu0 %v1732
      %v1856 = vpop.f32.mrb[0].mxu0
      %v1857 = vadd.f32 0.0, %v1856
      %v1858 = vpop.f32.mrb[0].mxu0
      %1859 = vmatprep.mubr.f32.mxu0 0.0
      %1860 = vmatmul.mubr.f32.gmra.mrb[0].mxu0 %v1735
      %v1861 = vpop.f32.mrb[0].mxu0
      %v1862 = vadd.f32 0.0, %v1861
      %v1863 = vpop.f32.mrb[0].mxu0
      %1864 = vmatprep.mubr.f32.mxu0 0.0
      %1865 = vmatmul.mubr.f32.gmra.mrb[0].mxu0 %v1738
      %v1866 = vpop.f32.mrb[0].mxu0
      %v1867 = vadd.f32 0.0, %v1866
      %v1868 = vpop.f32.mrb[0].mxu0
      %1869 = vdwg.mxu0
      %v1870 = vadd.f32 %v1670, %v1807
      %v1871 = vadd.f32 %v1671, %v1812
      %v1872 = vadd.f32 %v1672, %v1817
      %v1873 = vadd.f32 %v1673, %v1822
      %v1874 = vadd.f32 %v1674, %v1827
      %v1875 = vadd.f32 %v1675, %v1832
      %v1876 = vadd.f32 %v1676, %v1837
      %v1877 = vadd.f32 %v1677, %v1842
      %v1878 = vadd.f32 %v1678, %v1847
      %v1879 = vadd.f32 %v1679, %v1852
      %v1880 = vadd.f32 %v1680, %v1857
      %v1881 = vadd.f32 %v1681, %v1862
      %v1882 = vadd.f32 %v1682, %v1867
      %v1883 = vld [vmem:[%s912] sm:$0xff]
      %v1884 = vld [vmem:[%s912 + $0x8] sm:$0xff]
      %v1885 = vld [vmem:[%s912 + $0x10] sm:$0xff]
      %v1886 = vld [vmem:[%s912 + $0x18] sm:$0xff]
      %v1887 = vld [vmem:[%s912 + $0x20] sm:$0xff]
      %v1888 = vld [vmem:[%s912 + $0x28] sm:$0xff]
      %v1889 = vld [vmem:[%s912 + $0x30] sm:$0xff]
      %v1890 = vld [vmem:[%s912 + $0x38] sm:$0xff]
      %v1891 = vld [vmem:[%s912 + $0x40] sm:$0xff]
      %v1892 = vld [vmem:[%s912 + $0x48] sm:$0xff]
      %v1893 = vld [vmem:[%s912 + $0x50] sm:$0xff]
      %v1894 = vld [vmem:[%s912 + $0x58] sm:$0xff]
      %v1895 = vld [vmem:[%s912 + $0x60] sm:$0xf]
      %s1896 = scalar_lea.vmem %s3, 128
      %v1897 = vld [vmem:[%s1896] sm:$0xff]
      %v1898 = vld [vmem:[%s1896 + $0x8] sm:$0xff]
      %v1899 = vld [vmem:[%s1896 + $0x10] sm:$0xff]
      %v1900 = vld [vmem:[%s1896 + $0x18] sm:$0xff]
      %v1902 = vsel %vm279, %v1883, 0
      %v1905 = vsel %vm279, %v1884, 0
      %v1908 = vsel %vm279, %v1885, 0
      %v1911 = vsel %vm279, %v1886, 0
      %v1914 = vsel %vm279, %v1887, 0
      %v1917 = vsel %vm279, %v1888, 0
      %v1920 = vsel %vm279, %v1889, 0
      %v1923 = vsel %vm279, %v1890, 0
      %v1926 = vsel %vm279, %v1891, 0
      %v1929 = vsel %vm279, %v1892, 0
      %v1932 = vsel %vm279, %v1893, 0
      %v1935 = vsel %vm279, %v1894, 0
      %v1938 = vsel %vm279, %v1895, 0
      %1940 = vmatprep.subr.mxu0 0.0
      %1941 = vmatpush1.msra.mxu0 %v1897
      %1942 = vmatprep.subr.mxu0 0.0
      %1943 = vmatpush1.msra.mxu0 %v1898
      %1944 = vmatprep.subr.mxu0 0.0
      %1945 = vmatpush1.msra.mxu0 %v1899
      %1946 = vmatprep.subr.mxu0 0.0
      %1947 = vmatpush1.msra.mxu0 %v1900
      %1948 = vmatprep.subr.mxu0 0.0
      %1949 = vmatpush1.msra.mxu0 0.0
      %1950 = vmatprep.subr.mxu0 0.0
      %1951 = vmatpush1.msra.mxu0 0.0
      %1952 = vmatprep.subr.mxu0 0.0
      %1953 = vmatpush1.msra.mxu0 0.0
      %1954 = vmatprep.subr.mxu0 0.0
      %1955 = vmatpush1.msra.mxu0 0.0
      %1956 = vmatprep.subr.mxu0 0.0
      %1957 = vmatpush1.msra.mxu0 0.0
      %1958 = vmatprep.subr.mxu0 0.0
      %1959 = vmatpush1.msra.mxu0 0.0
      %1960 = vmatprep.subr.mxu0 0.0
      %1961 = vmatpush1.msra.mxu0 0.0
      %1962 = vmatprep.subr.mxu0 0.0
      %1963 = vmatpush1.msra.mxu0 0.0
      %1964 = vmatprep.subr.mxu0 0.0
      %1965 = vmatpush1.msra.mxu0 0.0
      %1966 = vmatprep.subr.mxu0 0.0
      %1967 = vmatpush1.msra.mxu0 0.0
      %1968 = vmatprep.subr.mxu0 0.0
      %1969 = vmatpush1.msra.mxu0 0.0
      %1970 = vmatprep.subr.mxu0 0.0
      %1971 = vmatpush1.msra.mxu0 0.0
      %1972 = vmatprep.subr.mxu0 0.0
      %1973 = vmatpush1.msra.mxu0 0.0
      %1974 = vmatprep.subr.mxu0 0.0
      %1975 = vmatpush1.msra.mxu0 0.0
      %1976 = vmatprep.subr.mxu0 0.0
      %1977 = vmatpush1.msra.mxu0 0.0
      %1978 = vmatprep.subr.mxu0 0.0
      %1979 = vmatpush1.msra.mxu0 0.0
      %1980 = vmatprep.subr.mxu0 0.0
      %1981 = vmatpush1.msra.mxu0 0.0
      %1982 = vmatprep.subr.mxu0 0.0
      %1983 = vmatpush1.msra.mxu0 0.0
      %1984 = vmatprep.subr.mxu0 0.0
      %1985 = vmatpush1.msra.mxu0 0.0
      %1986 = vmatprep.subr.mxu0 0.0
      %1987 = vmatpush1.msra.mxu0 0.0
      %1988 = vmatprep.subr.mxu0 0.0
      %1989 = vmatpush1.msra.mxu0 0.0
      %1990 = vmatprep.subr.mxu0 0.0
      %1991 = vmatpush1.msra.mxu0 0.0
      %1992 = vmatprep.subr.mxu0 0.0
      %1993 = vmatpush1.msra.mxu0 0.0
      %1994 = vmatprep.subr.mxu0 0.0
      %1995 = vmatpush1.msra.mxu0 0.0
      %1996 = vmatprep.subr.mxu0 0.0
      %1997 = vmatpush1.msra.mxu0 0.0
      %1998 = vmatprep.subr.mxu0 0.0
      %1999 = vmatpush1.msra.mxu0 0.0
      %2000 = vmatprep.subr.mxu0 0.0
      %2001 = vmatpush1.msra.mxu0 0.0
      %2002 = vmatprep.subr.mxu0 0.0
      %2003 = vmatpush1.msra.mxu0 0.0
      %2004 = vmatprep.mubr.f32.mxu0 0.0
      %2005 = vmatmul.mubr.f32.gmra.mrb[0].mxu0 %v1902
      %v2006 = vpop.f32.mrb[0].mxu0
      %v2007 = vadd.f32 0.0, %v2006
      %v2008 = vpop.f32.mrb[0].mxu0
      %2009 = vmatprep.mubr.f32.mxu0 0.0
      %2010 = vmatmul.mubr.f32.gmra.mrb[0].mxu0 %v1905
      %v2011 = vpop.f32.mrb[0].mxu0
      %v2012 = vadd.f32 0.0, %v2011
      %v2013 = vpop.f32.mrb[0].mxu0
      %2014 = vmatprep.mubr.f32.mxu0 0.0
      %2015 = vmatmul.mubr.f32.gmra.mrb[0].mxu0 %v1908
      %v2016 = vpop.f32.mrb[0].mxu0
      %v2017 = vadd.f32 0.0, %v2016
      %v2018 = vpop.f32.mrb[0].mxu0
      %2019 = vmatprep.mubr.f32.mxu0 0.0
      %2020 = vmatmul.mubr.f32.gmra.mrb[0].mxu0 %v1911
      %v2021 = vpop.f32.mrb[0].mxu0
      %v2022 = vadd.f32 0.0, %v2021
      %v2023 = vpop.f32.mrb[0].mxu0
      %2024 = vmatprep.mubr.f32.mxu0 0.0
      %2025 = vmatmul.mubr.f32.gmra.mrb[0].mxu0 %v1914
      %v2026 = vpop.f32.mrb[0].mxu0
      %v2027 = vadd.f32 0.0, %v2026
      %v2028 = vpop.f32.mrb[0].mxu0
      %2029 = vmatprep.mubr.f32.mxu0 0.0
      %2030 = vmatmul.mubr.f32.gmra.mrb[0].mxu0 %v1917
      %v2031 = vpop.f32.mrb[0].mxu0
      %v2032 = vadd.f32 0.0, %v2031
      %v2033 = vpop.f32.mrb[0].mxu0
      %2034 = vmatprep.mubr.f32.mxu0 0.0
      %2035 = vmatmul.mubr.f32.gmra.mrb[0].mxu0 %v1920
      %v2036 = vpop.f32.mrb[0].mxu0
      %v2037 = vadd.f32 0.0, %v2036
      %v2038 = vpop.f32.mrb[0].mxu0
      %2039 = vmatprep.mubr.f32.mxu0 0.0
      %2040 = vmatmul.mubr.f32.gmra.mrb[0].mxu0 %v1923
      %v2041 = vpop.f32.mrb[0].mxu0
      %v2042 = vadd.f32 0.0, %v2041
      %v2043 = vpop.f32.mrb[0].mxu0
      %2044 = vmatprep.mubr.f32.mxu0 0.0
      %2045 = vmatmul.mubr.f32.gmra.mrb[0].mxu0 %v1926
      %v2046 = vpop.f32.mrb[0].mxu0
      %v2047 = vadd.f32 0.0, %v2046
      %v2048 = vpop.f32.mrb[0].mxu0
      %2049 = vmatprep.mubr.f32.mxu0 0.0
      %2050 = vmatmul.mubr.f32.gmra.mrb[0].mxu0 %v1929
      %v2051 = vpop.f32.mrb[0].mxu0
      %v2052 = vadd.f32 0.0, %v2051
      %v2053 = vpop.f32.mrb[0].mxu0
      %2054 = vmatprep.mubr.f32.mxu0 0.0
      %2055 = vmatmul.mubr.f32.gmra.mrb[0].mxu0 %v1932
      %v2056 = vpop.f32.mrb[0].mxu0
      %v2057 = vadd.f32 0.0, %v2056
      %v2058 = vpop.f32.mrb[0].mxu0
      %2059 = vmatprep.mubr.f32.mxu0 0.0
      %2060 = vmatmul.mubr.f32.gmra.mrb[0].mxu0 %v1935
      %v2061 = vpop.f32.mrb[0].mxu0
      %v2062 = vadd.f32 0.0, %v2061
      %v2063 = vpop.f32.mrb[0].mxu0
      %2064 = vmatprep.mubr.f32.mxu0 0.0
      %2065 = vmatmul.mubr.f32.gmra.mrb[0].mxu0 %v1938
      %v2066 = vpop.f32.mrb[0].mxu0
      %v2067 = vadd.f32 0.0, %v2066
      %v2068 = vpop.f32.mrb[0].mxu0
      %2069 = vdwg.mxu0
      %v2070 = vadd.f32 %v1870, %v2007
      %v2071 = vadd.f32 %v1871, %v2012
      %v2072 = vadd.f32 %v1872, %v2017
      %v2073 = vadd.f32 %v1873, %v2022
      %v2074 = vadd.f32 %v1874, %v2027
      %v2075 = vadd.f32 %v1875, %v2032
      %v2076 = vadd.f32 %v1876, %v2037
      %v2077 = vadd.f32 %v1877, %v2042
      %v2078 = vadd.f32 %v1878, %v2047
      %v2079 = vadd.f32 %v1879, %v2052
      %v2080 = vadd.f32 %v1880, %v2057
      %v2081 = vadd.f32 %v1881, %v2062
      %v2082 = vadd.f32 %v1882, %v2067
      %v2083 = vld [vmem:[%s1096] sm:$0xff]
      %v2084 = vld [vmem:[%s1096 + $0x8] sm:$0xff]
      %v2085 = vld [vmem:[%s1096 + $0x10] sm:$0xff]
      %v2086 = vld [vmem:[%s1096 + $0x18] sm:$0xff]
      %v2087 = vld [vmem:[%s1096 + $0x20] sm:$0xff]
      %v2088 = vld [vmem:[%s1096 + $0x28] sm:$0xff]
      %v2089 = vld [vmem:[%s1096 + $0x30] sm:$0xff]
      %v2090 = vld [vmem:[%s1096 + $0x38] sm:$0xff]
      %v2091 = vld [vmem:[%s1096 + $0x40] sm:$0xff]
      %v2092 = vld [vmem:[%s1096 + $0x48] sm:$0xff]
      %v2093 = vld [vmem:[%s1096 + $0x50] sm:$0xff]
      %v2094 = vld [vmem:[%s1096 + $0x58] sm:$0xff]
      %v2095 = vld [vmem:[%s1096 + $0x60] sm:$0xf]
      %s2096 = scalar_lea.vmem %s3, 160
      %v2097 = vld [vmem:[%s2096] sm:$0xff]
      %v2098 = vld [vmem:[%s2096 + $0x8] sm:$0xff]
      %v2099 = vld [vmem:[%s2096 + $0x10] sm:$0xff]
      %v2100 = vld [vmem:[%s2096 + $0x18] sm:$0xff]
      %v2102 = vsel %vm279, %v2083, 0
      %v2105 = vsel %vm279, %v2084, 0
      %v2108 = vsel %vm279, %v2085, 0
      %v2111 = vsel %vm279, %v2086, 0
      %v2114 = vsel %vm279, %v2087, 0
      %v2117 = vsel %vm279, %v2088, 0
      %v2120 = vsel %vm279, %v2089, 0
      %v2123 = vsel %vm279, %v2090, 0
      %v2126 = vsel %vm279, %v2091, 0
      %v2129 = vsel %vm279, %v2092, 0
      %v2132 = vsel %vm279, %v2093, 0
      %v2135 = vsel %vm279, %v2094, 0
      %v2138 = vsel %vm279, %v2095, 0
      %2140 = vmatprep.subr.mxu0 0.0
      %2141 = vmatpush1.msra.mxu0 %v2097
      %2142 = vmatprep.subr.mxu0 0.0
      %2143 = vmatpush1.msra.mxu0 %v2098
      %2144 = vmatprep.subr.mxu0 0.0
      %2145 = vmatpush1.msra.mxu0 %v2099
      %2146 = vmatprep.subr.mxu0 0.0
      %2147 = vmatpush1.msra.mxu0 %v2100
      %2148 = vmatprep.subr.mxu0 0.0
      %2149 = vmatpush1.msra.mxu0 0.0
      %2150 = vmatprep.subr.mxu0 0.0
      %2151 = vmatpush1.msra.mxu0 0.0
      %2152 = vmatprep.subr.mxu0 0.0
      %2153 = vmatpush1.msra.mxu0 0.0
      %2154 = vmatprep.subr.mxu0 0.0
      %2155 = vmatpush1.msra.mxu0 0.0
      %2156 = vmatprep.subr.mxu0 0.0
      %2157 = vmatpush1.msra.mxu0 0.0
      %2158 = vmatprep.subr.mxu0 0.0
      %2159 = vmatpush1.msra.mxu0 0.0
      %2160 = vmatprep.subr.mxu0 0.0
      %2161 = vmatpush1.msra.mxu0 0.0
      %2162 = vmatprep.subr.mxu0 0.0
      %2163 = vmatpush1.msra.mxu0 0.0
      %2164 = vmatprep.subr.mxu0 0.0
      %2165 = vmatpush1.msra.mxu0 0.0
      %2166 = vmatprep.subr.mxu0 0.0
      %2167 = vmatpush1.msra.mxu0 0.0
      %2168 = vmatprep.subr.mxu0 0.0
      %2169 = vmatpush1.msra.mxu0 0.0
      %2170 = vmatprep.subr.mxu0 0.0
      %2171 = vmatpush1.msra.mxu0 0.0
      %2172 = vmatprep.subr.mxu0 0.0
      %2173 = vmatpush1.msra.mxu0 0.0
      %2174 = vmatprep.subr.mxu0 0.0
      %2175 = vmatpush1.msra.mxu0 0.0
      %2176 = vmatprep.subr.mxu0 0.0
      %2177 = vmatpush1.msra.mxu0 0.0
      %2178 = vmatprep.subr.mxu0 0.0
      %2179 = vmatpush1.msra.mxu0 0.0
      %2180 = vmatprep.subr.mxu0 0.0
      %2181 = vmatpush1.msra.mxu0 0.0
      %2182 = vmatprep.subr.mxu0 0.0
      %2183 = vmatpush1.msra.mxu0 0.0
      %2184 = vmatprep.subr.mxu0 0.0
      %2185 = vmatpush1.msra.mxu0 0.0
      %2186 = vmatprep.subr.mxu0 0.0
      %2187 = vmatpush1.msra.mxu0 0.0
      %2188 = vmatprep.subr.mxu0 0.0
      %2189 = vmatpush1.msra.mxu0 0.0
      %2190 = vmatprep.subr.mxu0 0.0
      %2191 = vmatpush1.msra.mxu0 0.0
      %2192 = vmatprep.subr.mxu0 0.0
      %2193 = vmatpush1.msra.mxu0 0.0
      %2194 = vmatprep.subr.mxu0 0.0
      %2195 = vmatpush1.msra.mxu0 0.0
      %2196 = vmatprep.subr.mxu0 0.0
      %2197 = vmatpush1.msra.mxu0 0.0
      %2198 = vmatprep.subr.mxu0 0.0
      %2199 = vmatpush1.msra.mxu0 0.0
      %2200 = vmatprep.subr.mxu0 0.0
      %2201 = vmatpush1.msra.mxu0 0.0
      %2202 = vmatprep.subr.mxu0 0.0
      %2203 = vmatpush1.msra.mxu0 0.0
      %2204 = vmatprep.mubr.f32.mxu0 0.0
      %2205 = vmatmul.mubr.f32.gmra.mrb[0].mxu0 %v2102
      %v2206 = vpop.f32.mrb[0].mxu0
      %v2207 = vadd.f32 0.0, %v2206
      %v2208 = vpop.f32.mrb[0].mxu0
      %2209 = vmatprep.mubr.f32.mxu0 0.0
      %2210 = vmatmul.mubr.f32.gmra.mrb[0].mxu0 %v2105
      %v2211 = vpop.f32.mrb[0].mxu0
      %v2212 = vadd.f32 0.0, %v2211
      %v2213 = vpop.f32.mrb[0].mxu0
      %2214 = vmatprep.mubr.f32.mxu0 0.0
      %2215 = vmatmul.mubr.f32.gmra.mrb[0].mxu0 %v2108
      %v2216 = vpop.f32.mrb[0].mxu0
      %v2217 = vadd.f32 0.0, %v2216
      %v2218 = vpop.f32.mrb[0].mxu0
      %2219 = vmatprep.mubr.f32.mxu0 0.0
      %2220 = vmatmul.mubr.f32.gmra.mrb[0].mxu0 %v2111
      %v2221 = vpop.f32.mrb[0].mxu0
      %v2222 = vadd.f32 0.0, %v2221
      %v2223 = vpop.f32.mrb[0].mxu0
      %2224 = vmatprep.mubr.f32.mxu0 0.0
      %2225 = vmatmul.mubr.f32.gmra.mrb[0].mxu0 %v2114
      %v2226 = vpop.f32.mrb[0].mxu0
      %v2227 = vadd.f32 0.0, %v2226
      %v2228 = vpop.f32.mrb[0].mxu0
      %2229 = vmatprep.mubr.f32.mxu0 0.0
      %2230 = vmatmul.mubr.f32.gmra.mrb[0].mxu0 %v2117
      %v2231 = vpop.f32.mrb[0].mxu0
      %v2232 = vadd.f32 0.0, %v2231
      %v2233 = vpop.f32.mrb[0].mxu0
      %2234 = vmatprep.mubr.f32.mxu0 0.0
      %2235 = vmatmul.mubr.f32.gmra.mrb[0].mxu0 %v2120
      %v2236 = vpop.f32.mrb[0].mxu0
      %v2237 = vadd.f32 0.0, %v2236
      %v2238 = vpop.f32.mrb[0].mxu0
      %2239 = vmatprep.mubr.f32.mxu0 0.0
      %2240 = vmatmul.mubr.f32.gmra.mrb[0].mxu0 %v2123
      %v2241 = vpop.f32.mrb[0].mxu0
      %v2242 = vadd.f32 0.0, %v2241
      %v2243 = vpop.f32.mrb[0].mxu0
      %2244 = vmatprep.mubr.f32.mxu0 0.0
      %2245 = vmatmul.mubr.f32.gmra.mrb[0].mxu0 %v2126
      %v2246 = vpop.f32.mrb[0].mxu0
      %v2247 = vadd.f32 0.0, %v2246
      %v2248 = vpop.f32.mrb[0].mxu0
      %2249 = vmatprep.mubr.f32.mxu0 0.0
      %2250 = vmatmul.mubr.f32.gmra.mrb[0].mxu0 %v2129
      %v2251 = vpop.f32.mrb[0].mxu0
      %v2252 = vadd.f32 0.0, %v2251
      %v2253 = vpop.f32.mrb[0].mxu0
      %2254 = vmatprep.mubr.f32.mxu0 0.0
      %2255 = vmatmul.mubr.f32.gmra.mrb[0].mxu0 %v2132
      %v2256 = vpop.f32.mrb[0].mxu0
      %v2257 = vadd.f32 0.0, %v2256
      %v2258 = vpop.f32.mrb[0].mxu0
      %2259 = vmatprep.mubr.f32.mxu0 0.0
      %2260 = vmatmul.mubr.f32.gmra.mrb[0].mxu0 %v2135
      %v2261 = vpop.f32.mrb[0].mxu0
      %v2262 = vadd.f32 0.0, %v2261
      %v2263 = vpop.f32.mrb[0].mxu0
      %2264 = vmatprep.mubr.f32.mxu0 0.0
      %2265 = vmatmul.mubr.f32.gmra.mrb[0].mxu0 %v2138
      %v2266 = vpop.f32.mrb[0].mxu0
      %v2267 = vadd.f32 0.0, %v2266
      %v2268 = vpop.f32.mrb[0].mxu0
      %2269 = vdwg.mxu0
      %v2270 = vadd.f32 %v2070, %v2207
      %v2271 = vadd.f32 %v2071, %v2212
      %v2272 = vadd.f32 %v2072, %v2217
      %v2273 = vadd.f32 %v2073, %v2222
      %v2274 = vadd.f32 %v2074, %v2227
      %v2275 = vadd.f32 %v2075, %v2232
      %v2276 = vadd.f32 %v2076, %v2237
      %v2277 = vadd.f32 %v2077, %v2242
      %v2278 = vadd.f32 %v2078, %v2247
      %v2279 = vadd.f32 %v2079, %v2252
      %v2280 = vadd.f32 %v2080, %v2257
      %v2281 = vadd.f32 %v2081, %v2262
      %v2282 = vadd.f32 %v2082, %v2267
      %v2283 = vld [vmem:[%s912 + $0x1] sm:$0xff]
      %v2284 = vld [vmem:[%s912 + $0x9] sm:$0xff]
      %v2285 = vld [vmem:[%s912 + $0x11] sm:$0xff]
      %v2286 = vld [vmem:[%s912 + $0x19] sm:$0xff]
      %v2287 = vld [vmem:[%s912 + $0x21] sm:$0xff]
      %v2288 = vld [vmem:[%s912 + $0x29] sm:$0xff]
      %v2289 = vld [vmem:[%s912 + $0x31] sm:$0xff]
      %v2290 = vld [vmem:[%s912 + $0x39] sm:$0xff]
      %v2291 = vld [vmem:[%s912 + $0x41] sm:$0xff]
      %v2292 = vld [vmem:[%s912 + $0x49] sm:$0xff]
      %v2293 = vld [vmem:[%s912 + $0x51] sm:$0xff]
      %v2294 = vld [vmem:[%s912 + $0x59] sm:$0xff]
      %v2295 = vld [vmem:[%s912 + $0x61] sm:$0xf]
      %s2296 = scalar_lea.vmem %s3, 192
      %v2297 = vld [vmem:[%s2296] sm:$0xff]
      %v2298 = vld [vmem:[%s2296 + $0x8] sm:$0xff]
      %v2299 = vld [vmem:[%s2296 + $0x10] sm:$0xff]
      %v2300 = vld [vmem:[%s2296 + $0x18] sm:$0xff]
      %v2302 = vsel %vm279, %v2283, 0
      %v2305 = vsel %vm279, %v2284, 0
      %v2308 = vsel %vm279, %v2285, 0
      %v2311 = vsel %vm279, %v2286, 0
      %v2314 = vsel %vm279, %v2287, 0
      %v2317 = vsel %vm279, %v2288, 0
      %v2320 = vsel %vm279, %v2289, 0
      %v2323 = vsel %vm279, %v2290, 0
      %v2326 = vsel %vm279, %v2291, 0
      %v2329 = vsel %vm279, %v2292, 0
      %v2332 = vsel %vm279, %v2293, 0
      %v2335 = vsel %vm279, %v2294, 0
      %v2338 = vsel %vm279, %v2295, 0
      %2340 = vmatprep.subr.mxu0 0.0
      %2341 = vmatpush1.msra.mxu0 %v2297
      %2342 = vmatprep.subr.mxu0 0.0
      %2343 = vmatpush1.msra.mxu0 %v2298
      %2344 = vmatprep.subr.mxu0 0.0
      %2345 = vmatpush1.msra.mxu0 %v2299
      %2346 = vmatprep.subr.mxu0 0.0
      %2347 = vmatpush1.msra.mxu0 %v2300
      %2348 = vmatprep.subr.mxu0 0.0
      %2349 = vmatpush1.msra.mxu0 0.0
      %2350 = vmatprep.subr.mxu0 0.0
      %2351 = vmatpush1.msra.mxu0 0.0
      %2352 = vmatprep.subr.mxu0 0.0
      %2353 = vmatpush1.msra.mxu0 0.0
      %2354 = vmatprep.subr.mxu0 0.0
      %2355 = vmatpush1.msra.mxu0 0.0
      %2356 = vmatprep.subr.mxu0 0.0
      %2357 = vmatpush1.msra.mxu0 0.0
      %2358 = vmatprep.subr.mxu0 0.0
      %2359 = vmatpush1.msra.mxu0 0.0
      %2360 = vmatprep.subr.mxu0 0.0
      %2361 = vmatpush1.msra.mxu0 0.0
      %2362 = vmatprep.subr.mxu0 0.0
      %2363 = vmatpush1.msra.mxu0 0.0
      %2364 = vmatprep.subr.mxu0 0.0
      %2365 = vmatpush1.msra.mxu0 0.0
      %2366 = vmatprep.subr.mxu0 0.0
      %2367 = vmatpush1.msra.mxu0 0.0
      %2368 = vmatprep.subr.mxu0 0.0
      %2369 = vmatpush1.msra.mxu0 0.0
      %2370 = vmatprep.subr.mxu0 0.0
      %2371 = vmatpush1.msra.mxu0 0.0
      %2372 = vmatprep.subr.mxu0 0.0
      %2373 = vmatpush1.msra.mxu0 0.0
      %2374 = vmatprep.subr.mxu0 0.0
      %2375 = vmatpush1.msra.mxu0 0.0
      %2376 = vmatprep.subr.mxu0 0.0
      %2377 = vmatpush1.msra.mxu0 0.0
      %2378 = vmatprep.subr.mxu0 0.0
      %2379 = vmatpush1.msra.mxu0 0.0
      %2380 = vmatprep.subr.mxu0 0.0
      %2381 = vmatpush1.msra.mxu0 0.0
      %2382 = vmatprep.subr.mxu0 0.0
      %2383 = vmatpush1.msra.mxu0 0.0
      %2384 = vmatprep.subr.mxu0 0.0
      %2385 = vmatpush1.msra.mxu0 0.0
      %2386 = vmatprep.subr.mxu0 0.0
      %2387 = vmatpush1.msra.mxu0 0.0
      %2388 = vmatprep.subr.mxu0 0.0
      %2389 = vmatpush1.msra.mxu0 0.0
      %2390 = vmatprep.subr.mxu0 0.0
      %2391 = vmatpush1.msra.mxu0 0.0
      %2392 = vmatprep.subr.mxu0 0.0
      %2393 = vmatpush1.msra.mxu0 0.0
      %2394 = vmatprep.subr.mxu0 0.0
      %2395 = vmatpush1.msra.mxu0 0.0
      %2396 = vmatprep.subr.mxu0 0.0
      %2397 = vmatpush1.msra.mxu0 0.0
      %2398 = vmatprep.subr.mxu0 0.0
      %2399 = vmatpush1.msra.mxu0 0.0
      %2400 = vmatprep.subr.mxu0 0.0
      %2401 = vmatpush1.msra.mxu0 0.0
      %2402 = vmatprep.subr.mxu0 0.0
      %2403 = vmatpush1.msra.mxu0 0.0
      %2404 = vmatprep.mubr.f32.mxu0 0.0
      %2405 = vmatmul.mubr.f32.gmra.mrb[0].mxu0 %v2302
      %v2406 = vpop.f32.mrb[0].mxu0
      %v2407 = vadd.f32 0.0, %v2406
      %v2408 = vpop.f32.mrb[0].mxu0
      %2409 = vmatprep.mubr.f32.mxu0 0.0
      %2410 = vmatmul.mubr.f32.gmra.mrb[0].mxu0 %v2305
      %v2411 = vpop.f32.mrb[0].mxu0
      %v2412 = vadd.f32 0.0, %v2411
      %v2413 = vpop.f32.mrb[0].mxu0
      %2414 = vmatprep.mubr.f32.mxu0 0.0
      %2415 = vmatmul.mubr.f32.gmra.mrb[0].mxu0 %v2308
      %v2416 = vpop.f32.mrb[0].mxu0
      %v2417 = vadd.f32 0.0, %v2416
      %v2418 = vpop.f32.mrb[0].mxu0
      %2419 = vmatprep.mubr.f32.mxu0 0.0
      %2420 = vmatmul.mubr.f32.gmra.mrb[0].mxu0 %v2311
      %v2421 = vpop.f32.mrb[0].mxu0
      %v2422 = vadd.f32 0.0, %v2421
      %v2423 = vpop.f32.mrb[0].mxu0
      %2424 = vmatprep.mubr.f32.mxu0 0.0
      %2425 = vmatmul.mubr.f32.gmra.mrb[0].mxu0 %v2314
      %v2426 = vpop.f32.mrb[0].mxu0
      %v2427 = vadd.f32 0.0, %v2426
      %v2428 = vpop.f32.mrb[0].mxu0
      %2429 = vmatprep.mubr.f32.mxu0 0.0
      %2430 = vmatmul.mubr.f32.gmra.mrb[0].mxu0 %v2317
      %v2431 = vpop.f32.mrb[0].mxu0
      %v2432 = vadd.f32 0.0, %v2431
      %v2433 = vpop.f32.mrb[0].mxu0
      %2434 = vmatprep.mubr.f32.mxu0 0.0
      %2435 = vmatmul.mubr.f32.gmra.mrb[0].mxu0 %v2320
      %v2436 = vpop.f32.mrb[0].mxu0
      %v2437 = vadd.f32 0.0, %v2436
      %v2438 = vpop.f32.mrb[0].mxu0
      %2439 = vmatprep.mubr.f32.mxu0 0.0
      %2440 = vmatmul.mubr.f32.gmra.mrb[0].mxu0 %v2323
      %v2441 = vpop.f32.mrb[0].mxu0
      %v2442 = vadd.f32 0.0, %v2441
      %v2443 = vpop.f32.mrb[0].mxu0
      %2444 = vmatprep.mubr.f32.mxu0 0.0
      %2445 = vmatmul.mubr.f32.gmra.mrb[0].mxu0 %v2326
      %v2446 = vpop.f32.mrb[0].mxu0
      %v2447 = vadd.f32 0.0, %v2446
      %v2448 = vpop.f32.mrb[0].mxu0
      %2449 = vmatprep.mubr.f32.mxu0 0.0
      %2450 = vmatmul.mubr.f32.gmra.mrb[0].mxu0 %v2329
      %v2451 = vpop.f32.mrb[0].mxu0
      %v2452 = vadd.f32 0.0, %v2451
      %v2453 = vpop.f32.mrb[0].mxu0
      %2454 = vmatprep.mubr.f32.mxu0 0.0
      %2455 = vmatmul.mubr.f32.gmra.mrb[0].mxu0 %v2332
      %v2456 = vpop.f32.mrb[0].mxu0
      %v2457 = vadd.f32 0.0, %v2456
      %v2458 = vpop.f32.mrb[0].mxu0
      %2459 = vmatprep.mubr.f32.mxu0 0.0
      %2460 = vmatmul.mubr.f32.gmra.mrb[0].mxu0 %v2335
      %v2461 = vpop.f32.mrb[0].mxu0
      %v2462 = vadd.f32 0.0, %v2461
      %v2463 = vpop.f32.mrb[0].mxu0
      %2464 = vmatprep.mubr.f32.mxu0 0.0
      %2465 = vmatmul.mubr.f32.gmra.mrb[0].mxu0 %v2338
      %v2466 = vpop.f32.mrb[0].mxu0
      %v2467 = vadd.f32 0.0, %v2466
      %v2468 = vpop.f32.mrb[0].mxu0
      %2469 = vdwg.mxu0
      %v2470 = vadd.f32 %v2270, %v2407
      %v2471 = vadd.f32 %v2271, %v2412
      %v2472 = vadd.f32 %v2272, %v2417
      %v2473 = vadd.f32 %v2273, %v2422
      %v2474 = vadd.f32 %v2274, %v2427
      %v2475 = vadd.f32 %v2275, %v2432
      %v2476 = vadd.f32 %v2276, %v2437
      %v2477 = vadd.f32 %v2277, %v2442
      %v2478 = vadd.f32 %v2278, %v2447
      %v2479 = vadd.f32 %v2279, %v2452
      %v2480 = vadd.f32 %v2280, %v2457
      %v2481 = vadd.f32 %v2281, %v2462
      %v2482 = vadd.f32 %v2282, %v2467
      %v2483 = vld [vmem:[%s1096 + $0x1] sm:$0xff]
      %v2484 = vld [vmem:[%s1096 + $0x9] sm:$0xff]
      %v2485 = vld [vmem:[%s1096 + $0x11] sm:$0xff]
      %v2486 = vld [vmem:[%s1096 + $0x19] sm:$0xff]
      %v2487 = vld [vmem:[%s1096 + $0x21] sm:$0xff]
      %v2488 = vld [vmem:[%s1096 + $0x29] sm:$0xff]
      %v2489 = vld [vmem:[%s1096 + $0x31] sm:$0xff]
      %v2490 = vld [vmem:[%s1096 + $0x39] sm:$0xff]
      %v2491 = vld [vmem:[%s1096 + $0x41] sm:$0xff]
      %v2492 = vld [vmem:[%s1096 + $0x49] sm:$0xff]
      %v2493 = vld [vmem:[%s1096 + $0x51] sm:$0xff]
      %v2494 = vld [vmem:[%s1096 + $0x59] sm:$0xff]
      %v2495 = vld [vmem:[%s1096 + $0x61] sm:$0xf]
      %s2496 = scalar_lea.vmem %s3, 224
      %v2497 = vld [vmem:[%s2496] sm:$0xff]
      %v2498 = vld [vmem:[%s2496 + $0x8] sm:$0xff]
      %v2499 = vld [vmem:[%s2496 + $0x10] sm:$0xff]
      %v2500 = vld [vmem:[%s2496 + $0x18] sm:$0xff]
      %v2502 = vsel %vm279, %v2483, 0
      %v2505 = vsel %vm279, %v2484, 0
      %v2508 = vsel %vm279, %v2485, 0
      %v2511 = vsel %vm279, %v2486, 0
      %v2514 = vsel %vm279, %v2487, 0
      %v2517 = vsel %vm279, %v2488, 0
      %v2520 = vsel %vm279, %v2489, 0
      %v2523 = vsel %vm279, %v2490, 0
      %v2526 = vsel %vm279, %v2491, 0
      %v2529 = vsel %vm279, %v2492, 0
      %v2532 = vsel %vm279, %v2493, 0
      %v2535 = vsel %vm279, %v2494, 0
      %v2538 = vsel %vm279, %v2495, 0
      %2540 = vmatprep.subr.mxu0 0.0
      %2541 = vmatpush1.msra.mxu0 %v2497
      %2542 = vmatprep.subr.mxu0 0.0
      %2543 = vmatpush1.msra.mxu0 %v2498
      %2544 = vmatprep.subr.mxu0 0.0
      %2545 = vmatpush1.msra.mxu0 %v2499
      %2546 = vmatprep.subr.mxu0 0.0
      %2547 = vmatpush1.msra.mxu0 %v2500
      %2548 = vmatprep.subr.mxu0 0.0
      %2549 = vmatpush1.msra.mxu0 0.0
      %2550 = vmatprep.subr.mxu0 0.0
      %2551 = vmatpush1.msra.mxu0 0.0
      %2552 = vmatprep.subr.mxu0 0.0
      %2553 = vmatpush1.msra.mxu0 0.0
      %2554 = vmatprep.subr.mxu0 0.0
      %2555 = vmatpush1.msra.mxu0 0.0
      %2556 = vmatprep.subr.mxu0 0.0
      %2557 = vmatpush1.msra.mxu0 0.0
      %2558 = vmatprep.subr.mxu0 0.0
      %2559 = vmatpush1.msra.mxu0 0.0
      %2560 = vmatprep.subr.mxu0 0.0
      %2561 = vmatpush1.msra.mxu0 0.0
      %2562 = vmatprep.subr.mxu0 0.0
      %2563 = vmatpush1.msra.mxu0 0.0
      %2564 = vmatprep.subr.mxu0 0.0
      %2565 = vmatpush1.msra.mxu0 0.0
      %2566 = vmatprep.subr.mxu0 0.0
      %2567 = vmatpush1.msra.mxu0 0.0
      %2568 = vmatprep.subr.mxu0 0.0
      %2569 = vmatpush1.msra.mxu0 0.0
      %2570 = vmatprep.subr.mxu0 0.0
      %2571 = vmatpush1.msra.mxu0 0.0
      %2572 = vmatprep.subr.mxu0 0.0
      %2573 = vmatpush1.msra.mxu0 0.0
      %2574 = vmatprep.subr.mxu0 0.0
      %2575 = vmatpush1.msra.mxu0 0.0
      %2576 = vmatprep.subr.mxu0 0.0
      %2577 = vmatpush1.msra.mxu0 0.0
      %2578 = vmatprep.subr.mxu0 0.0
      %2579 = vmatpush1.msra.mxu0 0.0
      %2580 = vmatprep.subr.mxu0 0.0
      %2581 = vmatpush1.msra.mxu0 0.0
      %2582 = vmatprep.subr.mxu0 0.0
      %2583 = vmatpush1.msra.mxu0 0.0
      %2584 = vmatprep.subr.mxu0 0.0
      %2585 = vmatpush1.msra.mxu0 0.0
      %2586 = vmatprep.subr.mxu0 0.0
      %2587 = vmatpush1.msra.mxu0 0.0
      %2588 = vmatprep.subr.mxu0 0.0
      %2589 = vmatpush1.msra.mxu0 0.0
      %2590 = vmatprep.subr.mxu0 0.0
      %2591 = vmatpush1.msra.mxu0 0.0
      %2592 = vmatprep.subr.mxu0 0.0
      %2593 = vmatpush1.msra.mxu0 0.0
      %2594 = vmatprep.subr.mxu0 0.0
      %2595 = vmatpush1.msra.mxu0 0.0
      %2596 = vmatprep.subr.mxu0 0.0
      %2597 = vmatpush1.msra.mxu0 0.0
      %2598 = vmatprep.subr.mxu0 0.0
      %2599 = vmatpush1.msra.mxu0 0.0
      %2600 = vmatprep.subr.mxu0 0.0
      %2601 = vmatpush1.msra.mxu0 0.0
      %2602 = vmatprep.subr.mxu0 0.0
      %2603 = vmatpush1.msra.mxu0 0.0
      %2604 = vmatprep.mubr.f32.mxu0 0.0
      %2605 = vmatmul.mubr.f32.gmra.mrb[0].mxu0 %v2502
      %v2606 = vpop.f32.mrb[0].mxu0
      %v2607 = vadd.f32 0.0, %v2606
      %v2608 = vpop.f32.mrb[0].mxu0
      %2609 = vmatprep.mubr.f32.mxu0 0.0
      %2610 = vmatmul.mubr.f32.gmra.mrb[0].mxu0 %v2505
      %v2611 = vpop.f32.mrb[0].mxu0
      %v2612 = vadd.f32 0.0, %v2611
      %v2613 = vpop.f32.mrb[0].mxu0
      %2614 = vmatprep.mubr.f32.mxu0 0.0
      %2615 = vmatmul.mubr.f32.gmra.mrb[0].mxu0 %v2508
      %v2616 = vpop.f32.mrb[0].mxu0
      %v2617 = vadd.f32 0.0, %v2616
      %v2618 = vpop.f32.mrb[0].mxu0
      %2619 = vmatprep.mubr.f32.mxu0 0.0
      %2620 = vmatmul.mubr.f32.gmra.mrb[0].mxu0 %v2511
      %v2621 = vpop.f32.mrb[0].mxu0
      %v2622 = vadd.f32 0.0, %v2621
      %v2623 = vpop.f32.mrb[0].mxu0
      %2624 = vmatprep.mubr.f32.mxu0 0.0
      %2625 = vmatmul.mubr.f32.gmra.mrb[0].mxu0 %v2514
      %v2626 = vpop.f32.mrb[0].mxu0
      %v2627 = vadd.f32 0.0, %v2626
      %v2628 = vpop.f32.mrb[0].mxu0
      %2629 = vmatprep.mubr.f32.mxu0 0.0
      %2630 = vmatmul.mubr.f32.gmra.mrb[0].mxu0 %v2517
      %v2631 = vpop.f32.mrb[0].mxu0
      %v2632 = vadd.f32 0.0, %v2631
      %v2633 = vpop.f32.mrb[0].mxu0
      %2634 = vmatprep.mubr.f32.mxu0 0.0
      %2635 = vmatmul.mubr.f32.gmra.mrb[0].mxu0 %v2520
      %v2636 = vpop.f32.mrb[0].mxu0
      %v2637 = vadd.f32 0.0, %v2636
      %v2638 = vpop.f32.mrb[0].mxu0
      %2639 = vmatprep.mubr.f32.mxu0 0.0
      %2640 = vmatmul.mubr.f32.gmra.mrb[0].mxu0 %v2523
      %v2641 = vpop.f32.mrb[0].mxu0
      %v2642 = vadd.f32 0.0, %v2641
      %v2643 = vpop.f32.mrb[0].mxu0
      %2644 = vmatprep.mubr.f32.mxu0 0.0
      %2645 = vmatmul.mubr.f32.gmra.mrb[0].mxu0 %v2526
      %v2646 = vpop.f32.mrb[0].mxu0
      %v2647 = vadd.f32 0.0, %v2646
      %v2648 = vpop.f32.mrb[0].mxu0
      %2649 = vmatprep.mubr.f32.mxu0 0.0
      %2650 = vmatmul.mubr.f32.gmra.mrb[0].mxu0 %v2529
      %v2651 = vpop.f32.mrb[0].mxu0
      %v2652 = vadd.f32 0.0, %v2651
      %v2653 = vpop.f32.mrb[0].mxu0
      %2654 = vmatprep.mubr.f32.mxu0 0.0
      %2655 = vmatmul.mubr.f32.gmra.mrb[0].mxu0 %v2532
      %v2656 = vpop.f32.mrb[0].mxu0
      %v2657 = vadd.f32 0.0, %v2656
      %v2658 = vpop.f32.mrb[0].mxu0
      %2659 = vmatprep.mubr.f32.mxu0 0.0
      %2660 = vmatmul.mubr.f32.gmra.mrb[0].mxu0 %v2535
      %v2661 = vpop.f32.mrb[0].mxu0
      %v2662 = vadd.f32 0.0, %v2661
      %v2663 = vpop.f32.mrb[0].mxu0
      %2664 = vmatprep.mubr.f32.mxu0 0.0
      %2665 = vmatmul.mubr.f32.gmra.mrb[0].mxu0 %v2538
      %v2666 = vpop.f32.mrb[0].mxu0
      %v2667 = vadd.f32 0.0, %v2666
      %v2668 = vpop.f32.mrb[0].mxu0
      %2669 = vdwg.mxu0
      %v2670 = vadd.f32 %v2470, %v2607
      %v2671 = vadd.f32 %v2471, %v2612
      %v2672 = vadd.f32 %v2472, %v2617
      %v2673 = vadd.f32 %v2473, %v2622
      %v2674 = vadd.f32 %v2474, %v2627
      %v2675 = vadd.f32 %v2475, %v2632
      %v2676 = vadd.f32 %v2476, %v2637
      %v2677 = vadd.f32 %v2477, %v2642
      %v2678 = vadd.f32 %v2478, %v2647
      %v2679 = vadd.f32 %v2479, %v2652
      %v2680 = vadd.f32 %v2480, %v2657
      %v2681 = vadd.f32 %v2481, %v2662
      %v2682 = vadd.f32 %v2482, %v2667
      %v2683 = vld [vmem:[#allocation2 + $0xa] sm:$0xff]
      %v2684 = vld [vmem:[#allocation2 + $0x12] sm:$0xff]
      %v2685 = vld [vmem:[#allocation2 + $0x1a] sm:$0xff]
      %v2686 = vld [vmem:[#allocation2 + $0x22] sm:$0xff]
      %v2687 = vld [vmem:[#allocation2 + $0x2a] sm:$0xff]
      %v2688 = vld [vmem:[#allocation2 + $0x32] sm:$0xff]
      %v2689 = vld [vmem:[#allocation2 + $0x3a] sm:$0xff]
      %v2690 = vld [vmem:[#allocation2 + $0x42] sm:$0xff]
      %v2691 = vld [vmem:[#allocation2 + $0x4a] sm:$0xff]
      %v2692 = vld [vmem:[#allocation2 + $0x52] sm:$0xff]
      %v2693 = vld [vmem:[#allocation2 + $0x5a] sm:$0xff]
      %v2694 = vld [vmem:[#allocation2 + $0x62] sm:$0xff]
      %v2695 = vld [vmem:[#allocation2 + $0x6a] sm:$0xf]
      %s2696 = scalar_lea.vmem %s3, 256
      %v2697 = vld [vmem:[%s2696] sm:$0xff]
      %v2698 = vld [vmem:[%s2696 + $0x8] sm:$0xff]
      %v2699 = vld [vmem:[%s2696 + $0x10] sm:$0xff]
      %v2700 = vld [vmem:[%s2696 + $0x18] sm:$0xff]
      %v2702 = vsel %vm279, %v2683, 0
      %v2705 = vsel %vm279, %v2684, 0
      %v2708 = vsel %vm279, %v2685, 0
      %v2711 = vsel %vm279, %v2686, 0
      %v2714 = vsel %vm279, %v2687, 0
      %v2717 = vsel %vm279, %v2688, 0
      %v2720 = vsel %vm279, %v2689, 0
      %v2723 = vsel %vm279, %v2690, 0
      %v2726 = vsel %vm279, %v2691, 0
      %v2729 = vsel %vm279, %v2692, 0
      %v2732 = vsel %vm279, %v2693, 0
      %v2735 = vsel %vm279, %v2694, 0
      %v2738 = vsel %vm279, %v2695, 0
      %2740 = vmatprep.subr.mxu0 0.0
      %2741 = vmatpush1.msra.mxu0 %v2697
      %2742 = vmatprep.subr.mxu0 0.0
      %2743 = vmatpush1.msra.mxu0 %v2698
      %2744 = vmatprep.subr.mxu0 0.0
      %2745 = vmatpush1.msra.mxu0 %v2699
      %2746 = vmatprep.subr.mxu0 0.0
      %2747 = vmatpush1.msra.mxu0 %v2700
      %2748 = vmatprep.subr.mxu0 0.0
      %2749 = vmatpush1.msra.mxu0 0.0
      %2750 = vmatprep.subr.mxu0 0.0
      %2751 = vmatpush1.msra.mxu0 0.0
      %2752 = vmatprep.subr.mxu0 0.0
      %2753 = vmatpush1.msra.mxu0 0.0
      %2754 = vmatprep.subr.mxu0 0.0
      %2755 = vmatpush1.msra.mxu0 0.0
      %2756 = vmatprep.subr.mxu0 0.0
      %2757 = vmatpush1.msra.mxu0 0.0
      %2758 = vmatprep.subr.mxu0 0.0
      %2759 = vmatpush1.msra.mxu0 0.0
      %2760 = vmatprep.subr.mxu0 0.0
      %2761 = vmatpush1.msra.mxu0 0.0
      %2762 = vmatprep.subr.mxu0 0.0
      %2763 = vmatpush1.msra.mxu0 0.0
      %2764 = vmatprep.subr.mxu0 0.0
      %2765 = vmatpush1.msra.mxu0 0.0
      %2766 = vmatprep.subr.mxu0 0.0
      %2767 = vmatpush1.msra.mxu0 0.0
      %2768 = vmatprep.subr.mxu0 0.0
      %2769 = vmatpush1.msra.mxu0 0.0
      %2770 = vmatprep.subr.mxu0 0.0
      %2771 = vmatpush1.msra.mxu0 0.0
      %2772 = vmatprep.subr.mxu0 0.0
      %2773 = vmatpush1.msra.mxu0 0.0
      %2774 = vmatprep.subr.mxu0 0.0
      %2775 = vmatpush1.msra.mxu0 0.0
      %2776 = vmatprep.subr.mxu0 0.0
      %2777 = vmatpush1.msra.mxu0 0.0
      %2778 = vmatprep.subr.mxu0 0.0
      %2779 = vmatpush1.msra.mxu0 0.0
      %2780 = vmatprep.subr.mxu0 0.0
      %2781 = vmatpush1.msra.mxu0 0.0
      %2782 = vmatprep.subr.mxu0 0.0
      %2783 = vmatpush1.msra.mxu0 0.0
      %2784 = vmatprep.subr.mxu0 0.0
      %2785 = vmatpush1.msra.mxu0 0.0
      %2786 = vmatprep.subr.mxu0 0.0
      %2787 = vmatpush1.msra.mxu0 0.0
      %2788 = vmatprep.subr.mxu0 0.0
      %2789 = vmatpush1.msra.mxu0 0.0
      %2790 = vmatprep.subr.mxu0 0.0
      %2791 = vmatpush1.msra.mxu0 0.0
      %2792 = vmatprep.subr.mxu0 0.0
      %2793 = vmatpush1.msra.mxu0 0.0
      %2794 = vmatprep.subr.mxu0 0.0
      %2795 = vmatpush1.msra.mxu0 0.0
      %2796 = vmatprep.subr.mxu0 0.0
      %2797 = vmatpush1.msra.mxu0 0.0
      %2798 = vmatprep.subr.mxu0 0.0
      %2799 = vmatpush1.msra.mxu0 0.0
      %2800 = vmatprep.subr.mxu0 0.0
      %2801 = vmatpush1.msra.mxu0 0.0
      %2802 = vmatprep.subr.mxu0 0.0
      %2803 = vmatpush1.msra.mxu0 0.0
      %2804 = vmatprep.mubr.f32.mxu0 0.0
      %2805 = vmatmul.mubr.f32.gmra.mrb[0].mxu0 %v2702
      %v2806 = vpop.f32.mrb[0].mxu0
      %v2807 = vadd.f32 0.0, %v2806
      %v2808 = vpop.f32.mrb[0].mxu0
      %2809 = vmatprep.mubr.f32.mxu0 0.0
      %2810 = vmatmul.mubr.f32.gmra.mrb[0].mxu0 %v2705
      %v2811 = vpop.f32.mrb[0].mxu0
      %v2812 = vadd.f32 0.0, %v2811
      %v2813 = vpop.f32.mrb[0].mxu0
      %2814 = vmatprep.mubr.f32.mxu0 0.0
      %2815 = vmatmul.mubr.f32.gmra.mrb[0].mxu0 %v2708
      %v2816 = vpop.f32.mrb[0].mxu0
      %v2817 = vadd.f32 0.0, %v2816
      %v2818 = vpop.f32.mrb[0].mxu0
      %2819 = vmatprep.mubr.f32.mxu0 0.0
      %2820 = vmatmul.mubr.f32.gmra.mrb[0].mxu0 %v2711
      %v2821 = vpop.f32.mrb[0].mxu0
      %v2822 = vadd.f32 0.0, %v2821
      %v2823 = vpop.f32.mrb[0].mxu0
      %2824 = vmatprep.mubr.f32.mxu0 0.0
      %2825 = vmatmul.mubr.f32.gmra.mrb[0].mxu0 %v2714
      %v2826 = vpop.f32.mrb[0].mxu0
      %v2827 = vadd.f32 0.0, %v2826
      %v2828 = vpop.f32.mrb[0].mxu0
      %2829 = vmatprep.mubr.f32.mxu0 0.0
      %2830 = vmatmul.mubr.f32.gmra.mrb[0].mxu0 %v2717
      %v2831 = vpop.f32.mrb[0].mxu0
      %v2832 = vadd.f32 0.0, %v2831
      %v2833 = vpop.f32.mrb[0].mxu0
      %2834 = vmatprep.mubr.f32.mxu0 0.0
      %2835 = vmatmul.mubr.f32.gmra.mrb[0].mxu0 %v2720
      %v2836 = vpop.f32.mrb[0].mxu0
      %v2837 = vadd.f32 0.0, %v2836
      %v2838 = vpop.f32.mrb[0].mxu0
      %2839 = vmatprep.mubr.f32.mxu0 0.0
      %2840 = vmatmul.mubr.f32.gmra.mrb[0].mxu0 %v2723
      %v2841 = vpop.f32.mrb[0].mxu0
      %v2842 = vadd.f32 0.0, %v2841
      %v2843 = vpop.f32.mrb[0].mxu0
      %2844 = vmatprep.mubr.f32.mxu0 0.0
      %2845 = vmatmul.mubr.f32.gmra.mrb[0].mxu0 %v2726
      %v2846 = vpop.f32.mrb[0].mxu0
      %v2847 = vadd.f32 0.0, %v2846
      %v2848 = vpop.f32.mrb[0].mxu0
      %2849 = vmatprep.mubr.f32.mxu0 0.0
      %2850 = vmatmul.mubr.f32.gmra.mrb[0].mxu0 %v2729
      %v2851 = vpop.f32.mrb[0].mxu0
      %v2852 = vadd.f32 0.0, %v2851
      %v2853 = vpop.f32.mrb[0].mxu0
      %2854 = vmatprep.mubr.f32.mxu0 0.0
      %2855 = vmatmul.mubr.f32.gmra.mrb[0].mxu0 %v2732
      %v2856 = vpop.f32.mrb[0].mxu0
      %v2857 = vadd.f32 0.0, %v2856
      %v2858 = vpop.f32.mrb[0].mxu0
      %2859 = vmatprep.mubr.f32.mxu0 0.0
      %2860 = vmatmul.mubr.f32.gmra.mrb[0].mxu0 %v2735
      %v2861 = vpop.f32.mrb[0].mxu0
      %v2862 = vadd.f32 0.0, %v2861
      %v2863 = vpop.f32.mrb[0].mxu0
      %2864 = vmatprep.mubr.f32.mxu0 0.0
      %2865 = vmatmul.mubr.f32.gmra.mrb[0].mxu0 %v2738
      %v2866 = vpop.f32.mrb[0].mxu0
      %v2867 = vadd.f32 0.0, %v2866
      %v2868 = vpop.f32.mrb[0].mxu0
      %2869 = vdwg.mxu0
      %v2870 = vadd.f32 %v2670, %v2807
      %v2871 = vadd.f32 %v2671, %v2812
      %v2872 = vadd.f32 %v2672, %v2817
      %v2873 = vadd.f32 %v2673, %v2822
      %v2874 = vadd.f32 %v2674, %v2827
      %v2875 = vadd.f32 %v2675, %v2832
      %v2876 = vadd.f32 %v2676, %v2837
      %v2877 = vadd.f32 %v2677, %v2842
      %v2878 = vadd.f32 %v2678, %v2847
      %v2879 = vadd.f32 %v2679, %v2852
      %v2880 = vadd.f32 %v2680, %v2857
      %v2881 = vadd.f32 %v2681, %v2862
      %v2882 = vadd.f32 %v2682, %v2867
      %v2883 = vld [vmem:[%s728 + $0xa] sm:$0xff]
      %v2884 = vld [vmem:[%s728 + $0x12] sm:$0xff]
      %v2885 = vld [vmem:[%s728 + $0x1a] sm:$0xff]
      %v2886 = vld [vmem:[%s728 + $0x22] sm:$0xff]
      %v2887 = vld [vmem:[%s728 + $0x2a] sm:$0xff]
      %v2888 = vld [vmem:[%s728 + $0x32] sm:$0xff]
      %v2889 = vld [vmem:[%s728 + $0x3a] sm:$0xff]
      %v2890 = vld [vmem:[%s728 + $0x42] sm:$0xff]
      %v2891 = vld [vmem:[%s728 + $0x4a] sm:$0xff]
      %v2892 = vld [vmem:[%s728 + $0x52] sm:$0xff]
      %v2893 = vld [vmem:[%s728 + $0x5a] sm:$0xff]
      %v2894 = vld [vmem:[%s728 + $0x62] sm:$0xff]
      %v2895 = vld [vmem:[%s728 + $0x6a] sm:$0xf]
      %s2896 = scalar_lea.vmem %s3, 288
      %v2897 = vld [vmem:[%s2896] sm:$0xff]
      %v2898 = vld [vmem:[%s2896 + $0x8] sm:$0xff]
      %v2899 = vld [vmem:[%s2896 + $0x10] sm:$0xff]
      %v2900 = vld [vmem:[%s2896 + $0x18] sm:$0xff]
      %v2902 = vsel %vm279, %v2883, 0
      %v2905 = vsel %vm279, %v2884, 0
      %v2908 = vsel %vm279, %v2885, 0
      %v2911 = vsel %vm279, %v2886, 0
      %v2914 = vsel %vm279, %v2887, 0
      %v2917 = vsel %vm279, %v2888, 0
      %v2920 = vsel %vm279, %v2889, 0
      %v2923 = vsel %vm279, %v2890, 0
      %v2926 = vsel %vm279, %v2891, 0
      %v2929 = vsel %vm279, %v2892, 0
      %v2932 = vsel %vm279, %v2893, 0
      %v2935 = vsel %vm279, %v2894, 0
      %v2938 = vsel %vm279, %v2895, 0
      %2940 = vmatprep.subr.mxu0 0.0
      %2941 = vmatpush1.msra.mxu0 %v2897
      %2942 = vmatprep.subr.mxu0 0.0
      %2943 = vmatpush1.msra.mxu0 %v2898
      %2944 = vmatprep.subr.mxu0 0.0
      %2945 = vmatpush1.msra.mxu0 %v2899
      %2946 = vmatprep.subr.mxu0 0.0
      %2947 = vmatpush1.msra.mxu0 %v2900
      %2948 = vmatprep.subr.mxu0 0.0
      %2949 = vmatpush1.msra.mxu0 0.0
      %2950 = vmatprep.subr.mxu0 0.0
      %2951 = vmatpush1.msra.mxu0 0.0
      %2952 = vmatprep.subr.mxu0 0.0
      %2953 = vmatpush1.msra.mxu0 0.0
      %2954 = vmatprep.subr.mxu0 0.0
      %2955 = vmatpush1.msra.mxu0 0.0
      %2956 = vmatprep.subr.mxu0 0.0
      %2957 = vmatpush1.msra.mxu0 0.0
      %2958 = vmatprep.subr.mxu0 0.0
      %2959 = vmatpush1.msra.mxu0 0.0
      %2960 = vmatprep.subr.mxu0 0.0
      %2961 = vmatpush1.msra.mxu0 0.0
      %2962 = vmatprep.subr.mxu0 0.0
      %2963 = vmatpush1.msra.mxu0 0.0
      %2964 = vmatprep.subr.mxu0 0.0
      %2965 = vmatpush1.msra.mxu0 0.0
      %2966 = vmatprep.subr.mxu0 0.0
      %2967 = vmatpush1.msra.mxu0 0.0
      %2968 = vmatprep.subr.mxu0 0.0
      %2969 = vmatpush1.msra.mxu0 0.0
      %2970 = vmatprep.subr.mxu0 0.0
      %2971 = vmatpush1.msra.mxu0 0.0
      %2972 = vmatprep.subr.mxu0 0.0
      %2973 = vmatpush1.msra.mxu0 0.0
      %2974 = vmatprep.subr.mxu0 0.0
      %2975 = vmatpush1.msra.mxu0 0.0
      %2976 = vmatprep.subr.mxu0 0.0
      %2977 = vmatpush1.msra.mxu0 0.0
      %2978 = vmatprep.subr.mxu0 0.0
      %2979 = vmatpush1.msra.mxu0 0.0
      %2980 = vmatprep.subr.mxu0 0.0
      %2981 = vmatpush1.msra.mxu0 0.0
      %2982 = vmatprep.subr.mxu0 0.0
      %2983 = vmatpush1.msra.mxu0 0.0
      %2984 = vmatprep.subr.mxu0 0.0
      %2985 = vmatpush1.msra.mxu0 0.0
      %2986 = vmatprep.subr.mxu0 0.0
      %2987 = vmatpush1.msra.mxu0 0.0
      %2988 = vmatprep.subr.mxu0 0.0
      %2989 = vmatpush1.msra.mxu0 0.0
      %2990 = vmatprep.subr.mxu0 0.0
      %2991 = vmatpush1.msra.mxu0 0.0
      %2992 = vmatprep.subr.mxu0 0.0
      %2993 = vmatpush1.msra.mxu0 0.0
      %2994 = vmatprep.subr.mxu0 0.0
      %2995 = vmatpush1.msra.mxu0 0.0
      %2996 = vmatprep.subr.mxu0 0.0
      %2997 = vmatpush1.msra.mxu0 0.0
      %2998 = vmatprep.subr.mxu0 0.0
      %2999 = vmatpush1.msra.mxu0 0.0
      %3000 = vmatprep.subr.mxu0 0.0
      %3001 = vmatpush1.msra.mxu0 0.0
      %3002 = vmatprep.subr.mxu0 0.0
      %3003 = vmatpush1.msra.mxu0 0.0
      %3004 = vmatprep.mubr.f32.mxu0 0.0
      %3005 = vmatmul.mubr.f32.gmra.mrb[0].mxu0 %v2902
      %v3006 = vpop.f32.mrb[0].mxu0
      %v3007 = vadd.f32 0.0, %v3006
      %v3008 = vpop.f32.mrb[0].mxu0
      %3009 = vmatprep.mubr.f32.mxu0 0.0
      %3010 = vmatmul.mubr.f32.gmra.mrb[0].mxu0 %v2905
      %v3011 = vpop.f32.mrb[0].mxu0
      %v3012 = vadd.f32 0.0, %v3011
      %v3013 = vpop.f32.mrb[0].mxu0
      %3014 = vmatprep.mubr.f32.mxu0 0.0
      %3015 = vmatmul.mubr.f32.gmra.mrb[0].mxu0 %v2908
      %v3016 = vpop.f32.mrb[0].mxu0
      %v3017 = vadd.f32 0.0, %v3016
      %v3018 = vpop.f32.mrb[0].mxu0
      %3019 = vmatprep.mubr.f32.mxu0 0.0
      %3020 = vmatmul.mubr.f32.gmra.mrb[0].mxu0 %v2911
      %v3021 = vpop.f32.mrb[0].mxu0
      %v3022 = vadd.f32 0.0, %v3021
      %v3023 = vpop.f32.mrb[0].mxu0
      %3024 = vmatprep.mubr.f32.mxu0 0.0
      %3025 = vmatmul.mubr.f32.gmra.mrb[0].mxu0 %v2914
      %v3026 = vpop.f32.mrb[0].mxu0
      %v3027 = vadd.f32 0.0, %v3026
      %v3028 = vpop.f32.mrb[0].mxu0
      %3029 = vmatprep.mubr.f32.mxu0 0.0
      %3030 = vmatmul.mubr.f32.gmra.mrb[0].mxu0 %v2917
      %v3031 = vpop.f32.mrb[0].mxu0
      %v3032 = vadd.f32 0.0, %v3031
      %v3033 = vpop.f32.mrb[0].mxu0
      %3034 = vmatprep.mubr.f32.mxu0 0.0
      %3035 = vmatmul.mubr.f32.gmra.mrb[0].mxu0 %v2920
      %v3036 = vpop.f32.mrb[0].mxu0
      %v3037 = vadd.f32 0.0, %v3036
      %v3038 = vpop.f32.mrb[0].mxu0
      %3039 = vmatprep.mubr.f32.mxu0 0.0
      %3040 = vmatmul.mubr.f32.gmra.mrb[0].mxu0 %v2923
      %v3041 = vpop.f32.mrb[0].mxu0
      %v3042 = vadd.f32 0.0, %v3041
      %v3043 = vpop.f32.mrb[0].mxu0
      %3044 = vmatprep.mubr.f32.mxu0 0.0
      %3045 = vmatmul.mubr.f32.gmra.mrb[0].mxu0 %v2926
      %v3046 = vpop.f32.mrb[0].mxu0
      %v3047 = vadd.f32 0.0, %v3046
      %v3048 = vpop.f32.mrb[0].mxu0
      %3049 = vmatprep.mubr.f32.mxu0 0.0
      %3050 = vmatmul.mubr.f32.gmra.mrb[0].mxu0 %v2929
      %v3051 = vpop.f32.mrb[0].mxu0
      %v3052 = vadd.f32 0.0, %v3051
      %v3053 = vpop.f32.mrb[0].mxu0
      %3054 = vmatprep.mubr.f32.mxu0 0.0
      %3055 = vmatmul.mubr.f32.gmra.mrb[0].mxu0 %v2932
      %v3056 = vpop.f32.mrb[0].mxu0
      %v3057 = vadd.f32 0.0, %v3056
      %v3058 = vpop.f32.mrb[0].mxu0
      %3059 = vmatprep.mubr.f32.mxu0 0.0
      %3060 = vmatmul.mubr.f32.gmra.mrb[0].mxu0 %v2935
      %v3061 = vpop.f32.mrb[0].mxu0
      %v3062 = vadd.f32 0.0, %v3061
      %v3063 = vpop.f32.mrb[0].mxu0
      %3064 = vmatprep.mubr.f32.mxu0 0.0
      %3065 = vmatmul.mubr.f32.gmra.mrb[0].mxu0 %v2938
      %v3066 = vpop.f32.mrb[0].mxu0
      %v3067 = vadd.f32 0.0, %v3066
      %v3068 = vpop.f32.mrb[0].mxu0
      %3069 = vdwg.mxu0
      %v3070 = vadd.f32 %v2870, %v3007
      %v3071 = vadd.f32 %v2871, %v3012
      %v3072 = vadd.f32 %v2872, %v3017
      %v3073 = vadd.f32 %v2873, %v3022
      %v3074 = vadd.f32 %v2874, %v3027
      %v3075 = vadd.f32 %v2875, %v3032
      %v3076 = vadd.f32 %v2876, %v3037
      %v3077 = vadd.f32 %v2877, %v3042
      %v3078 = vadd.f32 %v2878, %v3047
      %v3079 = vadd.f32 %v2879, %v3052
      %v3080 = vadd.f32 %v2880, %v3057
      %v3081 = vadd.f32 %v2881, %v3062
      %v3082 = vadd.f32 %v2882, %v3067
      %v3083 = vld [vmem:[#allocation2 + $0xb] sm:$0xff]
      %v3084 = vld [vmem:[#allocation2 + $0x13] sm:$0xff]
      %v3085 = vld [vmem:[#allocation2 + $0x1b] sm:$0xff]
      %v3086 = vld [vmem:[#allocation2 + $0x23] sm:$0xff]
      %v3087 = vld [vmem:[#allocation2 + $0x2b] sm:$0xff]
      %v3088 = vld [vmem:[#allocation2 + $0x33] sm:$0xff]
      %v3089 = vld [vmem:[#allocation2 + $0x3b] sm:$0xff]
      %v3090 = vld [vmem:[#allocation2 + $0x43] sm:$0xff]
      %v3091 = vld [vmem:[#allocation2 + $0x4b] sm:$0xff]
      %v3092 = vld [vmem:[#allocation2 + $0x53] sm:$0xff]
      %v3093 = vld [vmem:[#allocation2 + $0x5b] sm:$0xff]
      %v3094 = vld [vmem:[#allocation2 + $0x63] sm:$0xff]
      %v3095 = vld [vmem:[#allocation2 + $0x6b] sm:$0xf]
      %s3096 = scalar_lea.vmem %s3, 320
      %v3097 = vld [vmem:[%s3096] sm:$0xff]
      %v3098 = vld [vmem:[%s3096 + $0x8] sm:$0xff]
      %v3099 = vld [vmem:[%s3096 + $0x10] sm:$0xff]
      %v3100 = vld [vmem:[%s3096 + $0x18] sm:$0xff]
      %v3102 = vsel %vm279, %v3083, 0
      %v3105 = vsel %vm279, %v3084, 0
      %v3108 = vsel %vm279, %v3085, 0
      %v3111 = vsel %vm279, %v3086, 0
      %v3114 = vsel %vm279, %v3087, 0
      %v3117 = vsel %vm279, %v3088, 0
      %v3120 = vsel %vm279, %v3089, 0
      %v3123 = vsel %vm279, %v3090, 0
      %v3126 = vsel %vm279, %v3091, 0
      %v3129 = vsel %vm279, %v3092, 0
      %v3132 = vsel %vm279, %v3093, 0
      %v3135 = vsel %vm279, %v3094, 0
      %v3138 = vsel %vm279, %v3095, 0
      %3140 = vmatprep.subr.mxu0 0.0
      %3141 = vmatpush1.msra.mxu0 %v3097
      %3142 = vmatprep.subr.mxu0 0.0
      %3143 = vmatpush1.msra.mxu0 %v3098
      %3144 = vmatprep.subr.mxu0 0.0
      %3145 = vmatpush1.msra.mxu0 %v3099
      %3146 = vmatprep.subr.mxu0 0.0
      %3147 = vmatpush1.msra.mxu0 %v3100
      %3148 = vmatprep.subr.mxu0 0.0
      %3149 = vmatpush1.msra.mxu0 0.0
      %3150 = vmatprep.subr.mxu0 0.0
      %3151 = vmatpush1.msra.mxu0 0.0
      %3152 = vmatprep.subr.mxu0 0.0
      %3153 = vmatpush1.msra.mxu0 0.0
      %3154 = vmatprep.subr.mxu0 0.0
      %3155 = vmatpush1.msra.mxu0 0.0
      %3156 = vmatprep.subr.mxu0 0.0
      %3157 = vmatpush1.msra.mxu0 0.0
      %3158 = vmatprep.subr.mxu0 0.0
      %3159 = vmatpush1.msra.mxu0 0.0
      %3160 = vmatprep.subr.mxu0 0.0
      %3161 = vmatpush1.msra.mxu0 0.0
      %3162 = vmatprep.subr.mxu0 0.0
      %3163 = vmatpush1.msra.mxu0 0.0
      %3164 = vmatprep.subr.mxu0 0.0
      %3165 = vmatpush1.msra.mxu0 0.0
      %3166 = vmatprep.subr.mxu0 0.0
      %3167 = vmatpush1.msra.mxu0 0.0
      %3168 = vmatprep.subr.mxu0 0.0
      %3169 = vmatpush1.msra.mxu0 0.0
      %3170 = vmatprep.subr.mxu0 0.0
      %3171 = vmatpush1.msra.mxu0 0.0
      %3172 = vmatprep.subr.mxu0 0.0
      %3173 = vmatpush1.msra.mxu0 0.0
      %3174 = vmatprep.subr.mxu0 0.0
      %3175 = vmatpush1.msra.mxu0 0.0
      %3176 = vmatprep.subr.mxu0 0.0
      %3177 = vmatpush1.msra.mxu0 0.0
      %3178 = vmatprep.subr.mxu0 0.0
      %3179 = vmatpush1.msra.mxu0 0.0
      %3180 = vmatprep.subr.mxu0 0.0
      %3181 = vmatpush1.msra.mxu0 0.0
      %3182 = vmatprep.subr.mxu0 0.0
      %3183 = vmatpush1.msra.mxu0 0.0
      %3184 = vmatprep.subr.mxu0 0.0
      %3185 = vmatpush1.msra.mxu0 0.0
      %3186 = vmatprep.subr.mxu0 0.0
      %3187 = vmatpush1.msra.mxu0 0.0
      %3188 = vmatprep.subr.mxu0 0.0
      %3189 = vmatpush1.msra.mxu0 0.0
      %3190 = vmatprep.subr.mxu0 0.0
      %3191 = vmatpush1.msra.mxu0 0.0
      %3192 = vmatprep.subr.mxu0 0.0
      %3193 = vmatpush1.msra.mxu0 0.0
      %3194 = vmatprep.subr.mxu0 0.0
      %3195 = vmatpush1.msra.mxu0 0.0
      %3196 = vmatprep.subr.mxu0 0.0
      %3197 = vmatpush1.msra.mxu0 0.0
      %3198 = vmatprep.subr.mxu0 0.0
      %3199 = vmatpush1.msra.mxu0 0.0
      %3200 = vmatprep.subr.mxu0 0.0
      %3201 = vmatpush1.msra.mxu0 0.0
      %3202 = vmatprep.subr.mxu0 0.0
      %3203 = vmatpush1.msra.mxu0 0.0
      %3204 = vmatprep.mubr.f32.mxu0 0.0
      %3205 = vmatmul.mubr.f32.gmra.mrb[0].mxu0 %v3102
      %v3206 = vpop.f32.mrb[0].mxu0
      %v3207 = vadd.f32 0.0, %v3206
      %v3208 = vpop.f32.mrb[0].mxu0
      %3209 = vmatprep.mubr.f32.mxu0 0.0
      %3210 = vmatmul.mubr.f32.gmra.mrb[0].mxu0 %v3105
      %v3211 = vpop.f32.mrb[0].mxu0
      %v3212 = vadd.f32 0.0, %v3211
      %v3213 = vpop.f32.mrb[0].mxu0
      %3214 = vmatprep.mubr.f32.mxu0 0.0
      %3215 = vmatmul.mubr.f32.gmra.mrb[0].mxu0 %v3108
      %v3216 = vpop.f32.mrb[0].mxu0
      %v3217 = vadd.f32 0.0, %v3216
      %v3218 = vpop.f32.mrb[0].mxu0
      %3219 = vmatprep.mubr.f32.mxu0 0.0
      %3220 = vmatmul.mubr.f32.gmra.mrb[0].mxu0 %v3111
      %v3221 = vpop.f32.mrb[0].mxu0
      %v3222 = vadd.f32 0.0, %v3221
      %v3223 = vpop.f32.mrb[0].mxu0
      %3224 = vmatprep.mubr.f32.mxu0 0.0
      %3225 = vmatmul.mubr.f32.gmra.mrb[0].mxu0 %v3114
      %v3226 = vpop.f32.mrb[0].mxu0
      %v3227 = vadd.f32 0.0, %v3226
      %v3228 = vpop.f32.mrb[0].mxu0
      %3229 = vmatprep.mubr.f32.mxu0 0.0
      %3230 = vmatmul.mubr.f32.gmra.mrb[0].mxu0 %v3117
      %v3231 = vpop.f32.mrb[0].mxu0
      %v3232 = vadd.f32 0.0, %v3231
      %v3233 = vpop.f32.mrb[0].mxu0
      %3234 = vmatprep.mubr.f32.mxu0 0.0
      %3235 = vmatmul.mubr.f32.gmra.mrb[0].mxu0 %v3120
      %v3236 = vpop.f32.mrb[0].mxu0
      %v3237 = vadd.f32 0.0, %v3236
      %v3238 = vpop.f32.mrb[0].mxu0
      %3239 = vmatprep.mubr.f32.mxu0 0.0
      %3240 = vmatmul.mubr.f32.gmra.mrb[0].mxu0 %v3123
      %v3241 = vpop.f32.mrb[0].mxu0
      %v3242 = vadd.f32 0.0, %v3241
      %v3243 = vpop.f32.mrb[0].mxu0
      %3244 = vmatprep.mubr.f32.mxu0 0.0
      %3245 = vmatmul.mubr.f32.gmra.mrb[0].mxu0 %v3126
      %v3246 = vpop.f32.mrb[0].mxu0
      %v3247 = vadd.f32 0.0, %v3246
      %v3248 = vpop.f32.mrb[0].mxu0
      %3249 = vmatprep.mubr.f32.mxu0 0.0
      %3250 = vmatmul.mubr.f32.gmra.mrb[0].mxu0 %v3129
      %v3251 = vpop.f32.mrb[0].mxu0
      %v3252 = vadd.f32 0.0, %v3251
      %v3253 = vpop.f32.mrb[0].mxu0
      %3254 = vmatprep.mubr.f32.mxu0 0.0
      %3255 = vmatmul.mubr.f32.gmra.mrb[0].mxu0 %v3132
      %v3256 = vpop.f32.mrb[0].mxu0
      %v3257 = vadd.f32 0.0, %v3256
      %v3258 = vpop.f32.mrb[0].mxu0
      %3259 = vmatprep.mubr.f32.mxu0 0.0
      %3260 = vmatmul.mubr.f32.gmra.mrb[0].mxu0 %v3135
      %v3261 = vpop.f32.mrb[0].mxu0
      %v3262 = vadd.f32 0.0, %v3261
      %v3263 = vpop.f32.mrb[0].mxu0
      %3264 = vmatprep.mubr.f32.mxu0 0.0
      %3265 = vmatmul.mubr.f32.gmra.mrb[0].mxu0 %v3138
      %v3266 = vpop.f32.mrb[0].mxu0
      %v3267 = vadd.f32 0.0, %v3266
      %v3268 = vpop.f32.mrb[0].mxu0
      %3269 = vdwg.mxu0
      %v3270 = vadd.f32 %v3070, %v3207
      %v3271 = vadd.f32 %v3071, %v3212
      %v3272 = vadd.f32 %v3072, %v3217
      %v3273 = vadd.f32 %v3073, %v3222
      %v3274 = vadd.f32 %v3074, %v3227
      %v3275 = vadd.f32 %v3075, %v3232
      %v3276 = vadd.f32 %v3076, %v3237
      %v3277 = vadd.f32 %v3077, %v3242
      %v3278 = vadd.f32 %v3078, %v3247
      %v3279 = vadd.f32 %v3079, %v3252
      %v3280 = vadd.f32 %v3080, %v3257
      %v3281 = vadd.f32 %v3081, %v3262
      %v3282 = vadd.f32 %v3082, %v3267
      %v3283 = vld [vmem:[%s728 + $0xb] sm:$0xff]
      %v3284 = vld [vmem:[%s728 + $0x13] sm:$0xff]
      %v3285 = vld [vmem:[%s728 + $0x1b] sm:$0xff]
      %v3286 = vld [vmem:[%s728 + $0x23] sm:$0xff]
      %v3287 = vld [vmem:[%s728 + $0x2b] sm:$0xff]
      %v3288 = vld [vmem:[%s728 + $0x33] sm:$0xff]
      %v3289 = vld [vmem:[%s728 + $0x3b] sm:$0xff]
      %v3290 = vld [vmem:[%s728 + $0x43] sm:$0xff]
      %v3291 = vld [vmem:[%s728 + $0x4b] sm:$0xff]
      %v3292 = vld [vmem:[%s728 + $0x53] sm:$0xff]
      %v3293 = vld [vmem:[%s728 + $0x5b] sm:$0xff]
      %v3294 = vld [vmem:[%s728 + $0x63] sm:$0xff]
      %v3295 = vld [vmem:[%s728 + $0x6b] sm:$0xf]
      %s3296 = scalar_lea.vmem %s3, 352
      %v3297 = vld [vmem:[%s3296] sm:$0xff]
      %v3298 = vld [vmem:[%s3296 + $0x8] sm:$0xff]
      %v3299 = vld [vmem:[%s3296 + $0x10] sm:$0xff]
      %v3300 = vld [vmem:[%s3296 + $0x18] sm:$0xff]
      %v3302 = vsel %vm279, %v3283, 0
      %v3305 = vsel %vm279, %v3284, 0
      %v3308 = vsel %vm279, %v3285, 0
      %v3311 = vsel %vm279, %v3286, 0
      %v3314 = vsel %vm279, %v3287, 0
      %v3317 = vsel %vm279, %v3288, 0
      %v3320 = vsel %vm279, %v3289, 0
      %v3323 = vsel %vm279, %v3290, 0
      %v3326 = vsel %vm279, %v3291, 0
      %v3329 = vsel %vm279, %v3292, 0
      %v3332 = vsel %vm279, %v3293, 0
      %v3335 = vsel %vm279, %v3294, 0
      %v3338 = vsel %vm279, %v3295, 0
      %3340 = vmatprep.subr.mxu0 0.0
      %3341 = vmatpush1.msra.mxu0 %v3297
      %3342 = vmatprep.subr.mxu0 0.0
      %3343 = vmatpush1.msra.mxu0 %v3298
      %3344 = vmatprep.subr.mxu0 0.0
      %3345 = vmatpush1.msra.mxu0 %v3299
      %3346 = vmatprep.subr.mxu0 0.0
      %3347 = vmatpush1.msra.mxu0 %v3300
      %3348 = vmatprep.subr.mxu0 0.0
      %3349 = vmatpush1.msra.mxu0 0.0
      %3350 = vmatprep.subr.mxu0 0.0
      %3351 = vmatpush1.msra.mxu0 0.0
      %3352 = vmatprep.subr.mxu0 0.0
      %3353 = vmatpush1.msra.mxu0 0.0
      %3354 = vmatprep.subr.mxu0 0.0
      %3355 = vmatpush1.msra.mxu0 0.0
      %3356 = vmatprep.subr.mxu0 0.0
      %3357 = vmatpush1.msra.mxu0 0.0
      %3358 = vmatprep.subr.mxu0 0.0
      %3359 = vmatpush1.msra.mxu0 0.0
      %3360 = vmatprep.subr.mxu0 0.0
      %3361 = vmatpush1.msra.mxu0 0.0
      %3362 = vmatprep.subr.mxu0 0.0
      %3363 = vmatpush1.msra.mxu0 0.0
      %3364 = vmatprep.subr.mxu0 0.0
      %3365 = vmatpush1.msra.mxu0 0.0
      %3366 = vmatprep.subr.mxu0 0.0
      %3367 = vmatpush1.msra.mxu0 0.0
      %3368 = vmatprep.subr.mxu0 0.0
      %3369 = vmatpush1.msra.mxu0 0.0
      %3370 = vmatprep.subr.mxu0 0.0
      %3371 = vmatpush1.msra.mxu0 0.0
      %3372 = vmatprep.subr.mxu0 0.0
      %3373 = vmatpush1.msra.mxu0 0.0
      %3374 = vmatprep.subr.mxu0 0.0
      %3375 = vmatpush1.msra.mxu0 0.0
      %3376 = vmatprep.subr.mxu0 0.0
      %3377 = vmatpush1.msra.mxu0 0.0
      %3378 = vmatprep.subr.mxu0 0.0
      %3379 = vmatpush1.msra.mxu0 0.0
      %3380 = vmatprep.subr.mxu0 0.0
      %3381 = vmatpush1.msra.mxu0 0.0
      %3382 = vmatprep.subr.mxu0 0.0
      %3383 = vmatpush1.msra.mxu0 0.0
      %3384 = vmatprep.subr.mxu0 0.0
      %3385 = vmatpush1.msra.mxu0 0.0
      %3386 = vmatprep.subr.mxu0 0.0
      %3387 = vmatpush1.msra.mxu0 0.0
      %3388 = vmatprep.subr.mxu0 0.0
      %3389 = vmatpush1.msra.mxu0 0.0
      %3390 = vmatprep.subr.mxu0 0.0
      %3391 = vmatpush1.msra.mxu0 0.0
      %3392 = vmatprep.subr.mxu0 0.0
      %3393 = vmatpush1.msra.mxu0 0.0
      %3394 = vmatprep.subr.mxu0 0.0
      %3395 = vmatpush1.msra.mxu0 0.0
      %3396 = vmatprep.subr.mxu0 0.0
      %3397 = vmatpush1.msra.mxu0 0.0
      %3398 = vmatprep.subr.mxu0 0.0
      %3399 = vmatpush1.msra.mxu0 0.0
      %3400 = vmatprep.subr.mxu0 0.0
      %3401 = vmatpush1.msra.mxu0 0.0
      %3402 = vmatprep.subr.mxu0 0.0
      %3403 = vmatpush1.msra.mxu0 0.0
      %3404 = vmatprep.mubr.f32.mxu0 0.0
      %3405 = vmatmul.mubr.f32.gmra.mrb[0].mxu0 %v3302
      %v3406 = vpop.f32.mrb[0].mxu0
      %v3407 = vadd.f32 0.0, %v3406
      %v3408 = vpop.f32.mrb[0].mxu0
      %3409 = vmatprep.mubr.f32.mxu0 0.0
      %3410 = vmatmul.mubr.f32.gmra.mrb[0].mxu0 %v3305
      %v3411 = vpop.f32.mrb[0].mxu0
      %v3412 = vadd.f32 0.0, %v3411
      %v3413 = vpop.f32.mrb[0].mxu0
      %3414 = vmatprep.mubr.f32.mxu0 0.0
      %3415 = vmatmul.mubr.f32.gmra.mrb[0].mxu0 %v3308
      %v3416 = vpop.f32.mrb[0].mxu0
      %v3417 = vadd.f32 0.0, %v3416
      %v3418 = vpop.f32.mrb[0].mxu0
      %3419 = vmatprep.mubr.f32.mxu0 0.0
      %3420 = vmatmul.mubr.f32.gmra.mrb[0].mxu0 %v3311
      %v3421 = vpop.f32.mrb[0].mxu0
      %v3422 = vadd.f32 0.0, %v3421
      %v3423 = vpop.f32.mrb[0].mxu0
      %3424 = vmatprep.mubr.f32.mxu0 0.0
      %3425 = vmatmul.mubr.f32.gmra.mrb[0].mxu0 %v3314
      %v3426 = vpop.f32.mrb[0].mxu0
      %v3427 = vadd.f32 0.0, %v3426
      %v3428 = vpop.f32.mrb[0].mxu0
      %3429 = vmatprep.mubr.f32.mxu0 0.0
      %3430 = vmatmul.mubr.f32.gmra.mrb[0].mxu0 %v3317
      %v3431 = vpop.f32.mrb[0].mxu0
      %v3432 = vadd.f32 0.0, %v3431
      %v3433 = vpop.f32.mrb[0].mxu0
      %3434 = vmatprep.mubr.f32.mxu0 0.0
      %3435 = vmatmul.mubr.f32.gmra.mrb[0].mxu0 %v3320
      %v3436 = vpop.f32.mrb[0].mxu0
      %v3437 = vadd.f32 0.0, %v3436
      %v3438 = vpop.f32.mrb[0].mxu0
      %3439 = vmatprep.mubr.f32.mxu0 0.0
      %3440 = vmatmul.mubr.f32.gmra.mrb[0].mxu0 %v3323
      %v3441 = vpop.f32.mrb[0].mxu0
      %v3442 = vadd.f32 0.0, %v3441
      %v3443 = vpop.f32.mrb[0].mxu0
      %3444 = vmatprep.mubr.f32.mxu0 0.0
      %3445 = vmatmul.mubr.f32.gmra.mrb[0].mxu0 %v3326
      %v3446 = vpop.f32.mrb[0].mxu0
      %v3447 = vadd.f32 0.0, %v3446
      %v3448 = vpop.f32.mrb[0].mxu0
      %3449 = vmatprep.mubr.f32.mxu0 0.0
      %3450 = vmatmul.mubr.f32.gmra.mrb[0].mxu0 %v3329
      %v3451 = vpop.f32.mrb[0].mxu0
      %v3452 = vadd.f32 0.0, %v3451
      %v3453 = vpop.f32.mrb[0].mxu0
      %3454 = vmatprep.mubr.f32.mxu0 0.0
      %3455 = vmatmul.mubr.f32.gmra.mrb[0].mxu0 %v3332
      %v3456 = vpop.f32.mrb[0].mxu0
      %v3457 = vadd.f32 0.0, %v3456
      %v3458 = vpop.f32.mrb[0].mxu0
      %3459 = vmatprep.mubr.f32.mxu0 0.0
      %3460 = vmatmul.mubr.f32.gmra.mrb[0].mxu0 %v3335
      %v3461 = vpop.f32.mrb[0].mxu0
      %v3462 = vadd.f32 0.0, %v3461
      %v3463 = vpop.f32.mrb[0].mxu0
      %3464 = vmatprep.mubr.f32.mxu0 0.0
      %3465 = vmatmul.mubr.f32.gmra.mrb[0].mxu0 %v3338
      %v3466 = vpop.f32.mrb[0].mxu0
      %v3467 = vadd.f32 0.0, %v3466
      %v3468 = vpop.f32.mrb[0].mxu0
      %3469 = vdwg.mxu0
      %v3470 = vadd.f32 %v3270, %v3407
      %v3471 = vadd.f32 %v3271, %v3412
      %v3472 = vadd.f32 %v3272, %v3417
      %v3473 = vadd.f32 %v3273, %v3422
      %v3474 = vadd.f32 %v3274, %v3427
      %v3475 = vadd.f32 %v3275, %v3432
      %v3476 = vadd.f32 %v3276, %v3437
      %v3477 = vadd.f32 %v3277, %v3442
      %v3478 = vadd.f32 %v3278, %v3447
      %v3479 = vadd.f32 %v3279, %v3452
      %v3480 = vadd.f32 %v3280, %v3457
      %v3481 = vadd.f32 %v3281, %v3462
      %v3482 = vadd.f32 %v3282, %v3467
      %v3483 = vld [vmem:[%s912 + $0xa] sm:$0xff]
      %v3484 = vld [vmem:[%s912 + $0x12] sm:$0xff]
      %v3485 = vld [vmem:[%s912 + $0x1a] sm:$0xff]
      %v3486 = vld [vmem:[%s912 + $0x22] sm:$0xff]
      %v3487 = vld [vmem:[%s912 + $0x2a] sm:$0xff]
      %v3488 = vld [vmem:[%s912 + $0x32] sm:$0xff]
      %v3489 = vld [vmem:[%s912 + $0x3a] sm:$0xff]
      %v3490 = vld [vmem:[%s912 + $0x42] sm:$0xff]
      %v3491 = vld [vmem:[%s912 + $0x4a] sm:$0xff]
      %v3492 = vld [vmem:[%s912 + $0x52] sm:$0xff]
      %v3493 = vld [vmem:[%s912 + $0x5a] sm:$0xff]
      %v3494 = vld [vmem:[%s912 + $0x62] sm:$0xff]
      %v3495 = vld [vmem:[%s912 + $0x6a] sm:$0xf]
      %s3496 = scalar_lea.vmem %s3, 384
      %v3497 = vld [vmem:[%s3496] sm:$0xff]
      %v3498 = vld [vmem:[%s3496 + $0x8] sm:$0xff]
      %v3499 = vld [vmem:[%s3496 + $0x10] sm:$0xff]
      %v3500 = vld [vmem:[%s3496 + $0x18] sm:$0xff]
      %v3502 = vsel %vm279, %v3483, 0
      %v3505 = vsel %vm279, %v3484, 0
      %v3508 = vsel %vm279, %v3485, 0
      %v3511 = vsel %vm279, %v3486, 0
      %v3514 = vsel %vm279, %v3487, 0
      %v3517 = vsel %vm279, %v3488, 0
      %v3520 = vsel %vm279, %v3489, 0
      %v3523 = vsel %vm279, %v3490, 0
      %v3526 = vsel %vm279, %v3491, 0
      %v3529 = vsel %vm279, %v3492, 0
      %v3532 = vsel %vm279, %v3493, 0
      %v3535 = vsel %vm279, %v3494, 0
      %v3538 = vsel %vm279, %v3495, 0
      %3540 = vmatprep.subr.mxu0 0.0
      %3541 = vmatpush1.msra.mxu0 %v3497
      %3542 = vmatprep.subr.mxu0 0.0
      %3543 = vmatpush1.msra.mxu0 %v3498
      %3544 = vmatprep.subr.mxu0 0.0
      %3545 = vmatpush1.msra.mxu0 %v3499
      %3546 = vmatprep.subr.mxu0 0.0
      %3547 = vmatpush1.msra.mxu0 %v3500
      %3548 = vmatprep.subr.mxu0 0.0
      %3549 = vmatpush1.msra.mxu0 0.0
      %3550 = vmatprep.subr.mxu0 0.0
      %3551 = vmatpush1.msra.mxu0 0.0
      %3552 = vmatprep.subr.mxu0 0.0
      %3553 = vmatpush1.msra.mxu0 0.0
      %3554 = vmatprep.subr.mxu0 0.0
      %3555 = vmatpush1.msra.mxu0 0.0
      %3556 = vmatprep.subr.mxu0 0.0
      %3557 = vmatpush1.msra.mxu0 0.0
      %3558 = vmatprep.subr.mxu0 0.0
      %3559 = vmatpush1.msra.mxu0 0.0
      %3560 = vmatprep.subr.mxu0 0.0
      %3561 = vmatpush1.msra.mxu0 0.0
      %3562 = vmatprep.subr.mxu0 0.0
      %3563 = vmatpush1.msra.mxu0 0.0
      %3564 = vmatprep.subr.mxu0 0.0
      %3565 = vmatpush1.msra.mxu0 0.0
      %3566 = vmatprep.subr.mxu0 0.0
      %3567 = vmatpush1.msra.mxu0 0.0
      %3568 = vmatprep.subr.mxu0 0.0
      %3569 = vmatpush1.msra.mxu0 0.0
      %3570 = vmatprep.subr.mxu0 0.0
      %3571 = vmatpush1.msra.mxu0 0.0
      %3572 = vmatprep.subr.mxu0 0.0
      %3573 = vmatpush1.msra.mxu0 0.0
      %3574 = vmatprep.subr.mxu0 0.0
      %3575 = vmatpush1.msra.mxu0 0.0
      %3576 = vmatprep.subr.mxu0 0.0
      %3577 = vmatpush1.msra.mxu0 0.0
      %3578 = vmatprep.subr.mxu0 0.0
      %3579 = vmatpush1.msra.mxu0 0.0
      %3580 = vmatprep.subr.mxu0 0.0
      %3581 = vmatpush1.msra.mxu0 0.0
      %3582 = vmatprep.subr.mxu0 0.0
      %3583 = vmatpush1.msra.mxu0 0.0
      %3584 = vmatprep.subr.mxu0 0.0
      %3585 = vmatpush1.msra.mxu0 0.0
      %3586 = vmatprep.subr.mxu0 0.0
      %3587 = vmatpush1.msra.mxu0 0.0
      %3588 = vmatprep.subr.mxu0 0.0
      %3589 = vmatpush1.msra.mxu0 0.0
      %3590 = vmatprep.subr.mxu0 0.0
      %3591 = vmatpush1.msra.mxu0 0.0
      %3592 = vmatprep.subr.mxu0 0.0
      %3593 = vmatpush1.msra.mxu0 0.0
      %3594 = vmatprep.subr.mxu0 0.0
      %3595 = vmatpush1.msra.mxu0 0.0
      %3596 = vmatprep.subr.mxu0 0.0
      %3597 = vmatpush1.msra.mxu0 0.0
      %3598 = vmatprep.subr.mxu0 0.0
      %3599 = vmatpush1.msra.mxu0 0.0
      %3600 = vmatprep.subr.mxu0 0.0
      %3601 = vmatpush1.msra.mxu0 0.0
      %3602 = vmatprep.subr.mxu0 0.0
      %3603 = vmatpush1.msra.mxu0 0.0
      %3604 = vmatprep.mubr.f32.mxu0 0.0
      %3605 = vmatmul.mubr.f32.gmra.mrb[0].mxu0 %v3502
      %v3606 = vpop.f32.mrb[0].mxu0
      %v3607 = vadd.f32 0.0, %v3606
      %v3608 = vpop.f32.mrb[0].mxu0
      %3609 = vmatprep.mubr.f32.mxu0 0.0
      %3610 = vmatmul.mubr.f32.gmra.mrb[0].mxu0 %v3505
      %v3611 = vpop.f32.mrb[0].mxu0
      %v3612 = vadd.f32 0.0, %v3611
      %v3613 = vpop.f32.mrb[0].mxu0
      %3614 = vmatprep.mubr.f32.mxu0 0.0
      %3615 = vmatmul.mubr.f32.gmra.mrb[0].mxu0 %v3508
      %v3616 = vpop.f32.mrb[0].mxu0
      %v3617 = vadd.f32 0.0, %v3616
      %v3618 = vpop.f32.mrb[0].mxu0
      %3619 = vmatprep.mubr.f32.mxu0 0.0
      %3620 = vmatmul.mubr.f32.gmra.mrb[0].mxu0 %v3511
      %v3621 = vpop.f32.mrb[0].mxu0
      %v3622 = vadd.f32 0.0, %v3621
      %v3623 = vpop.f32.mrb[0].mxu0
      %3624 = vmatprep.mubr.f32.mxu0 0.0
      %3625 = vmatmul.mubr.f32.gmra.mrb[0].mxu0 %v3514
      %v3626 = vpop.f32.mrb[0].mxu0
      %v3627 = vadd.f32 0.0, %v3626
      %v3628 = vpop.f32.mrb[0].mxu0
      %3629 = vmatprep.mubr.f32.mxu0 0.0
      %3630 = vmatmul.mubr.f32.gmra.mrb[0].mxu0 %v3517
      %v3631 = vpop.f32.mrb[0].mxu0
      %v3632 = vadd.f32 0.0, %v3631
      %v3633 = vpop.f32.mrb[0].mxu0
      %3634 = vmatprep.mubr.f32.mxu0 0.0
      %3635 = vmatmul.mubr.f32.gmra.mrb[0].mxu0 %v3520
      %v3636 = vpop.f32.mrb[0].mxu0
      %v3637 = vadd.f32 0.0, %v3636
      %v3638 = vpop.f32.mrb[0].mxu0
      %3639 = vmatprep.mubr.f32.mxu0 0.0
      %3640 = vmatmul.mubr.f32.gmra.mrb[0].mxu0 %v3523
      %v3641 = vpop.f32.mrb[0].mxu0
      %v3642 = vadd.f32 0.0, %v3641
      %v3643 = vpop.f32.mrb[0].mxu0
      %3644 = vmatprep.mubr.f32.mxu0 0.0
      %3645 = vmatmul.mubr.f32.gmra.mrb[0].mxu0 %v3526
      %v3646 = vpop.f32.mrb[0].mxu0
      %v3647 = vadd.f32 0.0, %v3646
      %v3648 = vpop.f32.mrb[0].mxu0
      %3649 = vmatprep.mubr.f32.mxu0 0.0
      %3650 = vmatmul.mubr.f32.gmra.mrb[0].mxu0 %v3529
      %v3651 = vpop.f32.mrb[0].mxu0
      %v3652 = vadd.f32 0.0, %v3651
      %v3653 = vpop.f32.mrb[0].mxu0
      %3654 = vmatprep.mubr.f32.mxu0 0.0
      %3655 = vmatmul.mubr.f32.gmra.mrb[0].mxu0 %v3532
      %v3656 = vpop.f32.mrb[0].mxu0
      %v3657 = vadd.f32 0.0, %v3656
      %v3658 = vpop.f32.mrb[0].mxu0
      %3659 = vmatprep.mubr.f32.mxu0 0.0
      %3660 = vmatmul.mubr.f32.gmra.mrb[0].mxu0 %v3535
      %v3661 = vpop.f32.mrb[0].mxu0
      %v3662 = vadd.f32 0.0, %v3661
      %v3663 = vpop.f32.mrb[0].mxu0
      %3664 = vmatprep.mubr.f32.mxu0 0.0
      %3665 = vmatmul.mubr.f32.gmra.mrb[0].mxu0 %v3538
      %v3666 = vpop.f32.mrb[0].mxu0
      %v3667 = vadd.f32 0.0, %v3666
      %v3668 = vpop.f32.mrb[0].mxu0
      %3669 = vdwg.mxu0
      %v3670 = vadd.f32 %v3470, %v3607
      %v3671 = vadd.f32 %v3471, %v3612
      %v3672 = vadd.f32 %v3472, %v3617
      %v3673 = vadd.f32 %v3473, %v3622
      %v3674 = vadd.f32 %v3474, %v3627
      %v3675 = vadd.f32 %v3475, %v3632
      %v3676 = vadd.f32 %v3476, %v3637
      %v3677 = vadd.f32 %v3477, %v3642
      %v3678 = vadd.f32 %v3478, %v3647
      %v3679 = vadd.f32 %v3479, %v3652
      %v3680 = vadd.f32 %v3480, %v3657
      %v3681 = vadd.f32 %v3481, %v3662
      %v3682 = vadd.f32 %v3482, %v3667
      %v3683 = vld [vmem:[%s1096 + $0xa] sm:$0xff]
      %v3684 = vld [vmem:[%s1096 + $0x12] sm:$0xff]
      %v3685 = vld [vmem:[%s1096 + $0x1a] sm:$0xff]
      %v3686 = vld [vmem:[%s1096 + $0x22] sm:$0xff]
      %v3687 = vld [vmem:[%s1096 + $0x2a] sm:$0xff]
      %v3688 = vld [vmem:[%s1096 + $0x32] sm:$0xff]
      %v3689 = vld [vmem:[%s1096 + $0x3a] sm:$0xff]
      %v3690 = vld [vmem:[%s1096 + $0x42] sm:$0xff]
      %v3691 = vld [vmem:[%s1096 + $0x4a] sm:$0xff]
      %v3692 = vld [vmem:[%s1096 + $0x52] sm:$0xff]
      %v3693 = vld [vmem:[%s1096 + $0x5a] sm:$0xff]
      %v3694 = vld [vmem:[%s1096 + $0x62] sm:$0xff]
      %v3695 = vld [vmem:[%s1096 + $0x6a] sm:$0xf]
      %s3696 = scalar_lea.vmem %s3, 416
      %v3697 = vld [vmem:[%s3696] sm:$0xff]
      %v3698 = vld [vmem:[%s3696 + $0x8] sm:$0xff]
      %v3699 = vld [vmem:[%s3696 + $0x10] sm:$0xff]
      %v3700 = vld [vmem:[%s3696 + $0x18] sm:$0xff]
      %v3702 = vsel %vm279, %v3683, 0
      %v3705 = vsel %vm279, %v3684, 0
      %v3708 = vsel %vm279, %v3685, 0
      %v3711 = vsel %vm279, %v3686, 0
      %v3714 = vsel %vm279, %v3687, 0
      %v3717 = vsel %vm279, %v3688, 0
      %v3720 = vsel %vm279, %v3689, 0
      %v3723 = vsel %vm279, %v3690, 0
      %v3726 = vsel %vm279, %v3691, 0
      %v3729 = vsel %vm279, %v3692, 0
      %v3732 = vsel %vm279, %v3693, 0
      %v3735 = vsel %vm279, %v3694, 0
      %v3738 = vsel %vm279, %v3695, 0
      %3740 = vmatprep.subr.mxu0 0.0
      %3741 = vmatpush1.msra.mxu0 %v3697
      %3742 = vmatprep.subr.mxu0 0.0
      %3743 = vmatpush1.msra.mxu0 %v3698
      %3744 = vmatprep.subr.mxu0 0.0
      %3745 = vmatpush1.msra.mxu0 %v3699
      %3746 = vmatprep.subr.mxu0 0.0
      %3747 = vmatpush1.msra.mxu0 %v3700
      %3748 = vmatprep.subr.mxu0 0.0
      %3749 = vmatpush1.msra.mxu0 0.0
      %3750 = vmatprep.subr.mxu0 0.0
      %3751 = vmatpush1.msra.mxu0 0.0
      %3752 = vmatprep.subr.mxu0 0.0
      %3753 = vmatpush1.msra.mxu0 0.0
      %3754 = vmatprep.subr.mxu0 0.0
      %3755 = vmatpush1.msra.mxu0 0.0
      %3756 = vmatprep.subr.mxu0 0.0
      %3757 = vmatpush1.msra.mxu0 0.0
      %3758 = vmatprep.subr.mxu0 0.0
      %3759 = vmatpush1.msra.mxu0 0.0
      %3760 = vmatprep.subr.mxu0 0.0
      %3761 = vmatpush1.msra.mxu0 0.0
      %3762 = vmatprep.subr.mxu0 0.0
      %3763 = vmatpush1.msra.mxu0 0.0
      %3764 = vmatprep.subr.mxu0 0.0
      %3765 = vmatpush1.msra.mxu0 0.0
      %3766 = vmatprep.subr.mxu0 0.0
      %3767 = vmatpush1.msra.mxu0 0.0
      %3768 = vmatprep.subr.mxu0 0.0
      %3769 = vmatpush1.msra.mxu0 0.0
      %3770 = vmatprep.subr.mxu0 0.0
      %3771 = vmatpush1.msra.mxu0 0.0
      %3772 = vmatprep.subr.mxu0 0.0
      %3773 = vmatpush1.msra.mxu0 0.0
      %3774 = vmatprep.subr.mxu0 0.0
      %3775 = vmatpush1.msra.mxu0 0.0
      %3776 = vmatprep.subr.mxu0 0.0
      %3777 = vmatpush1.msra.mxu0 0.0
      %3778 = vmatprep.subr.mxu0 0.0
      %3779 = vmatpush1.msra.mxu0 0.0
      %3780 = vmatprep.subr.mxu0 0.0
      %3781 = vmatpush1.msra.mxu0 0.0
      %3782 = vmatprep.subr.mxu0 0.0
      %3783 = vmatpush1.msra.mxu0 0.0
      %3784 = vmatprep.subr.mxu0 0.0
      %3785 = vmatpush1.msra.mxu0 0.0
      %3786 = vmatprep.subr.mxu0 0.0
      %3787 = vmatpush1.msra.mxu0 0.0
      %3788 = vmatprep.subr.mxu0 0.0
      %3789 = vmatpush1.msra.mxu0 0.0
      %3790 = vmatprep.subr.mxu0 0.0
      %3791 = vmatpush1.msra.mxu0 0.0
      %3792 = vmatprep.subr.mxu0 0.0
      %3793 = vmatpush1.msra.mxu0 0.0
      %3794 = vmatprep.subr.mxu0 0.0
      %3795 = vmatpush1.msra.mxu0 0.0
      %3796 = vmatprep.subr.mxu0 0.0
      %3797 = vmatpush1.msra.mxu0 0.0
      %3798 = vmatprep.subr.mxu0 0.0
      %3799 = vmatpush1.msra.mxu0 0.0
      %3800 = vmatprep.subr.mxu0 0.0
      %3801 = vmatpush1.msra.mxu0 0.0
      %3802 = vmatprep.subr.mxu0 0.0
      %3803 = vmatpush1.msra.mxu0 0.0
      %3804 = vmatprep.mubr.f32.mxu0 0.0
      %3805 = vmatmul.mubr.f32.gmra.mrb[0].mxu0 %v3702
      %v3806 = vpop.f32.mrb[0].mxu0
      %v3807 = vadd.f32 0.0, %v3806
      %v3808 = vpop.f32.mrb[0].mxu0
      %3809 = vmatprep.mubr.f32.mxu0 0.0
      %3810 = vmatmul.mubr.f32.gmra.mrb[0].mxu0 %v3705
      %v3811 = vpop.f32.mrb[0].mxu0
      %v3812 = vadd.f32 0.0, %v3811
      %v3813 = vpop.f32.mrb[0].mxu0
      %3814 = vmatprep.mubr.f32.mxu0 0.0
      %3815 = vmatmul.mubr.f32.gmra.mrb[0].mxu0 %v3708
      %v3816 = vpop.f32.mrb[0].mxu0
      %v3817 = vadd.f32 0.0, %v3816
      %v3818 = vpop.f32.mrb[0].mxu0
      %3819 = vmatprep.mubr.f32.mxu0 0.0
      %3820 = vmatmul.mubr.f32.gmra.mrb[0].mxu0 %v3711
      %v3821 = vpop.f32.mrb[0].mxu0
      %v3822 = vadd.f32 0.0, %v3821
      %v3823 = vpop.f32.mrb[0].mxu0
      %3824 = vmatprep.mubr.f32.mxu0 0.0
      %3825 = vmatmul.mubr.f32.gmra.mrb[0].mxu0 %v3714
      %v3826 = vpop.f32.mrb[0].mxu0
      %v3827 = vadd.f32 0.0, %v3826
      %v3828 = vpop.f32.mrb[0].mxu0
      %3829 = vmatprep.mubr.f32.mxu0 0.0
      %3830 = vmatmul.mubr.f32.gmra.mrb[0].mxu0 %v3717
      %v3831 = vpop.f32.mrb[0].mxu0
      %v3832 = vadd.f32 0.0, %v3831
      %v3833 = vpop.f32.mrb[0].mxu0
      %3834 = vmatprep.mubr.f32.mxu0 0.0
      %3835 = vmatmul.mubr.f32.gmra.mrb[0].mxu0 %v3720
      %v3836 = vpop.f32.mrb[0].mxu0
      %v3837 = vadd.f32 0.0, %v3836
      %v3838 = vpop.f32.mrb[0].mxu0
      %3839 = vmatprep.mubr.f32.mxu0 0.0
      %3840 = vmatmul.mubr.f32.gmra.mrb[0].mxu0 %v3723
      %v3841 = vpop.f32.mrb[0].mxu0
      %v3842 = vadd.f32 0.0, %v3841
      %v3843 = vpop.f32.mrb[0].mxu0
      %3844 = vmatprep.mubr.f32.mxu0 0.0
      %3845 = vmatmul.mubr.f32.gmra.mrb[0].mxu0 %v3726
      %v3846 = vpop.f32.mrb[0].mxu0
      %v3847 = vadd.f32 0.0, %v3846
      %v3848 = vpop.f32.mrb[0].mxu0
      %3849 = vmatprep.mubr.f32.mxu0 0.0
      %3850 = vmatmul.mubr.f32.gmra.mrb[0].mxu0 %v3729
      %v3851 = vpop.f32.mrb[0].mxu0
      %v3852 = vadd.f32 0.0, %v3851
      %v3853 = vpop.f32.mrb[0].mxu0
      %3854 = vmatprep.mubr.f32.mxu0 0.0
      %3855 = vmatmul.mubr.f32.gmra.mrb[0].mxu0 %v3732
      %v3856 = vpop.f32.mrb[0].mxu0
      %v3857 = vadd.f32 0.0, %v3856
      %v3858 = vpop.f32.mrb[0].mxu0
      %3859 = vmatprep.mubr.f32.mxu0 0.0
      %3860 = vmatmul.mubr.f32.gmra.mrb[0].mxu0 %v3735
      %v3861 = vpop.f32.mrb[0].mxu0
      %v3862 = vadd.f32 0.0, %v3861
      %v3863 = vpop.f32.mrb[0].mxu0
      %3864 = vmatprep.mubr.f32.mxu0 0.0
      %3865 = vmatmul.mubr.f32.gmra.mrb[0].mxu0 %v3738
      %v3866 = vpop.f32.mrb[0].mxu0
      %v3867 = vadd.f32 0.0, %v3866
      %v3868 = vpop.f32.mrb[0].mxu0
      %3869 = vdwg.mxu0
      %v3870 = vadd.f32 %v3670, %v3807
      %v3871 = vadd.f32 %v3671, %v3812
      %v3872 = vadd.f32 %v3672, %v3817
      %v3873 = vadd.f32 %v3673, %v3822
      %v3874 = vadd.f32 %v3674, %v3827
      %v3875 = vadd.f32 %v3675, %v3832
      %v3876 = vadd.f32 %v3676, %v3837
      %v3877 = vadd.f32 %v3677, %v3842
      %v3878 = vadd.f32 %v3678, %v3847
      %v3879 = vadd.f32 %v3679, %v3852
      %v3880 = vadd.f32 %v3680, %v3857
      %v3881 = vadd.f32 %v3681, %v3862
      %v3882 = vadd.f32 %v3682, %v3867
      %v3883 = vld [vmem:[%s912 + $0xb] sm:$0xff]
      %v3884 = vld [vmem:[%s912 + $0x13] sm:$0xff]
      %v3885 = vld [vmem:[%s912 + $0x1b] sm:$0xff]
      %v3886 = vld [vmem:[%s912 + $0x23] sm:$0xff]
      %v3887 = vld [vmem:[%s912 + $0x2b] sm:$0xff]
      %v3888 = vld [vmem:[%s912 + $0x33] sm:$0xff]
      %v3889 = vld [vmem:[%s912 + $0x3b] sm:$0xff]
      %v3890 = vld [vmem:[%s912 + $0x43] sm:$0xff]
      %v3891 = vld [vmem:[%s912 + $0x4b] sm:$0xff]
      %v3892 = vld [vmem:[%s912 + $0x53] sm:$0xff]
      %v3893 = vld [vmem:[%s912 + $0x5b] sm:$0xff]
      %v3894 = vld [vmem:[%s912 + $0x63] sm:$0xff]
      %v3895 = vld [vmem:[%s912 + $0x6b] sm:$0xf]
      %s3896 = scalar_lea.vmem %s3, 448
      %v3897 = vld [vmem:[%s3896] sm:$0xff]
      %v3898 = vld [vmem:[%s3896 + $0x8] sm:$0xff]
      %v3899 = vld [vmem:[%s3896 + $0x10] sm:$0xff]
      %v3900 = vld [vmem:[%s3896 + $0x18] sm:$0xff]
      %v3902 = vsel %vm279, %v3883, 0
      %v3905 = vsel %vm279, %v3884, 0
      %v3908 = vsel %vm279, %v3885, 0
      %v3911 = vsel %vm279, %v3886, 0
      %v3914 = vsel %vm279, %v3887, 0
      %v3917 = vsel %vm279, %v3888, 0
      %v3920 = vsel %vm279, %v3889, 0
      %v3923 = vsel %vm279, %v3890, 0
      %v3926 = vsel %vm279, %v3891, 0
      %v3929 = vsel %vm279, %v3892, 0
      %v3932 = vsel %vm279, %v3893, 0
      %v3935 = vsel %vm279, %v3894, 0
      %v3938 = vsel %vm279, %v3895, 0
      %3940 = vmatprep.subr.mxu0 0.0
      %3941 = vmatpush1.msra.mxu0 %v3897
      %3942 = vmatprep.subr.mxu0 0.0
      %3943 = vmatpush1.msra.mxu0 %v3898
      %3944 = vmatprep.subr.mxu0 0.0
      %3945 = vmatpush1.msra.mxu0 %v3899
      %3946 = vmatprep.subr.mxu0 0.0
      %3947 = vmatpush1.msra.mxu0 %v3900
      %3948 = vmatprep.subr.mxu0 0.0
      %3949 = vmatpush1.msra.mxu0 0.0
      %3950 = vmatprep.subr.mxu0 0.0
      %3951 = vmatpush1.msra.mxu0 0.0
      %3952 = vmatprep.subr.mxu0 0.0
      %3953 = vmatpush1.msra.mxu0 0.0
      %3954 = vmatprep.subr.mxu0 0.0
      %3955 = vmatpush1.msra.mxu0 0.0
      %3956 = vmatprep.subr.mxu0 0.0
      %3957 = vmatpush1.msra.mxu0 0.0
      %3958 = vmatprep.subr.mxu0 0.0
      %3959 = vmatpush1.msra.mxu0 0.0
      %3960 = vmatprep.subr.mxu0 0.0
      %3961 = vmatpush1.msra.mxu0 0.0
      %3962 = vmatprep.subr.mxu0 0.0
      %3963 = vmatpush1.msra.mxu0 0.0
      %3964 = vmatprep.subr.mxu0 0.0
      %3965 = vmatpush1.msra.mxu0 0.0
      %3966 = vmatprep.subr.mxu0 0.0
      %3967 = vmatpush1.msra.mxu0 0.0
      %3968 = vmatprep.subr.mxu0 0.0
      %3969 = vmatpush1.msra.mxu0 0.0
      %3970 = vmatprep.subr.mxu0 0.0
      %3971 = vmatpush1.msra.mxu0 0.0
      %3972 = vmatprep.subr.mxu0 0.0
      %3973 = vmatpush1.msra.mxu0 0.0
      %3974 = vmatprep.subr.mxu0 0.0
      %3975 = vmatpush1.msra.mxu0 0.0
      %3976 = vmatprep.subr.mxu0 0.0
      %3977 = vmatpush1.msra.mxu0 0.0
      %3978 = vmatprep.subr.mxu0 0.0
      %3979 = vmatpush1.msra.mxu0 0.0
      %3980 = vmatprep.subr.mxu0 0.0
      %3981 = vmatpush1.msra.mxu0 0.0
      %3982 = vmatprep.subr.mxu0 0.0
      %3983 = vmatpush1.msra.mxu0 0.0
      %3984 = vmatprep.subr.mxu0 0.0
      %3985 = vmatpush1.msra.mxu0 0.0
      %3986 = vmatprep.subr.mxu0 0.0
      %3987 = vmatpush1.msra.mxu0 0.0
      %3988 = vmatprep.subr.mxu0 0.0
      %3989 = vmatpush1.msra.mxu0 0.0
      %3990 = vmatprep.subr.mxu0 0.0
      %3991 = vmatpush1.msra.mxu0 0.0
      %3992 = vmatprep.subr.mxu0 0.0
      %3993 = vmatpush1.msra.mxu0 0.0
      %3994 = vmatprep.subr.mxu0 0.0
      %3995 = vmatpush1.msra.mxu0 0.0
      %3996 = vmatprep.subr.mxu0 0.0
      %3997 = vmatpush1.msra.mxu0 0.0
      %3998 = vmatprep.subr.mxu0 0.0
      %3999 = vmatpush1.msra.mxu0 0.0
      %4000 = vmatprep.subr.mxu0 0.0
      %4001 = vmatpush1.msra.mxu0 0.0
      %4002 = vmatprep.subr.mxu0 0.0
      %4003 = vmatpush1.msra.mxu0 0.0
      %4004 = vmatprep.mubr.f32.mxu0 0.0
      %4005 = vmatmul.mubr.f32.gmra.mrb[0].mxu0 %v3902
      %v4006 = vpop.f32.mrb[0].mxu0
      %v4007 = vadd.f32 0.0, %v4006
      %v4008 = vpop.f32.mrb[0].mxu0
      %4009 = vmatprep.mubr.f32.mxu0 0.0
      %4010 = vmatmul.mubr.f32.gmra.mrb[0].mxu0 %v3905
      %v4011 = vpop.f32.mrb[0].mxu0
      %v4012 = vadd.f32 0.0, %v4011
      %v4013 = vpop.f32.mrb[0].mxu0
      %4014 = vmatprep.mubr.f32.mxu0 0.0
      %4015 = vmatmul.mubr.f32.gmra.mrb[0].mxu0 %v3908
      %v4016 = vpop.f32.mrb[0].mxu0
      %v4017 = vadd.f32 0.0, %v4016
      %v4018 = vpop.f32.mrb[0].mxu0
      %4019 = vmatprep.mubr.f32.mxu0 0.0
      %4020 = vmatmul.mubr.f32.gmra.mrb[0].mxu0 %v3911
      %v4021 = vpop.f32.mrb[0].mxu0
      %v4022 = vadd.f32 0.0, %v4021
      %v4023 = vpop.f32.mrb[0].mxu0
      %4024 = vmatprep.mubr.f32.mxu0 0.0
      %4025 = vmatmul.mubr.f32.gmra.mrb[0].mxu0 %v3914
      %v4026 = vpop.f32.mrb[0].mxu0
      %v4027 = vadd.f32 0.0, %v4026
      %v4028 = vpop.f32.mrb[0].mxu0
      %4029 = vmatprep.mubr.f32.mxu0 0.0
      %4030 = vmatmul.mubr.f32.gmra.mrb[0].mxu0 %v3917
      %v4031 = vpop.f32.mrb[0].mxu0
      %v4032 = vadd.f32 0.0, %v4031
      %v4033 = vpop.f32.mrb[0].mxu0
      %4034 = vmatprep.mubr.f32.mxu0 0.0
      %4035 = vmatmul.mubr.f32.gmra.mrb[0].mxu0 %v3920
      %v4036 = vpop.f32.mrb[0].mxu0
      %v4037 = vadd.f32 0.0, %v4036
      %v4038 = vpop.f32.mrb[0].mxu0
      %4039 = vmatprep.mubr.f32.mxu0 0.0
      %4040 = vmatmul.mubr.f32.gmra.mrb[0].mxu0 %v3923
      %v4041 = vpop.f32.mrb[0].mxu0
      %v4042 = vadd.f32 0.0, %v4041
      %v4043 = vpop.f32.mrb[0].mxu0
      %4044 = vmatprep.mubr.f32.mxu0 0.0
      %4045 = vmatmul.mubr.f32.gmra.mrb[0].mxu0 %v3926
      %v4046 = vpop.f32.mrb[0].mxu0
      %v4047 = vadd.f32 0.0, %v4046
      %v4048 = vpop.f32.mrb[0].mxu0
      %4049 = vmatprep.mubr.f32.mxu0 0.0
      %4050 = vmatmul.mubr.f32.gmra.mrb[0].mxu0 %v3929
      %v4051 = vpop.f32.mrb[0].mxu0
      %v4052 = vadd.f32 0.0, %v4051
      %v4053 = vpop.f32.mrb[0].mxu0
      %4054 = vmatprep.mubr.f32.mxu0 0.0
      %4055 = vmatmul.mubr.f32.gmra.mrb[0].mxu0 %v3932
      %v4056 = vpop.f32.mrb[0].mxu0
      %v4057 = vadd.f32 0.0, %v4056
      %v4058 = vpop.f32.mrb[0].mxu0
      %4059 = vmatprep.mubr.f32.mxu0 0.0
      %4060 = vmatmul.mubr.f32.gmra.mrb[0].mxu0 %v3935
      %v4061 = vpop.f32.mrb[0].mxu0
      %v4062 = vadd.f32 0.0, %v4061
      %v4063 = vpop.f32.mrb[0].mxu0
      %4064 = vmatprep.mubr.f32.mxu0 0.0
      %4065 = vmatmul.mubr.f32.gmra.mrb[0].mxu0 %v3938
      %v4066 = vpop.f32.mrb[0].mxu0
      %v4067 = vadd.f32 0.0, %v4066
      %v4068 = vpop.f32.mrb[0].mxu0
      %4069 = vdwg.mxu0
      %v4070 = vadd.f32 %v3870, %v4007
      %v4071 = vadd.f32 %v3871, %v4012
      %v4072 = vadd.f32 %v3872, %v4017
      %v4073 = vadd.f32 %v3873, %v4022
      %v4074 = vadd.f32 %v3874, %v4027
      %v4075 = vadd.f32 %v3875, %v4032
      %v4076 = vadd.f32 %v3876, %v4037
      %v4077 = vadd.f32 %v3877, %v4042
      %v4078 = vadd.f32 %v3878, %v4047
      %v4079 = vadd.f32 %v3879, %v4052
      %v4080 = vadd.f32 %v3880, %v4057
      %v4081 = vadd.f32 %v3881, %v4062
      %v4082 = vadd.f32 %v3882, %v4067
      %v4083 = vld [vmem:[%s1096 + $0xb] sm:$0xff]
      %v4084 = vld [vmem:[%s1096 + $0x13] sm:$0xff]
      %v4085 = vld [vmem:[%s1096 + $0x1b] sm:$0xff]
      %v4086 = vld [vmem:[%s1096 + $0x23] sm:$0xff]
      %v4087 = vld [vmem:[%s1096 + $0x2b] sm:$0xff]
      %v4088 = vld [vmem:[%s1096 + $0x33] sm:$0xff]
      %v4089 = vld [vmem:[%s1096 + $0x3b] sm:$0xff]
      %v4090 = vld [vmem:[%s1096 + $0x43] sm:$0xff]
      %v4091 = vld [vmem:[%s1096 + $0x4b] sm:$0xff]
      %v4092 = vld [vmem:[%s1096 + $0x53] sm:$0xff]
      %v4093 = vld [vmem:[%s1096 + $0x5b] sm:$0xff]
      %v4094 = vld [vmem:[%s1096 + $0x63] sm:$0xff]
      %v4095 = vld [vmem:[%s1096 + $0x6b] sm:$0xf]
      %s4096 = scalar_lea.vmem %s3, 480
      %v4097 = vld [vmem:[%s4096] sm:$0xff]
      %v4098 = vld [vmem:[%s4096 + $0x8] sm:$0xff]
      %v4099 = vld [vmem:[%s4096 + $0x10] sm:$0xff]
      %v4100 = vld [vmem:[%s4096 + $0x18] sm:$0xff]
      %v4102 = vsel %vm279, %v4083, 0
      %v4105 = vsel %vm279, %v4084, 0
      %v4108 = vsel %vm279, %v4085, 0
      %v4111 = vsel %vm279, %v4086, 0
      %v4114 = vsel %vm279, %v4087, 0
      %v4117 = vsel %vm279, %v4088, 0
      %v4120 = vsel %vm279, %v4089, 0
      %v4123 = vsel %vm279, %v4090, 0
      %v4126 = vsel %vm279, %v4091, 0
      %v4129 = vsel %vm279, %v4092, 0
      %v4132 = vsel %vm279, %v4093, 0
      %v4135 = vsel %vm279, %v4094, 0
      %v4138 = vsel %vm279, %v4095, 0
      %4140 = vmatprep.subr.mxu0 0.0
      %4141 = vmatpush1.msra.mxu0 %v4097
      %4142 = vmatprep.subr.mxu0 0.0
      %4143 = vmatpush1.msra.mxu0 %v4098
      %4144 = vmatprep.subr.mxu0 0.0
      %4145 = vmatpush1.msra.mxu0 %v4099
      %4146 = vmatprep.subr.mxu0 0.0
      %4147 = vmatpush1.msra.mxu0 %v4100
      %4148 = vmatprep.subr.mxu0 0.0
      %4149 = vmatpush1.msra.mxu0 0.0
      %4150 = vmatprep.subr.mxu0 0.0
      %4151 = vmatpush1.msra.mxu0 0.0
      %4152 = vmatprep.subr.mxu0 0.0
      %4153 = vmatpush1.msra.mxu0 0.0
      %4154 = vmatprep.subr.mxu0 0.0
      %4155 = vmatpush1.msra.mxu0 0.0
      %4156 = vmatprep.subr.mxu0 0.0
      %4157 = vmatpush1.msra.mxu0 0.0
      %4158 = vmatprep.subr.mxu0 0.0
      %4159 = vmatpush1.msra.mxu0 0.0
      %4160 = vmatprep.subr.mxu0 0.0
      %4161 = vmatpush1.msra.mxu0 0.0
      %4162 = vmatprep.subr.mxu0 0.0
      %4163 = vmatpush1.msra.mxu0 0.0
      %4164 = vmatprep.subr.mxu0 0.0
      %4165 = vmatpush1.msra.mxu0 0.0
      %4166 = vmatprep.subr.mxu0 0.0
      %4167 = vmatpush1.msra.mxu0 0.0
      %4168 = vmatprep.subr.mxu0 0.0
      %4169 = vmatpush1.msra.mxu0 0.0
      %4170 = vmatprep.subr.mxu0 0.0
      %4171 = vmatpush1.msra.mxu0 0.0
      %4172 = vmatprep.subr.mxu0 0.0
      %4173 = vmatpush1.msra.mxu0 0.0
      %4174 = vmatprep.subr.mxu0 0.0
      %4175 = vmatpush1.msra.mxu0 0.0
      %4176 = vmatprep.subr.mxu0 0.0
      %4177 = vmatpush1.msra.mxu0 0.0
      %4178 = vmatprep.subr.mxu0 0.0
      %4179 = vmatpush1.msra.mxu0 0.0
      %4180 = vmatprep.subr.mxu0 0.0
      %4181 = vmatpush1.msra.mxu0 0.0
      %4182 = vmatprep.subr.mxu0 0.0
      %4183 = vmatpush1.msra.mxu0 0.0
      %4184 = vmatprep.subr.mxu0 0.0
      %4185 = vmatpush1.msra.mxu0 0.0
      %4186 = vmatprep.subr.mxu0 0.0
      %4187 = vmatpush1.msra.mxu0 0.0
      %4188 = vmatprep.subr.mxu0 0.0
      %4189 = vmatpush1.msra.mxu0 0.0
      %4190 = vmatprep.subr.mxu0 0.0
      %4191 = vmatpush1.msra.mxu0 0.0
      %4192 = vmatprep.subr.mxu0 0.0
      %4193 = vmatpush1.msra.mxu0 0.0
      %4194 = vmatprep.subr.mxu0 0.0
      %4195 = vmatpush1.msra.mxu0 0.0
      %4196 = vmatprep.subr.mxu0 0.0
      %4197 = vmatpush1.msra.mxu0 0.0
      %4198 = vmatprep.subr.mxu0 0.0
      %4199 = vmatpush1.msra.mxu0 0.0
      %4200 = vmatprep.subr.mxu0 0.0
      %4201 = vmatpush1.msra.mxu0 0.0
      %4202 = vmatprep.subr.mxu0 0.0
      %4203 = vmatpush1.msra.mxu0 0.0
      %4204 = vmatprep.mubr.f32.mxu0 0.0
      %4205 = vmatmul.mubr.f32.gmra.mrb[0].mxu0 %v4102
      %v4206 = vpop.f32.mrb[0].mxu0
      %v4207 = vadd.f32 0.0, %v4206
      %v4208 = vpop.f32.mrb[0].mxu0
      %4209 = vmatprep.mubr.f32.mxu0 0.0
      %4210 = vmatmul.mubr.f32.gmra.mrb[0].mxu0 %v4105
      %v4211 = vpop.f32.mrb[0].mxu0
      %v4212 = vadd.f32 0.0, %v4211
      %v4213 = vpop.f32.mrb[0].mxu0
      %4214 = vmatprep.mubr.f32.mxu0 0.0
      %4215 = vmatmul.mubr.f32.gmra.mrb[0].mxu0 %v4108
      %v4216 = vpop.f32.mrb[0].mxu0
      %v4217 = vadd.f32 0.0, %v4216
      %v4218 = vpop.f32.mrb[0].mxu0
      %4219 = vmatprep.mubr.f32.mxu0 0.0
      %4220 = vmatmul.mubr.f32.gmra.mrb[0].mxu0 %v4111
      %v4221 = vpop.f32.mrb[0].mxu0
      %v4222 = vadd.f32 0.0, %v4221
      %v4223 = vpop.f32.mrb[0].mxu0
      %4224 = vmatprep.mubr.f32.mxu0 0.0
      %4225 = vmatmul.mubr.f32.gmra.mrb[0].mxu0 %v4114
      %v4226 = vpop.f32.mrb[0].mxu0
      %v4227 = vadd.f32 0.0, %v4226
      %v4228 = vpop.f32.mrb[0].mxu0
      %4229 = vmatprep.mubr.f32.mxu0 0.0
      %4230 = vmatmul.mubr.f32.gmra.mrb[0].mxu0 %v4117
      %v4231 = vpop.f32.mrb[0].mxu0
      %v4232 = vadd.f32 0.0, %v4231
      %v4233 = vpop.f32.mrb[0].mxu0
      %4234 = vmatprep.mubr.f32.mxu0 0.0
      %4235 = vmatmul.mubr.f32.gmra.mrb[0].mxu0 %v4120
      %v4236 = vpop.f32.mrb[0].mxu0
      %v4237 = vadd.f32 0.0, %v4236
      %v4238 = vpop.f32.mrb[0].mxu0
      %4239 = vmatprep.mubr.f32.mxu0 0.0
      %4240 = vmatmul.mubr.f32.gmra.mrb[0].mxu0 %v4123
      %v4241 = vpop.f32.mrb[0].mxu0
      %v4242 = vadd.f32 0.0, %v4241
      %v4243 = vpop.f32.mrb[0].mxu0
      %4244 = vmatprep.mubr.f32.mxu0 0.0
      %4245 = vmatmul.mubr.f32.gmra.mrb[0].mxu0 %v4126
      %v4246 = vpop.f32.mrb[0].mxu0
      %v4247 = vadd.f32 0.0, %v4246
      %v4248 = vpop.f32.mrb[0].mxu0
      %4249 = vmatprep.mubr.f32.mxu0 0.0
      %4250 = vmatmul.mubr.f32.gmra.mrb[0].mxu0 %v4129
      %v4251 = vpop.f32.mrb[0].mxu0
      %v4252 = vadd.f32 0.0, %v4251
      %v4253 = vpop.f32.mrb[0].mxu0
      %4254 = vmatprep.mubr.f32.mxu0 0.0
      %4255 = vmatmul.mubr.f32.gmra.mrb[0].mxu0 %v4132
      %v4256 = vpop.f32.mrb[0].mxu0
      %v4257 = vadd.f32 0.0, %v4256
      %v4258 = vpop.f32.mrb[0].mxu0
      %4259 = vmatprep.mubr.f32.mxu0 0.0
      %4260 = vmatmul.mubr.f32.gmra.mrb[0].mxu0 %v4135
      %v4261 = vpop.f32.mrb[0].mxu0
      %v4262 = vadd.f32 0.0, %v4261
      %v4263 = vpop.f32.mrb[0].mxu0
      %4264 = vmatprep.mubr.f32.mxu0 0.0
      %4265 = vmatmul.mubr.f32.gmra.mrb[0].mxu0 %v4138
      %v4266 = vpop.f32.mrb[0].mxu0
      %v4267 = vadd.f32 0.0, %v4266
      %v4268 = vpop.f32.mrb[0].mxu0
      %4269 = vdwg.mxu0
      %v4270 = vadd.f32 %v4070, %v4207
      %v4271 = vadd.f32 %v4071, %v4212
      %v4272 = vadd.f32 %v4072, %v4217
      %v4273 = vadd.f32 %v4073, %v4222
      %v4274 = vadd.f32 %v4074, %v4227
      %v4275 = vadd.f32 %v4075, %v4232
      %v4276 = vadd.f32 %v4076, %v4237
      %v4277 = vadd.f32 %v4077, %v4242
      %v4278 = vadd.f32 %v4078, %v4247
      %v4279 = vadd.f32 %v4079, %v4252
      %v4280 = vadd.f32 %v4080, %v4257
      %v4281 = vadd.f32 %v4081, %v4262
      %v4282 = vadd.f32 %v4082, %v4267
      %v4283 = vld [vmem:[%s4] sm:$0x1]
      %v4285 = vlaneseq
      %v4286 = vshrl.u32 %v4285, 7
      %v4287 = vsub.s32 0, %v4286
      %v4288 = vrot.slane %v4283, %v4287
      %v4290 = vadd.f32 %v4270, %v4288
      %v4291 = vadd.f32 %v4271, %v4288
      %v4292 = vadd.f32 %v4272, %v4288
      %v4293 = vadd.f32 %v4273, %v4288
      %v4294 = vadd.f32 %v4274, %v4288
      %v4295 = vadd.f32 %v4275, %v4288
      %v4296 = vadd.f32 %v4276, %v4288
      %v4297 = vadd.f32 %v4277, %v4288
      %v4298 = vadd.f32 %v4278, %v4288
      %v4299 = vadd.f32 %v4279, %v4288
      %v4300 = vadd.f32 %v4280, %v4288
      %v4301 = vadd.f32 %v4281, %v4288
      %v4302 = vadd.f32 %v4282, %v4288
      %v4303 = vmax.f32 %v4290, 0.0
      %v4304 = vmax.f32 %v4291, 0.0
      %v4305 = vmax.f32 %v4292, 0.0
      %v4306 = vmax.f32 %v4293, 0.0
      %v4307 = vmax.f32 %v4294, 0.0
      %v4308 = vmax.f32 %v4295, 0.0
      %v4309 = vmax.f32 %v4296, 0.0
      %v4310 = vmax.f32 %v4297, 0.0
      %v4311 = vmax.f32 %v4298, 0.0
      %v4312 = vmax.f32 %v4299, 0.0
      %v4313 = vmax.f32 %v4300, 0.0
      %v4314 = vmax.f32 %v4301, 0.0
      %v4315 = vmax.f32 %v4302, 0.0
      %vm4316 = vcmask 523264
      %4317 = vst.msk [vmem:[#allocation3] sm:$0xff] %vm4316, %v4303
      %4318 = vst.msk [vmem:[#allocation3 + $0x8] sm:$0xff] %vm4316, %v4304
      %4319 = vst.msk [vmem:[#allocation3 + $0x10] sm:$0xff] %vm4316, %v4305
      %4320 = vst.msk [vmem:[#allocation3 + $0x18] sm:$0xff] %vm4316, %v4306
      %4321 = vst.msk [vmem:[#allocation3 + $0x20] sm:$0xff] %vm4316, %v4307
      %4322 = vst.msk [vmem:[#allocation3 + $0x28] sm:$0xff] %vm4316, %v4308
      %4323 = vst.msk [vmem:[#allocation3 + $0x30] sm:$0xff] %vm4316, %v4309
      %4324 = vst.msk [vmem:[#allocation3 + $0x38] sm:$0xff] %vm4316, %v4310
      %4325 = vst.msk [vmem:[#allocation3 + $0x40] sm:$0xff] %vm4316, %v4311
      %4326 = vst.msk [vmem:[#allocation3 + $0x48] sm:$0xff] %vm4316, %v4312
      %4327 = vst.msk [vmem:[#allocation3 + $0x50] sm:$0xff] %vm4316, %v4313
      %4328 = vst.msk [vmem:[#allocation3 + $0x58] sm:$0xff] %vm4316, %v4314
      %vm4329 = vcmask 519168
      %4330 = vst.msk [vmem:[#allocation3 + $0x60] sm:$0xf] %vm4329, %v4315
      %v4331 = vld [vmem:[#allocation3] sm:$0xff]
      %v4332 = vld [vmem:[#allocation3 + $0x8] sm:$0xff]
      %v4333 = vld [vmem:[#allocation3 + $0x10] sm:$0xff]
      %v4334 = vld [vmem:[#allocation3 + $0x18] sm:$0xff]
      %v4335 = vld [vmem:[#allocation3 + $0x20] sm:$0xff]
      %v4336 = vld [vmem:[#allocation3 + $0x28] sm:$0xff]
      %v4337 = vld [vmem:[#allocation3 + $0x30] sm:$0xff]
      %v4338 = vld [vmem:[#allocation3 + $0x38] sm:$0xff]
      %v4339 = vld [vmem:[#allocation3 + $0x40] sm:$0x7]
      %v4340 = vld [vmem:[%s5] sm:$0xff]
      %v4341 = vld [vmem:[%s5 + $0x8] sm:$0xff]
      %v4342 = vld [vmem:[%s5 + $0x10] sm:$0xff]
      %v4343 = vld [vmem:[%s5 + $0x18] sm:$0xff]
      %v4344 = vld [vmem:[%s5 + $0x20] sm:$0xff]
      %v4345 = vld [vmem:[%s5 + $0x28] sm:$0xff]
      %v4346 = vld [vmem:[%s5 + $0x30] sm:$0xff]
      %v4347 = vld [vmem:[%s5 + $0x38] sm:$0xff]
      %v4348 = vld [vmem:[#allocation3 + $0x1] sm:$0xff]
      %v4349 = vld [vmem:[#allocation3 + $0x9] sm:$0xff]
      %v4350 = vld [vmem:[#allocation3 + $0x11] sm:$0xff]
      %v4351 = vld [vmem:[#allocation3 + $0x19] sm:$0xff]
      %v4352 = vld [vmem:[#allocation3 + $0x21] sm:$0xff]
      %v4353 = vld [vmem:[#allocation3 + $0x29] sm:$0xff]
      %v4354 = vld [vmem:[#allocation3 + $0x31] sm:$0xff]
      %v4355 = vld [vmem:[#allocation3 + $0x39] sm:$0xff]
      %v4356 = vld [vmem:[#allocation3 + $0x41] sm:$0x7]
      %s4357 = scalar_lea.vmem %s5, 64
      %v4358 = vld [vmem:[%s4357] sm:$0xff]
      %v4359 = vld [vmem:[%s4357 + $0x8] sm:$0xff]
      %v4360 = vld [vmem:[%s4357 + $0x10] sm:$0xff]
      %v4361 = vld [vmem:[%s4357 + $0x18] sm:$0xff]
      %v4362 = vld [vmem:[%s4357 + $0x20] sm:$0xff]
      %v4363 = vld [vmem:[%s4357 + $0x28] sm:$0xff]
      %v4364 = vld [vmem:[%s4357 + $0x30] sm:$0xff]
      %v4365 = vld [vmem:[%s4357 + $0x38] sm:$0xff]
      %v4367 = vsel %vm4316, %v4348, 0
      %v4370 = vsel %vm4316, %v4349, 0
      %v4373 = vsel %vm4316, %v4350, 0
      %v4376 = vsel %vm4316, %v4351, 0
      %v4379 = vsel %vm4316, %v4352, 0
      %v4382 = vsel %vm4316, %v4353, 0
      %v4385 = vsel %vm4316, %v4354, 0
      %v4388 = vsel %vm4316, %v4355, 0
      %v4391 = vsel %vm4316, %v4356, 0
      %4393 = vmatprep.subr.mxu0 0.0
      %4394 = vmatpush1.msra.mxu0 %v4358
      %4395 = vmatprep.subr.mxu0 0.0
      %4396 = vmatpush1.msra.mxu0 %v4359
      %4397 = vmatprep.subr.mxu0 0.0
      %4398 = vmatpush1.msra.mxu0 %v4360
      %4399 = vmatprep.subr.mxu0 0.0
      %4400 = vmatpush1.msra.mxu0 %v4361
      %4401 = vmatprep.subr.mxu0 0.0
      %4402 = vmatpush1.msra.mxu0 %v4362
      %4403 = vmatprep.subr.mxu0 0.0
      %4404 = vmatpush1.msra.mxu0 %v4363
      %4405 = vmatprep.subr.mxu0 0.0
      %4406 = vmatpush1.msra.mxu0 %v4364
      %4407 = vmatprep.subr.mxu0 0.0
      %4408 = vmatpush1.msra.mxu0 %v4365
      %4409 = vmatprep.subr.mxu0 0.0
      %4410 = vmatpush1.msra.mxu0 0.0
      %4411 = vmatprep.subr.mxu0 0.0
      %4412 = vmatpush1.msra.mxu0 0.0
      %4413 = vmatprep.subr.mxu0 0.0
      %4414 = vmatpush1.msra.mxu0 0.0
      %4415 = vmatprep.subr.mxu0 0.0
      %4416 = vmatpush1.msra.mxu0 0.0
      %4417 = vmatprep.subr.mxu0 0.0
      %4418 = vmatpush1.msra.mxu0 0.0
      %4419 = vmatprep.subr.mxu0 0.0
      %4420 = vmatpush1.msra.mxu0 0.0
      %4421 = vmatprep.subr.mxu0 0.0
      %4422 = vmatpush1.msra.mxu0 0.0
      %4423 = vmatprep.subr.mxu0 0.0
      %4424 = vmatpush1.msra.mxu0 0.0
      %4425 = vmatprep.subr.mxu0 0.0
      %4426 = vmatpush1.msra.mxu0 0.0
      %4427 = vmatprep.subr.mxu0 0.0
      %4428 = vmatpush1.msra.mxu0 0.0
      %4429 = vmatprep.subr.mxu0 0.0
      %4430 = vmatpush1.msra.mxu0 0.0
      %4431 = vmatprep.subr.mxu0 0.0
      %4432 = vmatpush1.msra.mxu0 0.0
      %4433 = vmatprep.subr.mxu0 0.0
      %4434 = vmatpush1.msra.mxu0 0.0
      %4435 = vmatprep.subr.mxu0 0.0
      %4436 = vmatpush1.msra.mxu0 0.0
      %4437 = vmatprep.subr.mxu0 0.0
      %4438 = vmatpush1.msra.mxu0 0.0
      %4439 = vmatprep.subr.mxu0 0.0
      %4440 = vmatpush1.msra.mxu0 0.0
      %4441 = vmatprep.subr.mxu0 0.0
      %4442 = vmatpush1.msra.mxu0 0.0
      %4443 = vmatprep.subr.mxu0 0.0
      %4444 = vmatpush1.msra.mxu0 0.0
      %4445 = vmatprep.subr.mxu0 0.0
      %4446 = vmatpush1.msra.mxu0 0.0
      %4447 = vmatprep.subr.mxu0 0.0
      %4448 = vmatpush1.msra.mxu0 0.0
      %4449 = vmatprep.subr.mxu0 0.0
      %4450 = vmatpush1.msra.mxu0 0.0
      %4451 = vmatprep.subr.mxu0 0.0
      %4452 = vmatpush1.msra.mxu0 0.0
      %4453 = vmatprep.subr.mxu0 0.0
      %4454 = vmatpush1.msra.mxu0 0.0
      %4455 = vmatprep.subr.mxu0 0.0
      %4456 = vmatpush1.msra.mxu0 0.0
      %4457 = vmatprep.mubr.f32.mxu0 0.0
      %4458 = vmatmul.mubr.f32.gmra.mrb[0].mxu0 %v4367
      %v4459 = vpop.f32.mrb[0].mxu0
      %v4460 = vadd.f32 0.0, %v4459
      %v4461 = vpop.f32.mrb[0].mxu0
      %4462 = vmatprep.mubr.f32.mxu0 0.0
      %4463 = vmatmul.mubr.f32.gmra.mrb[0].mxu0 %v4370
      %v4464 = vpop.f32.mrb[0].mxu0
      %v4465 = vadd.f32 0.0, %v4464
      %v4466 = vpop.f32.mrb[0].mxu0
      %4467 = vmatprep.mubr.f32.mxu0 0.0
      %4468 = vmatmul.mubr.f32.gmra.mrb[0].mxu0 %v4373
      %v4469 = vpop.f32.mrb[0].mxu0
      %v4470 = vadd.f32 0.0, %v4469
      %v4471 = vpop.f32.mrb[0].mxu0
      %4472 = vmatprep.mubr.f32.mxu0 0.0
      %4473 = vmatmul.mubr.f32.gmra.mrb[0].mxu0 %v4376
      %v4474 = vpop.f32.mrb[0].mxu0
      %v4475 = vadd.f32 0.0, %v4474
      %v4476 = vpop.f32.mrb[0].mxu0
      %4477 = vmatprep.mubr.f32.mxu0 0.0
      %4478 = vmatmul.mubr.f32.gmra.mrb[0].mxu0 %v4379
      %v4479 = vpop.f32.mrb[0].mxu0
      %v4480 = vadd.f32 0.0, %v4479
      %v4481 = vpop.f32.mrb[0].mxu0
      %4482 = vmatprep.mubr.f32.mxu0 0.0
      %4483 = vmatmul.mubr.f32.gmra.mrb[0].mxu0 %v4382
      %v4484 = vpop.f32.mrb[0].mxu0
      %v4485 = vadd.f32 0.0, %v4484
      %v4486 = vpop.f32.mrb[0].mxu0
      %4487 = vmatprep.mubr.f32.mxu0 0.0
      %4488 = vmatmul.mubr.f32.gmra.mrb[0].mxu0 %v4385
      %v4489 = vpop.f32.mrb[0].mxu0
      %v4490 = vadd.f32 0.0, %v4489
      %v4491 = vpop.f32.mrb[0].mxu0
      %4492 = vmatprep.mubr.f32.mxu0 0.0
      %4493 = vmatmul.mubr.f32.gmra.mrb[0].mxu0 %v4388
      %v4494 = vpop.f32.mrb[0].mxu0
      %v4495 = vadd.f32 0.0, %v4494
      %v4496 = vpop.f32.mrb[0].mxu0
      %4497 = vmatprep.mubr.f32.mxu0 0.0
      %4498 = vmatmul.mubr.f32.gmra.mrb[0].mxu0 %v4391
      %v4499 = vpop.f32.mrb[0].mxu0
      %v4500 = vadd.f32 0.0, %v4499
      %v4501 = vpop.f32.mrb[0].mxu0
      %4502 = vdwg.mxu0
      %v4504 = vsel %vm4316, %v4331, 0
      %v4507 = vsel %vm4316, %v4332, 0
      %v4510 = vsel %vm4316, %v4333, 0
      %v4513 = vsel %vm4316, %v4334, 0
      %v4516 = vsel %vm4316, %v4335, 0
      %v4519 = vsel %vm4316, %v4336, 0
      %v4522 = vsel %vm4316, %v4337, 0
      %v4525 = vsel %vm4316, %v4338, 0
      %v4528 = vsel %vm4316, %v4339, 0
      %4530 = vmatprep.subr.mxu0 0.0
      %4531 = vmatpush1.msra.mxu0 %v4340
      %4532 = vmatprep.subr.mxu0 0.0
      %4533 = vmatpush1.msra.mxu0 %v4341
      %4534 = vmatprep.subr.mxu0 0.0
      %4535 = vmatpush1.msra.mxu0 %v4342
      %4536 = vmatprep.subr.mxu0 0.0
      %4537 = vmatpush1.msra.mxu0 %v4343
      %4538 = vmatprep.subr.mxu0 0.0
      %4539 = vmatpush1.msra.mxu0 %v4344
      %4540 = vmatprep.subr.mxu0 0.0
      %4541 = vmatpush1.msra.mxu0 %v4345
      %4542 = vmatprep.subr.mxu0 0.0
      %4543 = vmatpush1.msra.mxu0 %v4346
      %4544 = vmatprep.subr.mxu0 0.0
      %4545 = vmatpush1.msra.mxu0 %v4347
      %4546 = vmatprep.subr.mxu0 0.0
      %4547 = vmatpush1.msra.mxu0 0.0
      %4548 = vmatprep.subr.mxu0 0.0
      %4549 = vmatpush1.msra.mxu0 0.0
      %4550 = vmatprep.subr.mxu0 0.0
      %4551 = vmatpush1.msra.mxu0 0.0
      %4552 = vmatprep.subr.mxu0 0.0
      %4553 = vmatpush1.msra.mxu0 0.0
      %4554 = vmatprep.subr.mxu0 0.0
      %4555 = vmatpush1.msra.mxu0 0.0
      %4556 = vmatprep.subr.mxu0 0.0
      %4557 = vmatpush1.msra.mxu0 0.0
      %4558 = vmatprep.subr.mxu0 0.0
      %4559 = vmatpush1.msra.mxu0 0.0
      %4560 = vmatprep.subr.mxu0 0.0
      %4561 = vmatpush1.msra.mxu0 0.0
      %4562 = vmatprep.subr.mxu0 0.0
      %4563 = vmatpush1.msra.mxu0 0.0
      %4564 = vmatprep.subr.mxu0 0.0
      %4565 = vmatpush1.msra.mxu0 0.0
      %4566 = vmatprep.subr.mxu0 0.0
      %4567 = vmatpush1.msra.mxu0 0.0
      %4568 = vmatprep.subr.mxu0 0.0
      %4569 = vmatpush1.msra.mxu0 0.0
      %4570 = vmatprep.subr.mxu0 0.0
      %4571 = vmatpush1.msra.mxu0 0.0
      %4572 = vmatprep.subr.mxu0 0.0
      %4573 = vmatpush1.msra.mxu0 0.0
      %4574 = vmatprep.subr.mxu0 0.0
      %4575 = vmatpush1.msra.mxu0 0.0
      %4576 = vmatprep.subr.mxu0 0.0
      %4577 = vmatpush1.msra.mxu0 0.0
      %4578 = vmatprep.subr.mxu0 0.0
      %4579 = vmatpush1.msra.mxu0 0.0
      %4580 = vmatprep.subr.mxu0 0.0
      %4581 = vmatpush1.msra.mxu0 0.0
      %4582 = vmatprep.subr.mxu0 0.0
      %4583 = vmatpush1.msra.mxu0 0.0
      %4584 = vmatprep.subr.mxu0 0.0
      %4585 = vmatpush1.msra.mxu0 0.0
      %4586 = vmatprep.subr.mxu0 0.0
      %4587 = vmatpush1.msra.mxu0 0.0
      %4588 = vmatprep.subr.mxu0 0.0
      %4589 = vmatpush1.msra.mxu0 0.0
      %4590 = vmatprep.subr.mxu0 0.0
      %4591 = vmatpush1.msra.mxu0 0.0
      %4592 = vmatprep.subr.mxu0 0.0
      %4593 = vmatpush1.msra.mxu0 0.0
      %4594 = vmatprep.mubr.f32.mxu0 0.0
      %4595 = vmatmul.mubr.f32.gmra.mrb[0].mxu0 %v4504
      %v4596 = vpop.f32.mrb[0].mxu0
      %v4597 = vadd.f32 %v4460, %v4596
      %v4598 = vpop.f32.mrb[0].mxu0
      %4599 = vmatprep.mubr.f32.mxu0 0.0
      %4600 = vmatmul.mubr.f32.gmra.mrb[0].mxu0 %v4507
      %v4601 = vpop.f32.mrb[0].mxu0
      %v4602 = vadd.f32 %v4465, %v4601
      %v4603 = vpop.f32.mrb[0].mxu0
      %4604 = vmatprep.mubr.f32.mxu0 0.0
      %4605 = vmatmul.mubr.f32.gmra.mrb[0].mxu0 %v4510
      %v4606 = vpop.f32.mrb[0].mxu0
      %v4607 = vadd.f32 %v4470, %v4606
      %v4608 = vpop.f32.mrb[0].mxu0
      %4609 = vmatprep.mubr.f32.mxu0 0.0
      %4610 = vmatmul.mubr.f32.gmra.mrb[0].mxu0 %v4513
      %v4611 = vpop.f32.mrb[0].mxu0
      %v4612 = vadd.f32 %v4475, %v4611
      %v4613 = vpop.f32.mrb[0].mxu0
      %4614 = vmatprep.mubr.f32.mxu0 0.0
      %4615 = vmatmul.mubr.f32.gmra.mrb[0].mxu0 %v4516
      %v4616 = vpop.f32.mrb[0].mxu0
      %v4617 = vadd.f32 %v4480, %v4616
      %v4618 = vpop.f32.mrb[0].mxu0
      %4619 = vmatprep.mubr.f32.mxu0 0.0
      %4620 = vmatmul.mubr.f32.gmra.mrb[0].mxu0 %v4519
      %v4621 = vpop.f32.mrb[0].mxu0
      %v4622 = vadd.f32 %v4485, %v4621
      %v4623 = vpop.f32.mrb[0].mxu0
      %4624 = vmatprep.mubr.f32.mxu0 0.0
      %4625 = vmatmul.mubr.f32.gmra.mrb[0].mxu0 %v4522
      %v4626 = vpop.f32.mrb[0].mxu0
      %v4627 = vadd.f32 %v4490, %v4626
      %v4628 = vpop.f32.mrb[0].mxu0
      %4629 = vmatprep.mubr.f32.mxu0 0.0
      %4630 = vmatmul.mubr.f32.gmra.mrb[0].mxu0 %v4525
      %v4631 = vpop.f32.mrb[0].mxu0
      %v4632 = vadd.f32 %v4495, %v4631
      %v4633 = vpop.f32.mrb[0].mxu0
      %4634 = vmatprep.mubr.f32.mxu0 0.0
      %4635 = vmatmul.mubr.f32.gmra.mrb[0].mxu0 %v4528
      %v4636 = vpop.f32.mrb[0].mxu0
      %v4637 = vadd.f32 %v4500, %v4636
      %v4638 = vpop.f32.mrb[0].mxu0
      %4639 = vdwg.mxu0
      %v4640 = vld [vmem:[#allocation3 + $0x2] sm:$0xff]
      %v4641 = vld [vmem:[#allocation3 + $0xa] sm:$0xff]
      %v4642 = vld [vmem:[#allocation3 + $0x12] sm:$0xff]
      %v4643 = vld [vmem:[#allocation3 + $0x1a] sm:$0xff]
      %v4644 = vld [vmem:[#allocation3 + $0x22] sm:$0xff]
      %v4645 = vld [vmem:[#allocation3 + $0x2a] sm:$0xff]
      %v4646 = vld [vmem:[#allocation3 + $0x32] sm:$0xff]
      %v4647 = vld [vmem:[#allocation3 + $0x3a] sm:$0xff]
      %v4648 = vld [vmem:[#allocation3 + $0x42] sm:$0x7]
      %s4649 = scalar_lea.vmem %s5, 128
      %v4650 = vld [vmem:[%s4649] sm:$0xff]
      %v4651 = vld [vmem:[%s4649 + $0x8] sm:$0xff]
      %v4652 = vld [vmem:[%s4649 + $0x10] sm:$0xff]
      %v4653 = vld [vmem:[%s4649 + $0x18] sm:$0xff]
      %v4654 = vld [vmem:[%s4649 + $0x20] sm:$0xff]
      %v4655 = vld [vmem:[%s4649 + $0x28] sm:$0xff]
      %v4656 = vld [vmem:[%s4649 + $0x30] sm:$0xff]
      %v4657 = vld [vmem:[%s4649 + $0x38] sm:$0xff]
      %v4659 = vsel %vm4316, %v4640, 0
      %v4662 = vsel %vm4316, %v4641, 0
      %v4665 = vsel %vm4316, %v4642, 0
      %v4668 = vsel %vm4316, %v4643, 0
      %v4671 = vsel %vm4316, %v4644, 0
      %v4674 = vsel %vm4316, %v4645, 0
      %v4677 = vsel %vm4316, %v4646, 0
      %v4680 = vsel %vm4316, %v4647, 0
      %v4683 = vsel %vm4316, %v4648, 0
      %4685 = vmatprep.subr.mxu0 0.0
      %4686 = vmatpush1.msra.mxu0 %v4650
      %4687 = vmatprep.subr.mxu0 0.0
      %4688 = vmatpush1.msra.mxu0 %v4651
      %4689 = vmatprep.subr.mxu0 0.0
      %4690 = vmatpush1.msra.mxu0 %v4652
      %4691 = vmatprep.subr.mxu0 0.0
      %4692 = vmatpush1.msra.mxu0 %v4653
      %4693 = vmatprep.subr.mxu0 0.0
      %4694 = vmatpush1.msra.mxu0 %v4654
      %4695 = vmatprep.subr.mxu0 0.0
      %4696 = vmatpush1.msra.mxu0 %v4655
      %4697 = vmatprep.subr.mxu0 0.0
      %4698 = vmatpush1.msra.mxu0 %v4656
      %4699 = vmatprep.subr.mxu0 0.0
      %4700 = vmatpush1.msra.mxu0 %v4657
      %4701 = vmatprep.subr.mxu0 0.0
      %4702 = vmatpush1.msra.mxu0 0.0
      %4703 = vmatprep.subr.mxu0 0.0
      %4704 = vmatpush1.msra.mxu0 0.0
      %4705 = vmatprep.subr.mxu0 0.0
      %4706 = vmatpush1.msra.mxu0 0.0
      %4707 = vmatprep.subr.mxu0 0.0
      %4708 = vmatpush1.msra.mxu0 0.0
      %4709 = vmatprep.subr.mxu0 0.0
      %4710 = vmatpush1.msra.mxu0 0.0
      %4711 = vmatprep.subr.mxu0 0.0
      %4712 = vmatpush1.msra.mxu0 0.0
      %4713 = vmatprep.subr.mxu0 0.0
      %4714 = vmatpush1.msra.mxu0 0.0
      %4715 = vmatprep.subr.mxu0 0.0
      %4716 = vmatpush1.msra.mxu0 0.0
      %4717 = vmatprep.subr.mxu0 0.0
      %4718 = vmatpush1.msra.mxu0 0.0
      %4719 = vmatprep.subr.mxu0 0.0
      %4720 = vmatpush1.msra.mxu0 0.0
      %4721 = vmatprep.subr.mxu0 0.0
      %4722 = vmatpush1.msra.mxu0 0.0
      %4723 = vmatprep.subr.mxu0 0.0
      %4724 = vmatpush1.msra.mxu0 0.0
      %4725 = vmatprep.subr.mxu0 0.0
      %4726 = vmatpush1.msra.mxu0 0.0
      %4727 = vmatprep.subr.mxu0 0.0
      %4728 = vmatpush1.msra.mxu0 0.0
      %4729 = vmatprep.subr.mxu0 0.0
      %4730 = vmatpush1.msra.mxu0 0.0
      %4731 = vmatprep.subr.mxu0 0.0
      %4732 = vmatpush1.msra.mxu0 0.0
      %4733 = vmatprep.subr.mxu0 0.0
      %4734 = vmatpush1.msra.mxu0 0.0
      %4735 = vmatprep.subr.mxu0 0.0
      %4736 = vmatpush1.msra.mxu0 0.0
      %4737 = vmatprep.subr.mxu0 0.0
      %4738 = vmatpush1.msra.mxu0 0.0
      %4739 = vmatprep.subr.mxu0 0.0
      %4740 = vmatpush1.msra.mxu0 0.0
      %4741 = vmatprep.subr.mxu0 0.0
      %4742 = vmatpush1.msra.mxu0 0.0
      %4743 = vmatprep.subr.mxu0 0.0
      %4744 = vmatpush1.msra.mxu0 0.0
      %4745 = vmatprep.subr.mxu0 0.0
      %4746 = vmatpush1.msra.mxu0 0.0
      %4747 = vmatprep.subr.mxu0 0.0
      %4748 = vmatpush1.msra.mxu0 0.0
      %4749 = vmatprep.mubr.f32.mxu0 0.0
      %4750 = vmatmul.mubr.f32.gmra.mrb[0].mxu0 %v4659
      %v4751 = vpop.f32.mrb[0].mxu0
      %v4752 = vadd.f32 0.0, %v4751
      %v4753 = vpop.f32.mrb[0].mxu0
      %4754 = vmatprep.mubr.f32.mxu0 0.0
      %4755 = vmatmul.mubr.f32.gmra.mrb[0].mxu0 %v4662
      %v4756 = vpop.f32.mrb[0].mxu0
      %v4757 = vadd.f32 0.0, %v4756
      %v4758 = vpop.f32.mrb[0].mxu0
      %4759 = vmatprep.mubr.f32.mxu0 0.0
      %4760 = vmatmul.mubr.f32.gmra.mrb[0].mxu0 %v4665
      %v4761 = vpop.f32.mrb[0].mxu0
      %v4762 = vadd.f32 0.0, %v4761
      %v4763 = vpop.f32.mrb[0].mxu0
      %4764 = vmatprep.mubr.f32.mxu0 0.0
      %4765 = vmatmul.mubr.f32.gmra.mrb[0].mxu0 %v4668
      %v4766 = vpop.f32.mrb[0].mxu0
      %v4767 = vadd.f32 0.0, %v4766
      %v4768 = vpop.f32.mrb[0].mxu0
      %4769 = vmatprep.mubr.f32.mxu0 0.0
      %4770 = vmatmul.mubr.f32.gmra.mrb[0].mxu0 %v4671
      %v4771 = vpop.f32.mrb[0].mxu0
      %v4772 = vadd.f32 0.0, %v4771
      %v4773 = vpop.f32.mrb[0].mxu0
      %4774 = vmatprep.mubr.f32.mxu0 0.0
      %4775 = vmatmul.mubr.f32.gmra.mrb[0].mxu0 %v4674
      %v4776 = vpop.f32.mrb[0].mxu0
      %v4777 = vadd.f32 0.0, %v4776
      %v4778 = vpop.f32.mrb[0].mxu0
      %4779 = vmatprep.mubr.f32.mxu0 0.0
      %4780 = vmatmul.mubr.f32.gmra.mrb[0].mxu0 %v4677
      %v4781 = vpop.f32.mrb[0].mxu0
      %v4782 = vadd.f32 0.0, %v4781
      %v4783 = vpop.f32.mrb[0].mxu0
      %4784 = vmatprep.mubr.f32.mxu0 0.0
      %4785 = vmatmul.mubr.f32.gmra.mrb[0].mxu0 %v4680
      %v4786 = vpop.f32.mrb[0].mxu0
      %v4787 = vadd.f32 0.0, %v4786
      %v4788 = vpop.f32.mrb[0].mxu0
      %4789 = vmatprep.mubr.f32.mxu0 0.0
      %4790 = vmatmul.mubr.f32.gmra.mrb[0].mxu0 %v4683
      %v4791 = vpop.f32.mrb[0].mxu0
      %v4792 = vadd.f32 0.0, %v4791
      %v4793 = vpop.f32.mrb[0].mxu0
      %4794 = vdwg.mxu0
      %v4795 = vadd.f32 %v4597, %v4752
      %v4796 = vadd.f32 %v4602, %v4757
      %v4797 = vadd.f32 %v4607, %v4762
      %v4798 = vadd.f32 %v4612, %v4767
      %v4799 = vadd.f32 %v4617, %v4772
      %v4800 = vadd.f32 %v4622, %v4777
      %v4801 = vadd.f32 %v4627, %v4782
      %v4802 = vadd.f32 %v4632, %v4787
      %v4803 = vadd.f32 %v4637, %v4792
      %v4804 = vld [vmem:[#allocation3 + $0xa] sm:$0xff]
      %v4805 = vld [vmem:[#allocation3 + $0x12] sm:$0xff]
      %v4806 = vld [vmem:[#allocation3 + $0x1a] sm:$0xff]
      %v4807 = vld [vmem:[#allocation3 + $0x22] sm:$0xff]
      %v4808 = vld [vmem:[#allocation3 + $0x2a] sm:$0xff]
      %v4809 = vld [vmem:[#allocation3 + $0x32] sm:$0xff]
      %v4810 = vld [vmem:[#allocation3 + $0x3a] sm:$0xff]
      %v4811 = vld [vmem:[#allocation3 + $0x42] sm:$0xff]
      %v4812 = vld [vmem:[#allocation3 + $0x4a] sm:$0x7]
      %s4813 = scalar_lea.vmem %s5, 192
      %v4814 = vld [vmem:[%s4813] sm:$0xff]
      %v4815 = vld [vmem:[%s4813 + $0x8] sm:$0xff]
      %v4816 = vld [vmem:[%s4813 + $0x10] sm:$0xff]
      %v4817 = vld [vmem:[%s4813 + $0x18] sm:$0xff]
      %v4818 = vld [vmem:[%s4813 + $0x20] sm:$0xff]
      %v4819 = vld [vmem:[%s4813 + $0x28] sm:$0xff]
      %v4820 = vld [vmem:[%s4813 + $0x30] sm:$0xff]
      %v4821 = vld [vmem:[%s4813 + $0x38] sm:$0xff]
      %v4823 = vsel %vm4316, %v4804, 0
      %v4826 = vsel %vm4316, %v4805, 0
      %v4829 = vsel %vm4316, %v4806, 0
      %v4832 = vsel %vm4316, %v4807, 0
      %v4835 = vsel %vm4316, %v4808, 0
      %v4838 = vsel %vm4316, %v4809, 0
      %v4841 = vsel %vm4316, %v4810, 0
      %v4844 = vsel %vm4316, %v4811, 0
      %v4847 = vsel %vm4316, %v4812, 0
      %4849 = vmatprep.subr.mxu0 0.0
      %4850 = vmatpush1.msra.mxu0 %v4814
      %4851 = vmatprep.subr.mxu0 0.0
      %4852 = vmatpush1.msra.mxu0 %v4815
      %4853 = vmatprep.subr.mxu0 0.0
      %4854 = vmatpush1.msra.mxu0 %v4816
      %4855 = vmatprep.subr.mxu0 0.0
      %4856 = vmatpush1.msra.mxu0 %v4817
      %4857 = vmatprep.subr.mxu0 0.0
      %4858 = vmatpush1.msra.mxu0 %v4818
      %4859 = vmatprep.subr.mxu0 0.0
      %4860 = vmatpush1.msra.mxu0 %v4819
      %4861 = vmatprep.subr.mxu0 0.0
      %4862 = vmatpush1.msra.mxu0 %v4820
      %4863 = vmatprep.subr.mxu0 0.0
      %4864 = vmatpush1.msra.mxu0 %v4821
      %4865 = vmatprep.subr.mxu0 0.0
      %4866 = vmatpush1.msra.mxu0 0.0
      %4867 = vmatprep.subr.mxu0 0.0
      %4868 = vmatpush1.msra.mxu0 0.0
      %4869 = vmatprep.subr.mxu0 0.0
      %4870 = vmatpush1.msra.mxu0 0.0
      %4871 = vmatprep.subr.mxu0 0.0
      %4872 = vmatpush1.msra.mxu0 0.0
      %4873 = vmatprep.subr.mxu0 0.0
      %4874 = vmatpush1.msra.mxu0 0.0
      %4875 = vmatprep.subr.mxu0 0.0
      %4876 = vmatpush1.msra.mxu0 0.0
      %4877 = vmatprep.subr.mxu0 0.0
      %4878 = vmatpush1.msra.mxu0 0.0
      %4879 = vmatprep.subr.mxu0 0.0
      %4880 = vmatpush1.msra.mxu0 0.0
      %4881 = vmatprep.subr.mxu0 0.0
      %4882 = vmatpush1.msra.mxu0 0.0
      %4883 = vmatprep.subr.mxu0 0.0
      %4884 = vmatpush1.msra.mxu0 0.0
      %4885 = vmatprep.subr.mxu0 0.0
      %4886 = vmatpush1.msra.mxu0 0.0
      %4887 = vmatprep.subr.mxu0 0.0
      %4888 = vmatpush1.msra.mxu0 0.0
      %4889 = vmatprep.subr.mxu0 0.0
      %4890 = vmatpush1.msra.mxu0 0.0
      %4891 = vmatprep.subr.mxu0 0.0
      %4892 = vmatpush1.msra.mxu0 0.0
      %4893 = vmatprep.subr.mxu0 0.0
      %4894 = vmatpush1.msra.mxu0 0.0
      %4895 = vmatprep.subr.mxu0 0.0
      %4896 = vmatpush1.msra.mxu0 0.0
      %4897 = vmatprep.subr.mxu0 0.0
      %4898 = vmatpush1.msra.mxu0 0.0
      %4899 = vmatprep.subr.mxu0 0.0
      %4900 = vmatpush1.msra.mxu0 0.0
      %4901 = vmatprep.subr.mxu0 0.0
      %4902 = vmatpush1.msra.mxu0 0.0
      %4903 = vmatprep.subr.mxu0 0.0
      %4904 = vmatpush1.msra.mxu0 0.0
      %4905 = vmatprep.subr.mxu0 0.0
      %4906 = vmatpush1.msra.mxu0 0.0
      %4907 = vmatprep.subr.mxu0 0.0
      %4908 = vmatpush1.msra.mxu0 0.0
      %4909 = vmatprep.subr.mxu0 0.0
      %4910 = vmatpush1.msra.mxu0 0.0
      %4911 = vmatprep.subr.mxu0 0.0
      %4912 = vmatpush1.msra.mxu0 0.0
      %4913 = vmatprep.mubr.f32.mxu0 0.0
      %4914 = vmatmul.mubr.f32.gmra.mrb[0].mxu0 %v4823
      %v4915 = vpop.f32.mrb[0].mxu0
      %v4916 = vadd.f32 0.0, %v4915
      %v4917 = vpop.f32.mrb[0].mxu0
      %4918 = vmatprep.mubr.f32.mxu0 0.0
      %4919 = vmatmul.mubr.f32.gmra.mrb[0].mxu0 %v4826
      %v4920 = vpop.f32.mrb[0].mxu0
      %v4921 = vadd.f32 0.0, %v4920
      %v4922 = vpop.f32.mrb[0].mxu0
      %4923 = vmatprep.mubr.f32.mxu0 0.0
      %4924 = vmatmul.mubr.f32.gmra.mrb[0].mxu0 %v4829
      %v4925 = vpop.f32.mrb[0].mxu0
      %v4926 = vadd.f32 0.0, %v4925
      %v4927 = vpop.f32.mrb[0].mxu0
      %4928 = vmatprep.mubr.f32.mxu0 0.0
      %4929 = vmatmul.mubr.f32.gmra.mrb[0].mxu0 %v4832
      %v4930 = vpop.f32.mrb[0].mxu0
      %v4931 = vadd.f32 0.0, %v4930
      %v4932 = vpop.f32.mrb[0].mxu0
      %4933 = vmatprep.mubr.f32.mxu0 0.0
      %4934 = vmatmul.mubr.f32.gmra.mrb[0].mxu0 %v4835
      %v4935 = vpop.f32.mrb[0].mxu0
      %v4936 = vadd.f32 0.0, %v4935
      %v4937 = vpop.f32.mrb[0].mxu0
      %4938 = vmatprep.mubr.f32.mxu0 0.0
      %4939 = vmatmul.mubr.f32.gmra.mrb[0].mxu0 %v4838
      %v4940 = vpop.f32.mrb[0].mxu0
      %v4941 = vadd.f32 0.0, %v4940
      %v4942 = vpop.f32.mrb[0].mxu0
      %4943 = vmatprep.mubr.f32.mxu0 0.0
      %4944 = vmatmul.mubr.f32.gmra.mrb[0].mxu0 %v4841
      %v4945 = vpop.f32.mrb[0].mxu0
      %v4946 = vadd.f32 0.0, %v4945
      %v4947 = vpop.f32.mrb[0].mxu0
      %4948 = vmatprep.mubr.f32.mxu0 0.0
      %4949 = vmatmul.mubr.f32.gmra.mrb[0].mxu0 %v4844
      %v4950 = vpop.f32.mrb[0].mxu0
      %v4951 = vadd.f32 0.0, %v4950
      %v4952 = vpop.f32.mrb[0].mxu0
      %4953 = vmatprep.mubr.f32.mxu0 0.0
      %4954 = vmatmul.mubr.f32.gmra.mrb[0].mxu0 %v4847
      %v4955 = vpop.f32.mrb[0].mxu0
      %v4956 = vadd.f32 0.0, %v4955
      %v4957 = vpop.f32.mrb[0].mxu0
      %4958 = vdwg.mxu0
      %v4959 = vadd.f32 %v4795, %v4916
      %v4960 = vadd.f32 %v4796, %v4921
      %v4961 = vadd.f32 %v4797, %v4926
      %v4962 = vadd.f32 %v4798, %v4931
      %v4963 = vadd.f32 %v4799, %v4936
      %v4964 = vadd.f32 %v4800, %v4941
      %v4965 = vadd.f32 %v4801, %v4946
      %v4966 = vadd.f32 %v4802, %v4951
      %v4967 = vadd.f32 %v4803, %v4956
      %v4968 = vld [vmem:[#allocation3 + $0xb] sm:$0xff]
      %v4969 = vld [vmem:[#allocation3 + $0x13] sm:$0xff]
      %v4970 = vld [vmem:[#allocation3 + $0x1b] sm:$0xff]
      %v4971 = vld [vmem:[#allocation3 + $0x23] sm:$0xff]
      %v4972 = vld [vmem:[#allocation3 + $0x2b] sm:$0xff]
      %v4973 = vld [vmem:[#allocation3 + $0x33] sm:$0xff]
      %v4974 = vld [vmem:[#allocation3 + $0x3b] sm:$0xff]
      %v4975 = vld [vmem:[#allocation3 + $0x43] sm:$0xff]
      %v4976 = vld [vmem:[#allocation3 + $0x4b] sm:$0x7]
      %s4977 = scalar_lea.vmem %s5, 256
      %v4978 = vld [vmem:[%s4977] sm:$0xff]
      %v4979 = vld [vmem:[%s4977 + $0x8] sm:$0xff]
      %v4980 = vld [vmem:[%s4977 + $0x10] sm:$0xff]
      %v4981 = vld [vmem:[%s4977 + $0x18] sm:$0xff]
      %v4982 = vld [vmem:[%s4977 + $0x20] sm:$0xff]
      %v4983 = vld [vmem:[%s4977 + $0x28] sm:$0xff]
      %v4984 = vld [vmem:[%s4977 + $0x30] sm:$0xff]
      %v4985 = vld [vmem:[%s4977 + $0x38] sm:$0xff]
      %v4987 = vsel %vm4316, %v4968, 0
      %v4990 = vsel %vm4316, %v4969, 0
      %v4993 = vsel %vm4316, %v4970, 0
      %v4996 = vsel %vm4316, %v4971, 0
      %v4999 = vsel %vm4316, %v4972, 0
      %v5002 = vsel %vm4316, %v4973, 0
      %v5005 = vsel %vm4316, %v4974, 0
      %v5008 = vsel %vm4316, %v4975, 0
      %v5011 = vsel %vm4316, %v4976, 0
      %5013 = vmatprep.subr.mxu0 0.0
      %5014 = vmatpush1.msra.mxu0 %v4978
      %5015 = vmatprep.subr.mxu0 0.0
      %5016 = vmatpush1.msra.mxu0 %v4979
      %5017 = vmatprep.subr.mxu0 0.0
      %5018 = vmatpush1.msra.mxu0 %v4980
      %5019 = vmatprep.subr.mxu0 0.0
      %5020 = vmatpush1.msra.mxu0 %v4981
      %5021 = vmatprep.subr.mxu0 0.0
      %5022 = vmatpush1.msra.mxu0 %v4982
      %5023 = vmatprep.subr.mxu0 0.0
      %5024 = vmatpush1.msra.mxu0 %v4983
      %5025 = vmatprep.subr.mxu0 0.0
      %5026 = vmatpush1.msra.mxu0 %v4984
      %5027 = vmatprep.subr.mxu0 0.0
      %5028 = vmatpush1.msra.mxu0 %v4985
      %5029 = vmatprep.subr.mxu0 0.0
      %5030 = vmatpush1.msra.mxu0 0.0
      %5031 = vmatprep.subr.mxu0 0.0
      %5032 = vmatpush1.msra.mxu0 0.0
      %5033 = vmatprep.subr.mxu0 0.0
      %5034 = vmatpush1.msra.mxu0 0.0
      %5035 = vmatprep.subr.mxu0 0.0
      %5036 = vmatpush1.msra.mxu0 0.0
      %5037 = vmatprep.subr.mxu0 0.0
      %5038 = vmatpush1.msra.mxu0 0.0
      %5039 = vmatprep.subr.mxu0 0.0
      %5040 = vmatpush1.msra.mxu0 0.0
      %5041 = vmatprep.subr.mxu0 0.0
      %5042 = vmatpush1.msra.mxu0 0.0
      %5043 = vmatprep.subr.mxu0 0.0
      %5044 = vmatpush1.msra.mxu0 0.0
      %5045 = vmatprep.subr.mxu0 0.0
      %5046 = vmatpush1.msra.mxu0 0.0
      %5047 = vmatprep.subr.mxu0 0.0
      %5048 = vmatpush1.msra.mxu0 0.0
      %5049 = vmatprep.subr.mxu0 0.0
      %5050 = vmatpush1.msra.mxu0 0.0
      %5051 = vmatprep.subr.mxu0 0.0
      %5052 = vmatpush1.msra.mxu0 0.0
      %5053 = vmatprep.subr.mxu0 0.0
      %5054 = vmatpush1.msra.mxu0 0.0
      %5055 = vmatprep.subr.mxu0 0.0
      %5056 = vmatpush1.msra.mxu0 0.0
      %5057 = vmatprep.subr.mxu0 0.0
      %5058 = vmatpush1.msra.mxu0 0.0
      %5059 = vmatprep.subr.mxu0 0.0
      %5060 = vmatpush1.msra.mxu0 0.0
      %5061 = vmatprep.subr.mxu0 0.0
      %5062 = vmatpush1.msra.mxu0 0.0
      %5063 = vmatprep.subr.mxu0 0.0
      %5064 = vmatpush1.msra.mxu0 0.0
      %5065 = vmatprep.subr.mxu0 0.0
      %5066 = vmatpush1.msra.mxu0 0.0
      %5067 = vmatprep.subr.mxu0 0.0
      %5068 = vmatpush1.msra.mxu0 0.0
      %5069 = vmatprep.subr.mxu0 0.0
      %5070 = vmatpush1.msra.mxu0 0.0
      %5071 = vmatprep.subr.mxu0 0.0
      %5072 = vmatpush1.msra.mxu0 0.0
      %5073 = vmatprep.subr.mxu0 0.0
      %5074 = vmatpush1.msra.mxu0 0.0
      %5075 = vmatprep.subr.mxu0 0.0
      %5076 = vmatpush1.msra.mxu0 0.0
      %5077 = vmatprep.mubr.f32.mxu0 0.0
      %5078 = vmatmul.mubr.f32.gmra.mrb[0].mxu0 %v4987
      %v5079 = vpop.f32.mrb[0].mxu0
      %v5080 = vadd.f32 0.0, %v5079
      %v5081 = vpop.f32.mrb[0].mxu0
      %5082 = vmatprep.mubr.f32.mxu0 0.0
      %5083 = vmatmul.mubr.f32.gmra.mrb[0].mxu0 %v4990
      %v5084 = vpop.f32.mrb[0].mxu0
      %v5085 = vadd.f32 0.0, %v5084
      %v5086 = vpop.f32.mrb[0].mxu0
      %5087 = vmatprep.mubr.f32.mxu0 0.0
      %5088 = vmatmul.mubr.f32.gmra.mrb[0].mxu0 %v4993
      %v5089 = vpop.f32.mrb[0].mxu0
      %v5090 = vadd.f32 0.0, %v5089
      %v5091 = vpop.f32.mrb[0].mxu0
      %5092 = vmatprep.mubr.f32.mxu0 0.0
      %5093 = vmatmul.mubr.f32.gmra.mrb[0].mxu0 %v4996
      %v5094 = vpop.f32.mrb[0].mxu0
      %v5095 = vadd.f32 0.0, %v5094
      %v5096 = vpop.f32.mrb[0].mxu0
      %5097 = vmatprep.mubr.f32.mxu0 0.0
      %5098 = vmatmul.mubr.f32.gmra.mrb[0].mxu0 %v4999
      %v5099 = vpop.f32.mrb[0].mxu0
      %v5100 = vadd.f32 0.0, %v5099
      %v5101 = vpop.f32.mrb[0].mxu0
      %5102 = vmatprep.mubr.f32.mxu0 0.0
      %5103 = vmatmul.mubr.f32.gmra.mrb[0].mxu0 %v5002
      %v5104 = vpop.f32.mrb[0].mxu0
      %v5105 = vadd.f32 0.0, %v5104
      %v5106 = vpop.f32.mrb[0].mxu0
      %5107 = vmatprep.mubr.f32.mxu0 0.0
      %5108 = vmatmul.mubr.f32.gmra.mrb[0].mxu0 %v5005
      %v5109 = vpop.f32.mrb[0].mxu0
      %v5110 = vadd.f32 0.0, %v5109
      %v5111 = vpop.f32.mrb[0].mxu0
      %5112 = vmatprep.mubr.f32.mxu0 0.0
      %5113 = vmatmul.mubr.f32.gmra.mrb[0].mxu0 %v5008
      %v5114 = vpop.f32.mrb[0].mxu0
      %v5115 = vadd.f32 0.0, %v5114
      %v5116 = vpop.f32.mrb[0].mxu0
      %5117 = vmatprep.mubr.f32.mxu0 0.0
      %5118 = vmatmul.mubr.f32.gmra.mrb[0].mxu0 %v5011
      %v5119 = vpop.f32.mrb[0].mxu0
      %v5120 = vadd.f32 0.0, %v5119
      %v5121 = vpop.f32.mrb[0].mxu0
      %5122 = vdwg.mxu0
      %v5123 = vadd.f32 %v4959, %v5080
      %v5124 = vadd.f32 %v4960, %v5085
      %v5125 = vadd.f32 %v4961, %v5090
      %v5126 = vadd.f32 %v4962, %v5095
      %v5127 = vadd.f32 %v4963, %v5100
      %v5128 = vadd.f32 %v4964, %v5105
      %v5129 = vadd.f32 %v4965, %v5110
      %v5130 = vadd.f32 %v4966, %v5115
      %v5131 = vadd.f32 %v4967, %v5120
      %v5132 = vld [vmem:[#allocation3 + $0xc] sm:$0xff]
      %v5133 = vld [vmem:[#allocation3 + $0x14] sm:$0xff]
      %v5134 = vld [vmem:[#allocation3 + $0x1c] sm:$0xff]
      %v5135 = vld [vmem:[#allocation3 + $0x24] sm:$0xff]
      %v5136 = vld [vmem:[#allocation3 + $0x2c] sm:$0xff]
      %v5137 = vld [vmem:[#allocation3 + $0x34] sm:$0xff]
      %v5138 = vld [vmem:[#allocation3 + $0x3c] sm:$0xff]
      %v5139 = vld [vmem:[#allocation3 + $0x44] sm:$0xff]
      %v5140 = vld [vmem:[#allocation3 + $0x4c] sm:$0x7]
      %s5141 = scalar_lea.vmem %s5, 320
      %v5142 = vld [vmem:[%s5141] sm:$0xff]
      %v5143 = vld [vmem:[%s5141 + $0x8] sm:$0xff]
      %v5144 = vld [vmem:[%s5141 + $0x10] sm:$0xff]
      %v5145 = vld [vmem:[%s5141 + $0x18] sm:$0xff]
      %v5146 = vld [vmem:[%s5141 + $0x20] sm:$0xff]
      %v5147 = vld [vmem:[%s5141 + $0x28] sm:$0xff]
      %v5148 = vld [vmem:[%s5141 + $0x30] sm:$0xff]
      %v5149 = vld [vmem:[%s5141 + $0x38] sm:$0xff]
      %v5151 = vsel %vm4316, %v5132, 0
      %v5154 = vsel %vm4316, %v5133, 0
      %v5157 = vsel %vm4316, %v5134, 0
      %v5160 = vsel %vm4316, %v5135, 0
      %v5163 = vsel %vm4316, %v5136, 0
      %v5166 = vsel %vm4316, %v5137, 0
      %v5169 = vsel %vm4316, %v5138, 0
      %v5172 = vsel %vm4316, %v5139, 0
      %v5175 = vsel %vm4316, %v5140, 0
      %5177 = vmatprep.subr.mxu0 0.0
      %5178 = vmatpush1.msra.mxu0 %v5142
      %5179 = vmatprep.subr.mxu0 0.0
      %5180 = vmatpush1.msra.mxu0 %v5143
      %5181 = vmatprep.subr.mxu0 0.0
      %5182 = vmatpush1.msra.mxu0 %v5144
      %5183 = vmatprep.subr.mxu0 0.0
      %5184 = vmatpush1.msra.mxu0 %v5145
      %5185 = vmatprep.subr.mxu0 0.0
      %5186 = vmatpush1.msra.mxu0 %v5146
      %5187 = vmatprep.subr.mxu0 0.0
      %5188 = vmatpush1.msra.mxu0 %v5147
      %5189 = vmatprep.subr.mxu0 0.0
      %5190 = vmatpush1.msra.mxu0 %v5148
      %5191 = vmatprep.subr.mxu0 0.0
      %5192 = vmatpush1.msra.mxu0 %v5149
      %5193 = vmatprep.subr.mxu0 0.0
      %5194 = vmatpush1.msra.mxu0 0.0
      %5195 = vmatprep.subr.mxu0 0.0
      %5196 = vmatpush1.msra.mxu0 0.0
      %5197 = vmatprep.subr.mxu0 0.0
      %5198 = vmatpush1.msra.mxu0 0.0
      %5199 = vmatprep.subr.mxu0 0.0
      %5200 = vmatpush1.msra.mxu0 0.0
      %5201 = vmatprep.subr.mxu0 0.0
      %5202 = vmatpush1.msra.mxu0 0.0
      %5203 = vmatprep.subr.mxu0 0.0
      %5204 = vmatpush1.msra.mxu0 0.0
      %5205 = vmatprep.subr.mxu0 0.0
      %5206 = vmatpush1.msra.mxu0 0.0
      %5207 = vmatprep.subr.mxu0 0.0
      %5208 = vmatpush1.msra.mxu0 0.0
      %5209 = vmatprep.subr.mxu0 0.0
      %5210 = vmatpush1.msra.mxu0 0.0
      %5211 = vmatprep.subr.mxu0 0.0
      %5212 = vmatpush1.msra.mxu0 0.0
      %5213 = vmatprep.subr.mxu0 0.0
      %5214 = vmatpush1.msra.mxu0 0.0
      %5215 = vmatprep.subr.mxu0 0.0
      %5216 = vmatpush1.msra.mxu0 0.0
      %5217 = vmatprep.subr.mxu0 0.0
      %5218 = vmatpush1.msra.mxu0 0.0
      %5219 = vmatprep.subr.mxu0 0.0
      %5220 = vmatpush1.msra.mxu0 0.0
      %5221 = vmatprep.subr.mxu0 0.0
      %5222 = vmatpush1.msra.mxu0 0.0
      %5223 = vmatprep.subr.mxu0 0.0
      %5224 = vmatpush1.msra.mxu0 0.0
      %5225 = vmatprep.subr.mxu0 0.0
      %5226 = vmatpush1.msra.mxu0 0.0
      %5227 = vmatprep.subr.mxu0 0.0
      %5228 = vmatpush1.msra.mxu0 0.0
      %5229 = vmatprep.subr.mxu0 0.0
      %5230 = vmatpush1.msra.mxu0 0.0
      %5231 = vmatprep.subr.mxu0 0.0
      %5232 = vmatpush1.msra.mxu0 0.0
      %5233 = vmatprep.subr.mxu0 0.0
      %5234 = vmatpush1.msra.mxu0 0.0
      %5235 = vmatprep.subr.mxu0 0.0
      %5236 = vmatpush1.msra.mxu0 0.0
      %5237 = vmatprep.subr.mxu0 0.0
      %5238 = vmatpush1.msra.mxu0 0.0
      %5239 = vmatprep.subr.mxu0 0.0
      %5240 = vmatpush1.msra.mxu0 0.0
      %5241 = vmatprep.mubr.f32.mxu0 0.0
      %5242 = vmatmul.mubr.f32.gmra.mrb[0].mxu0 %v5151
      %v5243 = vpop.f32.mrb[0].mxu0
      %v5244 = vadd.f32 0.0, %v5243
      %v5245 = vpop.f32.mrb[0].mxu0
      %5246 = vmatprep.mubr.f32.mxu0 0.0
      %5247 = vmatmul.mubr.f32.gmra.mrb[0].mxu0 %v5154
      %v5248 = vpop.f32.mrb[0].mxu0
      %v5249 = vadd.f32 0.0, %v5248
      %v5250 = vpop.f32.mrb[0].mxu0
      %5251 = vmatprep.mubr.f32.mxu0 0.0
      %5252 = vmatmul.mubr.f32.gmra.mrb[0].mxu0 %v5157
      %v5253 = vpop.f32.mrb[0].mxu0
      %v5254 = vadd.f32 0.0, %v5253
      %v5255 = vpop.f32.mrb[0].mxu0
      %5256 = vmatprep.mubr.f32.mxu0 0.0
      %5257 = vmatmul.mubr.f32.gmra.mrb[0].mxu0 %v5160
      %v5258 = vpop.f32.mrb[0].mxu0
      %v5259 = vadd.f32 0.0, %v5258
      %v5260 = vpop.f32.mrb[0].mxu0
      %5261 = vmatprep.mubr.f32.mxu0 0.0
      %5262 = vmatmul.mubr.f32.gmra.mrb[0].mxu0 %v5163
      %v5263 = vpop.f32.mrb[0].mxu0
      %v5264 = vadd.f32 0.0, %v5263
      %v5265 = vpop.f32.mrb[0].mxu0
      %5266 = vmatprep.mubr.f32.mxu0 0.0
      %5267 = vmatmul.mubr.f32.gmra.mrb[0].mxu0 %v5166
      %v5268 = vpop.f32.mrb[0].mxu0
      %v5269 = vadd.f32 0.0, %v5268
      %v5270 = vpop.f32.mrb[0].mxu0
      %5271 = vmatprep.mubr.f32.mxu0 0.0
      %5272 = vmatmul.mubr.f32.gmra.mrb[0].mxu0 %v5169
      %v5273 = vpop.f32.mrb[0].mxu0
      %v5274 = vadd.f32 0.0, %v5273
      %v5275 = vpop.f32.mrb[0].mxu0
      %5276 = vmatprep.mubr.f32.mxu0 0.0
      %5277 = vmatmul.mubr.f32.gmra.mrb[0].mxu0 %v5172
      %v5278 = vpop.f32.mrb[0].mxu0
      %v5279 = vadd.f32 0.0, %v5278
      %v5280 = vpop.f32.mrb[0].mxu0
      %5281 = vmatprep.mubr.f32.mxu0 0.0
      %5282 = vmatmul.mubr.f32.gmra.mrb[0].mxu0 %v5175
      %v5283 = vpop.f32.mrb[0].mxu0
      %v5284 = vadd.f32 0.0, %v5283
      %v5285 = vpop.f32.mrb[0].mxu0
      %5286 = vdwg.mxu0
      %v5287 = vadd.f32 %v5123, %v5244
      %v5288 = vadd.f32 %v5124, %v5249
      %v5289 = vadd.f32 %v5125, %v5254
      %v5290 = vadd.f32 %v5126, %v5259
      %v5291 = vadd.f32 %v5127, %v5264
      %v5292 = vadd.f32 %v5128, %v5269
      %v5293 = vadd.f32 %v5129, %v5274
      %v5294 = vadd.f32 %v5130, %v5279
      %v5295 = vadd.f32 %v5131, %v5284
      %v5296 = vld [vmem:[#allocation3 + $0x14] sm:$0xff]
      %v5297 = vld [vmem:[#allocation3 + $0x1c] sm:$0xff]
      %v5298 = vld [vmem:[#allocation3 + $0x24] sm:$0xff]
      %v5299 = vld [vmem:[#allocation3 + $0x2c] sm:$0xff]
      %v5300 = vld [vmem:[#allocation3 + $0x34] sm:$0xff]
      %v5301 = vld [vmem:[#allocation3 + $0x3c] sm:$0xff]
      %v5302 = vld [vmem:[#allocation3 + $0x44] sm:$0xff]
      %v5303 = vld [vmem:[#allocation3 + $0x4c] sm:$0xff]
      %v5304 = vld [vmem:[#allocation3 + $0x54] sm:$0x7]
      %s5305 = scalar_lea.vmem %s5, 384
      %v5306 = vld [vmem:[%s5305] sm:$0xff]
      %v5307 = vld [vmem:[%s5305 + $0x8] sm:$0xff]
      %v5308 = vld [vmem:[%s5305 + $0x10] sm:$0xff]
      %v5309 = vld [vmem:[%s5305 + $0x18] sm:$0xff]
      %v5310 = vld [vmem:[%s5305 + $0x20] sm:$0xff]
      %v5311 = vld [vmem:[%s5305 + $0x28] sm:$0xff]
      %v5312 = vld [vmem:[%s5305 + $0x30] sm:$0xff]
      %v5313 = vld [vmem:[%s5305 + $0x38] sm:$0xff]
      %v5315 = vsel %vm4316, %v5296, 0
      %v5318 = vsel %vm4316, %v5297, 0
      %v5321 = vsel %vm4316, %v5298, 0
      %v5324 = vsel %vm4316, %v5299, 0
      %v5327 = vsel %vm4316, %v5300, 0
      %v5330 = vsel %vm4316, %v5301, 0
      %v5333 = vsel %vm4316, %v5302, 0
      %v5336 = vsel %vm4316, %v5303, 0
      %v5339 = vsel %vm4316, %v5304, 0
      %5341 = vmatprep.subr.mxu0 0.0
      %5342 = vmatpush1.msra.mxu0 %v5306
      %5343 = vmatprep.subr.mxu0 0.0
      %5344 = vmatpush1.msra.mxu0 %v5307
      %5345 = vmatprep.subr.mxu0 0.0
      %5346 = vmatpush1.msra.mxu0 %v5308
      %5347 = vmatprep.subr.mxu0 0.0
      %5348 = vmatpush1.msra.mxu0 %v5309
      %5349 = vmatprep.subr.mxu0 0.0
      %5350 = vmatpush1.msra.mxu0 %v5310
      %5351 = vmatprep.subr.mxu0 0.0
      %5352 = vmatpush1.msra.mxu0 %v5311
      %5353 = vmatprep.subr.mxu0 0.0
      %5354 = vmatpush1.msra.mxu0 %v5312
      %5355 = vmatprep.subr.mxu0 0.0
      %5356 = vmatpush1.msra.mxu0 %v5313
      %5357 = vmatprep.subr.mxu0 0.0
      %5358 = vmatpush1.msra.mxu0 0.0
      %5359 = vmatprep.subr.mxu0 0.0
      %5360 = vmatpush1.msra.mxu0 0.0
      %5361 = vmatprep.subr.mxu0 0.0
      %5362 = vmatpush1.msra.mxu0 0.0
      %5363 = vmatprep.subr.mxu0 0.0
      %5364 = vmatpush1.msra.mxu0 0.0
      %5365 = vmatprep.subr.mxu0 0.0
      %5366 = vmatpush1.msra.mxu0 0.0
      %5367 = vmatprep.subr.mxu0 0.0
      %5368 = vmatpush1.msra.mxu0 0.0
      %5369 = vmatprep.subr.mxu0 0.0
      %5370 = vmatpush1.msra.mxu0 0.0
      %5371 = vmatprep.subr.mxu0 0.0
      %5372 = vmatpush1.msra.mxu0 0.0
      %5373 = vmatprep.subr.mxu0 0.0
      %5374 = vmatpush1.msra.mxu0 0.0
      %5375 = vmatprep.subr.mxu0 0.0
      %5376 = vmatpush1.msra.mxu0 0.0
      %5377 = vmatprep.subr.mxu0 0.0
      %5378 = vmatpush1.msra.mxu0 0.0
      %5379 = vmatprep.subr.mxu0 0.0
      %5380 = vmatpush1.msra.mxu0 0.0
      %5381 = vmatprep.subr.mxu0 0.0
      %5382 = vmatpush1.msra.mxu0 0.0
      %5383 = vmatprep.subr.mxu0 0.0
      %5384 = vmatpush1.msra.mxu0 0.0
      %5385 = vmatprep.subr.mxu0 0.0
      %5386 = vmatpush1.msra.mxu0 0.0
      %5387 = vmatprep.subr.mxu0 0.0
      %5388 = vmatpush1.msra.mxu0 0.0
      %5389 = vmatprep.subr.mxu0 0.0
      %5390 = vmatpush1.msra.mxu0 0.0
      %5391 = vmatprep.subr.mxu0 0.0
      %5392 = vmatpush1.msra.mxu0 0.0
      %5393 = vmatprep.subr.mxu0 0.0
      %5394 = vmatpush1.msra.mxu0 0.0
      %5395 = vmatprep.subr.mxu0 0.0
      %5396 = vmatpush1.msra.mxu0 0.0
      %5397 = vmatprep.subr.mxu0 0.0
      %5398 = vmatpush1.msra.mxu0 0.0
      %5399 = vmatprep.subr.mxu0 0.0
      %5400 = vmatpush1.msra.mxu0 0.0
      %5401 = vmatprep.subr.mxu0 0.0
      %5402 = vmatpush1.msra.mxu0 0.0
      %5403 = vmatprep.subr.mxu0 0.0
      %5404 = vmatpush1.msra.mxu0 0.0
      %5405 = vmatprep.mubr.f32.mxu0 0.0
      %5406 = vmatmul.mubr.f32.gmra.mrb[0].mxu0 %v5315
      %v5407 = vpop.f32.mrb[0].mxu0
      %v5408 = vadd.f32 0.0, %v5407
      %v5409 = vpop.f32.mrb[0].mxu0
      %5410 = vmatprep.mubr.f32.mxu0 0.0
      %5411 = vmatmul.mubr.f32.gmra.mrb[0].mxu0 %v5318
      %v5412 = vpop.f32.mrb[0].mxu0
      %v5413 = vadd.f32 0.0, %v5412
      %v5414 = vpop.f32.mrb[0].mxu0
      %5415 = vmatprep.mubr.f32.mxu0 0.0
      %5416 = vmatmul.mubr.f32.gmra.mrb[0].mxu0 %v5321
      %v5417 = vpop.f32.mrb[0].mxu0
      %v5418 = vadd.f32 0.0, %v5417
      %v5419 = vpop.f32.mrb[0].mxu0
      %5420 = vmatprep.mubr.f32.mxu0 0.0
      %5421 = vmatmul.mubr.f32.gmra.mrb[0].mxu0 %v5324
      %v5422 = vpop.f32.mrb[0].mxu0
      %v5423 = vadd.f32 0.0, %v5422
      %v5424 = vpop.f32.mrb[0].mxu0
      %5425 = vmatprep.mubr.f32.mxu0 0.0
      %5426 = vmatmul.mubr.f32.gmra.mrb[0].mxu0 %v5327
      %v5427 = vpop.f32.mrb[0].mxu0
      %v5428 = vadd.f32 0.0, %v5427
      %v5429 = vpop.f32.mrb[0].mxu0
      %5430 = vmatprep.mubr.f32.mxu0 0.0
      %5431 = vmatmul.mubr.f32.gmra.mrb[0].mxu0 %v5330
      %v5432 = vpop.f32.mrb[0].mxu0
      %v5433 = vadd.f32 0.0, %v5432
      %v5434 = vpop.f32.mrb[0].mxu0
      %5435 = vmatprep.mubr.f32.mxu0 0.0
      %5436 = vmatmul.mubr.f32.gmra.mrb[0].mxu0 %v5333
      %v5437 = vpop.f32.mrb[0].mxu0
      %v5438 = vadd.f32 0.0, %v5437
      %v5439 = vpop.f32.mrb[0].mxu0
      %5440 = vmatprep.mubr.f32.mxu0 0.0
      %5441 = vmatmul.mubr.f32.gmra.mrb[0].mxu0 %v5336
      %v5442 = vpop.f32.mrb[0].mxu0
      %v5443 = vadd.f32 0.0, %v5442
      %v5444 = vpop.f32.mrb[0].mxu0
      %5445 = vmatprep.mubr.f32.mxu0 0.0
      %5446 = vmatmul.mubr.f32.gmra.mrb[0].mxu0 %v5339
      %v5447 = vpop.f32.mrb[0].mxu0
      %v5448 = vadd.f32 0.0, %v5447
      %v5449 = vpop.f32.mrb[0].mxu0
      %5450 = vdwg.mxu0
      %v5451 = vadd.f32 %v5287, %v5408
      %v5452 = vadd.f32 %v5288, %v5413
      %v5453 = vadd.f32 %v5289, %v5418
      %v5454 = vadd.f32 %v5290, %v5423
      %v5455 = vadd.f32 %v5291, %v5428
      %v5456 = vadd.f32 %v5292, %v5433
      %v5457 = vadd.f32 %v5293, %v5438
      %v5458 = vadd.f32 %v5294, %v5443
      %v5459 = vadd.f32 %v5295, %v5448
      %v5460 = vld [vmem:[#allocation3 + $0x15] sm:$0xff]
      %v5461 = vld [vmem:[#allocation3 + $0x1d] sm:$0xff]
      %v5462 = vld [vmem:[#allocation3 + $0x25] sm:$0xff]
      %v5463 = vld [vmem:[#allocation3 + $0x2d] sm:$0xff]
      %v5464 = vld [vmem:[#allocation3 + $0x35] sm:$0xff]
      %v5465 = vld [vmem:[#allocation3 + $0x3d] sm:$0xff]
      %v5466 = vld [vmem:[#allocation3 + $0x45] sm:$0xff]
      %v5467 = vld [vmem:[#allocation3 + $0x4d] sm:$0xff]
      %v5468 = vld [vmem:[#allocation3 + $0x55] sm:$0x7]
      %s5469 = scalar_lea.vmem %s5, 448
      %v5470 = vld [vmem:[%s5469] sm:$0xff]
      %v5471 = vld [vmem:[%s5469 + $0x8] sm:$0xff]
      %v5472 = vld [vmem:[%s5469 + $0x10] sm:$0xff]
      %v5473 = vld [vmem:[%s5469 + $0x18] sm:$0xff]
      %v5474 = vld [vmem:[%s5469 + $0x20] sm:$0xff]
      %v5475 = vld [vmem:[%s5469 + $0x28] sm:$0xff]
      %v5476 = vld [vmem:[%s5469 + $0x30] sm:$0xff]
      %v5477 = vld [vmem:[%s5469 + $0x38] sm:$0xff]
      %v5479 = vsel %vm4316, %v5460, 0
      %v5482 = vsel %vm4316, %v5461, 0
      %v5485 = vsel %vm4316, %v5462, 0
      %v5488 = vsel %vm4316, %v5463, 0
      %v5491 = vsel %vm4316, %v5464, 0
      %v5494 = vsel %vm4316, %v5465, 0
      %v5497 = vsel %vm4316, %v5466, 0
      %v5500 = vsel %vm4316, %v5467, 0
      %v5503 = vsel %vm4316, %v5468, 0
      %5505 = vmatprep.subr.mxu0 0.0
      %5506 = vmatpush1.msra.mxu0 %v5470
      %5507 = vmatprep.subr.mxu0 0.0
      %5508 = vmatpush1.msra.mxu0 %v5471
      %5509 = vmatprep.subr.mxu0 0.0
      %5510 = vmatpush1.msra.mxu0 %v5472
      %5511 = vmatprep.subr.mxu0 0.0
      %5512 = vmatpush1.msra.mxu0 %v5473
      %5513 = vmatprep.subr.mxu0 0.0
      %5514 = vmatpush1.msra.mxu0 %v5474
      %5515 = vmatprep.subr.mxu0 0.0
      %5516 = vmatpush1.msra.mxu0 %v5475
      %5517 = vmatprep.subr.mxu0 0.0
      %5518 = vmatpush1.msra.mxu0 %v5476
      %5519 = vmatprep.subr.mxu0 0.0
      %5520 = vmatpush1.msra.mxu0 %v5477
      %5521 = vmatprep.subr.mxu0 0.0
      %5522 = vmatpush1.msra.mxu0 0.0
      %5523 = vmatprep.subr.mxu0 0.0
      %5524 = vmatpush1.msra.mxu0 0.0
      %5525 = vmatprep.subr.mxu0 0.0
      %5526 = vmatpush1.msra.mxu0 0.0
      %5527 = vmatprep.subr.mxu0 0.0
      %5528 = vmatpush1.msra.mxu0 0.0
      %5529 = vmatprep.subr.mxu0 0.0
      %5530 = vmatpush1.msra.mxu0 0.0
      %5531 = vmatprep.subr.mxu0 0.0
      %5532 = vmatpush1.msra.mxu0 0.0
      %5533 = vmatprep.subr.mxu0 0.0
      %5534 = vmatpush1.msra.mxu0 0.0
      %5535 = vmatprep.subr.mxu0 0.0
      %5536 = vmatpush1.msra.mxu0 0.0
      %5537 = vmatprep.subr.mxu0 0.0
      %5538 = vmatpush1.msra.mxu0 0.0
      %5539 = vmatprep.subr.mxu0 0.0
      %5540 = vmatpush1.msra.mxu0 0.0
      %5541 = vmatprep.subr.mxu0 0.0
      %5542 = vmatpush1.msra.mxu0 0.0
      %5543 = vmatprep.subr.mxu0 0.0
      %5544 = vmatpush1.msra.mxu0 0.0
      %5545 = vmatprep.subr.mxu0 0.0
      %5546 = vmatpush1.msra.mxu0 0.0
      %5547 = vmatprep.subr.mxu0 0.0
      %5548 = vmatpush1.msra.mxu0 0.0
      %5549 = vmatprep.subr.mxu0 0.0
      %5550 = vmatpush1.msra.mxu0 0.0
      %5551 = vmatprep.subr.mxu0 0.0
      %5552 = vmatpush1.msra.mxu0 0.0
      %5553 = vmatprep.subr.mxu0 0.0
      %5554 = vmatpush1.msra.mxu0 0.0
      %5555 = vmatprep.subr.mxu0 0.0
      %5556 = vmatpush1.msra.mxu0 0.0
      %5557 = vmatprep.subr.mxu0 0.0
      %5558 = vmatpush1.msra.mxu0 0.0
      %5559 = vmatprep.subr.mxu0 0.0
      %5560 = vmatpush1.msra.mxu0 0.0
      %5561 = vmatprep.subr.mxu0 0.0
      %5562 = vmatpush1.msra.mxu0 0.0
      %5563 = vmatprep.subr.mxu0 0.0
      %5564 = vmatpush1.msra.mxu0 0.0
      %5565 = vmatprep.subr.mxu0 0.0
      %5566 = vmatpush1.msra.mxu0 0.0
      %5567 = vmatprep.subr.mxu0 0.0
      %5568 = vmatpush1.msra.mxu0 0.0
      %5569 = vmatprep.mubr.f32.mxu0 0.0
      %5570 = vmatmul.mubr.f32.gmra.mrb[0].mxu0 %v5479
      %v5571 = vpop.f32.mrb[0].mxu0
      %v5572 = vadd.f32 0.0, %v5571
      %v5573 = vpop.f32.mrb[0].mxu0
      %5574 = vmatprep.mubr.f32.mxu0 0.0
      %5575 = vmatmul.mubr.f32.gmra.mrb[0].mxu0 %v5482
      %v5576 = vpop.f32.mrb[0].mxu0
      %v5577 = vadd.f32 0.0, %v5576
      %v5578 = vpop.f32.mrb[0].mxu0
      %5579 = vmatprep.mubr.f32.mxu0 0.0
      %5580 = vmatmul.mubr.f32.gmra.mrb[0].mxu0 %v5485
      %v5581 = vpop.f32.mrb[0].mxu0
      %v5582 = vadd.f32 0.0, %v5581
      %v5583 = vpop.f32.mrb[0].mxu0
      %5584 = vmatprep.mubr.f32.mxu0 0.0
      %5585 = vmatmul.mubr.f32.gmra.mrb[0].mxu0 %v5488
      %v5586 = vpop.f32.mrb[0].mxu0
      %v5587 = vadd.f32 0.0, %v5586
      %v5588 = vpop.f32.mrb[0].mxu0
      %5589 = vmatprep.mubr.f32.mxu0 0.0
      %5590 = vmatmul.mubr.f32.gmra.mrb[0].mxu0 %v5491
      %v5591 = vpop.f32.mrb[0].mxu0
      %v5592 = vadd.f32 0.0, %v5591
      %v5593 = vpop.f32.mrb[0].mxu0
      %5594 = vmatprep.mubr.f32.mxu0 0.0
      %5595 = vmatmul.mubr.f32.gmra.mrb[0].mxu0 %v5494
      %v5596 = vpop.f32.mrb[0].mxu0
      %v5597 = vadd.f32 0.0, %v5596
      %v5598 = vpop.f32.mrb[0].mxu0
      %5599 = vmatprep.mubr.f32.mxu0 0.0
      %5600 = vmatmul.mubr.f32.gmra.mrb[0].mxu0 %v5497
      %v5601 = vpop.f32.mrb[0].mxu0
      %v5602 = vadd.f32 0.0, %v5601
      %v5603 = vpop.f32.mrb[0].mxu0
      %5604 = vmatprep.mubr.f32.mxu0 0.0
      %5605 = vmatmul.mubr.f32.gmra.mrb[0].mxu0 %v5500
      %v5606 = vpop.f32.mrb[0].mxu0
      %v5607 = vadd.f32 0.0, %v5606
      %v5608 = vpop.f32.mrb[0].mxu0
      %5609 = vmatprep.mubr.f32.mxu0 0.0
      %5610 = vmatmul.mubr.f32.gmra.mrb[0].mxu0 %v5503
      %v5611 = vpop.f32.mrb[0].mxu0
      %v5612 = vadd.f32 0.0, %v5611
      %v5613 = vpop.f32.mrb[0].mxu0
      %5614 = vdwg.mxu0
      %v5615 = vadd.f32 %v5451, %v5572
      %v5616 = vadd.f32 %v5452, %v5577
      %v5617 = vadd.f32 %v5453, %v5582
      %v5618 = vadd.f32 %v5454, %v5587
      %v5619 = vadd.f32 %v5455, %v5592
      %v5620 = vadd.f32 %v5456, %v5597
      %v5621 = vadd.f32 %v5457, %v5602
      %v5622 = vadd.f32 %v5458, %v5607
      %v5623 = vadd.f32 %v5459, %v5612
      %v5624 = vld [vmem:[#allocation3 + $0x16] sm:$0xff]
      %v5625 = vld [vmem:[#allocation3 + $0x1e] sm:$0xff]
      %v5626 = vld [vmem:[#allocation3 + $0x26] sm:$0xff]
      %v5627 = vld [vmem:[#allocation3 + $0x2e] sm:$0xff]
      %v5628 = vld [vmem:[#allocation3 + $0x36] sm:$0xff]
      %v5629 = vld [vmem:[#allocation3 + $0x3e] sm:$0xff]
      %v5630 = vld [vmem:[#allocation3 + $0x46] sm:$0xff]
      %v5631 = vld [vmem:[#allocation3 + $0x4e] sm:$0xff]
      %v5632 = vld [vmem:[#allocation3 + $0x56] sm:$0x7]
      %s5633 = scalar_lea.vmem %s5, 512
      %v5634 = vld [vmem:[%s5633] sm:$0xff]
      %v5635 = vld [vmem:[%s5633 + $0x8] sm:$0xff]
      %v5636 = vld [vmem:[%s5633 + $0x10] sm:$0xff]
      %v5637 = vld [vmem:[%s5633 + $0x18] sm:$0xff]
      %v5638 = vld [vmem:[%s5633 + $0x20] sm:$0xff]
      %v5639 = vld [vmem:[%s5633 + $0x28] sm:$0xff]
      %v5640 = vld [vmem:[%s5633 + $0x30] sm:$0xff]
      %v5641 = vld [vmem:[%s5633 + $0x38] sm:$0xff]
      %v5643 = vsel %vm4316, %v5624, 0
      %v5646 = vsel %vm4316, %v5625, 0
      %v5649 = vsel %vm4316, %v5626, 0
      %v5652 = vsel %vm4316, %v5627, 0
      %v5655 = vsel %vm4316, %v5628, 0
      %v5658 = vsel %vm4316, %v5629, 0
      %v5661 = vsel %vm4316, %v5630, 0
      %v5664 = vsel %vm4316, %v5631, 0
      %v5667 = vsel %vm4316, %v5632, 0
      %5669 = vmatprep.subr.mxu0 0.0
      %5670 = vmatpush1.msra.mxu0 %v5634
      %5671 = vmatprep.subr.mxu0 0.0
      %5672 = vmatpush1.msra.mxu0 %v5635
      %5673 = vmatprep.subr.mxu0 0.0
      %5674 = vmatpush1.msra.mxu0 %v5636
      %5675 = vmatprep.subr.mxu0 0.0
      %5676 = vmatpush1.msra.mxu0 %v5637
      %5677 = vmatprep.subr.mxu0 0.0
      %5678 = vmatpush1.msra.mxu0 %v5638
      %5679 = vmatprep.subr.mxu0 0.0
      %5680 = vmatpush1.msra.mxu0 %v5639
      %5681 = vmatprep.subr.mxu0 0.0
      %5682 = vmatpush1.msra.mxu0 %v5640
      %5683 = vmatprep.subr.mxu0 0.0
      %5684 = vmatpush1.msra.mxu0 %v5641
      %5685 = vmatprep.subr.mxu0 0.0
      %5686 = vmatpush1.msra.mxu0 0.0
      %5687 = vmatprep.subr.mxu0 0.0
      %5688 = vmatpush1.msra.mxu0 0.0
      %5689 = vmatprep.subr.mxu0 0.0
      %5690 = vmatpush1.msra.mxu0 0.0
      %5691 = vmatprep.subr.mxu0 0.0
      %5692 = vmatpush1.msra.mxu0 0.0
      %5693 = vmatprep.subr.mxu0 0.0
      %5694 = vmatpush1.msra.mxu0 0.0
      %5695 = vmatprep.subr.mxu0 0.0
      %5696 = vmatpush1.msra.mxu0 0.0
      %5697 = vmatprep.subr.mxu0 0.0
      %5698 = vmatpush1.msra.mxu0 0.0
      %5699 = vmatprep.subr.mxu0 0.0
      %5700 = vmatpush1.msra.mxu0 0.0
      %5701 = vmatprep.subr.mxu0 0.0
      %5702 = vmatpush1.msra.mxu0 0.0
      %5703 = vmatprep.subr.mxu0 0.0
      %5704 = vmatpush1.msra.mxu0 0.0
      %5705 = vmatprep.subr.mxu0 0.0
      %5706 = vmatpush1.msra.mxu0 0.0
      %5707 = vmatprep.subr.mxu0 0.0
      %5708 = vmatpush1.msra.mxu0 0.0
      %5709 = vmatprep.subr.mxu0 0.0
      %5710 = vmatpush1.msra.mxu0 0.0
      %5711 = vmatprep.subr.mxu0 0.0
      %5712 = vmatpush1.msra.mxu0 0.0
      %5713 = vmatprep.subr.mxu0 0.0
      %5714 = vmatpush1.msra.mxu0 0.0
      %5715 = vmatprep.subr.mxu0 0.0
      %5716 = vmatpush1.msra.mxu0 0.0
      %5717 = vmatprep.subr.mxu0 0.0
      %5718 = vmatpush1.msra.mxu0 0.0
      %5719 = vmatprep.subr.mxu0 0.0
      %5720 = vmatpush1.msra.mxu0 0.0
      %5721 = vmatprep.subr.mxu0 0.0
      %5722 = vmatpush1.msra.mxu0 0.0
      %5723 = vmatprep.subr.mxu0 0.0
      %5724 = vmatpush1.msra.mxu0 0.0
      %5725 = vmatprep.subr.mxu0 0.0
      %5726 = vmatpush1.msra.mxu0 0.0
      %5727 = vmatprep.subr.mxu0 0.0
      %5728 = vmatpush1.msra.mxu0 0.0
      %5729 = vmatprep.subr.mxu0 0.0
      %5730 = vmatpush1.msra.mxu0 0.0
      %5731 = vmatprep.subr.mxu0 0.0
      %5732 = vmatpush1.msra.mxu0 0.0
      %5733 = vmatprep.mubr.f32.mxu0 0.0
      %5734 = vmatmul.mubr.f32.gmra.mrb[0].mxu0 %v5643
      %v5735 = vpop.f32.mrb[0].mxu0
      %v5736 = vadd.f32 0.0, %v5735
      %v5737 = vpop.f32.mrb[0].mxu0
      %5738 = vmatprep.mubr.f32.mxu0 0.0
      %5739 = vmatmul.mubr.f32.gmra.mrb[0].mxu0 %v5646
      %v5740 = vpop.f32.mrb[0].mxu0
      %v5741 = vadd.f32 0.0, %v5740
      %v5742 = vpop.f32.mrb[0].mxu0
      %5743 = vmatprep.mubr.f32.mxu0 0.0
      %5744 = vmatmul.mubr.f32.gmra.mrb[0].mxu0 %v5649
      %v5745 = vpop.f32.mrb[0].mxu0
      %v5746 = vadd.f32 0.0, %v5745
      %v5747 = vpop.f32.mrb[0].mxu0
      %5748 = vmatprep.mubr.f32.mxu0 0.0
      %5749 = vmatmul.mubr.f32.gmra.mrb[0].mxu0 %v5652
      %v5750 = vpop.f32.mrb[0].mxu0
      %v5751 = vadd.f32 0.0, %v5750
      %v5752 = vpop.f32.mrb[0].mxu0
      %5753 = vmatprep.mubr.f32.mxu0 0.0
      %5754 = vmatmul.mubr.f32.gmra.mrb[0].mxu0 %v5655
      %v5755 = vpop.f32.mrb[0].mxu0
      %v5756 = vadd.f32 0.0, %v5755
      %v5757 = vpop.f32.mrb[0].mxu0
      %5758 = vmatprep.mubr.f32.mxu0 0.0
      %5759 = vmatmul.mubr.f32.gmra.mrb[0].mxu0 %v5658
      %v5760 = vpop.f32.mrb[0].mxu0
      %v5761 = vadd.f32 0.0, %v5760
      %v5762 = vpop.f32.mrb[0].mxu0
      %5763 = vmatprep.mubr.f32.mxu0 0.0
      %5764 = vmatmul.mubr.f32.gmra.mrb[0].mxu0 %v5661
      %v5765 = vpop.f32.mrb[0].mxu0
      %v5766 = vadd.f32 0.0, %v5765
      %v5767 = vpop.f32.mrb[0].mxu0
      %5768 = vmatprep.mubr.f32.mxu0 0.0
      %5769 = vmatmul.mubr.f32.gmra.mrb[0].mxu0 %v5664
      %v5770 = vpop.f32.mrb[0].mxu0
      %v5771 = vadd.f32 0.0, %v5770
      %v5772 = vpop.f32.mrb[0].mxu0
      %5773 = vmatprep.mubr.f32.mxu0 0.0
      %5774 = vmatmul.mubr.f32.gmra.mrb[0].mxu0 %v5667
      %v5775 = vpop.f32.mrb[0].mxu0
      %v5776 = vadd.f32 0.0, %v5775
      %v5777 = vpop.f32.mrb[0].mxu0
      %5778 = vdwg.mxu0
      %v5779 = vadd.f32 %v5615, %v5736
      %v5780 = vadd.f32 %v5616, %v5741
      %v5781 = vadd.f32 %v5617, %v5746
      %v5782 = vadd.f32 %v5618, %v5751
      %v5783 = vadd.f32 %v5619, %v5756
      %v5784 = vadd.f32 %v5620, %v5761
      %v5785 = vadd.f32 %v5621, %v5766
      %v5786 = vadd.f32 %v5622, %v5771
      %v5787 = vadd.f32 %v5623, %v5776
      %v5788 = vld [vmem:[%s6] sm:$0x1]
      %v5790 = vlaneseq
      %v5791 = vshrl.u32 %v5790, 7
      %v5792 = vsub.s32 0, %v5791
      %v5793 = vrot.slane %v5788, %v5792
      %v5795 = vadd.f32 %v5779, %v5793
      %v5796 = vadd.f32 %v5780, %v5793
      %v5797 = vadd.f32 %v5781, %v5793
      %v5798 = vadd.f32 %v5782, %v5793
      %v5799 = vadd.f32 %v5783, %v5793
      %v5800 = vadd.f32 %v5784, %v5793
      %v5801 = vadd.f32 %v5785, %v5793
      %v5802 = vadd.f32 %v5786, %v5793
      %v5803 = vadd.f32 %v5787, %v5793
      %v5804 = vmax.f32 %v5795, 0.0
      %v5805 = vmax.f32 %v5796, 0.0
      %v5806 = vmax.f32 %v5797, 0.0
      %v5807 = vmax.f32 %v5798, 0.0
      %v5808 = vmax.f32 %v5799, 0.0
      %v5809 = vmax.f32 %v5800, 0.0
      %v5810 = vmax.f32 %v5801, 0.0
      %v5811 = vmax.f32 %v5802, 0.0
      %v5812 = vmax.f32 %v5803, 0.0
      %5813 = vst.msk [vmem:[#allocation4] sm:$0xff] %vm4316, %v5804
      %5814 = vst.msk [vmem:[#allocation4 + $0x8] sm:$0xff] %vm4316, %v5805
      %5815 = vst.msk [vmem:[#allocation4 + $0x10] sm:$0xff] %vm4316, %v5806
      %5816 = vst.msk [vmem:[#allocation4 + $0x18] sm:$0xff] %vm4316, %v5807
      %5817 = vst.msk [vmem:[#allocation4 + $0x20] sm:$0xff] %vm4316, %v5808
      %5818 = vst.msk [vmem:[#allocation4 + $0x28] sm:$0xff] %vm4316, %v5809
      %5819 = vst.msk [vmem:[#allocation4 + $0x30] sm:$0xff] %vm4316, %v5810
      %5820 = vst.msk [vmem:[#allocation4 + $0x38] sm:$0xff] %vm4316, %v5811
      %vm5821 = vcmask 518144
      %5822 = vst.msk [vmem:[#allocation4 + $0x40] sm:$0x7] %vm5821, %v5812
      %v5823 = vld [vmem:[#allocation4] sm:$0x7f]
      %vm5824 = vcmask 522240
      %5825 = vst.msk [vmem:[%s278] sm:$0x7f] %vm5824, %v5823
      %v5826 = vld [vmem:[#allocation4 + $0xa] sm:$0x7f]
      %s5827 = scalar_lea.vmem %s278, 8
      %5828 = vst.msk [vmem:[%s5827] sm:$0x7f] %vm5824, %v5826
      %v5829 = vld [vmem:[#allocation4 + $0x14] sm:$0x7f]
      %s5830 = scalar_lea.vmem %s278, 16
      %5831 = vst.msk [vmem:[%s5830] sm:$0x7f] %vm5824, %v5829
      %v5832 = vld [vmem:[#allocation4 + $0x1e] sm:$0x7f]
      %s5833 = scalar_lea.vmem %s278, 24
      %5834 = vst.msk [vmem:[%s5833] sm:$0x7f] %vm5824, %v5832
      %v5835 = vld [vmem:[#allocation4 + $0x28] sm:$0x7f]
      %s5836 = scalar_lea.vmem %s278, 32
      %5837 = vst.msk [vmem:[%s5836] sm:$0x7f] %vm5824, %v5835
      %v5838 = vld [vmem:[#allocation4 + $0x32] sm:$0x7f]
      %s5839 = scalar_lea.vmem %s278, 40
      %5840 = vst.msk [vmem:[%s5839] sm:$0x7f] %vm5824, %v5838
      %v5841 = vld [vmem:[#allocation4 + $0x3c] sm:$0x7f]
      %s5842 = scalar_lea.vmem %s278, 48
      %5843 = vst.msk [vmem:[%s5842] sm:$0x7f] %vm5824, %v5841
      %p5844 = scmp.lt.s32.totalorder %s18, 1
      %s5845 = scalar_select %p5844, %s18, 1
      %s5846 = smul.addr %s5845, 7
      %s5847 = smul.addr %s5846, 8
      %s5848 = scalar_lea.vmem %s7, %s5847
      // Predicated region
      $region49: #{dqn_forward.2} parent=47 // pred_check
        %p5849 = pneg %p188
      $region50: #{dqn_forward.2} parent=47 // pred_check_branch
        %5851 = sbr.rel (%p5849) target = $region52
      $region51: #{dqn_forward.2} parent=47 // pred_region
        _
      $region52: #{dqn_forward.2} parent=47 // pred_fallthru
        _
    $region48: #{dqn_forward.2} parent=5 // pred_fallthru
      _
    %p5852 = scmp.le.s32.totalorder 2, %s13
    // Predicated region
    $region53: #{dqn_forward.2} parent=5 // pred_check
      %p5853 = pneg %p5852
    $region54: #{dqn_forward.2} parent=5 // pred_check_branch
      %5855 = sbr.rel (%p5853) target = $region56
    $region55: #{dqn_forward.2} parent=5 // pred_region
      %s5856 = ssub.s32 %s13, 2
      // Predicated region
      $region57: #{dqn_forward.2} parent=55 // pred_check
        %p5857 = pneg %p194
      $region58: #{dqn_forward.2} parent=55 // pred_check_branch
        %5859 = sbr.rel (%p5857) target = $region60
      $region59: #{dqn_forward.2} parent=55 // pred_region
        %p5860 = scmp.lt.s32.totalorder %s19, 1
        %s5861 = scalar_select %p5860, %s19, 1
        %s5862 = smul.addr %s5861, 7
        %s5863 = smul.addr %s5862, 8
        %s5864 = scalar_lea.vmem %s7, %s5863
      $region60: #{dqn_forward.2} parent=55 // pred_fallthru
        _
    $region56: #{dqn_forward.2} parent=5 // pred_fallthru
      _
  $region6: #{dqn_forward.2} parent=0 // loop_footer
    %s17 = sadd.s32 1, %s13
  $region7: #{dqn_forward.2} parent=0 // loop_footer_branch
    %12 = sbr.rel target = $region3
  $region8: #{dqn_forward.2} parent=0 // loop_exit
    _

// kernel: dqn_forward.3
$region0: #{dqn_forward.3}
  #allocation0 [shape = 'u32[]', space=smem, size = 0x4, offset = 0x4, fixed_abs, tag = 'smem constant byte address 0x4 - core index']
  #allocation1 [shape = 'u32[144,128]{1,0:T(1,128)}', space=vmem, size = 0x12000, scoped, tag = 'internal scratch']
  %s0 = inlined_call_operand.vmem [shape: f32[2,3136], index: 0, kind: input, shape index: {}]
  %s1 = inlined_call_operand.hbm [shape: f32[3136,512], index: 1, kind: input, shape index: {}]
  %s2 = inlined_call_operand.vmem [shape: f32[1,512], index: 2, kind: input, shape index: {}]
  %s3 = inlined_call_operand.vmem [shape: f32[512,128], index: 3, kind: input, shape index: {}]
  %s4 = inlined_call_operand.vmem [shape: f32[1,128], index: 4, kind: input, shape index: {}]
  %s5 = inlined_call_operand.hbm [shape: f32[2,128], index: 5, kind: output, shape index: {}]
  %s6 = sld [smem:[#allocation0]]
  $region34: #{dqn_forward.3} parent=0
    _
  %s8 = ssub.s32 1, %s6
  %s9 = scalar_select 0, %s8, %s6
  $region1: #{dqn_forward.3} parent=0
    #allocation2 [shape = 'u8[6422528]{0}', space=vmem, size = 0x620000, scoped, tag = 'input window, operand 1, single buffered']
    #allocation3 [shape = 's32[1]{0}', space=sflag, size = 0x4, scoped, tag = 'scoped memory for dqn_forward.3']
    #allocation4 [shape = 's32[1]{0}', space=sflag, size = 0x4, scoped, tag = 'scoped memory for dqn_forward.3']
    #allocation5 [shape = 'u8[1024]{0}', space=vmem, size = 0x400, scoped, tag = 'output window, operand 0, single buffered']
    %10 = vsyncpa [#allocation3], 0
    %11 = vsyncpa [#allocation4], 0
    // Predicated region
    $region2: #{dqn_forward.3} parent=1 // pred_check
      _
    $region3: #{dqn_forward.3} parent=1 // pred_check_branch
      %13 = sbr.rel (0) target = $region5
    $region4: #{dqn_forward.3} parent=1 // pred_region
      _
    $region5: #{dqn_forward.3} parent=1 // pred_fallthru
      _
    // Predicated region
    $region6: #{dqn_forward.3} parent=1 // pred_check
      _
    $region7: #{dqn_forward.3} parent=1 // pred_check_branch
      %15 = sbr.rel (0) target = $region9
    $region8: #{dqn_forward.3} parent=1 // pred_region
      %s17 = ssub.s32 200704, 200704
      %18 = vsyncadd [#allocation3], %s17
      %s19 = sshll.u32 [#allocation2], 4
      %s20 = int_to_ptr.vmem [resolvable:$true] %s19
      %25 = dma.hbm_to_vmem [thread:$0]  %s1, 200704, %s20, [#allocation3], 512, 512, 32
    $region9: #{dqn_forward.3} parent=1 // pred_fallthru
      _
    // Predicated region
    $region10: #{dqn_forward.3} parent=1 // pred_check
      _
    $region11: #{dqn_forward.3} parent=1 // pred_check_branch
      %27 = sbr.rel (0) target = $region13
    $region12: #{dqn_forward.3} parent=1 // pred_region
      _
    $region13: #{dqn_forward.3} parent=1 // pred_fallthru
      _
    // Predicated region
    $region14: #{dqn_forward.3} parent=1 // pred_check
      _
    $region15: #{dqn_forward.3} parent=1 // pred_check_branch
      %29 = sbr.rel (0) target = $region17
    $region16: #{dqn_forward.3} parent=1 // pred_region
      _
    $region17: #{dqn_forward.3} parent=1 // pred_fallthru
      _
    // Predicated region
    $region18: #{dqn_forward.3} parent=1 // pred_check
      _
    $region19: #{dqn_forward.3} parent=1 // pred_check_branch
      %31 = sbr.rel (0) target = $region21
    $region20: #{dqn_forward.3} parent=1 // pred_region
      _
    $region21: #{dqn_forward.3} parent=1 // pred_fallthru
      _
    // Predicated region
    $region22: #{dqn_forward.3} parent=1 // pred_check
      _
    $region23: #{dqn_forward.3} parent=1 // pred_check_branch
      %33 = sbr.rel (0) target = $region25
    $region24: #{dqn_forward.3} parent=1 // pred_region
      %34 = dma.done [#allocation3], 200704
    $region25: #{dqn_forward.3} parent=1 // pred_fallthru
      _
    %v35 = vld [vmem:[%s0] sm:$0xff]
    %v36 = vld [vmem:[%s0 + $0x8] sm:$0xff]
    %v37 = vld [vmem:[%s0 + $0x10] sm:$0xff]
    %v38 = vld [vmem:[%s0 + $0x18] sm:$0xff]
    %v39 = vld [vmem:[%s0 + $0x20] sm:$0xff]
    %v40 = vld [vmem:[%s0 + $0x28] sm:$0xff]
    %v41 = vld [vmem:[%s0 + $0x30] sm:$0x3]
    %v42 = vld [vmem:[#allocation2] sm:$0xff]
    %v43 = vld [vmem:[#allocation2 + $0x8] sm:$0xff]
    %v44 = vld [vmem:[#allocation2 + $0x10] sm:$0xff]
    %v45 = vld [vmem:[#allocation2 + $0x18] sm:$0xff]
    %v46 = vld [vmem:[#allocation2 + $0x20] sm:$0xff]
    %v47 = vld [vmem:[#allocation2 + $0x28] sm:$0xff]
    %v48 = vld [vmem:[#allocation2 + $0x30] sm:$0xff]
    %v49 = vld [vmem:[#allocation2 + $0x38] sm:$0xff]
    %v50 = vld [vmem:[#allocation2 + $0x40] sm:$0xff]
    %v51 = vld [vmem:[#allocation2 + $0x48] sm:$0xff]
    %v52 = vld [vmem:[#allocation2 + $0x50] sm:$0xff]
    %v53 = vld [vmem:[#allocation2 + $0x58] sm:$0xff]
    %v54 = vld [vmem:[#allocation2 + $0x60] sm:$0xff]
    %v55 = vld [vmem:[#allocation2 + $0x68] sm:$0xff]
    %v56 = vld [vmem:[#allocation2 + $0x70] sm:$0xff]
    %v57 = vld [vmem:[#allocation2 + $0x78] sm:$0xff]
    %v58 = vld [vmem:[#allocation2 + $0x80] sm:$0xff]
    %v59 = vld [vmem:[#allocation2 + $0x88] sm:$0xff]
    %v60 = vld [vmem:[#allocation2 + $0x90] sm:$0xff]
    %v61 = vld [vmem:[#allocation2 + $0x98] sm:$0xff]
    %v62 = vld [vmem:[#allocation2 + $0xa0] sm:$0xff]
    %v63 = vld [vmem:[#allocation2 + $0xa8] sm:$0xff]
    %v64 = vld [vmem:[#allocation2 + $0xb0] sm:$0xff]
    %v65 = vld [vmem:[#allocation2 + $0xb8] sm:$0xff]
    %v66 = vld [vmem:[#allocation2 + $0xc0] sm:$0xff]
    %v67 = vld [vmem:[#allocation2 + $0xc8] sm:$0xff]
    %v68 = vld [vmem:[#allocation2 + $0xd0] sm:$0xff]
    %v69 = vld [vmem:[#allocation2 + $0xd8] sm:$0xff]
    %v70 = vld [vmem:[#allocation2 + $0xe0] sm:$0xff]
    %v71 = vld [vmem:[#allocation2 + $0xe8] sm:$0xff]
    %v72 = vld [vmem:[#allocation2 + $0xf0] sm:$0xff]
    %v73 = vld [vmem:[#allocation2 + $0xf8] sm:$0xff]
    %v74 = vld [vmem:[#allocation2 + $0x100] sm:$0xff]
    %v75 = vld [vmem:[#allocation2 + $0x108] sm:$0xff]
    %v76 = vld [vmem:[#allocation2 + $0x110] sm:$0xff]
    %v77 = vld [vmem:[#allocation2 + $0x118] sm:$0xff]
    %v78 = vld [vmem:[#allocation2 + $0x120] sm:$0xff]
    %v79 = vld [vmem:[#allocation2 + $0x128] sm:$0xff]
    %v80 = vld [vmem:[#allocation2 + $0x130] sm:$0xff]
    %v81 = vld [vmem:[#allocation2 + $0x138] sm:$0xff]
    %v82 = vld [vmem:[#allocation2 + $0x140] sm:$0xff]
    %v83 = vld [vmem:[#allocation2 + $0x148] sm:$0xff]
    %v84 = vld [vmem:[#allocation2 + $0x150] sm:$0xff]
    %v85 = vld [vmem:[#allocation2 + $0x158] sm:$0xff]
    %v86 = vld [vmem:[#allocation2 + $0x160] sm:$0xff]
    %v87 = vld [vmem:[#allocation2 + $0x168] sm:$0xff]
    %v88 = vld [vmem:[#allocation2 + $0x170] sm:$0xff]
    %v89 = vld [vmem:[#allocation2 + $0x178] sm:$0xff]
    %v90 = vld [vmem:[#allocation2 + $0x180] sm:$0xff]
    %v91 = vld [vmem:[#allocation2 + $0x188] sm:$0xff]
    %v92 = vld [vmem:[#allocation2 + $0x190] sm:$0xff]
    %v93 = vld [vmem:[#allocation2 + $0x198] sm:$0xff]
    %v94 = vld [vmem:[#allocation2 + $0x1a0] sm:$0xff]
    %v95 = vld [vmem:[#allocation2 + $0x1a8] sm:$0xff]
    %v96 = vld [vmem:[#allocation2 + $0x1b0] sm:$0xff]
    %v97 = vld [vmem:[#allocation2 + $0x1b8] sm:$0xff]
    %v98 = vld [vmem:[#allocation2 + $0x1c0] sm:$0xff]
    %v99 = vld [vmem:[#allocation2 + $0x1c8] sm:$0xff]
    %v100 = vld [vmem:[#allocation2 + $0x1d0] sm:$0xff]
    %v101 = vld [vmem:[#allocation2 + $0x1d8] sm:$0xff]
    %v102 = vld [vmem:[#allocation2 + $0x1e0] sm:$0xff]
    %v103 = vld [vmem:[#allocation2 + $0x1e8] sm:$0xff]
    %v104 = vld [vmem:[#allocation2 + $0x1f0] sm:$0xff]
    %v105 = vld [vmem:[#allocation2 + $0x1f8] sm:$0xff]
    %v106 = vld [vmem:[#allocation2 + $0x200] sm:$0xff]
    %v107 = vld [vmem:[#allocation2 + $0x208] sm:$0xff]
    %v108 = vld [vmem:[#allocation2 + $0x210] sm:$0xff]
    %v109 = vld [vmem:[#allocation2 + $0x218] sm:$0xff]
    %v110 = vld [vmem:[#allocation2 + $0x220] sm:$0xff]
    %v111 = vld [vmem:[#allocation2 + $0x228] sm:$0xff]
    %v112 = vld [vmem:[#allocation2 + $0x230] sm:$0xff]
    %v113 = vld [vmem:[#allocation2 + $0x238] sm:$0xff]
    %v114 = vld [vmem:[#allocation2 + $0x240] sm:$0xff]
    %v115 = vld [vmem:[#allocation2 + $0x248] sm:$0xff]
    %v116 = vld [vmem:[#allocation2 + $0x250] sm:$0xff]
    %v117 = vld [vmem:[#allocation2 + $0x258] sm:$0xff]
    %v118 = vld [vmem:[#allocation2 + $0x260] sm:$0xff]
    %v119 = vld [vmem:[#allocation2 + $0x268] sm:$0xff]
    %v120 = vld [vmem:[#allocation2 + $0x270] sm:$0xff]
    %v121 = vld [vmem:[#allocation2 + $0x278] sm:$0xff]
    %v122 = vld [vmem:[#allocation2 + $0x280] sm:$0xff]
    %v123 = vld [vmem:[#allocation2 + $0x288] sm:$0xff]
    %v124 = vld [vmem:[#allocation2 + $0x290] sm:$0xff]
    %v125 = vld [vmem:[#allocation2 + $0x298] sm:$0xff]
    %v126 = vld [vmem:[#allocation2 + $0x2a0] sm:$0xff]
    %v127 = vld [vmem:[#allocation2 + $0x2a8] sm:$0xff]
    %v128 = vld [vmem:[#allocation2 + $0x2b0] sm:$0xff]
    %v129 = vld [vmem:[#allocation2 + $0x2b8] sm:$0xff]
    %v130 = vld [vmem:[#allocation2 + $0x2c0] sm:$0xff]
    %v131 = vld [vmem:[#allocation2 + $0x2c8] sm:$0xff]
    %v132 = vld [vmem:[#allocation2 + $0x2d0] sm:$0xff]
    %v133 = vld [vmem:[#allocation2 + $0x2d8] sm:$0xff]
    %v134 = vld [vmem:[#allocation2 + $0x2e0] sm:$0xff]
    %v135 = vld [vmem:[#allocation2 + $0x2e8] sm:$0xff]
    %v136 = vld [vmem:[#allocation2 + $0x2f0] sm:$0xff]
    %v137 = vld [vmem:[#allocation2 + $0x2f8] sm:$0xff]
    %v138 = vld [vmem:[#allocation2 + $0x300] sm:$0xff]
    %v139 = vld [vmem:[#allocation2 + $0x308] sm:$0xff]
    %v140 = vld [vmem:[#allocation2 + $0x310] sm:$0xff]
    %v141 = vld [vmem:[#allocation2 + $0x318] sm:$0xff]
    %v142 = vld [vmem:[#allocation2 + $0x320] sm:$0xff]
    %v143 = vld [vmem:[#allocation2 + $0x328] sm:$0xff]
    %v144 = vld [vmem:[#allocation2 + $0x330] sm:$0xff]
    %v145 = vld [vmem:[#allocation2 + $0x338] sm:$0xff]
    %v146 = vld [vmem:[#allocation2 + $0x340] sm:$0xff]
    %v147 = vld [vmem:[#allocation2 + $0x348] sm:$0xff]
    %v148 = vld [vmem:[#allocation2 + $0x350] sm:$0xff]
    %v149 = vld [vmem:[#allocation2 + $0x358] sm:$0xff]
    %v150 = vld [vmem:[#allocation2 + $0x360] sm:$0xff]
    %v151 = vld [vmem:[#allocation2 + $0x368] sm:$0xff]
    %v152 = vld [vmem:[#allocation2 + $0x370] sm:$0xff]
    %v153 = vld [vmem:[#allocation2 + $0x378] sm:$0xff]
    %v154 = vld [vmem:[#allocation2 + $0x380] sm:$0xff]
    %v155 = vld [vmem:[#allocation2 + $0x388] sm:$0xff]
    %v156 = vld [vmem:[#allocation2 + $0x390] sm:$0xff]
    %v157 = vld [vmem:[#allocation2 + $0x398] sm:$0xff]
    %v158 = vld [vmem:[#allocation2 + $0x3a0] sm:$0xff]
    %v159 = vld [vmem:[#allocation2 + $0x3a8] sm:$0xff]
    %v160 = vld [vmem:[#allocation2 + $0x3b0] sm:$0xff]
    %v161 = vld [vmem:[#allocation2 + $0x3b8] sm:$0xff]
    %v162 = vld [vmem:[#allocation2 + $0x3c0] sm:$0xff]
    %v163 = vld [vmem:[#allocation2 + $0x3c8] sm:$0xff]
    %v164 = vld [vmem:[#allocation2 + $0x3d0] sm:$0xff]
    %v165 = vld [vmem:[#allocation2 + $0x3d8] sm:$0xff]
    %v166 = vld [vmem:[#allocation2 + $0x3e0] sm:$0xff]
    %v167 = vld [vmem:[#allocation2 + $0x3e8] sm:$0xff]
    %v168 = vld [vmem:[#allocation2 + $0x3f0] sm:$0xff]
    %v169 = vld [vmem:[#allocation2 + $0x3f8] sm:$0xff]
    %v170 = vld [vmem:[#allocation2 + $0x400] sm:$0xff]
    %v171 = vld [vmem:[#allocation2 + $0x408] sm:$0xff]
    %v172 = vld [vmem:[#allocation2 + $0x410] sm:$0xff]
    %v173 = vld [vmem:[#allocation2 + $0x418] sm:$0xff]
    %v174 = vld [vmem:[#allocation2 + $0x420] sm:$0xff]
    %v175 = vld [vmem:[#allocation2 + $0x428] sm:$0xff]
    %v176 = vld [vmem:[#allocation2 + $0x430] sm:$0xff]
    %v177 = vld [vmem:[#allocation2 + $0x438] sm:$0xff]
    %v178 = vld [vmem:[#allocation2 + $0x440] sm:$0xff]
    %v179 = vld [vmem:[#allocation2 + $0x448] sm:$0xff]
    %v180 = vld [vmem:[#allocation2 + $0x450] sm:$0xff]
    %v181 = vld [vmem:[#allocation2 + $0x458] sm:$0xff]
    %v182 = vld [vmem:[#allocation2 + $0x460] sm:$0xff]
    %v183 = vld [vmem:[#allocation2 + $0x468] sm:$0xff]
    %v184 = vld [vmem:[#allocation2 + $0x470] sm:$0xff]
    %v185 = vld [vmem:[#allocation2 + $0x478] sm:$0xff]
    %v186 = vld [vmem:[#allocation2 + $0x480] sm:$0xff]
    %v187 = vld [vmem:[#allocation2 + $0x488] sm:$0xff]
    %v188 = vld [vmem:[#allocation2 + $0x490] sm:$0xff]
    %v189 = vld [vmem:[#allocation2 + $0x498] sm:$0xff]
    %v190 = vld [vmem:[#allocation2 + $0x4a0] sm:$0xff]
    %v191 = vld [vmem:[#allocation2 + $0x4a8] sm:$0xff]
    %v192 = vld [vmem:[#allocation2 + $0x4b0] sm:$0xff]
    %v193 = vld [vmem:[#allocation2 + $0x4b8] sm:$0xff]
    %v194 = vld [vmem:[#allocation2 + $0x4c0] sm:$0xff]
    %v195 = vld [vmem:[#allocation2 + $0x4c8] sm:$0xff]
    %v196 = vld [vmem:[#allocation2 + $0x4d0] sm:$0xff]
    %v197 = vld [vmem:[#allocation2 + $0x4d8] sm:$0xff]
    %v198 = vld [vmem:[#allocation2 + $0x4e0] sm:$0xff]
    %v199 = vld [vmem:[#allocation2 + $0x4e8] sm:$0xff]
    %v200 = vld [vmem:[#allocation2 + $0x4f0] sm:$0xff]
    %v201 = vld [vmem:[#allocation2 + $0x4f8] sm:$0xff]
    %v202 = vld [vmem:[#allocation2 + $0x500] sm:$0xff]
    %v203 = vld [vmem:[#allocation2 + $0x508] sm:$0xff]
    %v204 = vld [vmem:[#allocation2 + $0x510] sm:$0xff]
    %v205 = vld [vmem:[#allocation2 + $0x518] sm:$0xff]
    %v206 = vld [vmem:[#allocation2 + $0x520] sm:$0xff]
    %v207 = vld [vmem:[#allocation2 + $0x528] sm:$0xff]
    %v208 = vld [vmem:[#allocation2 + $0x530] sm:$0xff]
    %v209 = vld [vmem:[#allocation2 + $0x538] sm:$0xff]
    %v210 = vld [vmem:[#allocation2 + $0x540] sm:$0xff]
    %v211 = vld [vmem:[#allocation2 + $0x548] sm:$0xff]
    %v212 = vld [vmem:[#allocation2 + $0x550] sm:$0xff]
    %v213 = vld [vmem:[#allocation2 + $0x558] sm:$0xff]
    %v214 = vld [vmem:[#allocation2 + $0x560] sm:$0xff]
    %v215 = vld [vmem:[#allocation2 + $0x568] sm:$0xff]
    %v216 = vld [vmem:[#allocation2 + $0x570] sm:$0xff]
    %v217 = vld [vmem:[#allocation2 + $0x578] sm:$0xff]
    %v218 = vld [vmem:[#allocation2 + $0x580] sm:$0xff]
    %v219 = vld [vmem:[#allocation2 + $0x588] sm:$0xff]
    %v220 = vld [vmem:[#allocation2 + $0x590] sm:$0xff]
    %v221 = vld [vmem:[#allocation2 + $0x598] sm:$0xff]
    %v222 = vld [vmem:[#allocation2 + $0x5a0] sm:$0xff]
    %v223 = vld [vmem:[#allocation2 + $0x5a8] sm:$0xff]
    %v224 = vld [vmem:[#allocation2 + $0x5b0] sm:$0xff]
    %v225 = vld [vmem:[#allocation2 + $0x5b8] sm:$0xff]
    %v226 = vld [vmem:[#allocation2 + $0x5c0] sm:$0xff]
    %v227 = vld [vmem:[#allocation2 + $0x5c8] sm:$0xff]
    %v228 = vld [vmem:[#allocation2 + $0x5d0] sm:$0xff]
    %v229 = vld [vmem:[#allocation2 + $0x5d8] sm:$0xff]
    %v230 = vld [vmem:[#allocation2 + $0x5e0] sm:$0xff]
    %v231 = vld [vmem:[#allocation2 + $0x5e8] sm:$0xff]
    %v232 = vld [vmem:[#allocation2 + $0x5f0] sm:$0xff]
    %v233 = vld [vmem:[#allocation2 + $0x5f8] sm:$0xff]
    %v234 = vld [vmem:[#allocation2 + $0x600] sm:$0xff]
    %v235 = vld [vmem:[#allocation2 + $0x608] sm:$0xff]
    %v236 = vld [vmem:[#allocation2 + $0x610] sm:$0xff]
    %v237 = vld [vmem:[#allocation2 + $0x618] sm:$0xff]
    %v238 = vld [vmem:[#allocation2 + $0x620] sm:$0xff]
    %v239 = vld [vmem:[#allocation2 + $0x628] sm:$0xff]
    %v240 = vld [vmem:[#allocation2 + $0x630] sm:$0xff]
    %v241 = vld [vmem:[#allocation2 + $0x638] sm:$0xff]
    %v242 = vld [vmem:[#allocation2 + $0x640] sm:$0xff]
    %v243 = vld [vmem:[#allocation2 + $0x648] sm:$0xff]
    %v244 = vld [vmem:[#allocation2 + $0x650] sm:$0xff]
    %v245 = vld [vmem:[#allocation2 + $0x658] sm:$0xff]
    %v246 = vld [vmem:[#allocation2 + $0x660] sm:$0xff]
    %v247 = vld [vmem:[#allocation2 + $0x668] sm:$0xff]
    %v248 = vld [vmem:[#allocation2 + $0x670] sm:$0xff]
    %v249 = vld [vmem:[#allocation2 + $0x678] sm:$0xff]
    %v250 = vld [vmem:[#allocation2 + $0x680] sm:$0xff]
    %v251 = vld [vmem:[#allocation2 + $0x688] sm:$0xff]
    %v252 = vld [vmem:[#allocation2 + $0x690] sm:$0xff]
    %v253 = vld [vmem:[#allocation2 + $0x698] sm:$0xff]
    %v254 = vld [vmem:[#allocation2 + $0x6a0] sm:$0xff]
    %v255 = vld [vmem:[#allocation2 + $0x6a8] sm:$0xff]
    %v256 = vld [vmem:[#allocation2 + $0x6b0] sm:$0xff]
    %v257 = vld [vmem:[#allocation2 + $0x6b8] sm:$0xff]
    %v258 = vld [vmem:[#allocation2 + $0x6c0] sm:$0xff]
    %v259 = vld [vmem:[#allocation2 + $0x6c8] sm:$0xff]
    %v260 = vld [vmem:[#allocation2 + $0x6d0] sm:$0xff]
    %v261 = vld [vmem:[#allocation2 + $0x6d8] sm:$0xff]
    %v262 = vld [vmem:[#allocation2 + $0x6e0] sm:$0xff]
    %v263 = vld [vmem:[#allocation2 + $0x6e8] sm:$0xff]
    %v264 = vld [vmem:[#allocation2 + $0x6f0] sm:$0xff]
    %v265 = vld [vmem:[#allocation2 + $0x6f8] sm:$0xff]
    %v266 = vld [vmem:[#allocation2 + $0x700] sm:$0xff]
    %v267 = vld [vmem:[#allocation2 + $0x708] sm:$0xff]
    %v268 = vld [vmem:[#allocation2 + $0x710] sm:$0xff]
    %v269 = vld [vmem:[#allocation2 + $0x718] sm:$0xff]
    %v270 = vld [vmem:[#allocation2 + $0x720] sm:$0xff]
    %v271 = vld [vmem:[#allocation2 + $0x728] sm:$0xff]
    %v272 = vld [vmem:[#allocation2 + $0x730] sm:$0xff]
    %v273 = vld [vmem:[#allocation2 + $0x738] sm:$0xff]
    %v274 = vld [vmem:[#allocation2 + $0x740] sm:$0xff]
    %v275 = vld [vmem:[#allocation2 + $0x748] sm:$0xff]
    %v276 = vld [vmem:[#allocation2 + $0x750] sm:$0xff]
    %v277 = vld [vmem:[#allocation2 + $0x758] sm:$0xff]
    %v278 = vld [vmem:[#allocation2 + $0x760] sm:$0xff]
    %v279 = vld [vmem:[#allocation2 + $0x768] sm:$0xff]
    %v280 = vld [vmem:[#allocation2 + $0x770] sm:$0xff]
    %v281 = vld [vmem:[#allocation2 + $0x778] sm:$0xff]
    %v282 = vld [vmem:[#allocation2 + $0x780] sm:$0xff]
    %v283 = vld [vmem:[#allocation2 + $0x788] sm:$0xff]
    %v284 = vld [vmem:[#allocation2 + $0x790] sm:$0xff]
    %v285 = vld [vmem:[#allocation2 + $0x798] sm:$0xff]
    %v286 = vld [vmem:[#allocation2 + $0x7a0] sm:$0xff]
    %v287 = vld [vmem:[#allocation2 + $0x7a8] sm:$0xff]
    %v288 = vld [vmem:[#allocation2 + $0x7b0] sm:$0xff]
    %v289 = vld [vmem:[#allocation2 + $0x7b8] sm:$0xff]
    %v290 = vld [vmem:[#allocation2 + $0x7c0] sm:$0xff]
    %v291 = vld [vmem:[#allocation2 + $0x7c8] sm:$0xff]
    %v292 = vld [vmem:[#allocation2 + $0x7d0] sm:$0xff]
    %v293 = vld [vmem:[#allocation2 + $0x7d8] sm:$0xff]
    %v294 = vld [vmem:[#allocation2 + $0x7e0] sm:$0xff]
    %v295 = vld [vmem:[#allocation2 + $0x7e8] sm:$0xff]
    %v296 = vld [vmem:[#allocation2 + $0x7f0] sm:$0xff]
    %v297 = vld [vmem:[#allocation2 + $0x7f8] sm:$0xff]
    %v298 = vld [vmem:[#allocation2 + $0x800] sm:$0xff]
    %v299 = vld [vmem:[#allocation2 + $0x808] sm:$0xff]
    %v300 = vld [vmem:[#allocation2 + $0x810] sm:$0xff]
    %v301 = vld [vmem:[#allocation2 + $0x818] sm:$0xff]
    %v302 = vld [vmem:[#allocation2 + $0x820] sm:$0xff]
    %v303 = vld [vmem:[#allocation2 + $0x828] sm:$0xff]
    %v304 = vld [vmem:[#allocation2 + $0x830] sm:$0xff]
    %v305 = vld [vmem:[#allocation2 + $0x838] sm:$0xff]
    %v306 = vld [vmem:[#allocation2 + $0x840] sm:$0xff]
    %v307 = vld [vmem:[#allocation2 + $0x848] sm:$0xff]
    %v308 = vld [vmem:[#allocation2 + $0x850] sm:$0xff]
    %v309 = vld [vmem:[#allocation2 + $0x858] sm:$0xff]
    %v310 = vld [vmem:[#allocation2 + $0x860] sm:$0xff]
    %v311 = vld [vmem:[#allocation2 + $0x868] sm:$0xff]
    %v312 = vld [vmem:[#allocation2 + $0x870] sm:$0xff]
    %v313 = vld [vmem:[#allocation2 + $0x878] sm:$0xff]
    %v314 = vld [vmem:[#allocation2 + $0x880] sm:$0xff]
    %v315 = vld [vmem:[#allocation2 + $0x888] sm:$0xff]
    %v316 = vld [vmem:[#allocation2 + $0x890] sm:$0xff]
    %v317 = vld [vmem:[#allocation2 + $0x898] sm:$0xff]
    %v318 = vld [vmem:[#allocation2 + $0x8a0] sm:$0xff]
    %v319 = vld [vmem:[#allocation2 + $0x8a8] sm:$0xff]
    %v320 = vld [vmem:[#allocation2 + $0x8b0] sm:$0xff]
    %v321 = vld [vmem:[#allocation2 + $0x8b8] sm:$0xff]
    %v322 = vld [vmem:[#allocation2 + $0x8c0] sm:$0xff]
    %v323 = vld [vmem:[#allocation2 + $0x8c8] sm:$0xff]
    %v324 = vld [vmem:[#allocation2 + $0x8d0] sm:$0xff]
    %v325 = vld [vmem:[#allocation2 + $0x8d8] sm:$0xff]
    %v326 = vld [vmem:[#allocation2 + $0x8e0] sm:$0xff]
    %v327 = vld [vmem:[#allocation2 + $0x8e8] sm:$0xff]
    %v328 = vld [vmem:[#allocation2 + $0x8f0] sm:$0xff]
    %v329 = vld [vmem:[#allocation2 + $0x8f8] sm:$0xff]
    %v330 = vld [vmem:[#allocation2 + $0x900] sm:$0xff]
    %v331 = vld [vmem:[#allocation2 + $0x908] sm:$0xff]
    %v332 = vld [vmem:[#allocation2 + $0x910] sm:$0xff]
    %v333 = vld [vmem:[#allocation2 + $0x918] sm:$0xff]
    %v334 = vld [vmem:[#allocation2 + $0x920] sm:$0xff]
    %v335 = vld [vmem:[#allocation2 + $0x928] sm:$0xff]
    %v336 = vld [vmem:[#allocation2 + $0x930] sm:$0xff]
    %v337 = vld [vmem:[#allocation2 + $0x938] sm:$0xff]
    %v338 = vld [vmem:[#allocation2 + $0x940] sm:$0xff]
    %v339 = vld [vmem:[#allocation2 + $0x948] sm:$0xff]
    %v340 = vld [vmem:[#allocation2 + $0x950] sm:$0xff]
    %v341 = vld [vmem:[#allocation2 + $0x958] sm:$0xff]
    %v342 = vld [vmem:[#allocation2 + $0x960] sm:$0xff]
    %v343 = vld [vmem:[#allocation2 + $0x968] sm:$0xff]
    %v344 = vld [vmem:[#allocation2 + $0x970] sm:$0xff]
    %v345 = vld [vmem:[#allocation2 + $0x978] sm:$0xff]
    %v346 = vld [vmem:[#allocation2 + $0x980] sm:$0xff]
    %v347 = vld [vmem:[#allocation2 + $0x988] sm:$0xff]
    %v348 = vld [vmem:[#allocation2 + $0x990] sm:$0xff]
    %v349 = vld [vmem:[#allocation2 + $0x998] sm:$0xff]
    %v350 = vld [vmem:[#allocation2 + $0x9a0] sm:$0xff]
    %v351 = vld [vmem:[#allocation2 + $0x9a8] sm:$0xff]
    %v352 = vld [vmem:[#allocation2 + $0x9b0] sm:$0xff]
    %v353 = vld [vmem:[#allocation2 + $0x9b8] sm:$0xff]
    %v354 = vld [vmem:[#allocation2 + $0x9c0] sm:$0xff]
    %v355 = vld [vmem:[#allocation2 + $0x9c8] sm:$0xff]
    %v356 = vld [vmem:[#allocation2 + $0x9d0] sm:$0xff]
    %v357 = vld [vmem:[#allocation2 + $0x9d8] sm:$0xff]
    %v358 = vld [vmem:[#allocation2 + $0x9e0] sm:$0xff]
    %v359 = vld [vmem:[#allocation2 + $0x9e8] sm:$0xff]
    %v360 = vld [vmem:[#allocation2 + $0x9f0] sm:$0xff]
    %v361 = vld [vmem:[#allocation2 + $0x9f8] sm:$0xff]
    %v362 = vld [vmem:[#allocation2 + $0xa00] sm:$0xff]
    %v363 = vld [vmem:[#allocation2 + $0xa08] sm:$0xff]
    %v364 = vld [vmem:[#allocation2 + $0xa10] sm:$0xff]
    %v365 = vld [vmem:[#allocation2 + $0xa18] sm:$0xff]
    %v366 = vld [vmem:[#allocation2 + $0xa20] sm:$0xff]
    %v367 = vld [vmem:[#allocation2 + $0xa28] sm:$0xff]
    %v368 = vld [vmem:[#allocation2 + $0xa30] sm:$0xff]
    %v369 = vld [vmem:[#allocation2 + $0xa38] sm:$0xff]
    %v370 = vld [vmem:[#allocation2 + $0xa40] sm:$0xff]
    %v371 = vld [vmem:[#allocation2 + $0xa48] sm:$0xff]
    %v372 = vld [vmem:[#allocation2 + $0xa50] sm:$0xff]
    %v373 = vld [vmem:[#allocation2 + $0xa58] sm:$0xff]
    %v374 = vld [vmem:[#allocation2 + $0xa60] sm:$0xff]
    %v375 = vld [vmem:[#allocation2 + $0xa68] sm:$0xff]
    %v376 = vld [vmem:[#allocation2 + $0xa70] sm:$0xff]
    %v377 = vld [vmem:[#allocation2 + $0xa78] sm:$0xff]
    %v378 = vld [vmem:[#allocation2 + $0xa80] sm:$0xff]
    %v379 = vld [vmem:[#allocation2 + $0xa88] sm:$0xff]
    %v380 = vld [vmem:[#allocation2 + $0xa90] sm:$0xff]
    %v381 = vld [vmem:[#allocation2 + $0xa98] sm:$0xff]
    %v382 = vld [vmem:[#allocation2 + $0xaa0] sm:$0xff]
    %v383 = vld [vmem:[#allocation2 + $0xaa8] sm:$0xff]
    %v384 = vld [vmem:[#allocation2 + $0xab0] sm:$0xff]
    %v385 = vld [vmem:[#allocation2 + $0xab8] sm:$0xff]
    %v386 = vld [vmem:[#allocation2 + $0xac0] sm:$0xff]
    %v387 = vld [vmem:[#allocation2 + $0xac8] sm:$0xff]
    %v388 = vld [vmem:[#allocation2 + $0xad0] sm:$0xff]
    %v389 = vld [vmem:[#allocation2 + $0xad8] sm:$0xff]
    %v390 = vld [vmem:[#allocation2 + $0xae0] sm:$0xff]
    %v391 = vld [vmem:[#allocation2 + $0xae8] sm:$0xff]
    %v392 = vld [vmem:[#allocation2 + $0xaf0] sm:$0xff]
    %v393 = vld [vmem:[#allocation2 + $0xaf8] sm:$0xff]
    %v394 = vld [vmem:[#allocation2 + $0xb00] sm:$0xff]
    %v395 = vld [vmem:[#allocation2 + $0xb08] sm:$0xff]
    %v396 = vld [vmem:[#allocation2 + $0xb10] sm:$0xff]
    %v397 = vld [vmem:[#allocation2 + $0xb18] sm:$0xff]
    %v398 = vld [vmem:[#allocation2 + $0xb20] sm:$0xff]
    %v399 = vld [vmem:[#allocation2 + $0xb28] sm:$0xff]
    %v400 = vld [vmem:[#allocation2 + $0xb30] sm:$0xff]
    %v401 = vld [vmem:[#allocation2 + $0xb38] sm:$0xff]
    %v402 = vld [vmem:[#allocation2 + $0xb40] sm:$0xff]
    %v403 = vld [vmem:[#allocation2 + $0xb48] sm:$0xff]
    %v404 = vld [vmem:[#allocation2 + $0xb50] sm:$0xff]
    %v405 = vld [vmem:[#allocation2 + $0xb58] sm:$0xff]
    %v406 = vld [vmem:[#allocation2 + $0xb60] sm:$0xff]
    %v407 = vld [vmem:[#allocation2 + $0xb68] sm:$0xff]
    %v408 = vld [vmem:[#allocation2 + $0xb70] sm:$0xff]
    %v409 = vld [vmem:[#allocation2 + $0xb78] sm:$0xff]
    %v410 = vld [vmem:[#allocation2 + $0xb80] sm:$0xff]
    %v411 = vld [vmem:[#allocation2 + $0xb88] sm:$0xff]
    %v412 = vld [vmem:[#allocation2 + $0xb90] sm:$0xff]
    %v413 = vld [vmem:[#allocation2 + $0xb98] sm:$0xff]
    %v414 = vld [vmem:[#allocation2 + $0xba0] sm:$0xff]
    %v415 = vld [vmem:[#allocation2 + $0xba8] sm:$0xff]
    %v416 = vld [vmem:[#allocation2 + $0xbb0] sm:$0xff]
    %v417 = vld [vmem:[#allocation2 + $0xbb8] sm:$0xff]
    %v418 = vld [vmem:[#allocation2 + $0xbc0] sm:$0xff]
    %v419 = vld [vmem:[#allocation2 + $0xbc8] sm:$0xff]
    %v420 = vld [vmem:[#allocation2 + $0xbd0] sm:$0xff]
    %v421 = vld [vmem:[#allocation2 + $0xbd8] sm:$0xff]
    %v422 = vld [vmem:[#allocation2 + $0xbe0] sm:$0xff]
    %v423 = vld [vmem:[#allocation2 + $0xbe8] sm:$0xff]
    %v424 = vld [vmem:[#allocation2 + $0xbf0] sm:$0xff]
    %v425 = vld [vmem:[#allocation2 + $0xbf8] sm:$0xff]
    %v426 = vld [vmem:[#allocation2 + $0xc00] sm:$0xff]
    %v427 = vld [vmem:[#allocation2 + $0xc08] sm:$0xff]
    %v428 = vld [vmem:[#allocation2 + $0xc10] sm:$0xff]
    %v429 = vld [vmem:[#allocation2 + $0xc18] sm:$0xff]
    %v430 = vld [vmem:[#allocation2 + $0xc20] sm:$0xff]
    %v431 = vld [vmem:[#allocation2 + $0xc28] sm:$0xff]
    %v432 = vld [vmem:[#allocation2 + $0xc30] sm:$0xff]
    %v433 = vld [vmem:[#allocation2 + $0xc38] sm:$0xff]
    %v434 = vld [vmem:[#allocation2 + $0xc40] sm:$0xff]
    %v435 = vld [vmem:[#allocation2 + $0xc48] sm:$0xff]
    %v436 = vld [vmem:[#allocation2 + $0xc50] sm:$0xff]
    %v437 = vld [vmem:[#allocation2 + $0xc58] sm:$0xff]
    %v438 = vld [vmem:[#allocation2 + $0xc60] sm:$0xff]
    %v439 = vld [vmem:[#allocation2 + $0xc68] sm:$0xff]
    %v440 = vld [vmem:[#allocation2 + $0xc70] sm:$0xff]
    %v441 = vld [vmem:[#allocation2 + $0xc78] sm:$0xff]
    %v442 = vld [vmem:[#allocation2 + $0xc80] sm:$0xff]
    %v443 = vld [vmem:[#allocation2 + $0xc88] sm:$0xff]
    %v444 = vld [vmem:[#allocation2 + $0xc90] sm:$0xff]
    %v445 = vld [vmem:[#allocation2 + $0xc98] sm:$0xff]
    %v446 = vld [vmem:[#allocation2 + $0xca0] sm:$0xff]
    %v447 = vld [vmem:[#allocation2 + $0xca8] sm:$0xff]
    %v448 = vld [vmem:[#allocation2 + $0xcb0] sm:$0xff]
    %v449 = vld [vmem:[#allocation2 + $0xcb8] sm:$0xff]
    %v450 = vld [vmem:[#allocation2 + $0xcc0] sm:$0xff]
    %v451 = vld [vmem:[#allocation2 + $0xcc8] sm:$0xff]
    %v452 = vld [vmem:[#allocation2 + $0xcd0] sm:$0xff]
    %v453 = vld [vmem:[#allocation2 + $0xcd8] sm:$0xff]
    %v454 = vld [vmem:[#allocation2 + $0xce0] sm:$0xff]
    %v455 = vld [vmem:[#allocation2 + $0xce8] sm:$0xff]
    %v456 = vld [vmem:[#allocation2 + $0xcf0] sm:$0xff]
    %v457 = vld [vmem:[#allocation2 + $0xcf8] sm:$0xff]
    %v458 = vld [vmem:[#allocation2 + $0xd00] sm:$0xff]
    %v459 = vld [vmem:[#allocation2 + $0xd08] sm:$0xff]
    %v460 = vld [vmem:[#allocation2 + $0xd10] sm:$0xff]
    %v461 = vld [vmem:[#allocation2 + $0xd18] sm:$0xff]
    %v462 = vld [vmem:[#allocation2 + $0xd20] sm:$0xff]
    %v463 = vld [vmem:[#allocation2 + $0xd28] sm:$0xff]
    %v464 = vld [vmem:[#allocation2 + $0xd30] sm:$0xff]
    %v465 = vld [vmem:[#allocation2 + $0xd38] sm:$0xff]
    %v466 = vld [vmem:[#allocation2 + $0xd40] sm:$0xff]
    %v467 = vld [vmem:[#allocation2 + $0xd48] sm:$0xff]
    %v468 = vld [vmem:[#allocation2 + $0xd50] sm:$0xff]
    %v469 = vld [vmem:[#allocation2 + $0xd58] sm:$0xff]
    %v470 = vld [vmem:[#allocation2 + $0xd60] sm:$0xff]
    %v471 = vld [vmem:[#allocation2 + $0xd68] sm:$0xff]
    %v472 = vld [vmem:[#allocation2 + $0xd70] sm:$0xff]
    %v473 = vld [vmem:[#allocation2 + $0xd78] sm:$0xff]
    %v474 = vld [vmem:[#allocation2 + $0xd80] sm:$0xff]
    %v475 = vld [vmem:[#allocation2 + $0xd88] sm:$0xff]
    %v476 = vld [vmem:[#allocation2 + $0xd90] sm:$0xff]
    %v477 = vld [vmem:[#allocation2 + $0xd98] sm:$0xff]
    %v478 = vld [vmem:[#allocation2 + $0xda0] sm:$0xff]
    %v479 = vld [vmem:[#allocation2 + $0xda8] sm:$0xff]
    %v480 = vld [vmem:[#allocation2 + $0xdb0] sm:$0xff]
    %v481 = vld [vmem:[#allocation2 + $0xdb8] sm:$0xff]
    %v482 = vld [vmem:[#allocation2 + $0xdc0] sm:$0xff]
    %v483 = vld [vmem:[#allocation2 + $0xdc8] sm:$0xff]
    %v484 = vld [vmem:[#allocation2 + $0xdd0] sm:$0xff]
    %v485 = vld [vmem:[#allocation2 + $0xdd8] sm:$0xff]
    %v486 = vld [vmem:[#allocation2 + $0xde0] sm:$0xff]
    %v487 = vld [vmem:[#allocation2 + $0xde8] sm:$0xff]
    %v488 = vld [vmem:[#allocation2 + $0xdf0] sm:$0xff]
    %v489 = vld [vmem:[#allocation2 + $0xdf8] sm:$0xff]
    %v490 = vld [vmem:[#allocation2 + $0xe00] sm:$0xff]
    %v491 = vld [vmem:[#allocation2 + $0xe08] sm:$0xff]
    %v492 = vld [vmem:[#allocation2 + $0xe10] sm:$0xff]
    %v493 = vld [vmem:[#allocation2 + $0xe18] sm:$0xff]
    %v494 = vld [vmem:[#allocation2 + $0xe20] sm:$0xff]
    %v495 = vld [vmem:[#allocation2 + $0xe28] sm:$0xff]
    %v496 = vld [vmem:[#allocation2 + $0xe30] sm:$0xff]
    %v497 = vld [vmem:[#allocation2 + $0xe38] sm:$0xff]
    %v498 = vld [vmem:[#allocation2 + $0xe40] sm:$0xff]
    %v499 = vld [vmem:[#allocation2 + $0xe48] sm:$0xff]
    %v500 = vld [vmem:[#allocation2 + $0xe50] sm:$0xff]
    %v501 = vld [vmem:[#allocation2 + $0xe58] sm:$0xff]
    %v502 = vld [vmem:[#allocation2 + $0xe60] sm:$0xff]
    %v503 = vld [vmem:[#allocation2 + $0xe68] sm:$0xff]
    %v504 = vld [vmem:[#allocation2 + $0xe70] sm:$0xff]
    %v505 = vld [vmem:[#allocation2 + $0xe78] sm:$0xff]
    %v506 = vld [vmem:[#allocation2 + $0xe80] sm:$0xff]
    %v507 = vld [vmem:[#allocation2 + $0xe88] sm:$0xff]
    %v508 = vld [vmem:[#allocation2 + $0xe90] sm:$0xff]
    %v509 = vld [vmem:[#allocation2 + $0xe98] sm:$0xff]
    %v510 = vld [vmem:[#allocation2 + $0xea0] sm:$0xff]
    %v511 = vld [vmem:[#allocation2 + $0xea8] sm:$0xff]
    %v512 = vld [vmem:[#allocation2 + $0xeb0] sm:$0xff]
    %v513 = vld [vmem:[#allocation2 + $0xeb8] sm:$0xff]
    %v514 = vld [vmem:[#allocation2 + $0xec0] sm:$0xff]
    %v515 = vld [vmem:[#allocation2 + $0xec8] sm:$0xff]
    %v516 = vld [vmem:[#allocation2 + $0xed0] sm:$0xff]
    %v517 = vld [vmem:[#allocation2 + $0xed8] sm:$0xff]
    %v518 = vld [vmem:[#allocation2 + $0xee0] sm:$0xff]
    %v519 = vld [vmem:[#allocation2 + $0xee8] sm:$0xff]
    %v520 = vld [vmem:[#allocation2 + $0xef0] sm:$0xff]
    %v521 = vld [vmem:[#allocation2 + $0xef8] sm:$0xff]
    %v522 = vld [vmem:[#allocation2 + $0xf00] sm:$0xff]
    %v523 = vld [vmem:[#allocation2 + $0xf08] sm:$0xff]
    %v524 = vld [vmem:[#allocation2 + $0xf10] sm:$0xff]
    %v525 = vld [vmem:[#allocation2 + $0xf18] sm:$0xff]
    %v526 = vld [vmem:[#allocation2 + $0xf20] sm:$0xff]
    %v527 = vld [vmem:[#allocation2 + $0xf28] sm:$0xff]
    %v528 = vld [vmem:[#allocation2 + $0xf30] sm:$0xff]
    %v529 = vld [vmem:[#allocation2 + $0xf38] sm:$0xff]
    %v530 = vld [vmem:[#allocation2 + $0xf40] sm:$0xff]
    %v531 = vld [vmem:[#allocation2 + $0xf48] sm:$0xff]
    %v532 = vld [vmem:[#allocation2 + $0xf50] sm:$0xff]
    %v533 = vld [vmem:[#allocation2 + $0xf58] sm:$0xff]
    %v534 = vld [vmem:[#allocation2 + $0xf60] sm:$0xff]
    %v535 = vld [vmem:[#allocation2 + $0xf68] sm:$0xff]
    %v536 = vld [vmem:[#allocation2 + $0xf70] sm:$0xff]
    %v537 = vld [vmem:[#allocation2 + $0xf78] sm:$0xff]
    %v538 = vld [vmem:[#allocation2 + $0xf80] sm:$0xff]
    %v539 = vld [vmem:[#allocation2 + $0xf88] sm:$0xff]
    %v540 = vld [vmem:[#allocation2 + $0xf90] sm:$0xff]
    %v541 = vld [vmem:[#allocation2 + $0xf98] sm:$0xff]
    %v542 = vld [vmem:[#allocation2 + $0xfa0] sm:$0xff]
    %v543 = vld [vmem:[#allocation2 + $0xfa8] sm:$0xff]
    %v544 = vld [vmem:[#allocation2 + $0xfb0] sm:$0xff]
    %v545 = vld [vmem:[#allocation2 + $0xfb8] sm:$0xff]
    %v546 = vld [vmem:[#allocation2 + $0xfc0] sm:$0xff]
    %v547 = vld [vmem:[#allocation2 + $0xfc8] sm:$0xff]
    %v548 = vld [vmem:[#allocation2 + $0xfd0] sm:$0xff]
    %v549 = vld [vmem:[#allocation2 + $0xfd8] sm:$0xff]
    %v550 = vld [vmem:[#allocation2 + $0xfe0] sm:$0xff]
    %v551 = vld [vmem:[#allocation2 + $0xfe8] sm:$0xff]
    %v552 = vld [vmem:[#allocation2 + $0xff0] sm:$0xff]
    %v553 = vld [vmem:[#allocation2 + $0xff8] sm:$0xff]
    %v554 = vld [vmem:[#allocation2 + $0x1000] sm:$0xff]
    %v555 = vld [vmem:[#allocation2 + $0x1008] sm:$0xff]
    %v556 = vld [vmem:[#allocation2 + $0x1010] sm:$0xff]
    %v557 = vld [vmem:[#allocation2 + $0x1018] sm:$0xff]
    %v558 = vld [vmem:[#allocation2 + $0x1020] sm:$0xff]
    %v559 = vld [vmem:[#allocation2 + $0x1028] sm:$0xff]
    %v560 = vld [vmem:[#allocation2 + $0x1030] sm:$0xff]
    %v561 = vld [vmem:[#allocation2 + $0x1038] sm:$0xff]
    %v562 = vld [vmem:[#allocation2 + $0x1040] sm:$0xff]
    %v563 = vld [vmem:[#allocation2 + $0x1048] sm:$0xff]
    %v564 = vld [vmem:[#allocation2 + $0x1050] sm:$0xff]
    %v565 = vld [vmem:[#allocation2 + $0x1058] sm:$0xff]
    %v566 = vld [vmem:[#allocation2 + $0x1060] sm:$0xff]
    %v567 = vld [vmem:[#allocation2 + $0x1068] sm:$0xff]
    %v568 = vld [vmem:[#allocation2 + $0x1070] sm:$0xff]
    %v569 = vld [vmem:[#allocation2 + $0x1078] sm:$0xff]
    %v570 = vld [vmem:[#allocation2 + $0x1080] sm:$0xff]
    %v571 = vld [vmem:[#allocation2 + $0x1088] sm:$0xff]
    %v572 = vld [vmem:[#allocation2 + $0x1090] sm:$0xff]
    %v573 = vld [vmem:[#allocation2 + $0x1098] sm:$0xff]
    %v574 = vld [vmem:[#allocation2 + $0x10a0] sm:$0xff]
    %v575 = vld [vmem:[#allocation2 + $0x10a8] sm:$0xff]
    %v576 = vld [vmem:[#allocation2 + $0x10b0] sm:$0xff]
    %v577 = vld [vmem:[#allocation2 + $0x10b8] sm:$0xff]
    %v578 = vld [vmem:[#allocation2 + $0x10c0] sm:$0xff]
    %v579 = vld [vmem:[#allocation2 + $0x10c8] sm:$0xff]
    %v580 = vld [vmem:[#allocation2 + $0x10d0] sm:$0xff]
    %v581 = vld [vmem:[#allocation2 + $0x10d8] sm:$0xff]
    %v582 = vld [vmem:[#allocation2 + $0x10e0] sm:$0xff]
    %v583 = vld [vmem:[#allocation2 + $0x10e8] sm:$0xff]
    %v584 = vld [vmem:[#allocation2 + $0x10f0] sm:$0xff]
    %v585 = vld [vmem:[#allocation2 + $0x10f8] sm:$0xff]
    %v586 = vld [vmem:[#allocation2 + $0x1100] sm:$0xff]
    %v587 = vld [vmem:[#allocation2 + $0x1108] sm:$0xff]
    %v588 = vld [vmem:[#allocation2 + $0x1110] sm:$0xff]
    %v589 = vld [vmem:[#allocation2 + $0x1118] sm:$0xff]
    %v590 = vld [vmem:[#allocation2 + $0x1120] sm:$0xff]
    %v591 = vld [vmem:[#allocation2 + $0x1128] sm:$0xff]
    %v592 = vld [vmem:[#allocation2 + $0x1130] sm:$0xff]
    %v593 = vld [vmem:[#allocation2 + $0x1138] sm:$0xff]
    %v594 = vld [vmem:[#allocation2 + $0x1140] sm:$0xff]
    %v595 = vld [vmem:[#allocation2 + $0x1148] sm:$0xff]
    %v596 = vld [vmem:[#allocation2 + $0x1150] sm:$0xff]
    %v597 = vld [vmem:[#allocation2 + $0x1158] sm:$0xff]
    %v598 = vld [vmem:[#allocation2 + $0x1160] sm:$0xff]
    %v599 = vld [vmem:[#allocation2 + $0x1168] sm:$0xff]
    %v600 = vld [vmem:[#allocation2 + $0x1170] sm:$0xff]
    %v601 = vld [vmem:[#allocation2 + $0x1178] sm:$0xff]
    %v602 = vld [vmem:[#allocation2 + $0x1180] sm:$0xff]
    %v603 = vld [vmem:[#allocation2 + $0x1188] sm:$0xff]
    %v604 = vld [vmem:[#allocation2 + $0x1190] sm:$0xff]
    %v605 = vld [vmem:[#allocation2 + $0x1198] sm:$0xff]
    %v606 = vld [vmem:[#allocation2 + $0x11a0] sm:$0xff]
    %v607 = vld [vmem:[#allocation2 + $0x11a8] sm:$0xff]
    %v608 = vld [vmem:[#allocation2 + $0x11b0] sm:$0xff]
    %v609 = vld [vmem:[#allocation2 + $0x11b8] sm:$0xff]
    %v610 = vld [vmem:[#allocation2 + $0x11c0] sm:$0xff]
    %v611 = vld [vmem:[#allocation2 + $0x11c8] sm:$0xff]
    %v612 = vld [vmem:[#allocation2 + $0x11d0] sm:$0xff]
    %v613 = vld [vmem:[#allocation2 + $0x11d8] sm:$0xff]
    %v614 = vld [vmem:[#allocation2 + $0x11e0] sm:$0xff]
    %v615 = vld [vmem:[#allocation2 + $0x11e8] sm:$0xff]
    %v616 = vld [vmem:[#allocation2 + $0x11f0] sm:$0xff]
    %v617 = vld [vmem:[#allocation2 + $0x11f8] sm:$0xff]
    %v618 = vld [vmem:[#allocation2 + $0x1200] sm:$0xff]
    %v619 = vld [vmem:[#allocation2 + $0x1208] sm:$0xff]
    %v620 = vld [vmem:[#allocation2 + $0x1210] sm:$0xff]
    %v621 = vld [vmem:[#allocation2 + $0x1218] sm:$0xff]
    %v622 = vld [vmem:[#allocation2 + $0x1220] sm:$0xff]
    %v623 = vld [vmem:[#allocation2 + $0x1228] sm:$0xff]
    %v624 = vld [vmem:[#allocation2 + $0x1230] sm:$0xff]
    %v625 = vld [vmem:[#allocation2 + $0x1238] sm:$0xff]
    %v626 = vld [vmem:[#allocation2 + $0x1240] sm:$0xff]
    %v627 = vld [vmem:[#allocation2 + $0x1248] sm:$0xff]
    %v628 = vld [vmem:[#allocation2 + $0x1250] sm:$0xff]
    %v629 = vld [vmem:[#allocation2 + $0x1258] sm:$0xff]
    %v630 = vld [vmem:[#allocation2 + $0x1260] sm:$0xff]
    %v631 = vld [vmem:[#allocation2 + $0x1268] sm:$0xff]
    %v632 = vld [vmem:[#allocation2 + $0x1270] sm:$0xff]
    %v633 = vld [vmem:[#allocation2 + $0x1278] sm:$0xff]
    %v634 = vld [vmem:[#allocation2 + $0x1280] sm:$0xff]
    %v635 = vld [vmem:[#allocation2 + $0x1288] sm:$0xff]
    %v636 = vld [vmem:[#allocation2 + $0x1290] sm:$0xff]
    %v637 = vld [vmem:[#allocation2 + $0x1298] sm:$0xff]
    %v638 = vld [vmem:[#allocation2 + $0x12a0] sm:$0xff]
    %v639 = vld [vmem:[#allocation2 + $0x12a8] sm:$0xff]
    %v640 = vld [vmem:[#allocation2 + $0x12b0] sm:$0xff]
    %v641 = vld [vmem:[#allocation2 + $0x12b8] sm:$0xff]
    %v642 = vld [vmem:[#allocation2 + $0x12c0] sm:$0xff]
    %v643 = vld [vmem:[#allocation2 + $0x12c8] sm:$0xff]
    %v644 = vld [vmem:[#allocation2 + $0x12d0] sm:$0xff]
    %v645 = vld [vmem:[#allocation2 + $0x12d8] sm:$0xff]
    %v646 = vld [vmem:[#allocation2 + $0x12e0] sm:$0xff]
    %v647 = vld [vmem:[#allocation2 + $0x12e8] sm:$0xff]
    %v648 = vld [vmem:[#allocation2 + $0x12f0] sm:$0xff]
    %v649 = vld [vmem:[#allocation2 + $0x12f8] sm:$0xff]
    %v650 = vld [vmem:[#allocation2 + $0x1300] sm:$0xff]
    %v651 = vld [vmem:[#allocation2 + $0x1308] sm:$0xff]
    %v652 = vld [vmem:[#allocation2 + $0x1310] sm:$0xff]
    %v653 = vld [vmem:[#allocation2 + $0x1318] sm:$0xff]
    %v654 = vld [vmem:[#allocation2 + $0x1320] sm:$0xff]
    %v655 = vld [vmem:[#allocation2 + $0x1328] sm:$0xff]
    %v656 = vld [vmem:[#allocation2 + $0x1330] sm:$0xff]
    %v657 = vld [vmem:[#allocation2 + $0x1338] sm:$0xff]
    %v658 = vld [vmem:[#allocation2 + $0x1340] sm:$0xff]
    %v659 = vld [vmem:[#allocation2 + $0x1348] sm:$0xff]
    %v660 = vld [vmem:[#allocation2 + $0x1350] sm:$0xff]
    %v661 = vld [vmem:[#allocation2 + $0x1358] sm:$0xff]
    %v662 = vld [vmem:[#allocation2 + $0x1360] sm:$0xff]
    %v663 = vld [vmem:[#allocation2 + $0x1368] sm:$0xff]
    %v664 = vld [vmem:[#allocation2 + $0x1370] sm:$0xff]
    %v665 = vld [vmem:[#allocation2 + $0x1378] sm:$0xff]
    %v666 = vld [vmem:[#allocation2 + $0x1380] sm:$0xff]
    %v667 = vld [vmem:[#allocation2 + $0x1388] sm:$0xff]
    %v668 = vld [vmem:[#allocation2 + $0x1390] sm:$0xff]
    %v669 = vld [vmem:[#allocation2 + $0x1398] sm:$0xff]
    %v670 = vld [vmem:[#allocation2 + $0x13a0] sm:$0xff]
    %v671 = vld [vmem:[#allocation2 + $0x13a8] sm:$0xff]
    %v672 = vld [vmem:[#allocation2 + $0x13b0] sm:$0xff]
    %v673 = vld [vmem:[#allocation2 + $0x13b8] sm:$0xff]
    %v674 = vld [vmem:[#allocation2 + $0x13c0] sm:$0xff]
    %v675 = vld [vmem:[#allocation2 + $0x13c8] sm:$0xff]
    %v676 = vld [vmem:[#allocation2 + $0x13d0] sm:$0xff]
    %v677 = vld [vmem:[#allocation2 + $0x13d8] sm:$0xff]
    %v678 = vld [vmem:[#allocation2 + $0x13e0] sm:$0xff]
    %v679 = vld [vmem:[#allocation2 + $0x13e8] sm:$0xff]
    %v680 = vld [vmem:[#allocation2 + $0x13f0] sm:$0xff]
    %v681 = vld [vmem:[#allocation2 + $0x13f8] sm:$0xff]
    %v682 = vld [vmem:[#allocation2 + $0x1400] sm:$0xff]
    %v683 = vld [vmem:[#allocation2 + $0x1408] sm:$0xff]
    %v684 = vld [vmem:[#allocation2 + $0x1410] sm:$0xff]
    %v685 = vld [vmem:[#allocation2 + $0x1418] sm:$0xff]
    %v686 = vld [vmem:[#allocation2 + $0x1420] sm:$0xff]
    %v687 = vld [vmem:[#allocation2 + $0x1428] sm:$0xff]
    %v688 = vld [vmem:[#allocation2 + $0x1430] sm:$0xff]
    %v689 = vld [vmem:[#allocation2 + $0x1438] sm:$0xff]
    %v690 = vld [vmem:[#allocation2 + $0x1440] sm:$0xff]
    %v691 = vld [vmem:[#allocation2 + $0x1448] sm:$0xff]
    %v692 = vld [vmem:[#allocation2 + $0x1450] sm:$0xff]
    %v693 = vld [vmem:[#allocation2 + $0x1458] sm:$0xff]
    %v694 = vld [vmem:[#allocation2 + $0x1460] sm:$0xff]
    %v695 = vld [vmem:[#allocation2 + $0x1468] sm:$0xff]
    %v696 = vld [vmem:[#allocation2 + $0x1470] sm:$0xff]
    %v697 = vld [vmem:[#allocation2 + $0x1478] sm:$0xff]
    %v698 = vld [vmem:[#allocation2 + $0x1480] sm:$0xff]
    %v699 = vld [vmem:[#allocation2 + $0x1488] sm:$0xff]
    %v700 = vld [vmem:[#allocation2 + $0x1490] sm:$0xff]
    %v701 = vld [vmem:[#allocation2 + $0x1498] sm:$0xff]
    %v702 = vld [vmem:[#allocation2 + $0x14a0] sm:$0xff]
    %v703 = vld [vmem:[#allocation2 + $0x14a8] sm:$0xff]
    %v704 = vld [vmem:[#allocation2 + $0x14b0] sm:$0xff]
    %v705 = vld [vmem:[#allocation2 + $0x14b8] sm:$0xff]
    %v706 = vld [vmem:[#allocation2 + $0x14c0] sm:$0xff]
    %v707 = vld [vmem:[#allocation2 + $0x14c8] sm:$0xff]
    %v708 = vld [vmem:[#allocation2 + $0x14d0] sm:$0xff]
    %v709 = vld [vmem:[#allocation2 + $0x14d8] sm:$0xff]
    %v710 = vld [vmem:[#allocation2 + $0x14e0] sm:$0xff]
    %v711 = vld [vmem:[#allocation2 + $0x14e8] sm:$0xff]
    %v712 = vld [vmem:[#allocation2 + $0x14f0] sm:$0xff]
    %v713 = vld [vmem:[#allocation2 + $0x14f8] sm:$0xff]
    %v714 = vld [vmem:[#allocation2 + $0x1500] sm:$0xff]
    %v715 = vld [vmem:[#allocation2 + $0x1508] sm:$0xff]
    %v716 = vld [vmem:[#allocation2 + $0x1510] sm:$0xff]
    %v717 = vld [vmem:[#allocation2 + $0x1518] sm:$0xff]
    %v718 = vld [vmem:[#allocation2 + $0x1520] sm:$0xff]
    %v719 = vld [vmem:[#allocation2 + $0x1528] sm:$0xff]
    %v720 = vld [vmem:[#allocation2 + $0x1530] sm:$0xff]
    %v721 = vld [vmem:[#allocation2 + $0x1538] sm:$0xff]
    %v722 = vld [vmem:[#allocation2 + $0x1540] sm:$0xff]
    %v723 = vld [vmem:[#allocation2 + $0x1548] sm:$0xff]
    %v724 = vld [vmem:[#allocation2 + $0x1550] sm:$0xff]
    %v725 = vld [vmem:[#allocation2 + $0x1558] sm:$0xff]
    %v726 = vld [vmem:[#allocation2 + $0x1560] sm:$0xff]
    %v727 = vld [vmem:[#allocation2 + $0x1568] sm:$0xff]
    %v728 = vld [vmem:[#allocation2 + $0x1570] sm:$0xff]
    %v729 = vld [vmem:[#allocation2 + $0x1578] sm:$0xff]
    %v730 = vld [vmem:[#allocation2 + $0x1580] sm:$0xff]
    %v731 = vld [vmem:[#allocation2 + $0x1588] sm:$0xff]
    %v732 = vld [vmem:[#allocation2 + $0x1590] sm:$0xff]
    %v733 = vld [vmem:[#allocation2 + $0x1598] sm:$0xff]
    %v734 = vld [vmem:[#allocation2 + $0x15a0] sm:$0xff]
    %v735 = vld [vmem:[#allocation2 + $0x15a8] sm:$0xff]
    %v736 = vld [vmem:[#allocation2 + $0x15b0] sm:$0xff]
    %v737 = vld [vmem:[#allocation2 + $0x15b8] sm:$0xff]
    %v738 = vld [vmem:[#allocation2 + $0x15c0] sm:$0xff]
    %v739 = vld [vmem:[#allocation2 + $0x15c8] sm:$0xff]
    %v740 = vld [vmem:[#allocation2 + $0x15d0] sm:$0xff]
    %v741 = vld [vmem:[#allocation2 + $0x15d8] sm:$0xff]
    %v742 = vld [vmem:[#allocation2 + $0x15e0] sm:$0xff]
    %v743 = vld [vmem:[#allocation2 + $0x15e8] sm:$0xff]
    %v744 = vld [vmem:[#allocation2 + $0x15f0] sm:$0xff]
    %v745 = vld [vmem:[#allocation2 + $0x15f8] sm:$0xff]
    %v746 = vld [vmem:[#allocation2 + $0x1600] sm:$0xff]
    %v747 = vld [vmem:[#allocation2 + $0x1608] sm:$0xff]
    %v748 = vld [vmem:[#allocation2 + $0x1610] sm:$0xff]
    %v749 = vld [vmem:[#allocation2 + $0x1618] sm:$0xff]
    %v750 = vld [vmem:[#allocation2 + $0x1620] sm:$0xff]
    %v751 = vld [vmem:[#allocation2 + $0x1628] sm:$0xff]
    %v752 = vld [vmem:[#allocation2 + $0x1630] sm:$0xff]
    %v753 = vld [vmem:[#allocation2 + $0x1638] sm:$0xff]
    %v754 = vld [vmem:[#allocation2 + $0x1640] sm:$0xff]
    %v755 = vld [vmem:[#allocation2 + $0x1648] sm:$0xff]
    %v756 = vld [vmem:[#allocation2 + $0x1650] sm:$0xff]
    %v757 = vld [vmem:[#allocation2 + $0x1658] sm:$0xff]
    %v758 = vld [vmem:[#allocation2 + $0x1660] sm:$0xff]
    %v759 = vld [vmem:[#allocation2 + $0x1668] sm:$0xff]
    %v760 = vld [vmem:[#allocation2 + $0x1670] sm:$0xff]
    %v761 = vld [vmem:[#allocation2 + $0x1678] sm:$0xff]
    %v762 = vld [vmem:[#allocation2 + $0x1680] sm:$0xff]
    %v763 = vld [vmem:[#allocation2 + $0x1688] sm:$0xff]
    %v764 = vld [vmem:[#allocation2 + $0x1690] sm:$0xff]
    %v765 = vld [vmem:[#allocation2 + $0x1698] sm:$0xff]
    %v766 = vld [vmem:[#allocation2 + $0x16a0] sm:$0xff]
    %v767 = vld [vmem:[#allocation2 + $0x16a8] sm:$0xff]
    %v768 = vld [vmem:[#allocation2 + $0x16b0] sm:$0xff]
    %v769 = vld [vmem:[#allocation2 + $0x16b8] sm:$0xff]
    %v770 = vld [vmem:[#allocation2 + $0x16c0] sm:$0xff]
    %v771 = vld [vmem:[#allocation2 + $0x16c8] sm:$0xff]
    %v772 = vld [vmem:[#allocation2 + $0x16d0] sm:$0xff]
    %v773 = vld [vmem:[#allocation2 + $0x16d8] sm:$0xff]
    %v774 = vld [vmem:[#allocation2 + $0x16e0] sm:$0xff]
    %v775 = vld [vmem:[#allocation2 + $0x16e8] sm:$0xff]
    %v776 = vld [vmem:[#allocation2 + $0x16f0] sm:$0xff]
    %v777 = vld [vmem:[#allocation2 + $0x16f8] sm:$0xff]
    %v778 = vld [vmem:[#allocation2 + $0x1700] sm:$0xff]
    %v779 = vld [vmem:[#allocation2 + $0x1708] sm:$0xff]
    %v780 = vld [vmem:[#allocation2 + $0x1710] sm:$0xff]
    %v781 = vld [vmem:[#allocation2 + $0x1718] sm:$0xff]
    %v782 = vld [vmem:[#allocation2 + $0x1720] sm:$0xff]
    %v783 = vld [vmem:[#allocation2 + $0x1728] sm:$0xff]
    %v784 = vld [vmem:[#allocation2 + $0x1730] sm:$0xff]
    %v785 = vld [vmem:[#allocation2 + $0x1738] sm:$0xff]
    %v786 = vld [vmem:[#allocation2 + $0x1740] sm:$0xff]
    %v787 = vld [vmem:[#allocation2 + $0x1748] sm:$0xff]
    %v788 = vld [vmem:[#allocation2 + $0x1750] sm:$0xff]
    %v789 = vld [vmem:[#allocation2 + $0x1758] sm:$0xff]
    %v790 = vld [vmem:[#allocation2 + $0x1760] sm:$0xff]
    %v791 = vld [vmem:[#allocation2 + $0x1768] sm:$0xff]
    %v792 = vld [vmem:[#allocation2 + $0x1770] sm:$0xff]
    %v793 = vld [vmem:[#allocation2 + $0x1778] sm:$0xff]
    %v794 = vld [vmem:[#allocation2 + $0x1780] sm:$0xff]
    %v795 = vld [vmem:[#allocation2 + $0x1788] sm:$0xff]
    %v796 = vld [vmem:[#allocation2 + $0x1790] sm:$0xff]
    %v797 = vld [vmem:[#allocation2 + $0x1798] sm:$0xff]
    %v798 = vld [vmem:[#allocation2 + $0x17a0] sm:$0xff]
    %v799 = vld [vmem:[#allocation2 + $0x17a8] sm:$0xff]
    %v800 = vld [vmem:[#allocation2 + $0x17b0] sm:$0xff]
    %v801 = vld [vmem:[#allocation2 + $0x17b8] sm:$0xff]
    %v802 = vld [vmem:[#allocation2 + $0x17c0] sm:$0xff]
    %v803 = vld [vmem:[#allocation2 + $0x17c8] sm:$0xff]
    %v804 = vld [vmem:[#allocation2 + $0x17d0] sm:$0xff]
    %v805 = vld [vmem:[#allocation2 + $0x17d8] sm:$0xff]
    %v806 = vld [vmem:[#allocation2 + $0x17e0] sm:$0xff]
    %v807 = vld [vmem:[#allocation2 + $0x17e8] sm:$0xff]
    %v808 = vld [vmem:[#allocation2 + $0x17f0] sm:$0xff]
    %v809 = vld [vmem:[#allocation2 + $0x17f8] sm:$0xff]
    %v810 = vld [vmem:[#allocation2 + $0x1800] sm:$0xff]
    %v811 = vld [vmem:[#allocation2 + $0x1808] sm:$0xff]
    %v812 = vld [vmem:[#allocation2 + $0x1810] sm:$0xff]
    %v813 = vld [vmem:[#allocation2 + $0x1818] sm:$0xff]
    %v814 = vld [vmem:[#allocation2 + $0x1820] sm:$0xff]
    %v815 = vld [vmem:[#allocation2 + $0x1828] sm:$0xff]
    %v816 = vld [vmem:[#allocation2 + $0x1830] sm:$0xff]
    %v817 = vld [vmem:[#allocation2 + $0x1838] sm:$0xff]
    %v818 = vld [vmem:[#allocation2 + $0x1840] sm:$0xff]
    %v819 = vld [vmem:[#allocation2 + $0x1848] sm:$0xff]
    %v820 = vld [vmem:[#allocation2 + $0x1850] sm:$0xff]
    %v821 = vld [vmem:[#allocation2 + $0x1858] sm:$0xff]
    %v822 = vld [vmem:[#allocation2 + $0x1860] sm:$0xff]
    %v823 = vld [vmem:[#allocation2 + $0x1868] sm:$0xff]
    %v824 = vld [vmem:[#allocation2 + $0x1870] sm:$0xff]
    %v825 = vld [vmem:[#allocation2 + $0x1878] sm:$0xff]
    %v826 = vld [vmem:[#allocation2 + $0x1880] sm:$0xff]
    %v827 = vld [vmem:[#allocation2 + $0x1888] sm:$0xff]
    %v828 = vld [vmem:[#allocation2 + $0x1890] sm:$0xff]
    %v829 = vld [vmem:[#allocation2 + $0x1898] sm:$0xff]
    %v830 = vld [vmem:[#allocation2 + $0x18a0] sm:$0xff]
    %v831 = vld [vmem:[#allocation2 + $0x18a8] sm:$0xff]
    %v832 = vld [vmem:[#allocation2 + $0x18b0] sm:$0xff]
    %v833 = vld [vmem:[#allocation2 + $0x18b8] sm:$0xff]
    %v834 = vld [vmem:[#allocation2 + $0x18c0] sm:$0xff]
    %v835 = vld [vmem:[#allocation2 + $0x18c8] sm:$0xff]
    %v836 = vld [vmem:[#allocation2 + $0x18d0] sm:$0xff]
    %v837 = vld [vmem:[#allocation2 + $0x18d8] sm:$0xff]
    %v838 = vld [vmem:[#allocation2 + $0x18e0] sm:$0xff]
    %v839 = vld [vmem:[#allocation2 + $0x18e8] sm:$0xff]
    %v840 = vld [vmem:[#allocation2 + $0x18f0] sm:$0xff]
    %v841 = vld [vmem:[#allocation2 + $0x18f8] sm:$0xff]
    %v842 = vld [vmem:[#allocation2 + $0x1900] sm:$0xff]
    %v843 = vld [vmem:[#allocation2 + $0x1908] sm:$0xff]
    %v844 = vld [vmem:[#allocation2 + $0x1910] sm:$0xff]
    %v845 = vld [vmem:[#allocation2 + $0x1918] sm:$0xff]
    %v846 = vld [vmem:[#allocation2 + $0x1920] sm:$0xff]
    %v847 = vld [vmem:[#allocation2 + $0x1928] sm:$0xff]
    %v848 = vld [vmem:[#allocation2 + $0x1930] sm:$0xff]
    %v849 = vld [vmem:[#allocation2 + $0x1938] sm:$0xff]
    %v850 = vld [vmem:[#allocation2 + $0x1940] sm:$0xff]
    %v851 = vld [vmem:[#allocation2 + $0x1948] sm:$0xff]
    %v852 = vld [vmem:[#allocation2 + $0x1950] sm:$0xff]
    %v853 = vld [vmem:[#allocation2 + $0x1958] sm:$0xff]
    %v854 = vld [vmem:[#allocation2 + $0x1960] sm:$0xff]
    %v855 = vld [vmem:[#allocation2 + $0x1968] sm:$0xff]
    %v856 = vld [vmem:[#allocation2 + $0x1970] sm:$0xff]
    %v857 = vld [vmem:[#allocation2 + $0x1978] sm:$0xff]
    %v858 = vld [vmem:[#allocation2 + $0x1980] sm:$0xff]
    %v859 = vld [vmem:[#allocation2 + $0x1988] sm:$0xff]
    %v860 = vld [vmem:[#allocation2 + $0x1990] sm:$0xff]
    %v861 = vld [vmem:[#allocation2 + $0x1998] sm:$0xff]
    %v862 = vld [vmem:[#allocation2 + $0x19a0] sm:$0xff]
    %v863 = vld [vmem:[#allocation2 + $0x19a8] sm:$0xff]
    %v864 = vld [vmem:[#allocation2 + $0x19b0] sm:$0xff]
    %v865 = vld [vmem:[#allocation2 + $0x19b8] sm:$0xff]
    %v866 = vld [vmem:[#allocation2 + $0x19c0] sm:$0xff]
    %v867 = vld [vmem:[#allocation2 + $0x19c8] sm:$0xff]
    %v868 = vld [vmem:[#allocation2 + $0x19d0] sm:$0xff]
    %v869 = vld [vmem:[#allocation2 + $0x19d8] sm:$0xff]
    %v870 = vld [vmem:[#allocation2 + $0x19e0] sm:$0xff]
    %v871 = vld [vmem:[#allocation2 + $0x19e8] sm:$0xff]
    %v872 = vld [vmem:[#allocation2 + $0x19f0] sm:$0xff]
    %v873 = vld [vmem:[#allocation2 + $0x19f8] sm:$0xff]
    %v874 = vld [vmem:[#allocation2 + $0x1a00] sm:$0xff]
    %v875 = vld [vmem:[#allocation2 + $0x1a08] sm:$0xff]
    %v876 = vld [vmem:[#allocation2 + $0x1a10] sm:$0xff]
    %v877 = vld [vmem:[#allocation2 + $0x1a18] sm:$0xff]
    %v878 = vld [vmem:[#allocation2 + $0x1a20] sm:$0xff]
    %v879 = vld [vmem:[#allocation2 + $0x1a28] sm:$0xff]
    %v880 = vld [vmem:[#allocation2 + $0x1a30] sm:$0xff]
    %v881 = vld [vmem:[#allocation2 + $0x1a38] sm:$0xff]
    %v882 = vld [vmem:[#allocation2 + $0x1a40] sm:$0xff]
    %v883 = vld [vmem:[#allocation2 + $0x1a48] sm:$0xff]
    %v884 = vld [vmem:[#allocation2 + $0x1a50] sm:$0xff]
    %v885 = vld [vmem:[#allocation2 + $0x1a58] sm:$0xff]
    %v886 = vld [vmem:[#allocation2 + $0x1a60] sm:$0xff]
    %v887 = vld [vmem:[#allocation2 + $0x1a68] sm:$0xff]
    %v888 = vld [vmem:[#allocation2 + $0x1a70] sm:$0xff]
    %v889 = vld [vmem:[#allocation2 + $0x1a78] sm:$0xff]
    %v890 = vld [vmem:[#allocation2 + $0x1a80] sm:$0xff]
    %v891 = vld [vmem:[#allocation2 + $0x1a88] sm:$0xff]
    %v892 = vld [vmem:[#allocation2 + $0x1a90] sm:$0xff]
    %v893 = vld [vmem:[#allocation2 + $0x1a98] sm:$0xff]
    %v894 = vld [vmem:[#allocation2 + $0x1aa0] sm:$0xff]
    %v895 = vld [vmem:[#allocation2 + $0x1aa8] sm:$0xff]
    %v896 = vld [vmem:[#allocation2 + $0x1ab0] sm:$0xff]
    %v897 = vld [vmem:[#allocation2 + $0x1ab8] sm:$0xff]
    %v898 = vld [vmem:[#allocation2 + $0x1ac0] sm:$0xff]
    %v899 = vld [vmem:[#allocation2 + $0x1ac8] sm:$0xff]
    %v900 = vld [vmem:[#allocation2 + $0x1ad0] sm:$0xff]
    %v901 = vld [vmem:[#allocation2 + $0x1ad8] sm:$0xff]
    %v902 = vld [vmem:[#allocation2 + $0x1ae0] sm:$0xff]
    %v903 = vld [vmem:[#allocation2 + $0x1ae8] sm:$0xff]
    %v904 = vld [vmem:[#allocation2 + $0x1af0] sm:$0xff]
    %v905 = vld [vmem:[#allocation2 + $0x1af8] sm:$0xff]
    %v906 = vld [vmem:[#allocation2 + $0x1b00] sm:$0xff]
    %v907 = vld [vmem:[#allocation2 + $0x1b08] sm:$0xff]
    %v908 = vld [vmem:[#allocation2 + $0x1b10] sm:$0xff]
    %v909 = vld [vmem:[#allocation2 + $0x1b18] sm:$0xff]
    %v910 = vld [vmem:[#allocation2 + $0x1b20] sm:$0xff]
    %v911 = vld [vmem:[#allocation2 + $0x1b28] sm:$0xff]
    %v912 = vld [vmem:[#allocation2 + $0x1b30] sm:$0xff]
    %v913 = vld [vmem:[#allocation2 + $0x1b38] sm:$0xff]
    %v914 = vld [vmem:[#allocation2 + $0x1b40] sm:$0xff]
    %v915 = vld [vmem:[#allocation2 + $0x1b48] sm:$0xff]
    %v916 = vld [vmem:[#allocation2 + $0x1b50] sm:$0xff]
    %v917 = vld [vmem:[#allocation2 + $0x1b58] sm:$0xff]
    %v918 = vld [vmem:[#allocation2 + $0x1b60] sm:$0xff]
    %v919 = vld [vmem:[#allocation2 + $0x1b68] sm:$0xff]
    %v920 = vld [vmem:[#allocation2 + $0x1b70] sm:$0xff]
    %v921 = vld [vmem:[#allocation2 + $0x1b78] sm:$0xff]
    %v922 = vld [vmem:[#allocation2 + $0x1b80] sm:$0xff]
    %v923 = vld [vmem:[#allocation2 + $0x1b88] sm:$0xff]
    %v924 = vld [vmem:[#allocation2 + $0x1b90] sm:$0xff]
    %v925 = vld [vmem:[#allocation2 + $0x1b98] sm:$0xff]
    %v926 = vld [vmem:[#allocation2 + $0x1ba0] sm:$0xff]
    %v927 = vld [vmem:[#allocation2 + $0x1ba8] sm:$0xff]
    %v928 = vld [vmem:[#allocation2 + $0x1bb0] sm:$0xff]
    %v929 = vld [vmem:[#allocation2 + $0x1bb8] sm:$0xff]
    %v930 = vld [vmem:[#allocation2 + $0x1bc0] sm:$0xff]
    %v931 = vld [vmem:[#allocation2 + $0x1bc8] sm:$0xff]
    %v932 = vld [vmem:[#allocation2 + $0x1bd0] sm:$0xff]
    %v933 = vld [vmem:[#allocation2 + $0x1bd8] sm:$0xff]
    %v934 = vld [vmem:[#allocation2 + $0x1be0] sm:$0xff]
    %v935 = vld [vmem:[#allocation2 + $0x1be8] sm:$0xff]
    %v936 = vld [vmem:[#allocation2 + $0x1bf0] sm:$0xff]
    %v937 = vld [vmem:[#allocation2 + $0x1bf8] sm:$0xff]
    %v938 = vld [vmem:[#allocation2 + $0x1c00] sm:$0xff]
    %v939 = vld [vmem:[#allocation2 + $0x1c08] sm:$0xff]
    %v940 = vld [vmem:[#allocation2 + $0x1c10] sm:$0xff]
    %v941 = vld [vmem:[#allocation2 + $0x1c18] sm:$0xff]
    %v942 = vld [vmem:[#allocation2 + $0x1c20] sm:$0xff]
    %v943 = vld [vmem:[#allocation2 + $0x1c28] sm:$0xff]
    %v944 = vld [vmem:[#allocation2 + $0x1c30] sm:$0xff]
    %v945 = vld [vmem:[#allocation2 + $0x1c38] sm:$0xff]
    %v946 = vld [vmem:[#allocation2 + $0x1c40] sm:$0xff]
    %v947 = vld [vmem:[#allocation2 + $0x1c48] sm:$0xff]
    %v948 = vld [vmem:[#allocation2 + $0x1c50] sm:$0xff]
    %v949 = vld [vmem:[#allocation2 + $0x1c58] sm:$0xff]
    %v950 = vld [vmem:[#allocation2 + $0x1c60] sm:$0xff]
    %v951 = vld [vmem:[#allocation2 + $0x1c68] sm:$0xff]
    %v952 = vld [vmem:[#allocation2 + $0x1c70] sm:$0xff]
    %v953 = vld [vmem:[#allocation2 + $0x1c78] sm:$0xff]
    %v954 = vld [vmem:[#allocation2 + $0x1c80] sm:$0xff]
    %v955 = vld [vmem:[#allocation2 + $0x1c88] sm:$0xff]
    %v956 = vld [vmem:[#allocation2 + $0x1c90] sm:$0xff]
    %v957 = vld [vmem:[#allocation2 + $0x1c98] sm:$0xff]
    %v958 = vld [vmem:[#allocation2 + $0x1ca0] sm:$0xff]
    %v959 = vld [vmem:[#allocation2 + $0x1ca8] sm:$0xff]
    %v960 = vld [vmem:[#allocation2 + $0x1cb0] sm:$0xff]
    %v961 = vld [vmem:[#allocation2 + $0x1cb8] sm:$0xff]
    %v962 = vld [vmem:[#allocation2 + $0x1cc0] sm:$0xff]
    %v963 = vld [vmem:[#allocation2 + $0x1cc8] sm:$0xff]
    %v964 = vld [vmem:[#allocation2 + $0x1cd0] sm:$0xff]
    %v965 = vld [vmem:[#allocation2 + $0x1cd8] sm:$0xff]
    %v966 = vld [vmem:[#allocation2 + $0x1ce0] sm:$0xff]
    %v967 = vld [vmem:[#allocation2 + $0x1ce8] sm:$0xff]
    %v968 = vld [vmem:[#allocation2 + $0x1cf0] sm:$0xff]
    %v969 = vld [vmem:[#allocation2 + $0x1cf8] sm:$0xff]
    %v970 = vld [vmem:[#allocation2 + $0x1d00] sm:$0xff]
    %v971 = vld [vmem:[#allocation2 + $0x1d08] sm:$0xff]
    %v972 = vld [vmem:[#allocation2 + $0x1d10] sm:$0xff]
    %v973 = vld [vmem:[#allocation2 + $0x1d18] sm:$0xff]
    %v974 = vld [vmem:[#allocation2 + $0x1d20] sm:$0xff]
    %v975 = vld [vmem:[#allocation2 + $0x1d28] sm:$0xff]
    %v976 = vld [vmem:[#allocation2 + $0x1d30] sm:$0xff]
    %v977 = vld [vmem:[#allocation2 + $0x1d38] sm:$0xff]
    %v978 = vld [vmem:[#allocation2 + $0x1d40] sm:$0xff]
    %v979 = vld [vmem:[#allocation2 + $0x1d48] sm:$0xff]
    %v980 = vld [vmem:[#allocation2 + $0x1d50] sm:$0xff]
    %v981 = vld [vmem:[#allocation2 + $0x1d58] sm:$0xff]
    %v982 = vld [vmem:[#allocation2 + $0x1d60] sm:$0xff]
    %v983 = vld [vmem:[#allocation2 + $0x1d68] sm:$0xff]
    %v984 = vld [vmem:[#allocation2 + $0x1d70] sm:$0xff]
    %v985 = vld [vmem:[#allocation2 + $0x1d78] sm:$0xff]
    %v986 = vld [vmem:[#allocation2 + $0x1d80] sm:$0xff]
    %v987 = vld [vmem:[#allocation2 + $0x1d88] sm:$0xff]
    %v988 = vld [vmem:[#allocation2 + $0x1d90] sm:$0xff]
    %v989 = vld [vmem:[#allocation2 + $0x1d98] sm:$0xff]
    %v990 = vld [vmem:[#allocation2 + $0x1da0] sm:$0xff]
    %v991 = vld [vmem:[#allocation2 + $0x1da8] sm:$0xff]
    %v992 = vld [vmem:[#allocation2 + $0x1db0] sm:$0xff]
    %v993 = vld [vmem:[#allocation2 + $0x1db8] sm:$0xff]
    %v994 = vld [vmem:[#allocation2 + $0x1dc0] sm:$0xff]
    %v995 = vld [vmem:[#allocation2 + $0x1dc8] sm:$0xff]
    %v996 = vld [vmem:[#allocation2 + $0x1dd0] sm:$0xff]
    %v997 = vld [vmem:[#allocation2 + $0x1dd8] sm:$0xff]
    %v998 = vld [vmem:[#allocation2 + $0x1de0] sm:$0xff]
    %v999 = vld [vmem:[#allocation2 + $0x1de8] sm:$0xff]
    %v1000 = vld [vmem:[#allocation2 + $0x1df0] sm:$0xff]
    %v1001 = vld [vmem:[#allocation2 + $0x1df8] sm:$0xff]
    %v1002 = vld [vmem:[#allocation2 + $0x1e00] sm:$0xff]
    %v1003 = vld [vmem:[#allocation2 + $0x1e08] sm:$0xff]
    %v1004 = vld [vmem:[#allocation2 + $0x1e10] sm:$0xff]
    %v1005 = vld [vmem:[#allocation2 + $0x1e18] sm:$0xff]
    %v1006 = vld [vmem:[#allocation2 + $0x1e20] sm:$0xff]
    %v1007 = vld [vmem:[#allocation2 + $0x1e28] sm:$0xff]
    %v1008 = vld [vmem:[#allocation2 + $0x1e30] sm:$0xff]
    %v1009 = vld [vmem:[#allocation2 + $0x1e38] sm:$0xff]
    %v1010 = vld [vmem:[#allocation2 + $0x1e40] sm:$0xff]
    %v1011 = vld [vmem:[#allocation2 + $0x1e48] sm:$0xff]
    %v1012 = vld [vmem:[#allocation2 + $0x1e50] sm:$0xff]
    %v1013 = vld [vmem:[#allocation2 + $0x1e58] sm:$0xff]
    %v1014 = vld [vmem:[#allocation2 + $0x1e60] sm:$0xff]
    %v1015 = vld [vmem:[#allocation2 + $0x1e68] sm:$0xff]
    %v1016 = vld [vmem:[#allocation2 + $0x1e70] sm:$0xff]
    %v1017 = vld [vmem:[#allocation2 + $0x1e78] sm:$0xff]
    %v1018 = vld [vmem:[#allocation2 + $0x1e80] sm:$0xff]
    %v1019 = vld [vmem:[#allocation2 + $0x1e88] sm:$0xff]
    %v1020 = vld [vmem:[#allocation2 + $0x1e90] sm:$0xff]
    %v1021 = vld [vmem:[#allocation2 + $0x1e98] sm:$0xff]
    %v1022 = vld [vmem:[#allocation2 + $0x1ea0] sm:$0xff]
    %v1023 = vld [vmem:[#allocation2 + $0x1ea8] sm:$0xff]
    %v1024 = vld [vmem:[#allocation2 + $0x1eb0] sm:$0xff]
    %v1025 = vld [vmem:[#allocation2 + $0x1eb8] sm:$0xff]
    %v1026 = vld [vmem:[#allocation2 + $0x1ec0] sm:$0xff]
    %v1027 = vld [vmem:[#allocation2 + $0x1ec8] sm:$0xff]
    %v1028 = vld [vmem:[#allocation2 + $0x1ed0] sm:$0xff]
    %v1029 = vld [vmem:[#allocation2 + $0x1ed8] sm:$0xff]
    %v1030 = vld [vmem:[#allocation2 + $0x1ee0] sm:$0xff]
    %v1031 = vld [vmem:[#allocation2 + $0x1ee8] sm:$0xff]
    %v1032 = vld [vmem:[#allocation2 + $0x1ef0] sm:$0xff]
    %v1033 = vld [vmem:[#allocation2 + $0x1ef8] sm:$0xff]
    %v1034 = vld [vmem:[#allocation2 + $0x1f00] sm:$0xff]
    %v1035 = vld [vmem:[#allocation2 + $0x1f08] sm:$0xff]
    %v1036 = vld [vmem:[#allocation2 + $0x1f10] sm:$0xff]
    %v1037 = vld [vmem:[#allocation2 + $0x1f18] sm:$0xff]
    %v1038 = vld [vmem:[#allocation2 + $0x1f20] sm:$0xff]
    %v1039 = vld [vmem:[#allocation2 + $0x1f28] sm:$0xff]
    %v1040 = vld [vmem:[#allocation2 + $0x1f30] sm:$0xff]
    %v1041 = vld [vmem:[#allocation2 + $0x1f38] sm:$0xff]
    %v1042 = vld [vmem:[#allocation2 + $0x1f40] sm:$0xff]
    %v1043 = vld [vmem:[#allocation2 + $0x1f48] sm:$0xff]
    %v1044 = vld [vmem:[#allocation2 + $0x1f50] sm:$0xff]
    %v1045 = vld [vmem:[#allocation2 + $0x1f58] sm:$0xff]
    %v1046 = vld [vmem:[#allocation2 + $0x1f60] sm:$0xff]
    %v1047 = vld [vmem:[#allocation2 + $0x1f68] sm:$0xff]
    %v1048 = vld [vmem:[#allocation2 + $0x1f70] sm:$0xff]
    %v1049 = vld [vmem:[#allocation2 + $0x1f78] sm:$0xff]
    %v1050 = vld [vmem:[#allocation2 + $0x1f80] sm:$0xff]
    %v1051 = vld [vmem:[#allocation2 + $0x1f88] sm:$0xff]
    %v1052 = vld [vmem:[#allocation2 + $0x1f90] sm:$0xff]
    %v1053 = vld [vmem:[#allocation2 + $0x1f98] sm:$0xff]
    %v1054 = vld [vmem:[#allocation2 + $0x1fa0] sm:$0xff]
    %v1055 = vld [vmem:[#allocation2 + $0x1fa8] sm:$0xff]
    %v1056 = vld [vmem:[#allocation2 + $0x1fb0] sm:$0xff]
    %v1057 = vld [vmem:[#allocation2 + $0x1fb8] sm:$0xff]
    %v1058 = vld [vmem:[#allocation2 + $0x1fc0] sm:$0xff]
    %v1059 = vld [vmem:[#allocation2 + $0x1fc8] sm:$0xff]
    %v1060 = vld [vmem:[#allocation2 + $0x1fd0] sm:$0xff]
    %v1061 = vld [vmem:[#allocation2 + $0x1fd8] sm:$0xff]
    %v1062 = vld [vmem:[#allocation2 + $0x1fe0] sm:$0xff]
    %v1063 = vld [vmem:[#allocation2 + $0x1fe8] sm:$0xff]
    %v1064 = vld [vmem:[#allocation2 + $0x1ff0] sm:$0xff]
    %v1065 = vld [vmem:[#allocation2 + $0x1ff8] sm:$0xff]
    %v1066 = vld [vmem:[#allocation2 + $0x2000] sm:$0xff]
    %v1067 = vld [vmem:[#allocation2 + $0x2008] sm:$0xff]
    %v1068 = vld [vmem:[#allocation2 + $0x2010] sm:$0xff]
    %v1069 = vld [vmem:[#allocation2 + $0x2018] sm:$0xff]
    %v1070 = vld [vmem:[#allocation2 + $0x2020] sm:$0xff]
    %v1071 = vld [vmem:[#allocation2 + $0x2028] sm:$0xff]
    %v1072 = vld [vmem:[#allocation2 + $0x2030] sm:$0xff]
    %v1073 = vld [vmem:[#allocation2 + $0x2038] sm:$0xff]
    %v1074 = vld [vmem:[#allocation2 + $0x2040] sm:$0xff]
    %v1075 = vld [vmem:[#allocation2 + $0x2048] sm:$0xff]
    %v1076 = vld [vmem:[#allocation2 + $0x2050] sm:$0xff]
    %v1077 = vld [vmem:[#allocation2 + $0x2058] sm:$0xff]
    %v1078 = vld [vmem:[#allocation2 + $0x2060] sm:$0xff]
    %v1079 = vld [vmem:[#allocation2 + $0x2068] sm:$0xff]
    %v1080 = vld [vmem:[#allocation2 + $0x2070] sm:$0xff]
    %v1081 = vld [vmem:[#allocation2 + $0x2078] sm:$0xff]
    %v1082 = vld [vmem:[#allocation2 + $0x2080] sm:$0xff]
    %v1083 = vld [vmem:[#allocation2 + $0x2088] sm:$0xff]
    %v1084 = vld [vmem:[#allocation2 + $0x2090] sm:$0xff]
    %v1085 = vld [vmem:[#allocation2 + $0x2098] sm:$0xff]
    %v1086 = vld [vmem:[#allocation2 + $0x20a0] sm:$0xff]
    %v1087 = vld [vmem:[#allocation2 + $0x20a8] sm:$0xff]
    %v1088 = vld [vmem:[#allocation2 + $0x20b0] sm:$0xff]
    %v1089 = vld [vmem:[#allocation2 + $0x20b8] sm:$0xff]
    %v1090 = vld [vmem:[#allocation2 + $0x20c0] sm:$0xff]
    %v1091 = vld [vmem:[#allocation2 + $0x20c8] sm:$0xff]
    %v1092 = vld [vmem:[#allocation2 + $0x20d0] sm:$0xff]
    %v1093 = vld [vmem:[#allocation2 + $0x20d8] sm:$0xff]
    %v1094 = vld [vmem:[#allocation2 + $0x20e0] sm:$0xff]
    %v1095 = vld [vmem:[#allocation2 + $0x20e8] sm:$0xff]
    %v1096 = vld [vmem:[#allocation2 + $0x20f0] sm:$0xff]
    %v1097 = vld [vmem:[#allocation2 + $0x20f8] sm:$0xff]
    %v1098 = vld [vmem:[#allocation2 + $0x2100] sm:$0xff]
    %v1099 = vld [vmem:[#allocation2 + $0x2108] sm:$0xff]
    %v1100 = vld [vmem:[#allocation2 + $0x2110] sm:$0xff]
    %v1101 = vld [vmem:[#allocation2 + $0x2118] sm:$0xff]
    %v1102 = vld [vmem:[#allocation2 + $0x2120] sm:$0xff]
    %v1103 = vld [vmem:[#allocation2 + $0x2128] sm:$0xff]
    %v1104 = vld [vmem:[#allocation2 + $0x2130] sm:$0xff]
    %v1105 = vld [vmem:[#allocation2 + $0x2138] sm:$0xff]
    %v1106 = vld [vmem:[#allocation2 + $0x2140] sm:$0xff]
    %v1107 = vld [vmem:[#allocation2 + $0x2148] sm:$0xff]
    %v1108 = vld [vmem:[#allocation2 + $0x2150] sm:$0xff]
    %v1109 = vld [vmem:[#allocation2 + $0x2158] sm:$0xff]
    %v1110 = vld [vmem:[#allocation2 + $0x2160] sm:$0xff]
    %v1111 = vld [vmem:[#allocation2 + $0x2168] sm:$0xff]
    %v1112 = vld [vmem:[#allocation2 + $0x2170] sm:$0xff]
    %v1113 = vld [vmem:[#allocation2 + $0x2178] sm:$0xff]
    %v1114 = vld [vmem:[#allocation2 + $0x2180] sm:$0xff]
    %v1115 = vld [vmem:[#allocation2 + $0x2188] sm:$0xff]
    %v1116 = vld [vmem:[#allocation2 + $0x2190] sm:$0xff]
    %v1117 = vld [vmem:[#allocation2 + $0x2198] sm:$0xff]
    %v1118 = vld [vmem:[#allocation2 + $0x21a0] sm:$0xff]
    %v1119 = vld [vmem:[#allocation2 + $0x21a8] sm:$0xff]
    %v1120 = vld [vmem:[#allocation2 + $0x21b0] sm:$0xff]
    %v1121 = vld [vmem:[#allocation2 + $0x21b8] sm:$0xff]
    %v1122 = vld [vmem:[#allocation2 + $0x21c0] sm:$0xff]
    %v1123 = vld [vmem:[#allocation2 + $0x21c8] sm:$0xff]
    %v1124 = vld [vmem:[#allocation2 + $0x21d0] sm:$0xff]
    %v1125 = vld [vmem:[#allocation2 + $0x21d8] sm:$0xff]
    %v1126 = vld [vmem:[#allocation2 + $0x21e0] sm:$0xff]
    %v1127 = vld [vmem:[#allocation2 + $0x21e8] sm:$0xff]
    %v1128 = vld [vmem:[#allocation2 + $0x21f0] sm:$0xff]
    %v1129 = vld [vmem:[#allocation2 + $0x21f8] sm:$0xff]
    %v1130 = vld [vmem:[#allocation2 + $0x2200] sm:$0xff]
    %v1131 = vld [vmem:[#allocation2 + $0x2208] sm:$0xff]
    %v1132 = vld [vmem:[#allocation2 + $0x2210] sm:$0xff]
    %v1133 = vld [vmem:[#allocation2 + $0x2218] sm:$0xff]
    %v1134 = vld [vmem:[#allocation2 + $0x2220] sm:$0xff]
    %v1135 = vld [vmem:[#allocation2 + $0x2228] sm:$0xff]
    %v1136 = vld [vmem:[#allocation2 + $0x2230] sm:$0xff]
    %v1137 = vld [vmem:[#allocation2 + $0x2238] sm:$0xff]
    %v1138 = vld [vmem:[#allocation2 + $0x2240] sm:$0xff]
    %v1139 = vld [vmem:[#allocation2 + $0x2248] sm:$0xff]
    %v1140 = vld [vmem:[#allocation2 + $0x2250] sm:$0xff]
    %v1141 = vld [vmem:[#allocation2 + $0x2258] sm:$0xff]
    %v1142 = vld [vmem:[#allocation2 + $0x2260] sm:$0xff]
    %v1143 = vld [vmem:[#allocation2 + $0x2268] sm:$0xff]
    %v1144 = vld [vmem:[#allocation2 + $0x2270] sm:$0xff]
    %v1145 = vld [vmem:[#allocation2 + $0x2278] sm:$0xff]
    %v1146 = vld [vmem:[#allocation2 + $0x2280] sm:$0xff]
    %v1147 = vld [vmem:[#allocation2 + $0x2288] sm:$0xff]
    %v1148 = vld [vmem:[#allocation2 + $0x2290] sm:$0xff]
    %v1149 = vld [vmem:[#allocation2 + $0x2298] sm:$0xff]
    %v1150 = vld [vmem:[#allocation2 + $0x22a0] sm:$0xff]
    %v1151 = vld [vmem:[#allocation2 + $0x22a8] sm:$0xff]
    %v1152 = vld [vmem:[#allocation2 + $0x22b0] sm:$0xff]
    %v1153 = vld [vmem:[#allocation2 + $0x22b8] sm:$0xff]
    %v1154 = vld [vmem:[#allocation2 + $0x22c0] sm:$0xff]
    %v1155 = vld [vmem:[#allocation2 + $0x22c8] sm:$0xff]
    %v1156 = vld [vmem:[#allocation2 + $0x22d0] sm:$0xff]
    %v1157 = vld [vmem:[#allocation2 + $0x22d8] sm:$0xff]
    %v1158 = vld [vmem:[#allocation2 + $0x22e0] sm:$0xff]
    %v1159 = vld [vmem:[#allocation2 + $0x22e8] sm:$0xff]
    %v1160 = vld [vmem:[#allocation2 + $0x22f0] sm:$0xff]
    %v1161 = vld [vmem:[#allocation2 + $0x22f8] sm:$0xff]
    %v1162 = vld [vmem:[#allocation2 + $0x2300] sm:$0xff]
    %v1163 = vld [vmem:[#allocation2 + $0x2308] sm:$0xff]
    %v1164 = vld [vmem:[#allocation2 + $0x2310] sm:$0xff]
    %v1165 = vld [vmem:[#allocation2 + $0x2318] sm:$0xff]
    %v1166 = vld [vmem:[#allocation2 + $0x2320] sm:$0xff]
    %v1167 = vld [vmem:[#allocation2 + $0x2328] sm:$0xff]
    %v1168 = vld [vmem:[#allocation2 + $0x2330] sm:$0xff]
    %v1169 = vld [vmem:[#allocation2 + $0x2338] sm:$0xff]
    %v1170 = vld [vmem:[#allocation2 + $0x2340] sm:$0xff]
    %v1171 = vld [vmem:[#allocation2 + $0x2348] sm:$0xff]
    %v1172 = vld [vmem:[#allocation2 + $0x2350] sm:$0xff]
    %v1173 = vld [vmem:[#allocation2 + $0x2358] sm:$0xff]
    %v1174 = vld [vmem:[#allocation2 + $0x2360] sm:$0xff]
    %v1175 = vld [vmem:[#allocation2 + $0x2368] sm:$0xff]
    %v1176 = vld [vmem:[#allocation2 + $0x2370] sm:$0xff]
    %v1177 = vld [vmem:[#allocation2 + $0x2378] sm:$0xff]
    %v1178 = vld [vmem:[#allocation2 + $0x2380] sm:$0xff]
    %v1179 = vld [vmem:[#allocation2 + $0x2388] sm:$0xff]
    %v1180 = vld [vmem:[#allocation2 + $0x2390] sm:$0xff]
    %v1181 = vld [vmem:[#allocation2 + $0x2398] sm:$0xff]
    %v1182 = vld [vmem:[#allocation2 + $0x23a0] sm:$0xff]
    %v1183 = vld [vmem:[#allocation2 + $0x23a8] sm:$0xff]
    %v1184 = vld [vmem:[#allocation2 + $0x23b0] sm:$0xff]
    %v1185 = vld [vmem:[#allocation2 + $0x23b8] sm:$0xff]
    %v1186 = vld [vmem:[#allocation2 + $0x23c0] sm:$0xff]
    %v1187 = vld [vmem:[#allocation2 + $0x23c8] sm:$0xff]
    %v1188 = vld [vmem:[#allocation2 + $0x23d0] sm:$0xff]
    %v1189 = vld [vmem:[#allocation2 + $0x23d8] sm:$0xff]
    %v1190 = vld [vmem:[#allocation2 + $0x23e0] sm:$0xff]
    %v1191 = vld [vmem:[#allocation2 + $0x23e8] sm:$0xff]
    %v1192 = vld [vmem:[#allocation2 + $0x23f0] sm:$0xff]
    %v1193 = vld [vmem:[#allocation2 + $0x23f8] sm:$0xff]
    %v1194 = vld [vmem:[#allocation2 + $0x2400] sm:$0xff]
    %v1195 = vld [vmem:[#allocation2 + $0x2408] sm:$0xff]
    %v1196 = vld [vmem:[#allocation2 + $0x2410] sm:$0xff]
    %v1197 = vld [vmem:[#allocation2 + $0x2418] sm:$0xff]
    %v1198 = vld [vmem:[#allocation2 + $0x2420] sm:$0xff]
    %v1199 = vld [vmem:[#allocation2 + $0x2428] sm:$0xff]
    %v1200 = vld [vmem:[#allocation2 + $0x2430] sm:$0xff]
    %v1201 = vld [vmem:[#allocation2 + $0x2438] sm:$0xff]
    %v1202 = vld [vmem:[#allocation2 + $0x2440] sm:$0xff]
    %v1203 = vld [vmem:[#allocation2 + $0x2448] sm:$0xff]
    %v1204 = vld [vmem:[#allocation2 + $0x2450] sm:$0xff]
    %v1205 = vld [vmem:[#allocation2 + $0x2458] sm:$0xff]
    %v1206 = vld [vmem:[#allocation2 + $0x2460] sm:$0xff]
    %v1207 = vld [vmem:[#allocation2 + $0x2468] sm:$0xff]
    %v1208 = vld [vmem:[#allocation2 + $0x2470] sm:$0xff]
    %v1209 = vld [vmem:[#allocation2 + $0x2478] sm:$0xff]
    %v1210 = vld [vmem:[#allocation2 + $0x2480] sm:$0xff]
    %v1211 = vld [vmem:[#allocation2 + $0x2488] sm:$0xff]
    %v1212 = vld [vmem:[#allocation2 + $0x2490] sm:$0xff]
    %v1213 = vld [vmem:[#allocation2 + $0x2498] sm:$0xff]
    %v1214 = vld [vmem:[#allocation2 + $0x24a0] sm:$0xff]
    %v1215 = vld [vmem:[#allocation2 + $0x24a8] sm:$0xff]
    %v1216 = vld [vmem:[#allocation2 + $0x24b0] sm:$0xff]
    %v1217 = vld [vmem:[#allocation2 + $0x24b8] sm:$0xff]
    %v1218 = vld [vmem:[#allocation2 + $0x24c0] sm:$0xff]
    %v1219 = vld [vmem:[#allocation2 + $0x24c8] sm:$0xff]
    %v1220 = vld [vmem:[#allocation2 + $0x24d0] sm:$0xff]
    %v1221 = vld [vmem:[#allocation2 + $0x24d8] sm:$0xff]
    %v1222 = vld [vmem:[#allocation2 + $0x24e0] sm:$0xff]
    %v1223 = vld [vmem:[#allocation2 + $0x24e8] sm:$0xff]
    %v1224 = vld [vmem:[#allocation2 + $0x24f0] sm:$0xff]
    %v1225 = vld [vmem:[#allocation2 + $0x24f8] sm:$0xff]
    %v1226 = vld [vmem:[#allocation2 + $0x2500] sm:$0xff]
    %v1227 = vld [vmem:[#allocation2 + $0x2508] sm:$0xff]
    %v1228 = vld [vmem:[#allocation2 + $0x2510] sm:$0xff]
    %v1229 = vld [vmem:[#allocation2 + $0x2518] sm:$0xff]
    %v1230 = vld [vmem:[#allocation2 + $0x2520] sm:$0xff]
    %v1231 = vld [vmem:[#allocation2 + $0x2528] sm:$0xff]
    %v1232 = vld [vmem:[#allocation2 + $0x2530] sm:$0xff]
    %v1233 = vld [vmem:[#allocation2 + $0x2538] sm:$0xff]
    %v1234 = vld [vmem:[#allocation2 + $0x2540] sm:$0xff]
    %v1235 = vld [vmem:[#allocation2 + $0x2548] sm:$0xff]
    %v1236 = vld [vmem:[#allocation2 + $0x2550] sm:$0xff]
    %v1237 = vld [vmem:[#allocation2 + $0x2558] sm:$0xff]
    %v1238 = vld [vmem:[#allocation2 + $0x2560] sm:$0xff]
    %v1239 = vld [vmem:[#allocation2 + $0x2568] sm:$0xff]
    %v1240 = vld [vmem:[#allocation2 + $0x2570] sm:$0xff]
    %v1241 = vld [vmem:[#allocation2 + $0x2578] sm:$0xff]
    %v1242 = vld [vmem:[#allocation2 + $0x2580] sm:$0xff]
    %v1243 = vld [vmem:[#allocation2 + $0x2588] sm:$0xff]
    %v1244 = vld [vmem:[#allocation2 + $0x2590] sm:$0xff]
    %v1245 = vld [vmem:[#allocation2 + $0x2598] sm:$0xff]
    %v1246 = vld [vmem:[#allocation2 + $0x25a0] sm:$0xff]
    %v1247 = vld [vmem:[#allocation2 + $0x25a8] sm:$0xff]
    %v1248 = vld [vmem:[#allocation2 + $0x25b0] sm:$0xff]
    %v1249 = vld [vmem:[#allocation2 + $0x25b8] sm:$0xff]
    %v1250 = vld [vmem:[#allocation2 + $0x25c0] sm:$0xff]
    %v1251 = vld [vmem:[#allocation2 + $0x25c8] sm:$0xff]
    %v1252 = vld [vmem:[#allocation2 + $0x25d0] sm:$0xff]
    %v1253 = vld [vmem:[#allocation2 + $0x25d8] sm:$0xff]
    %v1254 = vld [vmem:[#allocation2 + $0x25e0] sm:$0xff]
    %v1255 = vld [vmem:[#allocation2 + $0x25e8] sm:$0xff]
    %v1256 = vld [vmem:[#allocation2 + $0x25f0] sm:$0xff]
    %v1257 = vld [vmem:[#allocation2 + $0x25f8] sm:$0xff]
    %v1258 = vld [vmem:[#allocation2 + $0x2600] sm:$0xff]
    %v1259 = vld [vmem:[#allocation2 + $0x2608] sm:$0xff]
    %v1260 = vld [vmem:[#allocation2 + $0x2610] sm:$0xff]
    %v1261 = vld [vmem:[#allocation2 + $0x2618] sm:$0xff]
    %v1262 = vld [vmem:[#allocation2 + $0x2620] sm:$0xff]
    %v1263 = vld [vmem:[#allocation2 + $0x2628] sm:$0xff]
    %v1264 = vld [vmem:[#allocation2 + $0x2630] sm:$0xff]
    %v1265 = vld [vmem:[#allocation2 + $0x2638] sm:$0xff]
    %v1266 = vld [vmem:[#allocation2 + $0x2640] sm:$0xff]
    %v1267 = vld [vmem:[#allocation2 + $0x2648] sm:$0xff]
    %v1268 = vld [vmem:[#allocation2 + $0x2650] sm:$0xff]
    %v1269 = vld [vmem:[#allocation2 + $0x2658] sm:$0xff]
    %v1270 = vld [vmem:[#allocation2 + $0x2660] sm:$0xff]
    %v1271 = vld [vmem:[#allocation2 + $0x2668] sm:$0xff]
    %v1272 = vld [vmem:[#allocation2 + $0x2670] sm:$0xff]
    %v1273 = vld [vmem:[#allocation2 + $0x2678] sm:$0xff]
    %v1274 = vld [vmem:[#allocation2 + $0x2680] sm:$0xff]
    %v1275 = vld [vmem:[#allocation2 + $0x2688] sm:$0xff]
    %v1276 = vld [vmem:[#allocation2 + $0x2690] sm:$0xff]
    %v1277 = vld [vmem:[#allocation2 + $0x2698] sm:$0xff]
    %v1278 = vld [vmem:[#allocation2 + $0x26a0] sm:$0xff]
    %v1279 = vld [vmem:[#allocation2 + $0x26a8] sm:$0xff]
    %v1280 = vld [vmem:[#allocation2 + $0x26b0] sm:$0xff]
    %v1281 = vld [vmem:[#allocation2 + $0x26b8] sm:$0xff]
    %v1282 = vld [vmem:[#allocation2 + $0x26c0] sm:$0xff]
    %v1283 = vld [vmem:[#allocation2 + $0x26c8] sm:$0xff]
    %v1284 = vld [vmem:[#allocation2 + $0x26d0] sm:$0xff]
    %v1285 = vld [vmem:[#allocation2 + $0x26d8] sm:$0xff]
    %v1286 = vld [vmem:[#allocation2 + $0x26e0] sm:$0xff]
    %v1287 = vld [vmem:[#allocation2 + $0x26e8] sm:$0xff]
    %v1288 = vld [vmem:[#allocation2 + $0x26f0] sm:$0xff]
    %v1289 = vld [vmem:[#allocation2 + $0x26f8] sm:$0xff]
    %v1290 = vld [vmem:[#allocation2 + $0x2700] sm:$0xff]
    %v1291 = vld [vmem:[#allocation2 + $0x2708] sm:$0xff]
    %v1292 = vld [vmem:[#allocation2 + $0x2710] sm:$0xff]
    %v1293 = vld [vmem:[#allocation2 + $0x2718] sm:$0xff]
    %v1294 = vld [vmem:[#allocation2 + $0x2720] sm:$0xff]
    %v1295 = vld [vmem:[#allocation2 + $0x2728] sm:$0xff]
    %v1296 = vld [vmem:[#allocation2 + $0x2730] sm:$0xff]
    %v1297 = vld [vmem:[#allocation2 + $0x2738] sm:$0xff]
    %v1298 = vld [vmem:[#allocation2 + $0x2740] sm:$0xff]
    %v1299 = vld [vmem:[#allocation2 + $0x2748] sm:$0xff]
    %v1300 = vld [vmem:[#allocation2 + $0x2750] sm:$0xff]
    %v1301 = vld [vmem:[#allocation2 + $0x2758] sm:$0xff]
    %v1302 = vld [vmem:[#allocation2 + $0x2760] sm:$0xff]
    %v1303 = vld [vmem:[#allocation2 + $0x2768] sm:$0xff]
    %v1304 = vld [vmem:[#allocation2 + $0x2770] sm:$0xff]
    %v1305 = vld [vmem:[#allocation2 + $0x2778] sm:$0xff]
    %v1306 = vld [vmem:[#allocation2 + $0x2780] sm:$0xff]
    %v1307 = vld [vmem:[#allocation2 + $0x2788] sm:$0xff]
    %v1308 = vld [vmem:[#allocation2 + $0x2790] sm:$0xff]
    %v1309 = vld [vmem:[#allocation2 + $0x2798] sm:$0xff]
    %v1310 = vld [vmem:[#allocation2 + $0x27a0] sm:$0xff]
    %v1311 = vld [vmem:[#allocation2 + $0x27a8] sm:$0xff]
    %v1312 = vld [vmem:[#allocation2 + $0x27b0] sm:$0xff]
    %v1313 = vld [vmem:[#allocation2 + $0x27b8] sm:$0xff]
    %v1314 = vld [vmem:[#allocation2 + $0x27c0] sm:$0xff]
    %v1315 = vld [vmem:[#allocation2 + $0x27c8] sm:$0xff]
    %v1316 = vld [vmem:[#allocation2 + $0x27d0] sm:$0xff]
    %v1317 = vld [vmem:[#allocation2 + $0x27d8] sm:$0xff]
    %v1318 = vld [vmem:[#allocation2 + $0x27e0] sm:$0xff]
    %v1319 = vld [vmem:[#allocation2 + $0x27e8] sm:$0xff]
    %v1320 = vld [vmem:[#allocation2 + $0x27f0] sm:$0xff]
    %v1321 = vld [vmem:[#allocation2 + $0x27f8] sm:$0xff]
    %v1322 = vld [vmem:[#allocation2 + $0x2800] sm:$0xff]
    %v1323 = vld [vmem:[#allocation2 + $0x2808] sm:$0xff]
    %v1324 = vld [vmem:[#allocation2 + $0x2810] sm:$0xff]
    %v1325 = vld [vmem:[#allocation2 + $0x2818] sm:$0xff]
    %v1326 = vld [vmem:[#allocation2 + $0x2820] sm:$0xff]
    %v1327 = vld [vmem:[#allocation2 + $0x2828] sm:$0xff]
    %v1328 = vld [vmem:[#allocation2 + $0x2830] sm:$0xff]
    %v1329 = vld [vmem:[#allocation2 + $0x2838] sm:$0xff]
    %v1330 = vld [vmem:[#allocation2 + $0x2840] sm:$0xff]
    %v1331 = vld [vmem:[#allocation2 + $0x2848] sm:$0xff]
    %v1332 = vld [vmem:[#allocation2 + $0x2850] sm:$0xff]
    %v1333 = vld [vmem:[#allocation2 + $0x2858] sm:$0xff]
    %v1334 = vld [vmem:[#allocation2 + $0x2860] sm:$0xff]
    %v1335 = vld [vmem:[#allocation2 + $0x2868] sm:$0xff]
    %v1336 = vld [vmem:[#allocation2 + $0x2870] sm:$0xff]
    %v1337 = vld [vmem:[#allocation2 + $0x2878] sm:$0xff]
    %v1338 = vld [vmem:[#allocation2 + $0x2880] sm:$0xff]
    %v1339 = vld [vmem:[#allocation2 + $0x2888] sm:$0xff]
    %v1340 = vld [vmem:[#allocation2 + $0x2890] sm:$0xff]
    %v1341 = vld [vmem:[#allocation2 + $0x2898] sm:$0xff]
    %v1342 = vld [vmem:[#allocation2 + $0x28a0] sm:$0xff]
    %v1343 = vld [vmem:[#allocation2 + $0x28a8] sm:$0xff]
    %v1344 = vld [vmem:[#allocation2 + $0x28b0] sm:$0xff]
    %v1345 = vld [vmem:[#allocation2 + $0x28b8] sm:$0xff]
    %v1346 = vld [vmem:[#allocation2 + $0x28c0] sm:$0xff]
    %v1347 = vld [vmem:[#allocation2 + $0x28c8] sm:$0xff]
    %v1348 = vld [vmem:[#allocation2 + $0x28d0] sm:$0xff]
    %v1349 = vld [vmem:[#allocation2 + $0x28d8] sm:$0xff]
    %v1350 = vld [vmem:[#allocation2 + $0x28e0] sm:$0xff]
    %v1351 = vld [vmem:[#allocation2 + $0x28e8] sm:$0xff]
    %v1352 = vld [vmem:[#allocation2 + $0x28f0] sm:$0xff]
    %v1353 = vld [vmem:[#allocation2 + $0x28f8] sm:$0xff]
    %v1354 = vld [vmem:[#allocation2 + $0x2900] sm:$0xff]
    %v1355 = vld [vmem:[#allocation2 + $0x2908] sm:$0xff]
    %v1356 = vld [vmem:[#allocation2 + $0x2910] sm:$0xff]
    %v1357 = vld [vmem:[#allocation2 + $0x2918] sm:$0xff]
    %v1358 = vld [vmem:[#allocation2 + $0x2920] sm:$0xff]
    %v1359 = vld [vmem:[#allocation2 + $0x2928] sm:$0xff]
    %v1360 = vld [vmem:[#allocation2 + $0x2930] sm:$0xff]
    %v1361 = vld [vmem:[#allocation2 + $0x2938] sm:$0xff]
    %v1362 = vld [vmem:[#allocation2 + $0x2940] sm:$0xff]
    %v1363 = vld [vmem:[#allocation2 + $0x2948] sm:$0xff]
    %v1364 = vld [vmem:[#allocation2 + $0x2950] sm:$0xff]
    %v1365 = vld [vmem:[#allocation2 + $0x2958] sm:$0xff]
    %v1366 = vld [vmem:[#allocation2 + $0x2960] sm:$0xff]
    %v1367 = vld [vmem:[#allocation2 + $0x2968] sm:$0xff]
    %v1368 = vld [vmem:[#allocation2 + $0x2970] sm:$0xff]
    %v1369 = vld [vmem:[#allocation2 + $0x2978] sm:$0xff]
    %v1370 = vld [vmem:[#allocation2 + $0x2980] sm:$0xff]
    %v1371 = vld [vmem:[#allocation2 + $0x2988] sm:$0xff]
    %v1372 = vld [vmem:[#allocation2 + $0x2990] sm:$0xff]
    %v1373 = vld [vmem:[#allocation2 + $0x2998] sm:$0xff]
    %v1374 = vld [vmem:[#allocation2 + $0x29a0] sm:$0xff]
    %v1375 = vld [vmem:[#allocation2 + $0x29a8] sm:$0xff]
    %v1376 = vld [vmem:[#allocation2 + $0x29b0] sm:$0xff]
    %v1377 = vld [vmem:[#allocation2 + $0x29b8] sm:$0xff]
    %v1378 = vld [vmem:[#allocation2 + $0x29c0] sm:$0xff]
    %v1379 = vld [vmem:[#allocation2 + $0x29c8] sm:$0xff]
    %v1380 = vld [vmem:[#allocation2 + $0x29d0] sm:$0xff]
    %v1381 = vld [vmem:[#allocation2 + $0x29d8] sm:$0xff]
    %v1382 = vld [vmem:[#allocation2 + $0x29e0] sm:$0xff]
    %v1383 = vld [vmem:[#allocation2 + $0x29e8] sm:$0xff]
    %v1384 = vld [vmem:[#allocation2 + $0x29f0] sm:$0xff]
    %v1385 = vld [vmem:[#allocation2 + $0x29f8] sm:$0xff]
    %v1386 = vld [vmem:[#allocation2 + $0x2a00] sm:$0xff]
    %v1387 = vld [vmem:[#allocation2 + $0x2a08] sm:$0xff]
    %v1388 = vld [vmem:[#allocation2 + $0x2a10] sm:$0xff]
    %v1389 = vld [vmem:[#allocation2 + $0x2a18] sm:$0xff]
    %v1390 = vld [vmem:[#allocation2 + $0x2a20] sm:$0xff]
    %v1391 = vld [vmem:[#allocation2 + $0x2a28] sm:$0xff]
    %v1392 = vld [vmem:[#allocation2 + $0x2a30] sm:$0xff]
    %v1393 = vld [vmem:[#allocation2 + $0x2a38] sm:$0xff]
    %v1394 = vld [vmem:[#allocation2 + $0x2a40] sm:$0xff]
    %v1395 = vld [vmem:[#allocation2 + $0x2a48] sm:$0xff]
    %v1396 = vld [vmem:[#allocation2 + $0x2a50] sm:$0xff]
    %v1397 = vld [vmem:[#allocation2 + $0x2a58] sm:$0xff]
    %v1398 = vld [vmem:[#allocation2 + $0x2a60] sm:$0xff]
    %v1399 = vld [vmem:[#allocation2 + $0x2a68] sm:$0xff]
    %v1400 = vld [vmem:[#allocation2 + $0x2a70] sm:$0xff]
    %v1401 = vld [vmem:[#allocation2 + $0x2a78] sm:$0xff]
    %v1402 = vld [vmem:[#allocation2 + $0x2a80] sm:$0xff]
    %v1403 = vld [vmem:[#allocation2 + $0x2a88] sm:$0xff]
    %v1404 = vld [vmem:[#allocation2 + $0x2a90] sm:$0xff]
    %v1405 = vld [vmem:[#allocation2 + $0x2a98] sm:$0xff]
    %v1406 = vld [vmem:[#allocation2 + $0x2aa0] sm:$0xff]
    %v1407 = vld [vmem:[#allocation2 + $0x2aa8] sm:$0xff]
    %v1408 = vld [vmem:[#allocation2 + $0x2ab0] sm:$0xff]
    %v1409 = vld [vmem:[#allocation2 + $0x2ab8] sm:$0xff]
    %v1410 = vld [vmem:[#allocation2 + $0x2ac0] sm:$0xff]
    %v1411 = vld [vmem:[#allocation2 + $0x2ac8] sm:$0xff]
    %v1412 = vld [vmem:[#allocation2 + $0x2ad0] sm:$0xff]
    %v1413 = vld [vmem:[#allocation2 + $0x2ad8] sm:$0xff]
    %v1414 = vld [vmem:[#allocation2 + $0x2ae0] sm:$0xff]
    %v1415 = vld [vmem:[#allocation2 + $0x2ae8] sm:$0xff]
    %v1416 = vld [vmem:[#allocation2 + $0x2af0] sm:$0xff]
    %v1417 = vld [vmem:[#allocation2 + $0x2af8] sm:$0xff]
    %v1418 = vld [vmem:[#allocation2 + $0x2b00] sm:$0xff]
    %v1419 = vld [vmem:[#allocation2 + $0x2b08] sm:$0xff]
    %v1420 = vld [vmem:[#allocation2 + $0x2b10] sm:$0xff]
    %v1421 = vld [vmem:[#allocation2 + $0x2b18] sm:$0xff]
    %v1422 = vld [vmem:[#allocation2 + $0x2b20] sm:$0xff]
    %v1423 = vld [vmem:[#allocation2 + $0x2b28] sm:$0xff]
    %v1424 = vld [vmem:[#allocation2 + $0x2b30] sm:$0xff]
    %v1425 = vld [vmem:[#allocation2 + $0x2b38] sm:$0xff]
    %v1426 = vld [vmem:[#allocation2 + $0x2b40] sm:$0xff]
    %v1427 = vld [vmem:[#allocation2 + $0x2b48] sm:$0xff]
    %v1428 = vld [vmem:[#allocation2 + $0x2b50] sm:$0xff]
    %v1429 = vld [vmem:[#allocation2 + $0x2b58] sm:$0xff]
    %v1430 = vld [vmem:[#allocation2 + $0x2b60] sm:$0xff]
    %v1431 = vld [vmem:[#allocation2 + $0x2b68] sm:$0xff]
    %v1432 = vld [vmem:[#allocation2 + $0x2b70] sm:$0xff]
    %v1433 = vld [vmem:[#allocation2 + $0x2b78] sm:$0xff]
    %v1434 = vld [vmem:[#allocation2 + $0x2b80] sm:$0xff]
    %v1435 = vld [vmem:[#allocation2 + $0x2b88] sm:$0xff]
    %v1436 = vld [vmem:[#allocation2 + $0x2b90] sm:$0xff]
    %v1437 = vld [vmem:[#allocation2 + $0x2b98] sm:$0xff]
    %v1438 = vld [vmem:[#allocation2 + $0x2ba0] sm:$0xff]
    %v1439 = vld [vmem:[#allocation2 + $0x2ba8] sm:$0xff]
    %v1440 = vld [vmem:[#allocation2 + $0x2bb0] sm:$0xff]
    %v1441 = vld [vmem:[#allocation2 + $0x2bb8] sm:$0xff]
    %v1442 = vld [vmem:[#allocation2 + $0x2bc0] sm:$0xff]
    %v1443 = vld [vmem:[#allocation2 + $0x2bc8] sm:$0xff]
    %v1444 = vld [vmem:[#allocation2 + $0x2bd0] sm:$0xff]
    %v1445 = vld [vmem:[#allocation2 + $0x2bd8] sm:$0xff]
    %v1446 = vld [vmem:[#allocation2 + $0x2be0] sm:$0xff]
    %v1447 = vld [vmem:[#allocation2 + $0x2be8] sm:$0xff]
    %v1448 = vld [vmem:[#allocation2 + $0x2bf0] sm:$0xff]
    %v1449 = vld [vmem:[#allocation2 + $0x2bf8] sm:$0xff]
    %v1450 = vld [vmem:[#allocation2 + $0x2c00] sm:$0xff]
    %v1451 = vld [vmem:[#allocation2 + $0x2c08] sm:$0xff]
    %v1452 = vld [vmem:[#allocation2 + $0x2c10] sm:$0xff]
    %v1453 = vld [vmem:[#allocation2 + $0x2c18] sm:$0xff]
    %v1454 = vld [vmem:[#allocation2 + $0x2c20] sm:$0xff]
    %v1455 = vld [vmem:[#allocation2 + $0x2c28] sm:$0xff]
    %v1456 = vld [vmem:[#allocation2 + $0x2c30] sm:$0xff]
    %v1457 = vld [vmem:[#allocation2 + $0x2c38] sm:$0xff]
    %v1458 = vld [vmem:[#allocation2 + $0x2c40] sm:$0xff]
    %v1459 = vld [vmem:[#allocation2 + $0x2c48] sm:$0xff]
    %v1460 = vld [vmem:[#allocation2 + $0x2c50] sm:$0xff]
    %v1461 = vld [vmem:[#allocation2 + $0x2c58] sm:$0xff]
    %v1462 = vld [vmem:[#allocation2 + $0x2c60] sm:$0xff]
    %v1463 = vld [vmem:[#allocation2 + $0x2c68] sm:$0xff]
    %v1464 = vld [vmem:[#allocation2 + $0x2c70] sm:$0xff]
    %v1465 = vld [vmem:[#allocation2 + $0x2c78] sm:$0xff]
    %v1466 = vld [vmem:[#allocation2 + $0x2c80] sm:$0xff]
    %v1467 = vld [vmem:[#allocation2 + $0x2c88] sm:$0xff]
    %v1468 = vld [vmem:[#allocation2 + $0x2c90] sm:$0xff]
    %v1469 = vld [vmem:[#allocation2 + $0x2c98] sm:$0xff]
    %v1470 = vld [vmem:[#allocation2 + $0x2ca0] sm:$0xff]
    %v1471 = vld [vmem:[#allocation2 + $0x2ca8] sm:$0xff]
    %v1472 = vld [vmem:[#allocation2 + $0x2cb0] sm:$0xff]
    %v1473 = vld [vmem:[#allocation2 + $0x2cb8] sm:$0xff]
    %v1474 = vld [vmem:[#allocation2 + $0x2cc0] sm:$0xff]
    %v1475 = vld [vmem:[#allocation2 + $0x2cc8] sm:$0xff]
    %v1476 = vld [vmem:[#allocation2 + $0x2cd0] sm:$0xff]
    %v1477 = vld [vmem:[#allocation2 + $0x2cd8] sm:$0xff]
    %v1478 = vld [vmem:[#allocation2 + $0x2ce0] sm:$0xff]
    %v1479 = vld [vmem:[#allocation2 + $0x2ce8] sm:$0xff]
    %v1480 = vld [vmem:[#allocation2 + $0x2cf0] sm:$0xff]
    %v1481 = vld [vmem:[#allocation2 + $0x2cf8] sm:$0xff]
    %v1482 = vld [vmem:[#allocation2 + $0x2d00] sm:$0xff]
    %v1483 = vld [vmem:[#allocation2 + $0x2d08] sm:$0xff]
    %v1484 = vld [vmem:[#allocation2 + $0x2d10] sm:$0xff]
    %v1485 = vld [vmem:[#allocation2 + $0x2d18] sm:$0xff]
    %v1486 = vld [vmem:[#allocation2 + $0x2d20] sm:$0xff]
    %v1487 = vld [vmem:[#allocation2 + $0x2d28] sm:$0xff]
    %v1488 = vld [vmem:[#allocation2 + $0x2d30] sm:$0xff]
    %v1489 = vld [vmem:[#allocation2 + $0x2d38] sm:$0xff]
    %v1490 = vld [vmem:[#allocation2 + $0x2d40] sm:$0xff]
    %v1491 = vld [vmem:[#allocation2 + $0x2d48] sm:$0xff]
    %v1492 = vld [vmem:[#allocation2 + $0x2d50] sm:$0xff]
    %v1493 = vld [vmem:[#allocation2 + $0x2d58] sm:$0xff]
    %v1494 = vld [vmem:[#allocation2 + $0x2d60] sm:$0xff]
    %v1495 = vld [vmem:[#allocation2 + $0x2d68] sm:$0xff]
    %v1496 = vld [vmem:[#allocation2 + $0x2d70] sm:$0xff]
    %v1497 = vld [vmem:[#allocation2 + $0x2d78] sm:$0xff]
    %v1498 = vld [vmem:[#allocation2 + $0x2d80] sm:$0xff]
    %v1499 = vld [vmem:[#allocation2 + $0x2d88] sm:$0xff]
    %v1500 = vld [vmem:[#allocation2 + $0x2d90] sm:$0xff]
    %v1501 = vld [vmem:[#allocation2 + $0x2d98] sm:$0xff]
    %v1502 = vld [vmem:[#allocation2 + $0x2da0] sm:$0xff]
    %v1503 = vld [vmem:[#allocation2 + $0x2da8] sm:$0xff]
    %v1504 = vld [vmem:[#allocation2 + $0x2db0] sm:$0xff]
    %v1505 = vld [vmem:[#allocation2 + $0x2db8] sm:$0xff]
    %v1506 = vld [vmem:[#allocation2 + $0x2dc0] sm:$0xff]
    %v1507 = vld [vmem:[#allocation2 + $0x2dc8] sm:$0xff]
    %v1508 = vld [vmem:[#allocation2 + $0x2dd0] sm:$0xff]
    %v1509 = vld [vmem:[#allocation2 + $0x2dd8] sm:$0xff]
    %v1510 = vld [vmem:[#allocation2 + $0x2de0] sm:$0xff]
    %v1511 = vld [vmem:[#allocation2 + $0x2de8] sm:$0xff]
    %v1512 = vld [vmem:[#allocation2 + $0x2df0] sm:$0xff]
    %v1513 = vld [vmem:[#allocation2 + $0x2df8] sm:$0xff]
    %v1514 = vld [vmem:[#allocation2 + $0x2e00] sm:$0xff]
    %v1515 = vld [vmem:[#allocation2 + $0x2e08] sm:$0xff]
    %v1516 = vld [vmem:[#allocation2 + $0x2e10] sm:$0xff]
    %v1517 = vld [vmem:[#allocation2 + $0x2e18] sm:$0xff]
    %v1518 = vld [vmem:[#allocation2 + $0x2e20] sm:$0xff]
    %v1519 = vld [vmem:[#allocation2 + $0x2e28] sm:$0xff]
    %v1520 = vld [vmem:[#allocation2 + $0x2e30] sm:$0xff]
    %v1521 = vld [vmem:[#allocation2 + $0x2e38] sm:$0xff]
    %v1522 = vld [vmem:[#allocation2 + $0x2e40] sm:$0xff]
    %v1523 = vld [vmem:[#allocation2 + $0x2e48] sm:$0xff]
    %v1524 = vld [vmem:[#allocation2 + $0x2e50] sm:$0xff]
    %v1525 = vld [vmem:[#allocation2 + $0x2e58] sm:$0xff]
    %v1526 = vld [vmem:[#allocation2 + $0x2e60] sm:$0xff]
    %v1527 = vld [vmem:[#allocation2 + $0x2e68] sm:$0xff]
    %v1528 = vld [vmem:[#allocation2 + $0x2e70] sm:$0xff]
    %v1529 = vld [vmem:[#allocation2 + $0x2e78] sm:$0xff]
    %v1530 = vld [vmem:[#allocation2 + $0x2e80] sm:$0xff]
    %v1531 = vld [vmem:[#allocation2 + $0x2e88] sm:$0xff]
    %v1532 = vld [vmem:[#allocation2 + $0x2e90] sm:$0xff]
    %v1533 = vld [vmem:[#allocation2 + $0x2e98] sm:$0xff]
    %v1534 = vld [vmem:[#allocation2 + $0x2ea0] sm:$0xff]
    %v1535 = vld [vmem:[#allocation2 + $0x2ea8] sm:$0xff]
    %v1536 = vld [vmem:[#allocation2 + $0x2eb0] sm:$0xff]
    %v1537 = vld [vmem:[#allocation2 + $0x2eb8] sm:$0xff]
    %v1538 = vld [vmem:[#allocation2 + $0x2ec0] sm:$0xff]
    %v1539 = vld [vmem:[#allocation2 + $0x2ec8] sm:$0xff]
    %v1540 = vld [vmem:[#allocation2 + $0x2ed0] sm:$0xff]
    %v1541 = vld [vmem:[#allocation2 + $0x2ed8] sm:$0xff]
    %v1542 = vld [vmem:[#allocation2 + $0x2ee0] sm:$0xff]
    %v1543 = vld [vmem:[#allocation2 + $0x2ee8] sm:$0xff]
    %v1544 = vld [vmem:[#allocation2 + $0x2ef0] sm:$0xff]
    %v1545 = vld [vmem:[#allocation2 + $0x2ef8] sm:$0xff]
    %v1546 = vld [vmem:[#allocation2 + $0x2f00] sm:$0xff]
    %v1547 = vld [vmem:[#allocation2 + $0x2f08] sm:$0xff]
    %v1548 = vld [vmem:[#allocation2 + $0x2f10] sm:$0xff]
    %v1549 = vld [vmem:[#allocation2 + $0x2f18] sm:$0xff]
    %v1550 = vld [vmem:[#allocation2 + $0x2f20] sm:$0xff]
    %v1551 = vld [vmem:[#allocation2 + $0x2f28] sm:$0xff]
    %v1552 = vld [vmem:[#allocation2 + $0x2f30] sm:$0xff]
    %v1553 = vld [vmem:[#allocation2 + $0x2f38] sm:$0xff]
    %v1554 = vld [vmem:[#allocation2 + $0x2f40] sm:$0xff]
    %v1555 = vld [vmem:[#allocation2 + $0x2f48] sm:$0xff]
    %v1556 = vld [vmem:[#allocation2 + $0x2f50] sm:$0xff]
    %v1557 = vld [vmem:[#allocation2 + $0x2f58] sm:$0xff]
    %v1558 = vld [vmem:[#allocation2 + $0x2f60] sm:$0xff]
    %v1559 = vld [vmem:[#allocation2 + $0x2f68] sm:$0xff]
    %v1560 = vld [vmem:[#allocation2 + $0x2f70] sm:$0xff]
    %v1561 = vld [vmem:[#allocation2 + $0x2f78] sm:$0xff]
    %v1562 = vld [vmem:[#allocation2 + $0x2f80] sm:$0xff]
    %v1563 = vld [vmem:[#allocation2 + $0x2f88] sm:$0xff]
    %v1564 = vld [vmem:[#allocation2 + $0x2f90] sm:$0xff]
    %v1565 = vld [vmem:[#allocation2 + $0x2f98] sm:$0xff]
    %v1566 = vld [vmem:[#allocation2 + $0x2fa0] sm:$0xff]
    %v1567 = vld [vmem:[#allocation2 + $0x2fa8] sm:$0xff]
    %v1568 = vld [vmem:[#allocation2 + $0x2fb0] sm:$0xff]
    %v1569 = vld [vmem:[#allocation2 + $0x2fb8] sm:$0xff]
    %v1570 = vld [vmem:[#allocation2 + $0x2fc0] sm:$0xff]
    %v1571 = vld [vmem:[#allocation2 + $0x2fc8] sm:$0xff]
    %v1572 = vld [vmem:[#allocation2 + $0x2fd0] sm:$0xff]
    %v1573 = vld [vmem:[#allocation2 + $0x2fd8] sm:$0xff]
    %v1574 = vld [vmem:[#allocation2 + $0x2fe0] sm:$0xff]
    %v1575 = vld [vmem:[#allocation2 + $0x2fe8] sm:$0xff]
    %v1576 = vld [vmem:[#allocation2 + $0x2ff0] sm:$0xff]
    %v1577 = vld [vmem:[#allocation2 + $0x2ff8] sm:$0xff]
    %v1578 = vld [vmem:[#allocation2 + $0x3000] sm:$0xff]
    %v1579 = vld [vmem:[#allocation2 + $0x3008] sm:$0xff]
    %v1580 = vld [vmem:[#allocation2 + $0x3010] sm:$0xff]
    %v1581 = vld [vmem:[#allocation2 + $0x3018] sm:$0xff]
    %v1582 = vld [vmem:[#allocation2 + $0x3020] sm:$0xff]
    %v1583 = vld [vmem:[#allocation2 + $0x3028] sm:$0xff]
    %v1584 = vld [vmem:[#allocation2 + $0x3030] sm:$0xff]
    %v1585 = vld [vmem:[#allocation2 + $0x3038] sm:$0xff]
    %v1586 = vld [vmem:[#allocation2 + $0x3040] sm:$0xff]
    %v1587 = vld [vmem:[#allocation2 + $0x3048] sm:$0xff]
    %v1588 = vld [vmem:[#allocation2 + $0x3050] sm:$0xff]
    %v1589 = vld [vmem:[#allocation2 + $0x3058] sm:$0xff]
    %v1590 = vld [vmem:[#allocation2 + $0x3060] sm:$0xff]
    %v1591 = vld [vmem:[#allocation2 + $0x3068] sm:$0xff]
    %v1592 = vld [vmem:[#allocation2 + $0x3070] sm:$0xff]
    %v1593 = vld [vmem:[#allocation2 + $0x3078] sm:$0xff]
    %v1594 = vld [vmem:[#allocation2 + $0x3080] sm:$0xff]
    %v1595 = vld [vmem:[#allocation2 + $0x3088] sm:$0xff]
    %v1596 = vld [vmem:[#allocation2 + $0x3090] sm:$0xff]
    %v1597 = vld [vmem:[#allocation2 + $0x3098] sm:$0xff]
    %v1598 = vld [vmem:[#allocation2 + $0x30a0] sm:$0xff]
    %v1599 = vld [vmem:[#allocation2 + $0x30a8] sm:$0xff]
    %v1600 = vld [vmem:[#allocation2 + $0x30b0] sm:$0xff]
    %v1601 = vld [vmem:[#allocation2 + $0x30b8] sm:$0xff]
    %v1602 = vld [vmem:[#allocation2 + $0x30c0] sm:$0xff]
    %v1603 = vld [vmem:[#allocation2 + $0x30c8] sm:$0xff]
    %v1604 = vld [vmem:[#allocation2 + $0x30d0] sm:$0xff]
    %v1605 = vld [vmem:[#allocation2 + $0x30d8] sm:$0xff]
    %v1606 = vld [vmem:[#allocation2 + $0x30e0] sm:$0xff]
    %v1607 = vld [vmem:[#allocation2 + $0x30e8] sm:$0xff]
    %v1608 = vld [vmem:[#allocation2 + $0x30f0] sm:$0xff]
    %v1609 = vld [vmem:[#allocation2 + $0x30f8] sm:$0xff]
    %v1610 = vld [vmem:[%s2] sm:$0xf]
    %v1612 = vlaneseq
    %v1613 = vshrl.u32 %v1612, 7
    %v1614 = vsub.s32 0, %v1613
    %v1615 = vrot.slane %v1610, %v1614
    %v1616 = vlaneseq
    %v1617 = vshrl.u32 %v1616, 7
    %v1618 = vsub.s32 1, %v1617
    %v1619 = vrot.slane %v1610, %v1618
    %v1620 = vlaneseq
    %v1621 = vshrl.u32 %v1620, 7
    %v1622 = vsub.s32 2, %v1621
    %v1623 = vrot.slane %v1610, %v1622
    %v1624 = vlaneseq
    %v1625 = vshrl.u32 %v1624, 7
    %v1626 = vsub.s32 3, %v1625
    %v1627 = vrot.slane %v1610, %v1626
    %v1639 = vcombine.high %v35, %v35
    %v1641 = vunpack.c.l.s4 1983009808
    %v1642 = vunpack.c.0.s8 %v1641
    %v1643 = vlaneseq
    %v1644 = vshrl.u32 %v1643, 7
    %v1645 = vsub.s32 %v1642, %v1644
    %v1646 = vrot.slane %v35, %v1645
    %v1648 = vunpack.c.l.s4 1983009808
    %v1649 = vunpack.c.0.s8 %v1648
    %v1650 = vlaneseq
    %v1651 = vshrl.u32 %v1650, 7
    %v1652 = vsub.s32 %v1649, %v1651
    %v1653 = vrot.slane %v1639, %v1652
    %v1654 = vcombine.high %v1646, %v1646
    %v1655 = vcombine.high %v1653, %v1653
    %v1656 = vcombine.high %v36, %v36
    %v1658 = vunpack.c.l.s4 1983009808
    %v1659 = vunpack.c.0.s8 %v1658
    %v1660 = vlaneseq
    %v1661 = vshrl.u32 %v1660, 7
    %v1662 = vsub.s32 %v1659, %v1661
    %v1663 = vrot.slane %v36, %v1662
    %v1665 = vunpack.c.l.s4 1983009808
    %v1666 = vunpack.c.0.s8 %v1665
    %v1667 = vlaneseq
    %v1668 = vshrl.u32 %v1667, 7
    %v1669 = vsub.s32 %v1666, %v1668
    %v1670 = vrot.slane %v1656, %v1669
    %v1671 = vcombine.high %v1663, %v1663
    %v1672 = vcombine.high %v1670, %v1670
    %v1673 = vcombine.high %v37, %v37
    %v1675 = vunpack.c.l.s4 1983009808
    %v1676 = vunpack.c.0.s8 %v1675
    %v1677 = vlaneseq
    %v1678 = vshrl.u32 %v1677, 7
    %v1679 = vsub.s32 %v1676, %v1678
    %v1680 = vrot.slane %v37, %v1679
    %v1682 = vunpack.c.l.s4 1983009808
    %v1683 = vunpack.c.0.s8 %v1682
    %v1684 = vlaneseq
    %v1685 = vshrl.u32 %v1684, 7
    %v1686 = vsub.s32 %v1683, %v1685
    %v1687 = vrot.slane %v1673, %v1686
    %v1688 = vcombine.high %v1680, %v1680
    %v1689 = vcombine.high %v1687, %v1687
    %v1690 = vcombine.high %v38, %v38
    %v1692 = vunpack.c.l.s4 1983009808
    %v1693 = vunpack.c.0.s8 %v1692
    %v1694 = vlaneseq
    %v1695 = vshrl.u32 %v1694, 7
    %v1696 = vsub.s32 %v1693, %v1695
    %v1697 = vrot.slane %v38, %v1696
    %v1699 = vunpack.c.l.s4 1983009808
    %v1700 = vunpack.c.0.s8 %v1699
    %v1701 = vlaneseq
    %v1702 = vshrl.u32 %v1701, 7
    %v1703 = vsub.s32 %v1700, %v1702
    %v1704 = vrot.slane %v1690, %v1703
    %v1705 = vcombine.high %v1697, %v1697
    %v1706 = vcombine.high %v1704, %v1704
    %v1707 = vcombine.high %v39, %v39
    %v1709 = vunpack.c.l.s4 1983009808
    %v1710 = vunpack.c.0.s8 %v1709
    %v1711 = vlaneseq
    %v1712 = vshrl.u32 %v1711, 7
    %v1713 = vsub.s32 %v1710, %v1712
    %v1714 = vrot.slane %v39, %v1713
    %v1716 = vunpack.c.l.s4 1983009808
    %v1717 = vunpack.c.0.s8 %v1716
    %v1718 = vlaneseq
    %v1719 = vshrl.u32 %v1718, 7
    %v1720 = vsub.s32 %v1717, %v1719
    %v1721 = vrot.slane %v1707, %v1720
    %v1722 = vcombine.high %v1714, %v1714
    %v1723 = vcombine.high %v1721, %v1721
    %v1724 = vcombine.high %v40, %v40
    %v1726 = vunpack.c.l.s4 1983009808
    %v1727 = vunpack.c.0.s8 %v1726
    %v1728 = vlaneseq
    %v1729 = vshrl.u32 %v1728, 7
    %v1730 = vsub.s32 %v1727, %v1729
    %v1731 = vrot.slane %v40, %v1730
    %v1733 = vunpack.c.l.s4 1983009808
    %v1734 = vunpack.c.0.s8 %v1733
    %v1735 = vlaneseq
    %v1736 = vshrl.u32 %v1735, 7
    %v1737 = vsub.s32 %v1734, %v1736
    %v1738 = vrot.slane %v1724, %v1737
    %v1739 = vcombine.high %v1731, %v1731
    %v1740 = vcombine.high %v1738, %v1738
    %v1742 = vunpack.c.l.s4 1983009808
    %v1743 = vunpack.c.0.s8 %v1742
    %v1744 = vlaneseq
    %v1745 = vshrl.u32 %v1744, 7
    %v1746 = vsub.s32 %v1743, %v1745
    %v1747 = vrot.slane %v41, %v1746
    %vm1772 = vcmask 523264
    %v1773 = vsel %vm1772, %v1747, 0
    %1775 = vmatprep.subr.mxu0 %v43
    %1776 = vmatpush1.msra.mxu0 %v42
    %1777 = vmatprep.subr.mxu0 %v47
    %1778 = vmatpush1.msra.mxu0 %v46
    %1779 = vmatprep.subr.mxu0 %v51
    %1780 = vmatpush1.msra.mxu0 %v50
    %1781 = vmatprep.subr.mxu0 %v55
    %1782 = vmatpush1.msra.mxu0 %v54
    %1783 = vmatprep.subr.mxu0 %v59
    %1784 = vmatpush1.msra.mxu0 %v58
    %1785 = vmatprep.subr.mxu0 %v63
    %1786 = vmatpush1.msra.mxu0 %v62
    %1787 = vmatprep.subr.mxu0 %v67
    %1788 = vmatpush1.msra.mxu0 %v66
    %1789 = vmatprep.subr.mxu0 %v71
    %1790 = vmatpush1.msra.mxu0 %v70
    %1791 = vmatprep.subr.mxu0 %v75
    %1792 = vmatpush1.msra.mxu0 %v74
    %1793 = vmatprep.subr.mxu0 %v79
    %1794 = vmatpush1.msra.mxu0 %v78
    %1795 = vmatprep.subr.mxu0 %v83
    %1796 = vmatpush1.msra.mxu0 %v82
    %1797 = vmatprep.subr.mxu0 %v87
    %1798 = vmatpush1.msra.mxu0 %v86
    %1799 = vmatprep.subr.mxu0 %v91
    %1800 = vmatpush1.msra.mxu0 %v90
    %1801 = vmatprep.subr.mxu0 %v95
    %1802 = vmatpush1.msra.mxu0 %v94
    %1803 = vmatprep.subr.mxu0 %v99
    %1804 = vmatpush1.msra.mxu0 %v98
    %1805 = vmatprep.subr.mxu0 %v103
    %1806 = vmatpush1.msra.mxu0 %v102
    %1807 = vmatprep.subr.mxu0 %v107
    %1808 = vmatpush1.msra.mxu0 %v106
    %1809 = vmatprep.subr.mxu0 %v111
    %1810 = vmatpush1.msra.mxu0 %v110
    %1811 = vmatprep.subr.mxu0 %v115
    %1812 = vmatpush1.msra.mxu0 %v114
    %1813 = vmatprep.subr.mxu0 %v119
    %1814 = vmatpush1.msra.mxu0 %v118
    %1815 = vmatprep.subr.mxu0 %v123
    %1816 = vmatpush1.msra.mxu0 %v122
    %1817 = vmatprep.subr.mxu0 %v127
    %1818 = vmatpush1.msra.mxu0 %v126
    %1819 = vmatprep.subr.mxu0 %v131
    %1820 = vmatpush1.msra.mxu0 %v130
    %1821 = vmatprep.subr.mxu0 %v135
    %1822 = vmatpush1.msra.mxu0 %v134
    %1823 = vmatprep.subr.mxu0 %v139
    %1824 = vmatpush1.msra.mxu0 %v138
    %1825 = vmatprep.subr.mxu0 %v143
    %1826 = vmatpush1.msra.mxu0 %v142
    %1827 = vmatprep.subr.mxu0 %v147
    %1828 = vmatpush1.msra.mxu0 %v146
    %1829 = vmatprep.subr.mxu0 %v151
    %1830 = vmatpush1.msra.mxu0 %v150
    %1831 = vmatprep.subr.mxu0 %v155
    %1832 = vmatpush1.msra.mxu0 %v154
    %1833 = vmatprep.subr.mxu0 %v159
    %1834 = vmatpush1.msra.mxu0 %v158
    %1835 = vmatprep.subr.mxu0 %v163
    %1836 = vmatpush1.msra.mxu0 %v162
    %1837 = vmatprep.subr.mxu0 %v167
    %1838 = vmatpush1.msra.mxu0 %v166
    %1839 = vmatprep.mubr.f32.mxu0 %v1654
    %1840 = vmatmul.mubr.f32.gmra.mrb[0].mxu0 %v1646
    %v1841 = vpop.f32.mrb[0].mxu0
    %v1842 = vadd.f32 %v1615, %v1841
    %v1843 = vpop.f32.mrb[0].mxu0
    %v1844 = vadd.f32 %v1619, %v1843
    %1845 = vdwg.mxu0
    %1846 = vmatprep.subr.mxu0 %v171
    %1847 = vmatpush1.msra.mxu0 %v170
    %1848 = vmatprep.subr.mxu0 %v175
    %1849 = vmatpush1.msra.mxu0 %v174
    %1850 = vmatprep.subr.mxu0 %v179
    %1851 = vmatpush1.msra.mxu0 %v178
    %1852 = vmatprep.subr.mxu0 %v183
    %1853 = vmatpush1.msra.mxu0 %v182
    %1854 = vmatprep.subr.mxu0 %v187
    %1855 = vmatpush1.msra.mxu0 %v186
    %1856 = vmatprep.subr.mxu0 %v191
    %1857 = vmatpush1.msra.mxu0 %v190
    %1858 = vmatprep.subr.mxu0 %v195
    %1859 = vmatpush1.msra.mxu0 %v194
    %1860 = vmatprep.subr.mxu0 %v199
    %1861 = vmatpush1.msra.mxu0 %v198
    %1862 = vmatprep.subr.mxu0 %v203
    %1863 = vmatpush1.msra.mxu0 %v202
    %1864 = vmatprep.subr.mxu0 %v207
    %1865 = vmatpush1.msra.mxu0 %v206
    %1866 = vmatprep.subr.mxu0 %v211
    %1867 = vmatpush1.msra.mxu0 %v210
    %1868 = vmatprep.subr.mxu0 %v215
    %1869 = vmatpush1.msra.mxu0 %v214
    %1870 = vmatprep.subr.mxu0 %v219
    %1871 = vmatpush1.msra.mxu0 %v218
    %1872 = vmatprep.subr.mxu0 %v223
    %1873 = vmatpush1.msra.mxu0 %v222
    %1874 = vmatprep.subr.mxu0 %v227
    %1875 = vmatpush1.msra.mxu0 %v226
    %1876 = vmatprep.subr.mxu0 %v231
    %1877 = vmatpush1.msra.mxu0 %v230
    %1878 = vmatprep.subr.mxu0 %v235
    %1879 = vmatpush1.msra.mxu0 %v234
    %1880 = vmatprep.subr.mxu0 %v239
    %1881 = vmatpush1.msra.mxu0 %v238
    %1882 = vmatprep.subr.mxu0 %v243
    %1883 = vmatpush1.msra.mxu0 %v242
    %1884 = vmatprep.subr.mxu0 %v247
    %1885 = vmatpush1.msra.mxu0 %v246
    %1886 = vmatprep.subr.mxu0 %v251
    %1887 = vmatpush1.msra.mxu0 %v250
    %1888 = vmatprep.subr.mxu0 %v255
    %1889 = vmatpush1.msra.mxu0 %v254
    %1890 = vmatprep.subr.mxu0 %v259
    %1891 = vmatpush1.msra.mxu0 %v258
    %1892 = vmatprep.subr.mxu0 %v263
    %1893 = vmatpush1.msra.mxu0 %v262
    %1894 = vmatprep.subr.mxu0 %v267
    %1895 = vmatpush1.msra.mxu0 %v266
    %1896 = vmatprep.subr.mxu0 %v271
    %1897 = vmatpush1.msra.mxu0 %v270
    %1898 = vmatprep.subr.mxu0 %v275
    %1899 = vmatpush1.msra.mxu0 %v274
    %1900 = vmatprep.subr.mxu0 %v279
    %1901 = vmatpush1.msra.mxu0 %v278
    %1902 = vmatprep.subr.mxu0 %v283
    %1903 = vmatpush1.msra.mxu0 %v282
    %1904 = vmatprep.subr.mxu0 %v287
    %1905 = vmatpush1.msra.mxu0 %v286
    %1906 = vmatprep.subr.mxu0 %v291
    %1907 = vmatpush1.msra.mxu0 %v290
    %1908 = vmatprep.subr.mxu0 %v295
    %1909 = vmatpush1.msra.mxu0 %v294
    %1910 = vmatprep.mubr.f32.mxu0 %v1655
    %1911 = vmatmul.mubr.f32.gmra.mrb[0].mxu0 %v1653
    %v1912 = vpop.f32.mrb[0].mxu0
    %v1913 = vadd.f32 %v1842, %v1912
    %v1914 = vpop.f32.mrb[0].mxu0
    %v1915 = vadd.f32 %v1844, %v1914
    %1916 = vdwg.mxu0
    %1917 = vmatprep.subr.mxu0 %v299
    %1918 = vmatpush1.msra.mxu0 %v298
    %1919 = vmatprep.subr.mxu0 %v303
    %1920 = vmatpush1.msra.mxu0 %v302
    %1921 = vmatprep.subr.mxu0 %v307
    %1922 = vmatpush1.msra.mxu0 %v306
    %1923 = vmatprep.subr.mxu0 %v311
    %1924 = vmatpush1.msra.mxu0 %v310
    %1925 = vmatprep.subr.mxu0 %v315
    %1926 = vmatpush1.msra.mxu0 %v314
    %1927 = vmatprep.subr.mxu0 %v319
    %1928 = vmatpush1.msra.mxu0 %v318
    %1929 = vmatprep.subr.mxu0 %v323
    %1930 = vmatpush1.msra.mxu0 %v322
    %1931 = vmatprep.subr.mxu0 %v327
    %1932 = vmatpush1.msra.mxu0 %v326
    %1933 = vmatprep.subr.mxu0 %v331
    %1934 = vmatpush1.msra.mxu0 %v330
    %1935 = vmatprep.subr.mxu0 %v335
    %1936 = vmatpush1.msra.mxu0 %v334
    %1937 = vmatprep.subr.mxu0 %v339
    %1938 = vmatpush1.msra.mxu0 %v338
    %1939 = vmatprep.subr.mxu0 %v343
    %1940 = vmatpush1.msra.mxu0 %v342
    %1941 = vmatprep.subr.mxu0 %v347
    %1942 = vmatpush1.msra.mxu0 %v346
    %1943 = vmatprep.subr.mxu0 %v351
    %1944 = vmatpush1.msra.mxu0 %v350
    %1945 = vmatprep.subr.mxu0 %v355
    %1946 = vmatpush1.msra.mxu0 %v354
    %1947 = vmatprep.subr.mxu0 %v359
    %1948 = vmatpush1.msra.mxu0 %v358
    %1949 = vmatprep.subr.mxu0 %v363
    %1950 = vmatpush1.msra.mxu0 %v362
    %1951 = vmatprep.subr.mxu0 %v367
    %1952 = vmatpush1.msra.mxu0 %v366
    %1953 = vmatprep.subr.mxu0 %v371
    %1954 = vmatpush1.msra.mxu0 %v370
    %1955 = vmatprep.subr.mxu0 %v375
    %1956 = vmatpush1.msra.mxu0 %v374
    %1957 = vmatprep.subr.mxu0 %v379
    %1958 = vmatpush1.msra.mxu0 %v378
    %1959 = vmatprep.subr.mxu0 %v383
    %1960 = vmatpush1.msra.mxu0 %v382
    %1961 = vmatprep.subr.mxu0 %v387
    %1962 = vmatpush1.msra.mxu0 %v386
    %1963 = vmatprep.subr.mxu0 %v391
    %1964 = vmatpush1.msra.mxu0 %v390
    %1965 = vmatprep.subr.mxu0 %v395
    %1966 = vmatpush1.msra.mxu0 %v394
    %1967 = vmatprep.subr.mxu0 %v399
    %1968 = vmatpush1.msra.mxu0 %v398
    %1969 = vmatprep.subr.mxu0 %v403
    %1970 = vmatpush1.msra.mxu0 %v402
    %1971 = vmatprep.subr.mxu0 %v407
    %1972 = vmatpush1.msra.mxu0 %v406
    %1973 = vmatprep.subr.mxu0 %v411
    %1974 = vmatpush1.msra.mxu0 %v410
    %1975 = vmatprep.subr.mxu0 %v415
    %1976 = vmatpush1.msra.mxu0 %v414
    %1977 = vmatprep.subr.mxu0 %v419
    %1978 = vmatpush1.msra.mxu0 %v418
    %1979 = vmatprep.subr.mxu0 %v423
    %1980 = vmatpush1.msra.mxu0 %v422
    %1981 = vmatprep.mubr.f32.mxu0 %v1671
    %1982 = vmatmul.mubr.f32.gmra.mrb[0].mxu0 %v1663
    %v1983 = vpop.f32.mrb[0].mxu0
    %v1984 = vadd.f32 %v1913, %v1983
    %v1985 = vpop.f32.mrb[0].mxu0
    %v1986 = vadd.f32 %v1915, %v1985
    %1987 = vdwg.mxu0
    %1988 = vmatprep.subr.mxu0 %v427
    %1989 = vmatpush1.msra.mxu0 %v426
    %1990 = vmatprep.subr.mxu0 %v431
    %1991 = vmatpush1.msra.mxu0 %v430
    %1992 = vmatprep.subr.mxu0 %v435
    %1993 = vmatpush1.msra.mxu0 %v434
    %1994 = vmatprep.subr.mxu0 %v439
    %1995 = vmatpush1.msra.mxu0 %v438
    %1996 = vmatprep.subr.mxu0 %v443
    %1997 = vmatpush1.msra.mxu0 %v442
    %1998 = vmatprep.subr.mxu0 %v447
    %1999 = vmatpush1.msra.mxu0 %v446
    %2000 = vmatprep.subr.mxu0 %v451
    %2001 = vmatpush1.msra.mxu0 %v450
    %2002 = vmatprep.subr.mxu0 %v455
    %2003 = vmatpush1.msra.mxu0 %v454
    %2004 = vmatprep.subr.mxu0 %v459
    %2005 = vmatpush1.msra.mxu0 %v458
    %2006 = vmatprep.subr.mxu0 %v463
    %2007 = vmatpush1.msra.mxu0 %v462
    %2008 = vmatprep.subr.mxu0 %v467
    %2009 = vmatpush1.msra.mxu0 %v466
    %2010 = vmatprep.subr.mxu0 %v471
    %2011 = vmatpush1.msra.mxu0 %v470
    %2012 = vmatprep.subr.mxu0 %v475
    %2013 = vmatpush1.msra.mxu0 %v474
    %2014 = vmatprep.subr.mxu0 %v479
    %2015 = vmatpush1.msra.mxu0 %v478
    %2016 = vmatprep.subr.mxu0 %v483
    %2017 = vmatpush1.msra.mxu0 %v482
    %2018 = vmatprep.subr.mxu0 %v487
    %2019 = vmatpush1.msra.mxu0 %v486
    %2020 = vmatprep.subr.mxu0 %v491
    %2021 = vmatpush1.msra.mxu0 %v490
    %2022 = vmatprep.subr.mxu0 %v495
    %2023 = vmatpush1.msra.mxu0 %v494
    %2024 = vmatprep.subr.mxu0 %v499
    %2025 = vmatpush1.msra.mxu0 %v498
    %2026 = vmatprep.subr.mxu0 %v503
    %2027 = vmatpush1.msra.mxu0 %v502
    %2028 = vmatprep.subr.mxu0 %v507
    %2029 = vmatpush1.msra.mxu0 %v506
    %2030 = vmatprep.subr.mxu0 %v511
    %2031 = vmatpush1.msra.mxu0 %v510
    %2032 = vmatprep.subr.mxu0 %v515
    %2033 = vmatpush1.msra.mxu0 %v514
    %2034 = vmatprep.subr.mxu0 %v519
    %2035 = vmatpush1.msra.mxu0 %v518
    %2036 = vmatprep.subr.mxu0 %v523
    %2037 = vmatpush1.msra.mxu0 %v522
    %2038 = vmatprep.subr.mxu0 %v527
    %2039 = vmatpush1.msra.mxu0 %v526
    %2040 = vmatprep.subr.mxu0 %v531
    %2041 = vmatpush1.msra.mxu0 %v530
    %2042 = vmatprep.subr.mxu0 %v535
    %2043 = vmatpush1.msra.mxu0 %v534
    %2044 = vmatprep.subr.mxu0 %v539
    %2045 = vmatpush1.msra.mxu0 %v538
    %2046 = vmatprep.subr.mxu0 %v543
    %2047 = vmatpush1.msra.mxu0 %v542
    %2048 = vmatprep.subr.mxu0 %v547
    %2049 = vmatpush1.msra.mxu0 %v546
    %2050 = vmatprep.subr.mxu0 %v551
    %2051 = vmatpush1.msra.mxu0 %v550
    %2052 = vmatprep.mubr.f32.mxu0 %v1672
    %2053 = vmatmul.mubr.f32.gmra.mrb[0].mxu0 %v1670
    %v2054 = vpop.f32.mrb[0].mxu0
    %v2055 = vadd.f32 %v1984, %v2054
    %v2056 = vpop.f32.mrb[0].mxu0
    %v2057 = vadd.f32 %v1986, %v2056
    %2058 = vdwg.mxu0
    %2059 = vmatprep.subr.mxu0 %v555
    %2060 = vmatpush1.msra.mxu0 %v554
    %2061 = vmatprep.subr.mxu0 %v559
    %2062 = vmatpush1.msra.mxu0 %v558
    %2063 = vmatprep.subr.mxu0 %v563
    %2064 = vmatpush1.msra.mxu0 %v562
    %2065 = vmatprep.subr.mxu0 %v567
    %2066 = vmatpush1.msra.mxu0 %v566
    %2067 = vmatprep.subr.mxu0 %v571
    %2068 = vmatpush1.msra.mxu0 %v570
    %2069 = vmatprep.subr.mxu0 %v575
    %2070 = vmatpush1.msra.mxu0 %v574
    %2071 = vmatprep.subr.mxu0 %v579
    %2072 = vmatpush1.msra.mxu0 %v578
    %2073 = vmatprep.subr.mxu0 %v583
    %2074 = vmatpush1.msra.mxu0 %v582
    %2075 = vmatprep.subr.mxu0 %v587
    %2076 = vmatpush1.msra.mxu0 %v586
    %2077 = vmatprep.subr.mxu0 %v591
    %2078 = vmatpush1.msra.mxu0 %v590
    %2079 = vmatprep.subr.mxu0 %v595
    %2080 = vmatpush1.msra.mxu0 %v594
    %2081 = vmatprep.subr.mxu0 %v599
    %2082 = vmatpush1.msra.mxu0 %v598
    %2083 = vmatprep.subr.mxu0 %v603
    %2084 = vmatpush1.msra.mxu0 %v602
    %2085 = vmatprep.subr.mxu0 %v607
    %2086 = vmatpush1.msra.mxu0 %v606
    %2087 = vmatprep.subr.mxu0 %v611
    %2088 = vmatpush1.msra.mxu0 %v610
    %2089 = vmatprep.subr.mxu0 %v615
    %2090 = vmatpush1.msra.mxu0 %v614
    %2091 = vmatprep.subr.mxu0 %v619
    %2092 = vmatpush1.msra.mxu0 %v618
    %2093 = vmatprep.subr.mxu0 %v623
    %2094 = vmatpush1.msra.mxu0 %v622
    %2095 = vmatprep.subr.mxu0 %v627
    %2096 = vmatpush1.msra.mxu0 %v626
    %2097 = vmatprep.subr.mxu0 %v631
    %2098 = vmatpush1.msra.mxu0 %v630
    %2099 = vmatprep.subr.mxu0 %v635
    %2100 = vmatpush1.msra.mxu0 %v634
    %2101 = vmatprep.subr.mxu0 %v639
    %2102 = vmatpush1.msra.mxu0 %v638
    %2103 = vmatprep.subr.mxu0 %v643
    %2104 = vmatpush1.msra.mxu0 %v642
    %2105 = vmatprep.subr.mxu0 %v647
    %2106 = vmatpush1.msra.mxu0 %v646
    %2107 = vmatprep.subr.mxu0 %v651
    %2108 = vmatpush1.msra.mxu0 %v650
    %2109 = vmatprep.subr.mxu0 %v655
    %2110 = vmatpush1.msra.mxu0 %v654
    %2111 = vmatprep.subr.mxu0 %v659
    %2112 = vmatpush1.msra.mxu0 %v658
    %2113 = vmatprep.subr.mxu0 %v663
    %2114 = vmatpush1.msra.mxu0 %v662
    %2115 = vmatprep.subr.mxu0 %v667
    %2116 = vmatpush1.msra.mxu0 %v666
    %2117 = vmatprep.subr.mxu0 %v671
    %2118 = vmatpush1.msra.mxu0 %v670
    %2119 = vmatprep.subr.mxu0 %v675
    %2120 = vmatpush1.msra.mxu0 %v674
    %2121 = vmatprep.subr.mxu0 %v679
    %2122 = vmatpush1.msra.mxu0 %v678
    %2123 = vmatprep.mubr.f32.mxu0 %v1688
    %2124 = vmatmul.mubr.f32.gmra.mrb[0].mxu0 %v1680
    %v2125 = vpop.f32.mrb[0].mxu0
    %v2126 = vadd.f32 %v2055, %v2125
    %v2127 = vpop.f32.mrb[0].mxu0
    %v2128 = vadd.f32 %v2057, %v2127
    %2129 = vdwg.mxu0
    %2130 = vmatprep.subr.mxu0 %v683
    %2131 = vmatpush1.msra.mxu0 %v682
    %2132 = vmatprep.subr.mxu0 %v687
    %2133 = vmatpush1.msra.mxu0 %v686
    %2134 = vmatprep.subr.mxu0 %v691
    %2135 = vmatpush1.msra.mxu0 %v690
    %2136 = vmatprep.subr.mxu0 %v695
    %2137 = vmatpush1.msra.mxu0 %v694
    %2138 = vmatprep.subr.mxu0 %v699
    %2139 = vmatpush1.msra.mxu0 %v698
    %2140 = vmatprep.subr.mxu0 %v703
    %2141 = vmatpush1.msra.mxu0 %v702
    %2142 = vmatprep.subr.mxu0 %v707
    %2143 = vmatpush1.msra.mxu0 %v706
    %2144 = vmatprep.subr.mxu0 %v711
    %2145 = vmatpush1.msra.mxu0 %v710
    %2146 = vmatprep.subr.mxu0 %v715
    %2147 = vmatpush1.msra.mxu0 %v714
    %2148 = vmatprep.subr.mxu0 %v719
    %2149 = vmatpush1.msra.mxu0 %v718
    %2150 = vmatprep.subr.mxu0 %v723
    %2151 = vmatpush1.msra.mxu0 %v722
    %2152 = vmatprep.subr.mxu0 %v727
    %2153 = vmatpush1.msra.mxu0 %v726
    %2154 = vmatprep.subr.mxu0 %v731
    %2155 = vmatpush1.msra.mxu0 %v730
    %2156 = vmatprep.subr.mxu0 %v735
    %2157 = vmatpush1.msra.mxu0 %v734
    %2158 = vmatprep.subr.mxu0 %v739
    %2159 = vmatpush1.msra.mxu0 %v738
    %2160 = vmatprep.subr.mxu0 %v743
    %2161 = vmatpush1.msra.mxu0 %v742
    %2162 = vmatprep.subr.mxu0 %v747
    %2163 = vmatpush1.msra.mxu0 %v746
    %2164 = vmatprep.subr.mxu0 %v751
    %2165 = vmatpush1.msra.mxu0 %v750
    %2166 = vmatprep.subr.mxu0 %v755
    %2167 = vmatpush1.msra.mxu0 %v754
    %2168 = vmatprep.subr.mxu0 %v759
    %2169 = vmatpush1.msra.mxu0 %v758
    %2170 = vmatprep.subr.mxu0 %v763
    %2171 = vmatpush1.msra.mxu0 %v762
    %2172 = vmatprep.subr.mxu0 %v767
    %2173 = vmatpush1.msra.mxu0 %v766
    %2174 = vmatprep.subr.mxu0 %v771
    %2175 = vmatpush1.msra.mxu0 %v770
    %2176 = vmatprep.subr.mxu0 %v775
    %2177 = vmatpush1.msra.mxu0 %v774
    %2178 = vmatprep.subr.mxu0 %v779
    %2179 = vmatpush1.msra.mxu0 %v778
    %2180 = vmatprep.subr.mxu0 %v783
    %2181 = vmatpush1.msra.mxu0 %v782
    %2182 = vmatprep.subr.mxu0 %v787
    %2183 = vmatpush1.msra.mxu0 %v786
    %2184 = vmatprep.subr.mxu0 %v791
    %2185 = vmatpush1.msra.mxu0 %v790
    %2186 = vmatprep.subr.mxu0 %v795
    %2187 = vmatpush1.msra.mxu0 %v794
    %2188 = vmatprep.subr.mxu0 %v799
    %2189 = vmatpush1.msra.mxu0 %v798
    %2190 = vmatprep.subr.mxu0 %v803
    %2191 = vmatpush1.msra.mxu0 %v802
    %2192 = vmatprep.subr.mxu0 %v807
    %2193 = vmatpush1.msra.mxu0 %v806
    %2194 = vmatprep.mubr.f32.mxu0 %v1689
    %2195 = vmatmul.mubr.f32.gmra.mrb[0].mxu0 %v1687
    %v2196 = vpop.f32.mrb[0].mxu0
    %v2197 = vadd.f32 %v2126, %v2196
    %v2198 = vpop.f32.mrb[0].mxu0
    %v2199 = vadd.f32 %v2128, %v2198
    %2200 = vdwg.mxu0
    %2201 = vmatprep.subr.mxu0 %v811
    %2202 = vmatpush1.msra.mxu0 %v810
    %2203 = vmatprep.subr.mxu0 %v815
    %2204 = vmatpush1.msra.mxu0 %v814
    %2205 = vmatprep.subr.mxu0 %v819
    %2206 = vmatpush1.msra.mxu0 %v818
    %2207 = vmatprep.subr.mxu0 %v823
    %2208 = vmatpush1.msra.mxu0 %v822
    %2209 = vmatprep.subr.mxu0 %v827
    %2210 = vmatpush1.msra.mxu0 %v826
    %2211 = vmatprep.subr.mxu0 %v831
    %2212 = vmatpush1.msra.mxu0 %v830
    %2213 = vmatprep.subr.mxu0 %v835
    %2214 = vmatpush1.msra.mxu0 %v834
    %2215 = vmatprep.subr.mxu0 %v839
    %2216 = vmatpush1.msra.mxu0 %v838
    %2217 = vmatprep.subr.mxu0 %v843
    %2218 = vmatpush1.msra.mxu0 %v842
    %2219 = vmatprep.subr.mxu0 %v847
    %2220 = vmatpush1.msra.mxu0 %v846
    %2221 = vmatprep.subr.mxu0 %v851
    %2222 = vmatpush1.msra.mxu0 %v850
    %2223 = vmatprep.subr.mxu0 %v855
    %2224 = vmatpush1.msra.mxu0 %v854
    %2225 = vmatprep.subr.mxu0 %v859
    %2226 = vmatpush1.msra.mxu0 %v858
    %2227 = vmatprep.subr.mxu0 %v863
    %2228 = vmatpush1.msra.mxu0 %v862
    %2229 = vmatprep.subr.mxu0 %v867
    %2230 = vmatpush1.msra.mxu0 %v866
    %2231 = vmatprep.subr.mxu0 %v871
    %2232 = vmatpush1.msra.mxu0 %v870
    %2233 = vmatprep.subr.mxu0 %v875
    %2234 = vmatpush1.msra.mxu0 %v874
    %2235 = vmatprep.subr.mxu0 %v879
    %2236 = vmatpush1.msra.mxu0 %v878
    %2237 = vmatprep.subr.mxu0 %v883
    %2238 = vmatpush1.msra.mxu0 %v882
    %2239 = vmatprep.subr.mxu0 %v887
    %2240 = vmatpush1.msra.mxu0 %v886
    %2241 = vmatprep.subr.mxu0 %v891
    %2242 = vmatpush1.msra.mxu0 %v890
    %2243 = vmatprep.subr.mxu0 %v895
    %2244 = vmatpush1.msra.mxu0 %v894
    %2245 = vmatprep.subr.mxu0 %v899
    %2246 = vmatpush1.msra.mxu0 %v898
    %2247 = vmatprep.subr.mxu0 %v903
    %2248 = vmatpush1.msra.mxu0 %v902
    %2249 = vmatprep.subr.mxu0 %v907
    %2250 = vmatpush1.msra.mxu0 %v906
    %2251 = vmatprep.subr.mxu0 %v911
    %2252 = vmatpush1.msra.mxu0 %v910
    %2253 = vmatprep.subr.mxu0 %v915
    %2254 = vmatpush1.msra.mxu0 %v914
    %2255 = vmatprep.subr.mxu0 %v919
    %2256 = vmatpush1.msra.mxu0 %v918
    %2257 = vmatprep.subr.mxu0 %v923
    %2258 = vmatpush1.msra.mxu0 %v922
    %2259 = vmatprep.subr.mxu0 %v927
    %2260 = vmatpush1.msra.mxu0 %v926
    %2261 = vmatprep.subr.mxu0 %v931
    %2262 = vmatpush1.msra.mxu0 %v930
    %2263 = vmatprep.subr.mxu0 %v935
    %2264 = vmatpush1.msra.mxu0 %v934
    %2265 = vmatprep.mubr.f32.mxu0 %v1705
    %2266 = vmatmul.mubr.f32.gmra.mrb[0].mxu0 %v1697
    %v2267 = vpop.f32.mrb[0].mxu0
    %v2268 = vadd.f32 %v2197, %v2267
    %v2269 = vpop.f32.mrb[0].mxu0
    %v2270 = vadd.f32 %v2199, %v2269
    %2271 = vdwg.mxu0
    %2272 = vmatprep.subr.mxu0 %v939
    %2273 = vmatpush1.msra.mxu0 %v938
    %2274 = vmatprep.subr.mxu0 %v943
    %2275 = vmatpush1.msra.mxu0 %v942
    %2276 = vmatprep.subr.mxu0 %v947
    %2277 = vmatpush1.msra.mxu0 %v946
    %2278 = vmatprep.subr.mxu0 %v951
    %2279 = vmatpush1.msra.mxu0 %v950
    %2280 = vmatprep.subr.mxu0 %v955
    %2281 = vmatpush1.msra.mxu0 %v954
    %2282 = vmatprep.subr.mxu0 %v959
    %2283 = vmatpush1.msra.mxu0 %v958
    %2284 = vmatprep.subr.mxu0 %v963
    %2285 = vmatpush1.msra.mxu0 %v962
    %2286 = vmatprep.subr.mxu0 %v967
    %2287 = vmatpush1.msra.mxu0 %v966
    %2288 = vmatprep.subr.mxu0 %v971
    %2289 = vmatpush1.msra.mxu0 %v970
    %2290 = vmatprep.subr.mxu0 %v975
    %2291 = vmatpush1.msra.mxu0 %v974
    %2292 = vmatprep.subr.mxu0 %v979
    %2293 = vmatpush1.msra.mxu0 %v978
    %2294 = vmatprep.subr.mxu0 %v983
    %2295 = vmatpush1.msra.mxu0 %v982
    %2296 = vmatprep.subr.mxu0 %v987
    %2297 = vmatpush1.msra.mxu0 %v986
    %2298 = vmatprep.subr.mxu0 %v991
    %2299 = vmatpush1.msra.mxu0 %v990
    %2300 = vmatprep.subr.mxu0 %v995
    %2301 = vmatpush1.msra.mxu0 %v994
    %2302 = vmatprep.subr.mxu0 %v999
    %2303 = vmatpush1.msra.mxu0 %v998
    %2304 = vmatprep.subr.mxu0 %v1003
    %2305 = vmatpush1.msra.mxu0 %v1002
    %2306 = vmatprep.subr.mxu0 %v1007
    %2307 = vmatpush1.msra.mxu0 %v1006
    %2308 = vmatprep.subr.mxu0 %v1011
    %2309 = vmatpush1.msra.mxu0 %v1010
    %2310 = vmatprep.subr.mxu0 %v1015
    %2311 = vmatpush1.msra.mxu0 %v1014
    %2312 = vmatprep.subr.mxu0 %v1019
    %2313 = vmatpush1.msra.mxu0 %v1018
    %2314 = vmatprep.subr.mxu0 %v1023
    %2315 = vmatpush1.msra.mxu0 %v1022
    %2316 = vmatprep.subr.mxu0 %v1027
    %2317 = vmatpush1.msra.mxu0 %v1026
    %2318 = vmatprep.subr.mxu0 %v1031
    %2319 = vmatpush1.msra.mxu0 %v1030
    %2320 = vmatprep.subr.mxu0 %v1035
    %2321 = vmatpush1.msra.mxu0 %v1034
    %2322 = vmatprep.subr.mxu0 %v1039
    %2323 = vmatpush1.msra.mxu0 %v1038
    %2324 = vmatprep.subr.mxu0 %v1043
    %2325 = vmatpush1.msra.mxu0 %v1042
    %2326 = vmatprep.subr.mxu0 %v1047
    %2327 = vmatpush1.msra.mxu0 %v1046
    %2328 = vmatprep.subr.mxu0 %v1051
    %2329 = vmatpush1.msra.mxu0 %v1050
    %2330 = vmatprep.subr.mxu0 %v1055
    %2331 = vmatpush1.msra.mxu0 %v1054
    %2332 = vmatprep.subr.mxu0 %v1059
    %2333 = vmatpush1.msra.mxu0 %v1058
    %2334 = vmatprep.subr.mxu0 %v1063
    %2335 = vmatpush1.msra.mxu0 %v1062
    %2336 = vmatprep.mubr.f32.mxu0 %v1706
    %2337 = vmatmul.mubr.f32.gmra.mrb[0].mxu0 %v1704
    %v2338 = vpop.f32.mrb[0].mxu0
    %v2339 = vadd.f32 %v2268, %v2338
    %v2340 = vpop.f32.mrb[0].mxu0
    %v2341 = vadd.f32 %v2270, %v2340
    %2342 = vdwg.mxu0
    %2343 = vmatprep.subr.mxu0 %v1067
    %2344 = vmatpush1.msra.mxu0 %v1066
    %2345 = vmatprep.subr.mxu0 %v1071
    %2346 = vmatpush1.msra.mxu0 %v1070
    %2347 = vmatprep.subr.mxu0 %v1075
    %2348 = vmatpush1.msra.mxu0 %v1074
    %2349 = vmatprep.subr.mxu0 %v1079
    %2350 = vmatpush1.msra.mxu0 %v1078
    %2351 = vmatprep.subr.mxu0 %v1083
    %2352 = vmatpush1.msra.mxu0 %v1082
    %2353 = vmatprep.subr.mxu0 %v1087
    %2354 = vmatpush1.msra.mxu0 %v1086
    %2355 = vmatprep.subr.mxu0 %v1091
    %2356 = vmatpush1.msra.mxu0 %v1090
    %2357 = vmatprep.subr.mxu0 %v1095
    %2358 = vmatpush1.msra.mxu0 %v1094
    %2359 = vmatprep.subr.mxu0 %v1099
    %2360 = vmatpush1.msra.mxu0 %v1098
    %2361 = vmatprep.subr.mxu0 %v1103
    %2362 = vmatpush1.msra.mxu0 %v1102
    %2363 = vmatprep.subr.mxu0 %v1107
    %2364 = vmatpush1.msra.mxu0 %v1106
    %2365 = vmatprep.subr.mxu0 %v1111
    %2366 = vmatpush1.msra.mxu0 %v1110
    %2367 = vmatprep.subr.mxu0 %v1115
    %2368 = vmatpush1.msra.mxu0 %v1114
    %2369 = vmatprep.subr.mxu0 %v1119
    %2370 = vmatpush1.msra.mxu0 %v1118
    %2371 = vmatprep.subr.mxu0 %v1123
    %2372 = vmatpush1.msra.mxu0 %v1122
    %2373 = vmatprep.subr.mxu0 %v1127
    %2374 = vmatpush1.msra.mxu0 %v1126
    %2375 = vmatprep.subr.mxu0 %v1131
    %2376 = vmatpush1.msra.mxu0 %v1130
    %2377 = vmatprep.subr.mxu0 %v1135
    %2378 = vmatpush1.msra.mxu0 %v1134
    %2379 = vmatprep.subr.mxu0 %v1139
    %2380 = vmatpush1.msra.mxu0 %v1138
    %2381 = vmatprep.subr.mxu0 %v1143
    %2382 = vmatpush1.msra.mxu0 %v1142
    %2383 = vmatprep.subr.mxu0 %v1147
    %2384 = vmatpush1.msra.mxu0 %v1146
    %2385 = vmatprep.subr.mxu0 %v1151
    %2386 = vmatpush1.msra.mxu0 %v1150
    %2387 = vmatprep.subr.mxu0 %v1155
    %2388 = vmatpush1.msra.mxu0 %v1154
    %2389 = vmatprep.subr.mxu0 %v1159
    %2390 = vmatpush1.msra.mxu0 %v1158
    %2391 = vmatprep.subr.mxu0 %v1163
    %2392 = vmatpush1.msra.mxu0 %v1162
    %2393 = vmatprep.subr.mxu0 %v1167
    %2394 = vmatpush1.msra.mxu0 %v1166
    %2395 = vmatprep.subr.mxu0 %v1171
    %2396 = vmatpush1.msra.mxu0 %v1170
    %2397 = vmatprep.subr.mxu0 %v1175
    %2398 = vmatpush1.msra.mxu0 %v1174
    %2399 = vmatprep.subr.mxu0 %v1179
    %2400 = vmatpush1.msra.mxu0 %v1178
    %2401 = vmatprep.subr.mxu0 %v1183
    %2402 = vmatpush1.msra.mxu0 %v1182
    %2403 = vmatprep.subr.mxu0 %v1187
    %2404 = vmatpush1.msra.mxu0 %v1186
    %2405 = vmatprep.subr.mxu0 %v1191
    %2406 = vmatpush1.msra.mxu0 %v1190
    %2407 = vmatprep.mubr.f32.mxu0 %v1722
    %2408 = vmatmul.mubr.f32.gmra.mrb[0].mxu0 %v1714
    %v2409 = vpop.f32.mrb[0].mxu0
    %v2410 = vadd.f32 %v2339, %v2409
    %v2411 = vpop.f32.mrb[0].mxu0
    %v2412 = vadd.f32 %v2341, %v2411
    %2413 = vdwg.mxu0
    %2414 = vmatprep.subr.mxu0 %v1195
    %2415 = vmatpush1.msra.mxu0 %v1194
    %2416 = vmatprep.subr.mxu0 %v1199
    %2417 = vmatpush1.msra.mxu0 %v1198
    %2418 = vmatprep.subr.mxu0 %v1203
    %2419 = vmatpush1.msra.mxu0 %v1202
    %2420 = vmatprep.subr.mxu0 %v1207
    %2421 = vmatpush1.msra.mxu0 %v1206
    %2422 = vmatprep.subr.mxu0 %v1211
    %2423 = vmatpush1.msra.mxu0 %v1210
    %2424 = vmatprep.subr.mxu0 %v1215
    %2425 = vmatpush1.msra.mxu0 %v1214
    %2426 = vmatprep.subr.mxu0 %v1219
    %2427 = vmatpush1.msra.mxu0 %v1218
    %2428 = vmatprep.subr.mxu0 %v1223
    %2429 = vmatpush1.msra.mxu0 %v1222
    %2430 = vmatprep.subr.mxu0 %v1227
    %2431 = vmatpush1.msra.mxu0 %v1226
    %2432 = vmatprep.subr.mxu0 %v1231
    %2433 = vmatpush1.msra.mxu0 %v1230
    %2434 = vmatprep.subr.mxu0 %v1235
    %2435 = vmatpush1.msra.mxu0 %v1234
    %2436 = vmatprep.subr.mxu0 %v1239
    %2437 = vmatpush1.msra.mxu0 %v1238
    %2438 = vmatprep.subr.mxu0 %v1243
    %2439 = vmatpush1.msra.mxu0 %v1242
    %2440 = vmatprep.subr.mxu0 %v1247
    %2441 = vmatpush1.msra.mxu0 %v1246
    %2442 = vmatprep.subr.mxu0 %v1251
    %2443 = vmatpush1.msra.mxu0 %v1250
    %2444 = vmatprep.subr.mxu0 %v1255
    %2445 = vmatpush1.msra.mxu0 %v1254
    %2446 = vmatprep.subr.mxu0 %v1259
    %2447 = vmatpush1.msra.mxu0 %v1258
    %2448 = vmatprep.subr.mxu0 %v1263
    %2449 = vmatpush1.msra.mxu0 %v1262
    %2450 = vmatprep.subr.mxu0 %v1267
    %2451 = vmatpush1.msra.mxu0 %v1266
    %2452 = vmatprep.subr.mxu0 %v1271
    %2453 = vmatpush1.msra.mxu0 %v1270
    %2454 = vmatprep.subr.mxu0 %v1275
    %2455 = vmatpush1.msra.mxu0 %v1274
    %2456 = vmatprep.subr.mxu0 %v1279
    %2457 = vmatpush1.msra.mxu0 %v1278
    %2458 = vmatprep.subr.mxu0 %v1283
    %2459 = vmatpush1.msra.mxu0 %v1282
    %2460 = vmatprep.subr.mxu0 %v1287
    %2461 = vmatpush1.msra.mxu0 %v1286
    %2462 = vmatprep.subr.mxu0 %v1291
    %2463 = vmatpush1.msra.mxu0 %v1290
    %2464 = vmatprep.subr.mxu0 %v1295
    %2465 = vmatpush1.msra.mxu0 %v1294
    %2466 = vmatprep.subr.mxu0 %v1299
    %2467 = vmatpush1.msra.mxu0 %v1298
    %2468 = vmatprep.subr.mxu0 %v1303
    %2469 = vmatpush1.msra.mxu0 %v1302
    %2470 = vmatprep.subr.mxu0 %v1307
    %2471 = vmatpush1.msra.mxu0 %v1306
    %2472 = vmatprep.subr.mxu0 %v1311
    %2473 = vmatpush1.msra.mxu0 %v1310
    %2474 = vmatprep.subr.mxu0 %v1315
    %2475 = vmatpush1.msra.mxu0 %v1314
    %2476 = vmatprep.subr.mxu0 %v1319
    %2477 = vmatpush1.msra.mxu0 %v1318
    %2478 = vmatprep.mubr.f32.mxu0 %v1723
    %2479 = vmatmul.mubr.f32.gmra.mrb[0].mxu0 %v1721
    %v2480 = vpop.f32.mrb[0].mxu0
    %v2481 = vadd.f32 %v2410, %v2480
    %v2482 = vpop.f32.mrb[0].mxu0
    %v2483 = vadd.f32 %v2412, %v2482
    %2484 = vdwg.mxu0
    %2485 = vmatprep.subr.mxu0 %v1323
    %2486 = vmatpush1.msra.mxu0 %v1322
    %2487 = vmatprep.subr.mxu0 %v1327
    %2488 = vmatpush1.msra.mxu0 %v1326
    %2489 = vmatprep.subr.mxu0 %v1331
    %2490 = vmatpush1.msra.mxu0 %v1330
    %2491 = vmatprep.subr.mxu0 %v1335
    %2492 = vmatpush1.msra.mxu0 %v1334
    %2493 = vmatprep.subr.mxu0 %v1339
    %2494 = vmatpush1.msra.mxu0 %v1338
    %2495 = vmatprep.subr.mxu0 %v1343
    %2496 = vmatpush1.msra.mxu0 %v1342
    %2497 = vmatprep.subr.mxu0 %v1347
    %2498 = vmatpush1.msra.mxu0 %v1346
    %2499 = vmatprep.subr.mxu0 %v1351
    %2500 = vmatpush1.msra.mxu0 %v1350
    %2501 = vmatprep.subr.mxu0 %v1355
    %2502 = vmatpush1.msra.mxu0 %v1354
    %2503 = vmatprep.subr.mxu0 %v1359
    %2504 = vmatpush1.msra.mxu0 %v1358
    %2505 = vmatprep.subr.mxu0 %v1363
    %2506 = vmatpush1.msra.mxu0 %v1362
    %2507 = vmatprep.subr.mxu0 %v1367
    %2508 = vmatpush1.msra.mxu0 %v1366
    %2509 = vmatprep.subr.mxu0 %v1371
    %2510 = vmatpush1.msra.mxu0 %v1370
    %2511 = vmatprep.subr.mxu0 %v1375
    %2512 = vmatpush1.msra.mxu0 %v1374
    %2513 = vmatprep.subr.mxu0 %v1379
    %2514 = vmatpush1.msra.mxu0 %v1378
    %2515 = vmatprep.subr.mxu0 %v1383
    %2516 = vmatpush1.msra.mxu0 %v1382
    %2517 = vmatprep.subr.mxu0 %v1387
    %2518 = vmatpush1.msra.mxu0 %v1386
    %2519 = vmatprep.subr.mxu0 %v1391
    %2520 = vmatpush1.msra.mxu0 %v1390
    %2521 = vmatprep.subr.mxu0 %v1395
    %2522 = vmatpush1.msra.mxu0 %v1394
    %2523 = vmatprep.subr.mxu0 %v1399
    %2524 = vmatpush1.msra.mxu0 %v1398
    %2525 = vmatprep.subr.mxu0 %v1403
    %2526 = vmatpush1.msra.mxu0 %v1402
    %2527 = vmatprep.subr.mxu0 %v1407
    %2528 = vmatpush1.msra.mxu0 %v1406
    %2529 = vmatprep.subr.mxu0 %v1411
    %2530 = vmatpush1.msra.mxu0 %v1410
    %2531 = vmatprep.subr.mxu0 %v1415
    %2532 = vmatpush1.msra.mxu0 %v1414
    %2533 = vmatprep.subr.mxu0 %v1419
    %2534 = vmatpush1.msra.mxu0 %v1418
    %2535 = vmatprep.subr.mxu0 %v1423
    %2536 = vmatpush1.msra.mxu0 %v1422
    %2537 = vmatprep.subr.mxu0 %v1427
    %2538 = vmatpush1.msra.mxu0 %v1426
    %2539 = vmatprep.subr.mxu0 %v1431
    %2540 = vmatpush1.msra.mxu0 %v1430
    %2541 = vmatprep.subr.mxu0 %v1435
    %2542 = vmatpush1.msra.mxu0 %v1434
    %2543 = vmatprep.subr.mxu0 %v1439
    %2544 = vmatpush1.msra.mxu0 %v1438
    %2545 = vmatprep.subr.mxu0 %v1443
    %2546 = vmatpush1.msra.mxu0 %v1442
    %2547 = vmatprep.subr.mxu0 %v1447
    %2548 = vmatpush1.msra.mxu0 %v1446
    %2549 = vmatprep.mubr.f32.mxu0 %v1739
    %2550 = vmatmul.mubr.f32.gmra.mrb[0].mxu0 %v1731
    %v2551 = vpop.f32.mrb[0].mxu0
    %v2552 = vadd.f32 %v2481, %v2551
    %v2553 = vpop.f32.mrb[0].mxu0
    %v2554 = vadd.f32 %v2483, %v2553
    %2555 = vdwg.mxu0
    %2556 = vmatprep.subr.mxu0 %v1451
    %2557 = vmatpush1.msra.mxu0 %v1450
    %2558 = vmatprep.subr.mxu0 %v1455
    %2559 = vmatpush1.msra.mxu0 %v1454
    %2560 = vmatprep.subr.mxu0 %v1459
    %2561 = vmatpush1.msra.mxu0 %v1458
    %2562 = vmatprep.subr.mxu0 %v1463
    %2563 = vmatpush1.msra.mxu0 %v1462
    %2564 = vmatprep.subr.mxu0 %v1467
    %2565 = vmatpush1.msra.mxu0 %v1466
    %2566 = vmatprep.subr.mxu0 %v1471
    %2567 = vmatpush1.msra.mxu0 %v1470
    %2568 = vmatprep.subr.mxu0 %v1475
    %2569 = vmatpush1.msra.mxu0 %v1474
    %2570 = vmatprep.subr.mxu0 %v1479
    %2571 = vmatpush1.msra.mxu0 %v1478
    %2572 = vmatprep.subr.mxu0 %v1483
    %2573 = vmatpush1.msra.mxu0 %v1482
    %2574 = vmatprep.subr.mxu0 %v1487
    %2575 = vmatpush1.msra.mxu0 %v1486
    %2576 = vmatprep.subr.mxu0 %v1491
    %2577 = vmatpush1.msra.mxu0 %v1490
    %2578 = vmatprep.subr.mxu0 %v1495
    %2579 = vmatpush1.msra.mxu0 %v1494
    %2580 = vmatprep.subr.mxu0 %v1499
    %2581 = vmatpush1.msra.mxu0 %v1498
    %2582 = vmatprep.subr.mxu0 %v1503
    %2583 = vmatpush1.msra.mxu0 %v1502
    %2584 = vmatprep.subr.mxu0 %v1507
    %2585 = vmatpush1.msra.mxu0 %v1506
    %2586 = vmatprep.subr.mxu0 %v1511
    %2587 = vmatpush1.msra.mxu0 %v1510
    %2588 = vmatprep.subr.mxu0 %v1515
    %2589 = vmatpush1.msra.mxu0 %v1514
    %2590 = vmatprep.subr.mxu0 %v1519
    %2591 = vmatpush1.msra.mxu0 %v1518
    %2592 = vmatprep.subr.mxu0 %v1523
    %2593 = vmatpush1.msra.mxu0 %v1522
    %2594 = vmatprep.subr.mxu0 %v1527
    %2595 = vmatpush1.msra.mxu0 %v1526
    %2596 = vmatprep.subr.mxu0 %v1531
    %2597 = vmatpush1.msra.mxu0 %v1530
    %2598 = vmatprep.subr.mxu0 %v1535
    %2599 = vmatpush1.msra.mxu0 %v1534
    %2600 = vmatprep.subr.mxu0 %v1539
    %2601 = vmatpush1.msra.mxu0 %v1538
    %2602 = vmatprep.subr.mxu0 %v1543
    %2603 = vmatpush1.msra.mxu0 %v1542
    %2604 = vmatprep.subr.mxu0 %v1547
    %2605 = vmatpush1.msra.mxu0 %v1546
    %2606 = vmatprep.subr.mxu0 %v1551
    %2607 = vmatpush1.msra.mxu0 %v1550
    %2608 = vmatprep.subr.mxu0 %v1555
    %2609 = vmatpush1.msra.mxu0 %v1554
    %2610 = vmatprep.subr.mxu0 %v1559
    %2611 = vmatpush1.msra.mxu0 %v1558
    %2612 = vmatprep.subr.mxu0 %v1563
    %2613 = vmatpush1.msra.mxu0 %v1562
    %2614 = vmatprep.subr.mxu0 %v1567
    %2615 = vmatpush1.msra.mxu0 %v1566
    %2616 = vmatprep.subr.mxu0 %v1571
    %2617 = vmatpush1.msra.mxu0 %v1570
    %2618 = vmatprep.subr.mxu0 %v1575
    %2619 = vmatpush1.msra.mxu0 %v1574
    %2620 = vmatprep.mubr.f32.mxu0 %v1740
    %2621 = vmatmul.mubr.f32.gmra.mrb[0].mxu0 %v1738
    %v2622 = vpop.f32.mrb[0].mxu0
    %v2623 = vadd.f32 %v2552, %v2622
    %v2624 = vpop.f32.mrb[0].mxu0
    %v2625 = vadd.f32 %v2554, %v2624
    %2626 = vdwg.mxu0
    %2627 = vmatprep.subr.mxu0 %v1579
    %2628 = vmatpush1.msra.mxu0 %v1578
    %2629 = vmatprep.subr.mxu0 %v1583
    %2630 = vmatpush1.msra.mxu0 %v1582
    %2631 = vmatprep.subr.mxu0 %v1587
    %2632 = vmatpush1.msra.mxu0 %v1586
    %2633 = vmatprep.subr.mxu0 %v1591
    %2634 = vmatpush1.msra.mxu0 %v1590
    %2635 = vmatprep.subr.mxu0 %v1595
    %2636 = vmatpush1.msra.mxu0 %v1594
    %2637 = vmatprep.subr.mxu0 %v1599
    %2638 = vmatpush1.msra.mxu0 %v1598
    %2639 = vmatprep.subr.mxu0 %v1603
    %2640 = vmatpush1.msra.mxu0 %v1602
    %2641 = vmatprep.subr.mxu0 %v1607
    %2642 = vmatpush1.msra.mxu0 %v1606
    %2643 = vmatprep.subr.mxu0 0.0
    %2644 = vmatpush1.msra.mxu0 0.0
    %2645 = vmatprep.subr.mxu0 0.0
    %2646 = vmatpush1.msra.mxu0 0.0
    %2647 = vmatprep.subr.mxu0 0.0
    %2648 = vmatpush1.msra.mxu0 0.0
    %2649 = vmatprep.subr.mxu0 0.0
    %2650 = vmatpush1.msra.mxu0 0.0
    %2651 = vmatprep.subr.mxu0 0.0
    %2652 = vmatpush1.msra.mxu0 0.0
    %2653 = vmatprep.subr.mxu0 0.0
    %2654 = vmatpush1.msra.mxu0 0.0
    %2655 = vmatprep.subr.mxu0 0.0
    %2656 = vmatpush1.msra.mxu0 0.0
    %2657 = vmatprep.subr.mxu0 0.0
    %2658 = vmatpush1.msra.mxu0 0.0
    %2659 = vmatprep.subr.mxu0 0.0
    %2660 = vmatpush1.msra.mxu0 0.0
    %2661 = vmatprep.subr.mxu0 0.0
    %2662 = vmatpush1.msra.mxu0 0.0
    %2663 = vmatprep.subr.mxu0 0.0
    %2664 = vmatpush1.msra.mxu0 0.0
    %2665 = vmatprep.subr.mxu0 0.0
    %2666 = vmatpush1.msra.mxu0 0.0
    %2667 = vmatprep.subr.mxu0 0.0
    %2668 = vmatpush1.msra.mxu0 0.0
    %2669 = vmatprep.subr.mxu0 0.0
    %2670 = vmatpush1.msra.mxu0 0.0
    %2671 = vmatprep.subr.mxu0 0.0
    %2672 = vmatpush1.msra.mxu0 0.0
    %2673 = vmatprep.subr.mxu0 0.0
    %2674 = vmatpush1.msra.mxu0 0.0
    %2675 = vmatprep.subr.mxu0 0.0
    %2676 = vmatpush1.msra.mxu0 0.0
    %2677 = vmatprep.subr.mxu0 0.0
    %2678 = vmatpush1.msra.mxu0 0.0
    %2679 = vmatprep.subr.mxu0 0.0
    %2680 = vmatpush1.msra.mxu0 0.0
    %2681 = vmatprep.subr.mxu0 0.0
    %2682 = vmatpush1.msra.mxu0 0.0
    %2683 = vmatprep.subr.mxu0 0.0
    %2684 = vmatpush1.msra.mxu0 0.0
    %2685 = vmatprep.subr.mxu0 0.0
    %2686 = vmatpush1.msra.mxu0 0.0
    %2687 = vmatprep.subr.mxu0 0.0
    %2688 = vmatpush1.msra.mxu0 0.0
    %2689 = vmatprep.subr.mxu0 0.0
    %2690 = vmatpush1.msra.mxu0 0.0
    %2691 = vmatprep.mubr.f32.mxu0 0.0
    %2692 = vmatmul.mubr.f32.gmra.mrb[0].mxu0 %v1773
    %v2693 = vpop.f32.mrb[0].mxu0
    %v2694 = vadd.f32 %v2623, %v2693
    %v2695 = vpop.f32.mrb[0].mxu0
    %v2696 = vadd.f32 %v2625, %v2695
    %2697 = vdwg.mxu0
    %2698 = vmatprep.subr.mxu0 %v45
    %2699 = vmatpush1.msra.mxu0 %v44
    %2700 = vmatprep.subr.mxu0 %v49
    %2701 = vmatpush1.msra.mxu0 %v48
    %2702 = vmatprep.subr.mxu0 %v53
    %2703 = vmatpush1.msra.mxu0 %v52
    %2704 = vmatprep.subr.mxu0 %v57
    %2705 = vmatpush1.msra.mxu0 %v56
    %2706 = vmatprep.subr.mxu0 %v61
    %2707 = vmatpush1.msra.mxu0 %v60
    %2708 = vmatprep.subr.mxu0 %v65
    %2709 = vmatpush1.msra.mxu0 %v64
    %2710 = vmatprep.subr.mxu0 %v69
    %2711 = vmatpush1.msra.mxu0 %v68
    %2712 = vmatprep.subr.mxu0 %v73
    %2713 = vmatpush1.msra.mxu0 %v72
    %2714 = vmatprep.subr.mxu0 %v77
    %2715 = vmatpush1.msra.mxu0 %v76
    %2716 = vmatprep.subr.mxu0 %v81
    %2717 = vmatpush1.msra.mxu0 %v80
    %2718 = vmatprep.subr.mxu0 %v85
    %2719 = vmatpush1.msra.mxu0 %v84
    %2720 = vmatprep.subr.mxu0 %v89
    %2721 = vmatpush1.msra.mxu0 %v88
    %2722 = vmatprep.subr.mxu0 %v93
    %2723 = vmatpush1.msra.mxu0 %v92
    %2724 = vmatprep.subr.mxu0 %v97
    %2725 = vmatpush1.msra.mxu0 %v96
    %2726 = vmatprep.subr.mxu0 %v101
    %2727 = vmatpush1.msra.mxu0 %v100
    %2728 = vmatprep.subr.mxu0 %v105
    %2729 = vmatpush1.msra.mxu0 %v104
    %2730 = vmatprep.subr.mxu0 %v109
    %2731 = vmatpush1.msra.mxu0 %v108
    %2732 = vmatprep.subr.mxu0 %v113
    %2733 = vmatpush1.msra.mxu0 %v112
    %2734 = vmatprep.subr.mxu0 %v117
    %2735 = vmatpush1.msra.mxu0 %v116
    %2736 = vmatprep.subr.mxu0 %v121
    %2737 = vmatpush1.msra.mxu0 %v120
    %2738 = vmatprep.subr.mxu0 %v125
    %2739 = vmatpush1.msra.mxu0 %v124
    %2740 = vmatprep.subr.mxu0 %v129
    %2741 = vmatpush1.msra.mxu0 %v128
    %2742 = vmatprep.subr.mxu0 %v133
    %2743 = vmatpush1.msra.mxu0 %v132
    %2744 = vmatprep.subr.mxu0 %v137
    %2745 = vmatpush1.msra.mxu0 %v136
    %2746 = vmatprep.subr.mxu0 %v141
    %2747 = vmatpush1.msra.mxu0 %v140
    %2748 = vmatprep.subr.mxu0 %v145
    %2749 = vmatpush1.msra.mxu0 %v144
    %2750 = vmatprep.subr.mxu0 %v149
    %2751 = vmatpush1.msra.mxu0 %v148
    %2752 = vmatprep.subr.mxu0 %v153
    %2753 = vmatpush1.msra.mxu0 %v152
    %2754 = vmatprep.subr.mxu0 %v157
    %2755 = vmatpush1.msra.mxu0 %v156
    %2756 = vmatprep.subr.mxu0 %v161
    %2757 = vmatpush1.msra.mxu0 %v160
    %2758 = vmatprep.subr.mxu0 %v165
    %2759 = vmatpush1.msra.mxu0 %v164
    %2760 = vmatprep.subr.mxu0 %v169
    %2761 = vmatpush1.msra.mxu0 %v168
    %2762 = vmatprep.mubr.f32.mxu0 %v1654
    %2763 = vmatmul.mubr.f32.gmra.mrb[0].mxu0 %v1646
    %v2764 = vpop.f32.mrb[0].mxu0
    %v2765 = vadd.f32 %v1623, %v2764
    %v2766 = vpop.f32.mrb[0].mxu0
    %v2767 = vadd.f32 %v1627, %v2766
    %2768 = vdwg.mxu0
    %2769 = vmatprep.subr.mxu0 %v173
    %2770 = vmatpush1.msra.mxu0 %v172
    %2771 = vmatprep.subr.mxu0 %v177
    %2772 = vmatpush1.msra.mxu0 %v176
    %2773 = vmatprep.subr.mxu0 %v181
    %2774 = vmatpush1.msra.mxu0 %v180
    %2775 = vmatprep.subr.mxu0 %v185
    %2776 = vmatpush1.msra.mxu0 %v184
    %2777 = vmatprep.subr.mxu0 %v189
    %2778 = vmatpush1.msra.mxu0 %v188
    %2779 = vmatprep.subr.mxu0 %v193
    %2780 = vmatpush1.msra.mxu0 %v192
    %2781 = vmatprep.subr.mxu0 %v197
    %2782 = vmatpush1.msra.mxu0 %v196
    %2783 = vmatprep.subr.mxu0 %v201
    %2784 = vmatpush1.msra.mxu0 %v200
    %2785 = vmatprep.subr.mxu0 %v205
    %2786 = vmatpush1.msra.mxu0 %v204
    %2787 = vmatprep.subr.mxu0 %v209
    %2788 = vmatpush1.msra.mxu0 %v208
    %2789 = vmatprep.subr.mxu0 %v213
    %2790 = vmatpush1.msra.mxu0 %v212
    %2791 = vmatprep.subr.mxu0 %v217
    %2792 = vmatpush1.msra.mxu0 %v216
    %2793 = vmatprep.subr.mxu0 %v221
    %2794 = vmatpush1.msra.mxu0 %v220
    %2795 = vmatprep.subr.mxu0 %v225
    %2796 = vmatpush1.msra.mxu0 %v224
    %2797 = vmatprep.subr.mxu0 %v229
    %2798 = vmatpush1.msra.mxu0 %v228
    %2799 = vmatprep.subr.mxu0 %v233
    %2800 = vmatpush1.msra.mxu0 %v232
    %2801 = vmatprep.subr.mxu0 %v237
    %2802 = vmatpush1.msra.mxu0 %v236
    %2803 = vmatprep.subr.mxu0 %v241
    %2804 = vmatpush1.msra.mxu0 %v240
    %2805 = vmatprep.subr.mxu0 %v245
    %2806 = vmatpush1.msra.mxu0 %v244
    %2807 = vmatprep.subr.mxu0 %v249
    %2808 = vmatpush1.msra.mxu0 %v248
    %2809 = vmatprep.subr.mxu0 %v253
    %2810 = vmatpush1.msra.mxu0 %v252
    %2811 = vmatprep.subr.mxu0 %v257
    %2812 = vmatpush1.msra.mxu0 %v256
    %2813 = vmatprep.subr.mxu0 %v261
    %2814 = vmatpush1.msra.mxu0 %v260
    %2815 = vmatprep.subr.mxu0 %v265
    %2816 = vmatpush1.msra.mxu0 %v264
    %2817 = vmatprep.subr.mxu0 %v269
    %2818 = vmatpush1.msra.mxu0 %v268
    %2819 = vmatprep.subr.mxu0 %v273
    %2820 = vmatpush1.msra.mxu0 %v272
    %2821 = vmatprep.subr.mxu0 %v277
    %2822 = vmatpush1.msra.mxu0 %v276
    %2823 = vmatprep.subr.mxu0 %v281
    %2824 = vmatpush1.msra.mxu0 %v280
    %2825 = vmatprep.subr.mxu0 %v285
    %2826 = vmatpush1.msra.mxu0 %v284
    %2827 = vmatprep.subr.mxu0 %v289
    %2828 = vmatpush1.msra.mxu0 %v288
    %2829 = vmatprep.subr.mxu0 %v293
    %2830 = vmatpush1.msra.mxu0 %v292
    %2831 = vmatprep.subr.mxu0 %v297
    %2832 = vmatpush1.msra.mxu0 %v296
    %2833 = vmatprep.mubr.f32.mxu0 %v1655
    %2834 = vmatmul.mubr.f32.gmra.mrb[0].mxu0 %v1653
    %v2835 = vpop.f32.mrb[0].mxu0
    %v2836 = vadd.f32 %v2765, %v2835
    %v2837 = vpop.f32.mrb[0].mxu0
    %v2838 = vadd.f32 %v2767, %v2837
    %2839 = vdwg.mxu0
    %2840 = vmatprep.subr.mxu0 %v301
    %2841 = vmatpush1.msra.mxu0 %v300
    %2842 = vmatprep.subr.mxu0 %v305
    %2843 = vmatpush1.msra.mxu0 %v304
    %2844 = vmatprep.subr.mxu0 %v309
    %2845 = vmatpush1.msra.mxu0 %v308
    %2846 = vmatprep.subr.mxu0 %v313
    %2847 = vmatpush1.msra.mxu0 %v312
    %2848 = vmatprep.subr.mxu0 %v317
    %2849 = vmatpush1.msra.mxu0 %v316
    %2850 = vmatprep.subr.mxu0 %v321
    %2851 = vmatpush1.msra.mxu0 %v320
    %2852 = vmatprep.subr.mxu0 %v325
    %2853 = vmatpush1.msra.mxu0 %v324
    %2854 = vmatprep.subr.mxu0 %v329
    %2855 = vmatpush1.msra.mxu0 %v328
    %2856 = vmatprep.subr.mxu0 %v333
    %2857 = vmatpush1.msra.mxu0 %v332
    %2858 = vmatprep.subr.mxu0 %v337
    %2859 = vmatpush1.msra.mxu0 %v336
    %2860 = vmatprep.subr.mxu0 %v341
    %2861 = vmatpush1.msra.mxu0 %v340
    %2862 = vmatprep.subr.mxu0 %v345
    %2863 = vmatpush1.msra.mxu0 %v344
    %2864 = vmatprep.subr.mxu0 %v349
    %2865 = vmatpush1.msra.mxu0 %v348
    %2866 = vmatprep.subr.mxu0 %v353
    %2867 = vmatpush1.msra.mxu0 %v352
    %2868 = vmatprep.subr.mxu0 %v357
    %2869 = vmatpush1.msra.mxu0 %v356
    %2870 = vmatprep.subr.mxu0 %v361
    %2871 = vmatpush1.msra.mxu0 %v360
    %2872 = vmatprep.subr.mxu0 %v365
    %2873 = vmatpush1.msra.mxu0 %v364
    %2874 = vmatprep.subr.mxu0 %v369
    %2875 = vmatpush1.msra.mxu0 %v368
    %2876 = vmatprep.subr.mxu0 %v373
    %2877 = vmatpush1.msra.mxu0 %v372
    %2878 = vmatprep.subr.mxu0 %v377
    %2879 = vmatpush1.msra.mxu0 %v376
    %2880 = vmatprep.subr.mxu0 %v381
    %2881 = vmatpush1.msra.mxu0 %v380
    %2882 = vmatprep.subr.mxu0 %v385
    %2883 = vmatpush1.msra.mxu0 %v384
    %2884 = vmatprep.subr.mxu0 %v389
    %2885 = vmatpush1.msra.mxu0 %v388
    %2886 = vmatprep.subr.mxu0 %v393
    %2887 = vmatpush1.msra.mxu0 %v392
    %2888 = vmatprep.subr.mxu0 %v397
    %2889 = vmatpush1.msra.mxu0 %v396
    %2890 = vmatprep.subr.mxu0 %v401
    %2891 = vmatpush1.msra.mxu0 %v400
    %2892 = vmatprep.subr.mxu0 %v405
    %2893 = vmatpush1.msra.mxu0 %v404
    %2894 = vmatprep.subr.mxu0 %v409
    %2895 = vmatpush1.msra.mxu0 %v408
    %2896 = vmatprep.subr.mxu0 %v413
    %2897 = vmatpush1.msra.mxu0 %v412
    %2898 = vmatprep.subr.mxu0 %v417
    %2899 = vmatpush1.msra.mxu0 %v416
    %2900 = vmatprep.subr.mxu0 %v421
    %2901 = vmatpush1.msra.mxu0 %v420
    %2902 = vmatprep.subr.mxu0 %v425
    %2903 = vmatpush1.msra.mxu0 %v424
    %2904 = vmatprep.mubr.f32.mxu0 %v1671
    %2905 = vmatmul.mubr.f32.gmra.mrb[0].mxu0 %v1663
    %v2906 = vpop.f32.mrb[0].mxu0
    %v2907 = vadd.f32 %v2836, %v2906
    %v2908 = vpop.f32.mrb[0].mxu0
    %v2909 = vadd.f32 %v2838, %v2908
    %2910 = vdwg.mxu0
    %2911 = vmatprep.subr.mxu0 %v429
    %2912 = vmatpush1.msra.mxu0 %v428
    %2913 = vmatprep.subr.mxu0 %v433
    %2914 = vmatpush1.msra.mxu0 %v432
    %2915 = vmatprep.subr.mxu0 %v437
    %2916 = vmatpush1.msra.mxu0 %v436
    %2917 = vmatprep.subr.mxu0 %v441
    %2918 = vmatpush1.msra.mxu0 %v440
    %2919 = vmatprep.subr.mxu0 %v445
    %2920 = vmatpush1.msra.mxu0 %v444
    %2921 = vmatprep.subr.mxu0 %v449
    %2922 = vmatpush1.msra.mxu0 %v448
    %2923 = vmatprep.subr.mxu0 %v453
    %2924 = vmatpush1.msra.mxu0 %v452
    %2925 = vmatprep.subr.mxu0 %v457
    %2926 = vmatpush1.msra.mxu0 %v456
    %2927 = vmatprep.subr.mxu0 %v461
    %2928 = vmatpush1.msra.mxu0 %v460
    %2929 = vmatprep.subr.mxu0 %v465
    %2930 = vmatpush1.msra.mxu0 %v464
    %2931 = vmatprep.subr.mxu0 %v469
    %2932 = vmatpush1.msra.mxu0 %v468
    %2933 = vmatprep.subr.mxu0 %v473
    %2934 = vmatpush1.msra.mxu0 %v472
    %2935 = vmatprep.subr.mxu0 %v477
    %2936 = vmatpush1.msra.mxu0 %v476
    %2937 = vmatprep.subr.mxu0 %v481
    %2938 = vmatpush1.msra.mxu0 %v480
    %2939 = vmatprep.subr.mxu0 %v485
    %2940 = vmatpush1.msra.mxu0 %v484
    %2941 = vmatprep.subr.mxu0 %v489
    %2942 = vmatpush1.msra.mxu0 %v488
    %2943 = vmatprep.subr.mxu0 %v493
    %2944 = vmatpush1.msra.mxu0 %v492
    %2945 = vmatprep.subr.mxu0 %v497
    %2946 = vmatpush1.msra.mxu0 %v496
    %2947 = vmatprep.subr.mxu0 %v501
    %2948 = vmatpush1.msra.mxu0 %v500
    %2949 = vmatprep.subr.mxu0 %v505
    %2950 = vmatpush1.msra.mxu0 %v504
    %2951 = vmatprep.subr.mxu0 %v509
    %2952 = vmatpush1.msra.mxu0 %v508
    %2953 = vmatprep.subr.mxu0 %v513
    %2954 = vmatpush1.msra.mxu0 %v512
    %2955 = vmatprep.subr.mxu0 %v517
    %2956 = vmatpush1.msra.mxu0 %v516
    %2957 = vmatprep.subr.mxu0 %v521
    %2958 = vmatpush1.msra.mxu0 %v520
    %2959 = vmatprep.subr.mxu0 %v525
    %2960 = vmatpush1.msra.mxu0 %v524
    %2961 = vmatprep.subr.mxu0 %v529
    %2962 = vmatpush1.msra.mxu0 %v528
    %2963 = vmatprep.subr.mxu0 %v533
    %2964 = vmatpush1.msra.mxu0 %v532
    %2965 = vmatprep.subr.mxu0 %v537
    %2966 = vmatpush1.msra.mxu0 %v536
    %2967 = vmatprep.subr.mxu0 %v541
    %2968 = vmatpush1.msra.mxu0 %v540
    %2969 = vmatprep.subr.mxu0 %v545
    %2970 = vmatpush1.msra.mxu0 %v544
    %2971 = vmatprep.subr.mxu0 %v549
    %2972 = vmatpush1.msra.mxu0 %v548
    %2973 = vmatprep.subr.mxu0 %v553
    %2974 = vmatpush1.msra.mxu0 %v552
    %2975 = vmatprep.mubr.f32.mxu0 %v1672
    %2976 = vmatmul.mubr.f32.gmra.mrb[0].mxu0 %v1670
    %v2977 = vpop.f32.mrb[0].mxu0
    %v2978 = vadd.f32 %v2907, %v2977
    %v2979 = vpop.f32.mrb[0].mxu0
    %v2980 = vadd.f32 %v2909, %v2979
    %2981 = vdwg.mxu0
    %2982 = vmatprep.subr.mxu0 %v557
    %2983 = vmatpush1.msra.mxu0 %v556
    %2984 = vmatprep.subr.mxu0 %v561
    %2985 = vmatpush1.msra.mxu0 %v560
    %2986 = vmatprep.subr.mxu0 %v565
    %2987 = vmatpush1.msra.mxu0 %v564
    %2988 = vmatprep.subr.mxu0 %v569
    %2989 = vmatpush1.msra.mxu0 %v568
    %2990 = vmatprep.subr.mxu0 %v573
    %2991 = vmatpush1.msra.mxu0 %v572
    %2992 = vmatprep.subr.mxu0 %v577
    %2993 = vmatpush1.msra.mxu0 %v576
    %2994 = vmatprep.subr.mxu0 %v581
    %2995 = vmatpush1.msra.mxu0 %v580
    %2996 = vmatprep.subr.mxu0 %v585
    %2997 = vmatpush1.msra.mxu0 %v584
    %2998 = vmatprep.subr.mxu0 %v589
    %2999 = vmatpush1.msra.mxu0 %v588
    %3000 = vmatprep.subr.mxu0 %v593
    %3001 = vmatpush1.msra.mxu0 %v592
    %3002 = vmatprep.subr.mxu0 %v597
    %3003 = vmatpush1.msra.mxu0 %v596
    %3004 = vmatprep.subr.mxu0 %v601
    %3005 = vmatpush1.msra.mxu0 %v600
    %3006 = vmatprep.subr.mxu0 %v605
    %3007 = vmatpush1.msra.mxu0 %v604
    %3008 = vmatprep.subr.mxu0 %v609
    %3009 = vmatpush1.msra.mxu0 %v608
    %3010 = vmatprep.subr.mxu0 %v613
    %3011 = vmatpush1.msra.mxu0 %v612
    %3012 = vmatprep.subr.mxu0 %v617
    %3013 = vmatpush1.msra.mxu0 %v616
    %3014 = vmatprep.subr.mxu0 %v621
    %3015 = vmatpush1.msra.mxu0 %v620
    %3016 = vmatprep.subr.mxu0 %v625
    %3017 = vmatpush1.msra.mxu0 %v624
    %3018 = vmatprep.subr.mxu0 %v629
    %3019 = vmatpush1.msra.mxu0 %v628
    %3020 = vmatprep.subr.mxu0 %v633
    %3021 = vmatpush1.msra.mxu0 %v632
    %3022 = vmatprep.subr.mxu0 %v637
    %3023 = vmatpush1.msra.mxu0 %v636
    %3024 = vmatprep.subr.mxu0 %v641
    %3025 = vmatpush1.msra.mxu0 %v640
    %3026 = vmatprep.subr.mxu0 %v645
    %3027 = vmatpush1.msra.mxu0 %v644
    %3028 = vmatprep.subr.mxu0 %v649
    %3029 = vmatpush1.msra.mxu0 %v648
    %3030 = vmatprep.subr.mxu0 %v653
    %3031 = vmatpush1.msra.mxu0 %v652
    %3032 = vmatprep.subr.mxu0 %v657
    %3033 = vmatpush1.msra.mxu0 %v656
    %3034 = vmatprep.subr.mxu0 %v661
    %3035 = vmatpush1.msra.mxu0 %v660
    %3036 = vmatprep.subr.mxu0 %v665
    %3037 = vmatpush1.msra.mxu0 %v664
    %3038 = vmatprep.subr.mxu0 %v669
    %3039 = vmatpush1.msra.mxu0 %v668
    %3040 = vmatprep.subr.mxu0 %v673
    %3041 = vmatpush1.msra.mxu0 %v672
    %3042 = vmatprep.subr.mxu0 %v677
    %3043 = vmatpush1.msra.mxu0 %v676
    %3044 = vmatprep.subr.mxu0 %v681
    %3045 = vmatpush1.msra.mxu0 %v680
    %3046 = vmatprep.mubr.f32.mxu0 %v1688
    %3047 = vmatmul.mubr.f32.gmra.mrb[0].mxu0 %v1680
    %v3048 = vpop.f32.mrb[0].mxu0
    %v3049 = vadd.f32 %v2978, %v3048
    %v3050 = vpop.f32.mrb[0].mxu0
    %v3051 = vadd.f32 %v2980, %v3050
    %3052 = vdwg.mxu0
    %3053 = vmatprep.subr.mxu0 %v685
    %3054 = vmatpush1.msra.mxu0 %v684
    %3055 = vmatprep.subr.mxu0 %v689
    %3056 = vmatpush1.msra.mxu0 %v688
    %3057 = vmatprep.subr.mxu0 %v693
    %3058 = vmatpush1.msra.mxu0 %v692
    %3059 = vmatprep.subr.mxu0 %v697
    %3060 = vmatpush1.msra.mxu0 %v696
    %3061 = vmatprep.subr.mxu0 %v701
    %3062 = vmatpush1.msra.mxu0 %v700
    %3063 = vmatprep.subr.mxu0 %v705
    %3064 = vmatpush1.msra.mxu0 %v704
    %3065 = vmatprep.subr.mxu0 %v709
    %3066 = vmatpush1.msra.mxu0 %v708
    %3067 = vmatprep.subr.mxu0 %v713
    %3068 = vmatpush1.msra.mxu0 %v712
    %3069 = vmatprep.subr.mxu0 %v717
    %3070 = vmatpush1.msra.mxu0 %v716
    %3071 = vmatprep.subr.mxu0 %v721
    %3072 = vmatpush1.msra.mxu0 %v720
    %3073 = vmatprep.subr.mxu0 %v725
    %3074 = vmatpush1.msra.mxu0 %v724
    %3075 = vmatprep.subr.mxu0 %v729
    %3076 = vmatpush1.msra.mxu0 %v728
    %3077 = vmatprep.subr.mxu0 %v733
    %3078 = vmatpush1.msra.mxu0 %v732
    %3079 = vmatprep.subr.mxu0 %v737
    %3080 = vmatpush1.msra.mxu0 %v736
    %3081 = vmatprep.subr.mxu0 %v741
    %3082 = vmatpush1.msra.mxu0 %v740
    %3083 = vmatprep.subr.mxu0 %v745
    %3084 = vmatpush1.msra.mxu0 %v744
    %3085 = vmatprep.subr.mxu0 %v749
    %3086 = vmatpush1.msra.mxu0 %v748
    %3087 = vmatprep.subr.mxu0 %v753
    %3088 = vmatpush1.msra.mxu0 %v752
    %3089 = vmatprep.subr.mxu0 %v757
    %3090 = vmatpush1.msra.mxu0 %v756
    %3091 = vmatprep.subr.mxu0 %v761
    %3092 = vmatpush1.msra.mxu0 %v760
    %3093 = vmatprep.subr.mxu0 %v765
    %3094 = vmatpush1.msra.mxu0 %v764
    %3095 = vmatprep.subr.mxu0 %v769
    %3096 = vmatpush1.msra.mxu0 %v768
    %3097 = vmatprep.subr.mxu0 %v773
    %3098 = vmatpush1.msra.mxu0 %v772
    %3099 = vmatprep.subr.mxu0 %v777
    %3100 = vmatpush1.msra.mxu0 %v776
    %3101 = vmatprep.subr.mxu0 %v781
    %3102 = vmatpush1.msra.mxu0 %v780
    %3103 = vmatprep.subr.mxu0 %v785
    %3104 = vmatpush1.msra.mxu0 %v784
    %3105 = vmatprep.subr.mxu0 %v789
    %3106 = vmatpush1.msra.mxu0 %v788
    %3107 = vmatprep.subr.mxu0 %v793
    %3108 = vmatpush1.msra.mxu0 %v792
    %3109 = vmatprep.subr.mxu0 %v797
    %3110 = vmatpush1.msra.mxu0 %v796
    %3111 = vmatprep.subr.mxu0 %v801
    %3112 = vmatpush1.msra.mxu0 %v800
    %3113 = vmatprep.subr.mxu0 %v805
    %3114 = vmatpush1.msra.mxu0 %v804
    %3115 = vmatprep.subr.mxu0 %v809
    %3116 = vmatpush1.msra.mxu0 %v808
    %3117 = vmatprep.mubr.f32.mxu0 %v1689
    %3118 = vmatmul.mubr.f32.gmra.mrb[0].mxu0 %v1687
    %v3119 = vpop.f32.mrb[0].mxu0
    %v3120 = vadd.f32 %v3049, %v3119
    %v3121 = vpop.f32.mrb[0].mxu0
    %v3122 = vadd.f32 %v3051, %v3121
    %3123 = vdwg.mxu0
    %3124 = vmatprep.subr.mxu0 %v813
    %3125 = vmatpush1.msra.mxu0 %v812
    %3126 = vmatprep.subr.mxu0 %v817
    %3127 = vmatpush1.msra.mxu0 %v816
    %3128 = vmatprep.subr.mxu0 %v821
    %3129 = vmatpush1.msra.mxu0 %v820
    %3130 = vmatprep.subr.mxu0 %v825
    %3131 = vmatpush1.msra.mxu0 %v824
    %3132 = vmatprep.subr.mxu0 %v829
    %3133 = vmatpush1.msra.mxu0 %v828
    %3134 = vmatprep.subr.mxu0 %v833
    %3135 = vmatpush1.msra.mxu0 %v832
    %3136 = vmatprep.subr.mxu0 %v837
    %3137 = vmatpush1.msra.mxu0 %v836
    %3138 = vmatprep.subr.mxu0 %v841
    %3139 = vmatpush1.msra.mxu0 %v840
    %3140 = vmatprep.subr.mxu0 %v845
    %3141 = vmatpush1.msra.mxu0 %v844
    %3142 = vmatprep.subr.mxu0 %v849
    %3143 = vmatpush1.msra.mxu0 %v848
    %3144 = vmatprep.subr.mxu0 %v853
    %3145 = vmatpush1.msra.mxu0 %v852
    %3146 = vmatprep.subr.mxu0 %v857
    %3147 = vmatpush1.msra.mxu0 %v856
    %3148 = vmatprep.subr.mxu0 %v861
    %3149 = vmatpush1.msra.mxu0 %v860
    %3150 = vmatprep.subr.mxu0 %v865
    %3151 = vmatpush1.msra.mxu0 %v864
    %3152 = vmatprep.subr.mxu0 %v869
    %3153 = vmatpush1.msra.mxu0 %v868
    %3154 = vmatprep.subr.mxu0 %v873
    %3155 = vmatpush1.msra.mxu0 %v872
    %3156 = vmatprep.subr.mxu0 %v877
    %3157 = vmatpush1.msra.mxu0 %v876
    %3158 = vmatprep.subr.mxu0 %v881
    %3159 = vmatpush1.msra.mxu0 %v880
    %3160 = vmatprep.subr.mxu0 %v885
    %3161 = vmatpush1.msra.mxu0 %v884
    %3162 = vmatprep.subr.mxu0 %v889
    %3163 = vmatpush1.msra.mxu0 %v888
    %3164 = vmatprep.subr.mxu0 %v893
    %3165 = vmatpush1.msra.mxu0 %v892
    %3166 = vmatprep.subr.mxu0 %v897
    %3167 = vmatpush1.msra.mxu0 %v896
    %3168 = vmatprep.subr.mxu0 %v901
    %3169 = vmatpush1.msra.mxu0 %v900
    %3170 = vmatprep.subr.mxu0 %v905
    %3171 = vmatpush1.msra.mxu0 %v904
    %3172 = vmatprep.subr.mxu0 %v909
    %3173 = vmatpush1.msra.mxu0 %v908
    %3174 = vmatprep.subr.mxu0 %v913
    %3175 = vmatpush1.msra.mxu0 %v912
    %3176 = vmatprep.subr.mxu0 %v917
    %3177 = vmatpush1.msra.mxu0 %v916
    %3178 = vmatprep.subr.mxu0 %v921
    %3179 = vmatpush1.msra.mxu0 %v920
    %3180 = vmatprep.subr.mxu0 %v925
    %3181 = vmatpush1.msra.mxu0 %v924
    %3182 = vmatprep.subr.mxu0 %v929
    %3183 = vmatpush1.msra.mxu0 %v928
    %3184 = vmatprep.subr.mxu0 %v933
    %3185 = vmatpush1.msra.mxu0 %v932
    %3186 = vmatprep.subr.mxu0 %v937
    %3187 = vmatpush1.msra.mxu0 %v936
    %3188 = vmatprep.mubr.f32.mxu0 %v1705
    %3189 = vmatmul.mubr.f32.gmra.mrb[0].mxu0 %v1697
    %v3190 = vpop.f32.mrb[0].mxu0
    %v3191 = vadd.f32 %v3120, %v3190
    %v3192 = vpop.f32.mrb[0].mxu0
    %v3193 = vadd.f32 %v3122, %v3192
    %3194 = vdwg.mxu0
    %3195 = vmatprep.subr.mxu0 %v941
    %3196 = vmatpush1.msra.mxu0 %v940
    %3197 = vmatprep.subr.mxu0 %v945
    %3198 = vmatpush1.msra.mxu0 %v944
    %3199 = vmatprep.subr.mxu0 %v949
    %3200 = vmatpush1.msra.mxu0 %v948
    %3201 = vmatprep.subr.mxu0 %v953
    %3202 = vmatpush1.msra.mxu0 %v952
    %3203 = vmatprep.subr.mxu0 %v957
    %3204 = vmatpush1.msra.mxu0 %v956
    %3205 = vmatprep.subr.mxu0 %v961
    %3206 = vmatpush1.msra.mxu0 %v960
    %3207 = vmatprep.subr.mxu0 %v965
    %3208 = vmatpush1.msra.mxu0 %v964
    %3209 = vmatprep.subr.mxu0 %v969
    %3210 = vmatpush1.msra.mxu0 %v968
    %3211 = vmatprep.subr.mxu0 %v973
    %3212 = vmatpush1.msra.mxu0 %v972
    %3213 = vmatprep.subr.mxu0 %v977
    %3214 = vmatpush1.msra.mxu0 %v976
    %3215 = vmatprep.subr.mxu0 %v981
    %3216 = vmatpush1.msra.mxu0 %v980
    %3217 = vmatprep.subr.mxu0 %v985
    %3218 = vmatpush1.msra.mxu0 %v984
    %3219 = vmatprep.subr.mxu0 %v989
    %3220 = vmatpush1.msra.mxu0 %v988
    %3221 = vmatprep.subr.mxu0 %v993
    %3222 = vmatpush1.msra.mxu0 %v992
    %3223 = vmatprep.subr.mxu0 %v997
    %3224 = vmatpush1.msra.mxu0 %v996
    %3225 = vmatprep.subr.mxu0 %v1001
    %3226 = vmatpush1.msra.mxu0 %v1000
    %3227 = vmatprep.subr.mxu0 %v1005
    %3228 = vmatpush1.msra.mxu0 %v1004
    %3229 = vmatprep.subr.mxu0 %v1009
    %3230 = vmatpush1.msra.mxu0 %v1008
    %3231 = vmatprep.subr.mxu0 %v1013
    %3232 = vmatpush1.msra.mxu0 %v1012
    %3233 = vmatprep.subr.mxu0 %v1017
    %3234 = vmatpush1.msra.mxu0 %v1016
    %3235 = vmatprep.subr.mxu0 %v1021
    %3236 = vmatpush1.msra.mxu0 %v1020
    %3237 = vmatprep.subr.mxu0 %v1025
    %3238 = vmatpush1.msra.mxu0 %v1024
    %3239 = vmatprep.subr.mxu0 %v1029
    %3240 = vmatpush1.msra.mxu0 %v1028
    %3241 = vmatprep.subr.mxu0 %v1033
    %3242 = vmatpush1.msra.mxu0 %v1032
    %3243 = vmatprep.subr.mxu0 %v1037
    %3244 = vmatpush1.msra.mxu0 %v1036
    %3245 = vmatprep.subr.mxu0 %v1041
    %3246 = vmatpush1.msra.mxu0 %v1040
    %3247 = vmatprep.subr.mxu0 %v1045
    %3248 = vmatpush1.msra.mxu0 %v1044
    %3249 = vmatprep.subr.mxu0 %v1049
    %3250 = vmatpush1.msra.mxu0 %v1048
    %3251 = vmatprep.subr.mxu0 %v1053
    %3252 = vmatpush1.msra.mxu0 %v1052
    %3253 = vmatprep.subr.mxu0 %v1057
    %3254 = vmatpush1.msra.mxu0 %v1056
    %3255 = vmatprep.subr.mxu0 %v1061
    %3256 = vmatpush1.msra.mxu0 %v1060
    %3257 = vmatprep.subr.mxu0 %v1065
    %3258 = vmatpush1.msra.mxu0 %v1064
    %3259 = vmatprep.mubr.f32.mxu0 %v1706
    %3260 = vmatmul.mubr.f32.gmra.mrb[0].mxu0 %v1704
    %v3261 = vpop.f32.mrb[0].mxu0
    %v3262 = vadd.f32 %v3191, %v3261
    %v3263 = vpop.f32.mrb[0].mxu0
    %v3264 = vadd.f32 %v3193, %v3263
    %3265 = vdwg.mxu0
    %3266 = vmatprep.subr.mxu0 %v1069
    %3267 = vmatpush1.msra.mxu0 %v1068
    %3268 = vmatprep.subr.mxu0 %v1073
    %3269 = vmatpush1.msra.mxu0 %v1072
    %3270 = vmatprep.subr.mxu0 %v1077
    %3271 = vmatpush1.msra.mxu0 %v1076
    %3272 = vmatprep.subr.mxu0 %v1081
    %3273 = vmatpush1.msra.mxu0 %v1080
    %3274 = vmatprep.subr.mxu0 %v1085
    %3275 = vmatpush1.msra.mxu0 %v1084
    %3276 = vmatprep.subr.mxu0 %v1089
    %3277 = vmatpush1.msra.mxu0 %v1088
    %3278 = vmatprep.subr.mxu0 %v1093
    %3279 = vmatpush1.msra.mxu0 %v1092
    %3280 = vmatprep.subr.mxu0 %v1097
    %3281 = vmatpush1.msra.mxu0 %v1096
    %3282 = vmatprep.subr.mxu0 %v1101
    %3283 = vmatpush1.msra.mxu0 %v1100
    %3284 = vmatprep.subr.mxu0 %v1105
    %3285 = vmatpush1.msra.mxu0 %v1104
    %3286 = vmatprep.subr.mxu0 %v1109
    %3287 = vmatpush1.msra.mxu0 %v1108
    %3288 = vmatprep.subr.mxu0 %v1113
    %3289 = vmatpush1.msra.mxu0 %v1112
    %3290 = vmatprep.subr.mxu0 %v1117
    %3291 = vmatpush1.msra.mxu0 %v1116
    %3292 = vmatprep.subr.mxu0 %v1121
    %3293 = vmatpush1.msra.mxu0 %v1120
    %3294 = vmatprep.subr.mxu0 %v1125
    %3295 = vmatpush1.msra.mxu0 %v1124
    %3296 = vmatprep.subr.mxu0 %v1129
    %3297 = vmatpush1.msra.mxu0 %v1128
    %3298 = vmatprep.subr.mxu0 %v1133
    %3299 = vmatpush1.msra.mxu0 %v1132
    %3300 = vmatprep.subr.mxu0 %v1137
    %3301 = vmatpush1.msra.mxu0 %v1136
    %3302 = vmatprep.subr.mxu0 %v1141
    %3303 = vmatpush1.msra.mxu0 %v1140
    %3304 = vmatprep.subr.mxu0 %v1145
    %3305 = vmatpush1.msra.mxu0 %v1144
    %3306 = vmatprep.subr.mxu0 %v1149
    %3307 = vmatpush1.msra.mxu0 %v1148
    %3308 = vmatprep.subr.mxu0 %v1153
    %3309 = vmatpush1.msra.mxu0 %v1152
    %3310 = vmatprep.subr.mxu0 %v1157
    %3311 = vmatpush1.msra.mxu0 %v1156
    %3312 = vmatprep.subr.mxu0 %v1161
    %3313 = vmatpush1.msra.mxu0 %v1160
    %3314 = vmatprep.subr.mxu0 %v1165
    %3315 = vmatpush1.msra.mxu0 %v1164
    %3316 = vmatprep.subr.mxu0 %v1169
    %3317 = vmatpush1.msra.mxu0 %v1168
    %3318 = vmatprep.subr.mxu0 %v1173
    %3319 = vmatpush1.msra.mxu0 %v1172
    %3320 = vmatprep.subr.mxu0 %v1177
    %3321 = vmatpush1.msra.mxu0 %v1176
    %3322 = vmatprep.subr.mxu0 %v1181
    %3323 = vmatpush1.msra.mxu0 %v1180
    %3324 = vmatprep.subr.mxu0 %v1185
    %3325 = vmatpush1.msra.mxu0 %v1184
    %3326 = vmatprep.subr.mxu0 %v1189
    %3327 = vmatpush1.msra.mxu0 %v1188
    %3328 = vmatprep.subr.mxu0 %v1193
    %3329 = vmatpush1.msra.mxu0 %v1192
    %3330 = vmatprep.mubr.f32.mxu0 %v1722
    %3331 = vmatmul.mubr.f32.gmra.mrb[0].mxu0 %v1714
    %v3332 = vpop.f32.mrb[0].mxu0
    %v3333 = vadd.f32 %v3262, %v3332
    %v3334 = vpop.f32.mrb[0].mxu0
    %v3335 = vadd.f32 %v3264, %v3334
    %3336 = vdwg.mxu0
    %3337 = vmatprep.subr.mxu0 %v1197
    %3338 = vmatpush1.msra.mxu0 %v1196
    %3339 = vmatprep.subr.mxu0 %v1201
    %3340 = vmatpush1.msra.mxu0 %v1200
    %3341 = vmatprep.subr.mxu0 %v1205
    %3342 = vmatpush1.msra.mxu0 %v1204
    %3343 = vmatprep.subr.mxu0 %v1209
    %3344 = vmatpush1.msra.mxu0 %v1208
    %3345 = vmatprep.subr.mxu0 %v1213
    %3346 = vmatpush1.msra.mxu0 %v1212
    %3347 = vmatprep.subr.mxu0 %v1217
    %3348 = vmatpush1.msra.mxu0 %v1216
    %3349 = vmatprep.subr.mxu0 %v1221
    %3350 = vmatpush1.msra.mxu0 %v1220
    %3351 = vmatprep.subr.mxu0 %v1225
    %3352 = vmatpush1.msra.mxu0 %v1224
    %3353 = vmatprep.subr.mxu0 %v1229
    %3354 = vmatpush1.msra.mxu0 %v1228
    %3355 = vmatprep.subr.mxu0 %v1233
    %3356 = vmatpush1.msra.mxu0 %v1232
    %3357 = vmatprep.subr.mxu0 %v1237
    %3358 = vmatpush1.msra.mxu0 %v1236
    %3359 = vmatprep.subr.mxu0 %v1241
    %3360 = vmatpush1.msra.mxu0 %v1240
    %3361 = vmatprep.subr.mxu0 %v1245
    %3362 = vmatpush1.msra.mxu0 %v1244
    %3363 = vmatprep.subr.mxu0 %v1249
    %3364 = vmatpush1.msra.mxu0 %v1248
    %3365 = vmatprep.subr.mxu0 %v1253
    %3366 = vmatpush1.msra.mxu0 %v1252
    %3367 = vmatprep.subr.mxu0 %v1257
    %3368 = vmatpush1.msra.mxu0 %v1256
    %3369 = vmatprep.subr.mxu0 %v1261
    %3370 = vmatpush1.msra.mxu0 %v1260
    %3371 = vmatprep.subr.mxu0 %v1265
    %3372 = vmatpush1.msra.mxu0 %v1264
    %3373 = vmatprep.subr.mxu0 %v1269
    %3374 = vmatpush1.msra.mxu0 %v1268
    %3375 = vmatprep.subr.mxu0 %v1273
    %3376 = vmatpush1.msra.mxu0 %v1272
    %3377 = vmatprep.subr.mxu0 %v1277
    %3378 = vmatpush1.msra.mxu0 %v1276
    %3379 = vmatprep.subr.mxu0 %v1281
    %3380 = vmatpush1.msra.mxu0 %v1280
    %3381 = vmatprep.subr.mxu0 %v1285
    %3382 = vmatpush1.msra.mxu0 %v1284
    %3383 = vmatprep.subr.mxu0 %v1289
    %3384 = vmatpush1.msra.mxu0 %v1288
    %3385 = vmatprep.subr.mxu0 %v1293
    %3386 = vmatpush1.msra.mxu0 %v1292
    %3387 = vmatprep.subr.mxu0 %v1297
    %3388 = vmatpush1.msra.mxu0 %v1296
    %3389 = vmatprep.subr.mxu0 %v1301
    %3390 = vmatpush1.msra.mxu0 %v1300
    %3391 = vmatprep.subr.mxu0 %v1305
    %3392 = vmatpush1.msra.mxu0 %v1304
    %3393 = vmatprep.subr.mxu0 %v1309
    %3394 = vmatpush1.msra.mxu0 %v1308
    %3395 = vmatprep.subr.mxu0 %v1313
    %3396 = vmatpush1.msra.mxu0 %v1312
    %3397 = vmatprep.subr.mxu0 %v1317
    %3398 = vmatpush1.msra.mxu0 %v1316
    %3399 = vmatprep.subr.mxu0 %v1321
    %3400 = vmatpush1.msra.mxu0 %v1320
    %3401 = vmatprep.mubr.f32.mxu0 %v1723
    %3402 = vmatmul.mubr.f32.gmra.mrb[0].mxu0 %v1721
    %v3403 = vpop.f32.mrb[0].mxu0
    %v3404 = vadd.f32 %v3333, %v3403
    %v3405 = vpop.f32.mrb[0].mxu0
    %v3406 = vadd.f32 %v3335, %v3405
    %3407 = vdwg.mxu0
    %3408 = vmatprep.subr.mxu0 %v1325
    %3409 = vmatpush1.msra.mxu0 %v1324
    %3410 = vmatprep.subr.mxu0 %v1329
    %3411 = vmatpush1.msra.mxu0 %v1328
    %3412 = vmatprep.subr.mxu0 %v1333
    %3413 = vmatpush1.msra.mxu0 %v1332
    %3414 = vmatprep.subr.mxu0 %v1337
    %3415 = vmatpush1.msra.mxu0 %v1336
    %3416 = vmatprep.subr.mxu0 %v1341
    %3417 = vmatpush1.msra.mxu0 %v1340
    %3418 = vmatprep.subr.mxu0 %v1345
    %3419 = vmatpush1.msra.mxu0 %v1344
    %3420 = vmatprep.subr.mxu0 %v1349
    %3421 = vmatpush1.msra.mxu0 %v1348
    %3422 = vmatprep.subr.mxu0 %v1353
    %3423 = vmatpush1.msra.mxu0 %v1352
    %3424 = vmatprep.subr.mxu0 %v1357
    %3425 = vmatpush1.msra.mxu0 %v1356
    %3426 = vmatprep.subr.mxu0 %v1361
    %3427 = vmatpush1.msra.mxu0 %v1360
    %3428 = vmatprep.subr.mxu0 %v1365
    %3429 = vmatpush1.msra.mxu0 %v1364
    %3430 = vmatprep.subr.mxu0 %v1369
    %3431 = vmatpush1.msra.mxu0 %v1368
    %3432 = vmatprep.subr.mxu0 %v1373
    %3433 = vmatpush1.msra.mxu0 %v1372
    %3434 = vmatprep.subr.mxu0 %v1377
    %3435 = vmatpush1.msra.mxu0 %v1376
    %3436 = vmatprep.subr.mxu0 %v1381
    %3437 = vmatpush1.msra.mxu0 %v1380
    %3438 = vmatprep.subr.mxu0 %v1385
    %3439 = vmatpush1.msra.mxu0 %v1384
    %3440 = vmatprep.subr.mxu0 %v1389
    %3441 = vmatpush1.msra.mxu0 %v1388
    %3442 = vmatprep.subr.mxu0 %v1393
    %3443 = vmatpush1.msra.mxu0 %v1392
    %3444 = vmatprep.subr.mxu0 %v1397
    %3445 = vmatpush1.msra.mxu0 %v1396
    %3446 = vmatprep.subr.mxu0 %v1401
    %3447 = vmatpush1.msra.mxu0 %v1400
    %3448 = vmatprep.subr.mxu0 %v1405
    %3449 = vmatpush1.msra.mxu0 %v1404
    %3450 = vmatprep.subr.mxu0 %v1409
    %3451 = vmatpush1.msra.mxu0 %v1408
    %3452 = vmatprep.subr.mxu0 %v1413
    %3453 = vmatpush1.msra.mxu0 %v1412
    %3454 = vmatprep.subr.mxu0 %v1417
    %3455 = vmatpush1.msra.mxu0 %v1416
    %3456 = vmatprep.subr.mxu0 %v1421
    %3457 = vmatpush1.msra.mxu0 %v1420
    %3458 = vmatprep.subr.mxu0 %v1425
    %3459 = vmatpush1.msra.mxu0 %v1424
    %3460 = vmatprep.subr.mxu0 %v1429
    %3461 = vmatpush1.msra.mxu0 %v1428
    %3462 = vmatprep.subr.mxu0 %v1433
    %3463 = vmatpush1.msra.mxu0 %v1432
    %3464 = vmatprep.subr.mxu0 %v1437
    %3465 = vmatpush1.msra.mxu0 %v1436
    %3466 = vmatprep.subr.mxu0 %v1441
    %3467 = vmatpush1.msra.mxu0 %v1440
    %3468 = vmatprep.subr.mxu0 %v1445
    %3469 = vmatpush1.msra.mxu0 %v1444
    %3470 = vmatprep.subr.mxu0 %v1449
    %3471 = vmatpush1.msra.mxu0 %v1448
    %3472 = vmatprep.mubr.f32.mxu0 %v1739
    %3473 = vmatmul.mubr.f32.gmra.mrb[0].mxu0 %v1731
    %v3474 = vpop.f32.mrb[0].mxu0
    %v3475 = vadd.f32 %v3404, %v3474
    %v3476 = vpop.f32.mrb[0].mxu0
    %v3477 = vadd.f32 %v3406, %v3476
    %3478 = vdwg.mxu0
    %3479 = vmatprep.subr.mxu0 %v1453
    %3480 = vmatpush1.msra.mxu0 %v1452
    %3481 = vmatprep.subr.mxu0 %v1457
    %3482 = vmatpush1.msra.mxu0 %v1456
    %3483 = vmatprep.subr.mxu0 %v1461
    %3484 = vmatpush1.msra.mxu0 %v1460
    %3485 = vmatprep.subr.mxu0 %v1465
    %3486 = vmatpush1.msra.mxu0 %v1464
    %3487 = vmatprep.subr.mxu0 %v1469
    %3488 = vmatpush1.msra.mxu0 %v1468
    %3489 = vmatprep.subr.mxu0 %v1473
    %3490 = vmatpush1.msra.mxu0 %v1472
    %3491 = vmatprep.subr.mxu0 %v1477
    %3492 = vmatpush1.msra.mxu0 %v1476
    %3493 = vmatprep.subr.mxu0 %v1481
    %3494 = vmatpush1.msra.mxu0 %v1480
    %3495 = vmatprep.subr.mxu0 %v1485
    %3496 = vmatpush1.msra.mxu0 %v1484
    %3497 = vmatprep.subr.mxu0 %v1489
    %3498 = vmatpush1.msra.mxu0 %v1488
    %3499 = vmatprep.subr.mxu0 %v1493
    %3500 = vmatpush1.msra.mxu0 %v1492
    %3501 = vmatprep.subr.mxu0 %v1497
    %3502 = vmatpush1.msra.mxu0 %v1496
    %3503 = vmatprep.subr.mxu0 %v1501
    %3504 = vmatpush1.msra.mxu0 %v1500
    %3505 = vmatprep.subr.mxu0 %v1505
    %3506 = vmatpush1.msra.mxu0 %v1504
    %3507 = vmatprep.subr.mxu0 %v1509
    %3508 = vmatpush1.msra.mxu0 %v1508
    %3509 = vmatprep.subr.mxu0 %v1513
    %3510 = vmatpush1.msra.mxu0 %v1512
    %3511 = vmatprep.subr.mxu0 %v1517
    %3512 = vmatpush1.msra.mxu0 %v1516
    %3513 = vmatprep.subr.mxu0 %v1521
    %3514 = vmatpush1.msra.mxu0 %v1520
    %3515 = vmatprep.subr.mxu0 %v1525
    %3516 = vmatpush1.msra.mxu0 %v1524
    %3517 = vmatprep.subr.mxu0 %v1529
    %3518 = vmatpush1.msra.mxu0 %v1528
    %3519 = vmatprep.subr.mxu0 %v1533
    %3520 = vmatpush1.msra.mxu0 %v1532
    %3521 = vmatprep.subr.mxu0 %v1537
    %3522 = vmatpush1.msra.mxu0 %v1536
    %3523 = vmatprep.subr.mxu0 %v1541
    %3524 = vmatpush1.msra.mxu0 %v1540
    %3525 = vmatprep.subr.mxu0 %v1545
    %3526 = vmatpush1.msra.mxu0 %v1544
    %3527 = vmatprep.subr.mxu0 %v1549
    %3528 = vmatpush1.msra.mxu0 %v1548
    %3529 = vmatprep.subr.mxu0 %v1553
    %3530 = vmatpush1.msra.mxu0 %v1552
    %3531 = vmatprep.subr.mxu0 %v1557
    %3532 = vmatpush1.msra.mxu0 %v1556
    %3533 = vmatprep.subr.mxu0 %v1561
    %3534 = vmatpush1.msra.mxu0 %v1560
    %3535 = vmatprep.subr.mxu0 %v1565
    %3536 = vmatpush1.msra.mxu0 %v1564
    %3537 = vmatprep.subr.mxu0 %v1569
    %3538 = vmatpush1.msra.mxu0 %v1568
    %3539 = vmatprep.subr.mxu0 %v1573
    %3540 = vmatpush1.msra.mxu0 %v1572
    %3541 = vmatprep.subr.mxu0 %v1577
    %3542 = vmatpush1.msra.mxu0 %v1576
    %3543 = vmatprep.mubr.f32.mxu0 %v1740
    %3544 = vmatmul.mubr.f32.gmra.mrb[0].mxu0 %v1738
    %v3545 = vpop.f32.mrb[0].mxu0
    %v3546 = vadd.f32 %v3475, %v3545
    %v3547 = vpop.f32.mrb[0].mxu0
    %v3548 = vadd.f32 %v3477, %v3547
    %3549 = vdwg.mxu0
    %3550 = vmatprep.subr.mxu0 %v1581
    %3551 = vmatpush1.msra.mxu0 %v1580
    %3552 = vmatprep.subr.mxu0 %v1585
    %3553 = vmatpush1.msra.mxu0 %v1584
    %3554 = vmatprep.subr.mxu0 %v1589
    %3555 = vmatpush1.msra.mxu0 %v1588
    %3556 = vmatprep.subr.mxu0 %v1593
    %3557 = vmatpush1.msra.mxu0 %v1592
    %3558 = vmatprep.subr.mxu0 %v1597
    %3559 = vmatpush1.msra.mxu0 %v1596
    %3560 = vmatprep.subr.mxu0 %v1601
    %3561 = vmatpush1.msra.mxu0 %v1600
    %3562 = vmatprep.subr.mxu0 %v1605
    %3563 = vmatpush1.msra.mxu0 %v1604
    %3564 = vmatprep.subr.mxu0 %v1609
    %3565 = vmatpush1.msra.mxu0 %v1608
    %3566 = vmatprep.subr.mxu0 0.0
    %3567 = vmatpush1.msra.mxu0 0.0
    %3568 = vmatprep.subr.mxu0 0.0
    %3569 = vmatpush1.msra.mxu0 0.0
    %3570 = vmatprep.subr.mxu0 0.0
    %3571 = vmatpush1.msra.mxu0 0.0
    %3572 = vmatprep.subr.mxu0 0.0
    %3573 = vmatpush1.msra.mxu0 0.0
    %3574 = vmatprep.subr.mxu0 0.0
    %3575 = vmatpush1.msra.mxu0 0.0
    %3576 = vmatprep.subr.mxu0 0.0
    %3577 = vmatpush1.msra.mxu0 0.0
    %3578 = vmatprep.subr.mxu0 0.0
    %3579 = vmatpush1.msra.mxu0 0.0
    %3580 = vmatprep.subr.mxu0 0.0
    %3581 = vmatpush1.msra.mxu0 0.0
    %3582 = vmatprep.subr.mxu0 0.0
    %3583 = vmatpush1.msra.mxu0 0.0
    %3584 = vmatprep.subr.mxu0 0.0
    %3585 = vmatpush1.msra.mxu0 0.0
    %3586 = vmatprep.subr.mxu0 0.0
    %3587 = vmatpush1.msra.mxu0 0.0
    %3588 = vmatprep.subr.mxu0 0.0
    %3589 = vmatpush1.msra.mxu0 0.0
    %3590 = vmatprep.subr.mxu0 0.0
    %3591 = vmatpush1.msra.mxu0 0.0
    %3592 = vmatprep.subr.mxu0 0.0
    %3593 = vmatpush1.msra.mxu0 0.0
    %3594 = vmatprep.subr.mxu0 0.0
    %3595 = vmatpush1.msra.mxu0 0.0
    %3596 = vmatprep.subr.mxu0 0.0
    %3597 = vmatpush1.msra.mxu0 0.0
    %3598 = vmatprep.subr.mxu0 0.0
    %3599 = vmatpush1.msra.mxu0 0.0
    %3600 = vmatprep.subr.mxu0 0.0
    %3601 = vmatpush1.msra.mxu0 0.0
    %3602 = vmatprep.subr.mxu0 0.0
    %3603 = vmatpush1.msra.mxu0 0.0
    %3604 = vmatprep.subr.mxu0 0.0
    %3605 = vmatpush1.msra.mxu0 0.0
    %3606 = vmatprep.subr.mxu0 0.0
    %3607 = vmatpush1.msra.mxu0 0.0
    %3608 = vmatprep.subr.mxu0 0.0
    %3609 = vmatpush1.msra.mxu0 0.0
    %3610 = vmatprep.subr.mxu0 0.0
    %3611 = vmatpush1.msra.mxu0 0.0
    %3612 = vmatprep.subr.mxu0 0.0
    %3613 = vmatpush1.msra.mxu0 0.0
    %3614 = vmatprep.mubr.f32.mxu0 0.0
    %3615 = vmatmul.mubr.f32.gmra.mrb[0].mxu0 %v1773
    %v3616 = vpop.f32.mrb[0].mxu0
    %v3617 = vadd.f32 %v3546, %v3616
    %v3618 = vpop.f32.mrb[0].mxu0
    %v3619 = vadd.f32 %v3548, %v3618
    %3620 = vdwg.mxu0
    %v3621 = vmax.f32 %v2694, 0.0
    %v3622 = vmax.f32 %v2696, 0.0
    %v3623 = vmax.f32 %v3617, 0.0
    %v3624 = vmax.f32 %v3619, 0.0
    %v3625 = vld [vmem:[%s3] sm:$0xff]
    %v3626 = vld [vmem:[%s3 + $0x8] sm:$0xff]
    %v3627 = vld [vmem:[%s3 + $0x10] sm:$0xff]
    %v3628 = vld [vmem:[%s3 + $0x18] sm:$0xff]
    %v3629 = vld [vmem:[%s3 + $0x20] sm:$0xff]
    %v3630 = vld [vmem:[%s3 + $0x28] sm:$0xff]
    %v3631 = vld [vmem:[%s3 + $0x30] sm:$0xff]
    %v3632 = vld [vmem:[%s3 + $0x38] sm:$0xff]
    %v3633 = vld [vmem:[%s3 + $0x40] sm:$0xff]
    %v3634 = vld [vmem:[%s3 + $0x48] sm:$0xff]
    %v3635 = vld [vmem:[%s3 + $0x50] sm:$0xff]
    %v3636 = vld [vmem:[%s3 + $0x58] sm:$0xff]
    %v3637 = vld [vmem:[%s3 + $0x60] sm:$0xff]
    %v3638 = vld [vmem:[%s3 + $0x68] sm:$0xff]
    %v3639 = vld [vmem:[%s3 + $0x70] sm:$0xff]
    %v3640 = vld [vmem:[%s3 + $0x78] sm:$0xff]
    %v3641 = vld [vmem:[%s3 + $0x80] sm:$0xff]
    %v3642 = vld [vmem:[%s3 + $0x88] sm:$0xff]
    %v3643 = vld [vmem:[%s3 + $0x90] sm:$0xff]
    %v3644 = vld [vmem:[%s3 + $0x98] sm:$0xff]
    %v3645 = vld [vmem:[%s3 + $0xa0] sm:$0xff]
    %v3646 = vld [vmem:[%s3 + $0xa8] sm:$0xff]
    %v3647 = vld [vmem:[%s3 + $0xb0] sm:$0xff]
    %v3648 = vld [vmem:[%s3 + $0xb8] sm:$0xff]
    %v3649 = vld [vmem:[%s3 + $0xc0] sm:$0xff]
    %v3650 = vld [vmem:[%s3 + $0xc8] sm:$0xff]
    %v3651 = vld [vmem:[%s3 + $0xd0] sm:$0xff]
    %v3652 = vld [vmem:[%s3 + $0xd8] sm:$0xff]
    %v3653 = vld [vmem:[%s3 + $0xe0] sm:$0xff]
    %v3654 = vld [vmem:[%s3 + $0xe8] sm:$0xff]
    %v3655 = vld [vmem:[%s3 + $0xf0] sm:$0xff]
    %v3656 = vld [vmem:[%s3 + $0xf8] sm:$0xff]
    %v3657 = vld [vmem:[%s3 + $0x100] sm:$0xff]
    %v3658 = vld [vmem:[%s3 + $0x108] sm:$0xff]
    %v3659 = vld [vmem:[%s3 + $0x110] sm:$0xff]
    %v3660 = vld [vmem:[%s3 + $0x118] sm:$0xff]
    %v3661 = vld [vmem:[%s3 + $0x120] sm:$0xff]
    %v3662 = vld [vmem:[%s3 + $0x128] sm:$0xff]
    %v3663 = vld [vmem:[%s3 + $0x130] sm:$0xff]
    %v3664 = vld [vmem:[%s3 + $0x138] sm:$0xff]
    %v3665 = vld [vmem:[%s3 + $0x140] sm:$0xff]
    %v3666 = vld [vmem:[%s3 + $0x148] sm:$0xff]
    %v3667 = vld [vmem:[%s3 + $0x150] sm:$0xff]
    %v3668 = vld [vmem:[%s3 + $0x158] sm:$0xff]
    %v3669 = vld [vmem:[%s3 + $0x160] sm:$0xff]
    %v3670 = vld [vmem:[%s3 + $0x168] sm:$0xff]
    %v3671 = vld [vmem:[%s3 + $0x170] sm:$0xff]
    %v3672 = vld [vmem:[%s3 + $0x178] sm:$0xff]
    %v3673 = vld [vmem:[%s3 + $0x180] sm:$0xff]
    %v3674 = vld [vmem:[%s3 + $0x188] sm:$0xff]
    %v3675 = vld [vmem:[%s3 + $0x190] sm:$0xff]
    %v3676 = vld [vmem:[%s3 + $0x198] sm:$0xff]
    %v3677 = vld [vmem:[%s3 + $0x1a0] sm:$0xff]
    %v3678 = vld [vmem:[%s3 + $0x1a8] sm:$0xff]
    %v3679 = vld [vmem:[%s3 + $0x1b0] sm:$0xff]
    %v3680 = vld [vmem:[%s3 + $0x1b8] sm:$0xff]
    %v3681 = vld [vmem:[%s3 + $0x1c0] sm:$0xff]
    %v3682 = vld [vmem:[%s3 + $0x1c8] sm:$0xff]
    %v3683 = vld [vmem:[%s3 + $0x1d0] sm:$0xff]
    %v3684 = vld [vmem:[%s3 + $0x1d8] sm:$0xff]
    %v3685 = vld [vmem:[%s3 + $0x1e0] sm:$0xff]
    %v3686 = vld [vmem:[%s3 + $0x1e8] sm:$0xff]
    %v3687 = vld [vmem:[%s3 + $0x1f0] sm:$0xff]
    %v3688 = vld [vmem:[%s3 + $0x1f8] sm:$0xff]
    %v3689 = vld [vmem:[%s4] sm:$0x1]
    %v3691 = vlaneseq
    %v3692 = vshrl.u32 %v3691, 7
    %v3693 = vsub.s32 0, %v3692
    %v3694 = vrot.slane %v3689, %v3693
    %3696 = vmatprep.subr.mxu0 0.0
    %3697 = vmatpush1.msra.mxu0 %v3625
    %3698 = vmatprep.subr.mxu0 0.0
    %3699 = vmatpush1.msra.mxu0 %v3626
    %3700 = vmatprep.subr.mxu0 0.0
    %3701 = vmatpush1.msra.mxu0 %v3627
    %3702 = vmatprep.subr.mxu0 0.0
    %3703 = vmatpush1.msra.mxu0 %v3628
    %3704 = vmatprep.subr.mxu0 0.0
    %3705 = vmatpush1.msra.mxu0 %v3629
    %3706 = vmatprep.subr.mxu0 0.0
    %3707 = vmatpush1.msra.mxu0 %v3630
    %3708 = vmatprep.subr.mxu0 0.0
    %3709 = vmatpush1.msra.mxu0 %v3631
    %3710 = vmatprep.subr.mxu0 0.0
    %3711 = vmatpush1.msra.mxu0 %v3632
    %3712 = vmatprep.subr.mxu0 0.0
    %3713 = vmatpush1.msra.mxu0 %v3633
    %3714 = vmatprep.subr.mxu0 0.0
    %3715 = vmatpush1.msra.mxu0 %v3634
    %3716 = vmatprep.subr.mxu0 0.0
    %3717 = vmatpush1.msra.mxu0 %v3635
    %3718 = vmatprep.subr.mxu0 0.0
    %3719 = vmatpush1.msra.mxu0 %v3636
    %3720 = vmatprep.subr.mxu0 0.0
    %3721 = vmatpush1.msra.mxu0 %v3637
    %3722 = vmatprep.subr.mxu0 0.0
    %3723 = vmatpush1.msra.mxu0 %v3638
    %3724 = vmatprep.subr.mxu0 0.0
    %3725 = vmatpush1.msra.mxu0 %v3639
    %3726 = vmatprep.subr.mxu0 0.0
    %3727 = vmatpush1.msra.mxu0 %v3640
    %3728 = vmatprep.subr.mxu0 0.0
    %3729 = vmatpush1.msra.mxu0 %v3641
    %3730 = vmatprep.subr.mxu0 0.0
    %3731 = vmatpush1.msra.mxu0 %v3642
    %3732 = vmatprep.subr.mxu0 0.0
    %3733 = vmatpush1.msra.mxu0 %v3643
    %3734 = vmatprep.subr.mxu0 0.0
    %3735 = vmatpush1.msra.mxu0 %v3644
    %3736 = vmatprep.subr.mxu0 0.0
    %3737 = vmatpush1.msra.mxu0 %v3645
    %3738 = vmatprep.subr.mxu0 0.0
    %3739 = vmatpush1.msra.mxu0 %v3646
    %3740 = vmatprep.subr.mxu0 0.0
    %3741 = vmatpush1.msra.mxu0 %v3647
    %3742 = vmatprep.subr.mxu0 0.0
    %3743 = vmatpush1.msra.mxu0 %v3648
    %3744 = vmatprep.subr.mxu0 0.0
    %3745 = vmatpush1.msra.mxu0 %v3649
    %3746 = vmatprep.subr.mxu0 0.0
    %3747 = vmatpush1.msra.mxu0 %v3650
    %3748 = vmatprep.subr.mxu0 0.0
    %3749 = vmatpush1.msra.mxu0 %v3651
    %3750 = vmatprep.subr.mxu0 0.0
    %3751 = vmatpush1.msra.mxu0 %v3652
    %3752 = vmatprep.subr.mxu0 0.0
    %3753 = vmatpush1.msra.mxu0 %v3653
    %3754 = vmatprep.subr.mxu0 0.0
    %3755 = vmatpush1.msra.mxu0 %v3654
    %3756 = vmatprep.subr.mxu0 0.0
    %3757 = vmatpush1.msra.mxu0 %v3655
    %3758 = vmatprep.subr.mxu0 0.0
    %3759 = vmatpush1.msra.mxu0 %v3656
    %3760 = vmatprep.mubr.f32.mxu0 %v3622
    %3761 = vmatmul.mubr.f32.gmra.mrb[0].mxu0 %v3621
    %v3762 = vpop.f32.mrb[0].mxu0
    %v3763 = vadd.f32 %v3694, %v3762
    %v3764 = vpop.f32.mrb[0].mxu0
    %3765 = vdwg.mxu0
    %3766 = vmatprep.subr.mxu0 0.0
    %3767 = vmatpush1.msra.mxu0 %v3657
    %3768 = vmatprep.subr.mxu0 0.0
    %3769 = vmatpush1.msra.mxu0 %v3658
    %3770 = vmatprep.subr.mxu0 0.0
    %3771 = vmatpush1.msra.mxu0 %v3659
    %3772 = vmatprep.subr.mxu0 0.0
    %3773 = vmatpush1.msra.mxu0 %v3660
    %3774 = vmatprep.subr.mxu0 0.0
    %3775 = vmatpush1.msra.mxu0 %v3661
    %3776 = vmatprep.subr.mxu0 0.0
    %3777 = vmatpush1.msra.mxu0 %v3662
    %3778 = vmatprep.subr.mxu0 0.0
    %3779 = vmatpush1.msra.mxu0 %v3663
    %3780 = vmatprep.subr.mxu0 0.0
    %3781 = vmatpush1.msra.mxu0 %v3664
    %3782 = vmatprep.subr.mxu0 0.0
    %3783 = vmatpush1.msra.mxu0 %v3665
    %3784 = vmatprep.subr.mxu0 0.0
    %3785 = vmatpush1.msra.mxu0 %v3666
    %3786 = vmatprep.subr.mxu0 0.0
    %3787 = vmatpush1.msra.mxu0 %v3667
    %3788 = vmatprep.subr.mxu0 0.0
    %3789 = vmatpush1.msra.mxu0 %v3668
    %3790 = vmatprep.subr.mxu0 0.0
    %3791 = vmatpush1.msra.mxu0 %v3669
    %3792 = vmatprep.subr.mxu0 0.0
    %3793 = vmatpush1.msra.mxu0 %v3670
    %3794 = vmatprep.subr.mxu0 0.0
    %3795 = vmatpush1.msra.mxu0 %v3671
    %3796 = vmatprep.subr.mxu0 0.0
    %3797 = vmatpush1.msra.mxu0 %v3672
    %3798 = vmatprep.subr.mxu0 0.0
    %3799 = vmatpush1.msra.mxu0 %v3673
    %3800 = vmatprep.subr.mxu0 0.0
    %3801 = vmatpush1.msra.mxu0 %v3674
    %3802 = vmatprep.subr.mxu0 0.0
    %3803 = vmatpush1.msra.mxu0 %v3675
    %3804 = vmatprep.subr.mxu0 0.0
    %3805 = vmatpush1.msra.mxu0 %v3676
    %3806 = vmatprep.subr.mxu0 0.0
    %3807 = vmatpush1.msra.mxu0 %v3677
    %3808 = vmatprep.subr.mxu0 0.0
    %3809 = vmatpush1.msra.mxu0 %v3678
    %3810 = vmatprep.subr.mxu0 0.0
    %3811 = vmatpush1.msra.mxu0 %v3679
    %3812 = vmatprep.subr.mxu0 0.0
    %3813 = vmatpush1.msra.mxu0 %v3680
    %3814 = vmatprep.subr.mxu0 0.0
    %3815 = vmatpush1.msra.mxu0 %v3681
    %3816 = vmatprep.subr.mxu0 0.0
    %3817 = vmatpush1.msra.mxu0 %v3682
    %3818 = vmatprep.subr.mxu0 0.0
    %3819 = vmatpush1.msra.mxu0 %v3683
    %3820 = vmatprep.subr.mxu0 0.0
    %3821 = vmatpush1.msra.mxu0 %v3684
    %3822 = vmatprep.subr.mxu0 0.0
    %3823 = vmatpush1.msra.mxu0 %v3685
    %3824 = vmatprep.subr.mxu0 0.0
    %3825 = vmatpush1.msra.mxu0 %v3686
    %3826 = vmatprep.subr.mxu0 0.0
    %3827 = vmatpush1.msra.mxu0 %v3687
    %3828 = vmatprep.subr.mxu0 0.0
    %3829 = vmatpush1.msra.mxu0 %v3688
    %3830 = vmatprep.mubr.f32.mxu0 %v3624
    %3831 = vmatmul.mubr.f32.gmra.mrb[0].mxu0 %v3623
    %v3832 = vpop.f32.mrb[0].mxu0
    %v3833 = vadd.f32 %v3763, %v3832
    %v3834 = vpop.f32.mrb[0].mxu0
    %3835 = vdwg.mxu0
    %3836 = vst [vmem:[#allocation5] sm:$0x3] %v3833
    // Predicated region
    $region26: #{dqn_forward.3} parent=1 // pred_check
      _
    $region27: #{dqn_forward.3} parent=1 // pred_check_branch
      %3838 = sbr.rel (0) target = $region29
    $region28: #{dqn_forward.3} parent=1 // pred_region
      %s3840 = ssub.s32 32, 32
      %3841 = vsyncadd [#allocation4], %s3840
      %s3843 = sshll.u32 [#allocation5], 4
      %s3844 = int_to_ptr.vmem [resolvable:$true] %s3843
      %3846 = dma.vmem_to_hbm [thread:$0]  %s3844, 32, %s5, [#allocation4]
    $region29: #{dqn_forward.3} parent=1 // pred_fallthru
      _
    // Predicated region
    $region30: #{dqn_forward.3} parent=1 // pred_check
      _
    $region31: #{dqn_forward.3} parent=1 // pred_check_branch
      %3848 = sbr.rel (0) target = $region33
    $region32: #{dqn_forward.3} parent=1 // pred_region
      %3849 = dma.done [#allocation4], 32
    $region33: #{dqn_forward.3} parent=1 // pred_fallthru
      _
    %3850 = vsyncpa [#allocation3], 1
    %3851 = vsyncpa [#allocation4], 1

</llo_original>
